<compile_context>
chip_gen: v7x
topology: tpu7x:2x2x1
jax: 0.10.0
libtpu: 0.0.40
codegen_flags: <defaults>
</compile_context>

<pallas_src>
import functools
import math

import jax
import jax.numpy as jnp
from jax.experimental import pallas as pl
from jax.experimental.pallas import tpu as pltpu


# ----------------------------------------------------------------------------- #
# Small helpers
# ----------------------------------------------------------------------------- #
def _round_up(x, m):
    return ((x + m - 1) // m) * m


def _row_tiles(M, tm=256):
    TM = min(tm, _round_up(M, 8))
    Mp = _round_up(M, TM)
    return TM, Mp


def _pad_rows(x, Mp):
    M = x.shape[0]
    return x if Mp == M else jnp.pad(x, ((0, Mp - M), (0, 0)))


def _batch_tile(B, max_tile):
    """Batch tile (multiple of 8 when actually tiling) and padded batch size."""
    if B <= max_tile:
        return B, B
    return max_tile, _round_up(B, max_tile)


def _const_map(nd):
    def imap(i, *_):          # accepts (i) or (i, scalar_prefetch_ref)
        return (0,) * nd
    return imap


# ----------------------------------------------------------------------------- #
# Tiled linear:  (M, K) @ (K, N) + (N,)  with optional fused relu
# ----------------------------------------------------------------------------- #
def _linear_kernel(x_ref, w_ref, b_ref, o_ref, *, activation):
    y = jnp.dot(x_ref[...], w_ref[...], preferred_element_type=jnp.float32) + b_ref[...]
    if activation == "relu":
        y = jnp.maximum(y, 0.0)
    o_ref[...] = y


def pallas_linear(x, w, b, activation=None, tm=256):
    x = x.astype(jnp.float32)
    M, K = x.shape
    N = w.shape[1]
    TM, Mp = _row_tiles(M, tm)
    xp = _pad_rows(x, Mp)
    out = pl.pallas_call(
        functools.partial(_linear_kernel, activation=activation),
        out_shape=jax.ShapeDtypeStruct((Mp, N), jnp.float32),
        grid=(Mp // TM,),
        in_specs=[pl.BlockSpec((TM, K), lambda i: (i, 0)),
                  pl.BlockSpec((K, N), lambda i: (0, 0)),
                  pl.BlockSpec((1, N), lambda i: (0, 0))],
        out_specs=pl.BlockSpec((TM, N), lambda i: (i, 0)),
        compiler_params=pltpu.CompilerParams(dimension_semantics=("parallel",)),
    )(xp, w, b.reshape(1, N))
    return out[:M] if Mp != M else out


# ----------------------------------------------------------------------------- #
# Encoder: fused (QKV projection + multi-head attention + single Wo + residual)
# ----------------------------------------------------------------------------- #
def _enc_attn_kernel(h_ref, wqkv_ref, bqkv_ref, wo_ref, bo_ref, o_ref, *, H, D):
    h = h_ref[...]                                   # (TB, N, D) f32
    TB, N, _ = h.shape
    dh = D // H
    scale = 1.0 / math.sqrt(dh)
    h2 = h.reshape(TB * N, D)
    # fused Q/K/V projection: one (rows, D) @ (D, 3D) MXU matmul (review items 6, v6e sizing)
    qkv = jnp.dot(h2, wqkv_ref[...], preferred_element_type=jnp.float32) + bqkv_ref[...]
    qkv = qkv.reshape(TB, N, 3 * D)
    heads = []
    # TODO(synk): fully head-batched (2 batch dims) dot_general would need in-kernel
    # transposes Mosaic does not reliably lower; per-head rank-3 einsums keep the MXU path.
    for hd in range(H):
        lo = hd * dh
        q = qkv[:, :, lo:lo + dh]
        k = qkv[:, :, D + lo:D + lo + dh]
        v = qkv[:, :, 2 * D + lo:2 * D + lo + dh]
        s = jnp.einsum('bqd,bkd->bqk', q, k, preferred_element_type=jnp.float32) * scale
        s = s - jnp.max(s, axis=-1, keepdims=True)
        e = jnp.exp(s)
        p = e * pl.reciprocal(jnp.sum(e, axis=-1, keepdims=True), approx=True)
        heads.append(jnp.einsum('bqk,bkd->bqd', p, v, preferred_element_type=jnp.float32))
    # single output projection on the concatenated head outputs (review item 3)
    o_cat = jnp.concatenate(heads, axis=-1).reshape(TB * N, D)
    delta = jnp.dot(o_cat, wo_ref[...], preferred_element_type=jnp.float32) + bo_ref[...]
    o_ref[...] = (h2 + delta).reshape(TB, N, D)      # residual fused (review item 6)


def pallas_enc_attn_residual(h, Wqkv, bqkv, Wo, bo, H, D, max_tile=16):
    B, N, _ = h.shape
    TB, Bp = _batch_tile(B, max_tile)
    hp = h if Bp == B else jnp.pad(h, ((0, Bp - B), (0, 0), (0, 0)))
    out = pl.pallas_call(
        functools.partial(_enc_attn_kernel, H=H, D=D),
        out_shape=jax.ShapeDtypeStruct((Bp, N, D), jnp.float32),
        grid=(Bp // TB,),
        in_specs=[pl.BlockSpec((TB, N, D), lambda i: (i, 0, 0)),
                  pl.BlockSpec((D, 3 * D), lambda i: (0, 0)),
                  pl.BlockSpec((1, 3 * D), lambda i: (0, 0)),
                  pl.BlockSpec((D, D), lambda i: (0, 0)),
                  pl.BlockSpec((1, D), lambda i: (0, 0))],
        out_specs=pl.BlockSpec((TB, N, D), lambda i: (i, 0, 0)),
        compiler_params=pltpu.CompilerParams(dimension_semantics=("parallel",)),
    )(hp, Wqkv, bqkv.reshape(1, 3 * D), Wo, bo.reshape(1, D))
    return out[:B] if Bp != B else out


# ----------------------------------------------------------------------------- #
# Row-tiled normalization kernels (review item 5)
#   BatchNorm path: two passes (tiled sum/sumsq accumulator, then tiled normalize)
#   LayerNorm path: per-row, fused where convenient
# ----------------------------------------------------------------------------- #
def _bn_stats_kernel(y_ref, sum_ref, ssq_ref):
    y = y_ref[...]

    @pl.when(pl.program_id(0) == 0)
    def _():
        sum_ref[...] = jnp.zeros_like(sum_ref)
        ssq_ref[...] = jnp.zeros_like(ssq_ref)

    sum_ref[...] += jnp.sum(y, axis=0, keepdims=True)
    ssq_ref[...] += jnp.sum(y * y, axis=0, keepdims=True)


def pallas_bn_stats(y2d, tm=512):
    M, D = y2d.shape
    TM, Mp = _row_tiles(M, tm)
    yp = _pad_rows(y2d, Mp)                 # zero padding contributes nothing to sums
    return pl.pallas_call(
        _bn_stats_kernel,
        out_shape=(jax.ShapeDtypeStruct((1, D), jnp.float32),
                   jax.ShapeDtypeStruct((1, D), jnp.float32)),
        grid=(Mp // TM,),
        in_specs=[pl.BlockSpec((TM, D), lambda i: (i, 0))],
        out_specs=(pl.BlockSpec((1, D), lambda i: (0, 0)),
                   pl.BlockSpec((1, D), lambda i: (0, 0))),
        compiler_params=pltpu.CompilerParams(dimension_semantics=("arbitrary",)),
    )(yp)


def _bn_apply_kernel(y_ref, sum_ref, ssq_ref, g_ref, b_ref, o_ref, *, count):
    inv_n = 1.0 / count
    mu = sum_ref[...] * inv_n
    var = ssq_ref[...] * inv_n - mu * mu
    o_ref[...] = (y_ref[...] - mu) * jax.lax.rsqrt(var + 1e-5) * g_ref[...] + b_ref[...]


def pallas_bn_apply(y2d, s, ss, gamma, beta, count, tm=512):
    M, D = y2d.shape
    TM, Mp = _row_tiles(M, tm)
    yp = _pad_rows(y2d, Mp)
    out = pl.pallas_call(
        functools.partial(_bn_apply_kernel, count=count),
        out_shape=jax.ShapeDtypeStruct((Mp, D), jnp.float32),
        grid=(Mp // TM,),
        in_specs=[pl.BlockSpec((TM, D), lambda i: (i, 0)),
                  pl.BlockSpec((1, D), lambda i: (0, 0)),
                  pl.BlockSpec((1, D), lambda i: (0, 0)),
                  pl.BlockSpec((1, D), lambda i: (0, 0)),
                  pl.BlockSpec((1, D), lambda i: (0, 0))],
        out_specs=pl.BlockSpec((TM, D), lambda i: (i, 0)),
        compiler_params=pltpu.CompilerParams(dimension_semantics=("parallel",)),
    )(yp, s, ss, gamma.reshape(1, D), beta.reshape(1, D))
    return out[:M] if Mp != M else out


def _ln_apply_kernel(y_ref, g_ref, b_ref, o_ref):
    y = y_ref[...]
    mu = jnp.mean(y, axis=-1, keepdims=True)
    var = jnp.mean((y - mu) ** 2, axis=-1, keepdims=True)
    o_ref[...] = (y - mu) * jax.lax.rsqrt(var + 1e-5) * g_ref[...] + b_ref[...]


def pallas_ln_apply(y2d, gamma, beta, tm=512):
    M, D = y2d.shape
    TM, Mp = _row_tiles(M, tm)
    yp = _pad_rows(y2d, Mp)
    out = pl.pallas_call(
        _ln_apply_kernel,
        out_shape=jax.ShapeDtypeStruct((Mp, D), jnp.float32),
        grid=(Mp // TM,),
        in_specs=[pl.BlockSpec((TM, D), lambda i: (i, 0)),
                  pl.BlockSpec((1, D), lambda i: (0, 0)),
                  pl.BlockSpec((1, D), lambda i: (0, 0))],
        out_specs=pl.BlockSpec((TM, D), lambda i: (i, 0)),
        compiler_params=pltpu.CompilerParams(dimension_semantics=("parallel",)),
    )(yp, gamma.reshape(1, D), beta.reshape(1, D))
    return out[:M] if Mp != M else out


def _ffn_res_kernel(h_ref, w1_ref, b1_ref, w2_ref, b2_ref, g_ref, be_ref, o_ref, *, fuse_ln):
    h = h_ref[...]
    f = jnp.maximum(jnp.dot(h, w1_ref[...], preferred_element_type=jnp.float32) + b1_ref[...], 0.0)
    y = h + jnp.dot(f, w2_ref[...], preferred_element_type=jnp.float32) + b2_ref[...]
    if fuse_ln:
        mu = jnp.mean(y, axis=-1, keepdims=True)
        var = jnp.mean((y - mu) ** 2, axis=-1, keepdims=True)
        y = (y - mu) * jax.lax.rsqrt(var + 1e-5) * g_ref[...] + be_ref[...]
    o_ref[...] = y


def pallas_ffn_residual(h2d, W1, b1, W2, b2, gamma, beta, fuse_ln, tm=256):
    M, D = h2d.shape
    F = W1.shape[1]
    TM, Mp = _row_tiles(M, tm)
    hp = _pad_rows(h2d, Mp)
    out = pl.pallas_call(
        functools.partial(_ffn_res_kernel, fuse_ln=fuse_ln),
        out_shape=jax.ShapeDtypeStruct((Mp, D), jnp.float32),
        grid=(Mp // TM,),
        in_specs=[pl.BlockSpec((TM, D), lambda i: (i, 0)),
                  pl.BlockSpec((D, F), lambda i: (0, 0)),
                  pl.BlockSpec((1, F), lambda i: (0, 0)),
                  pl.BlockSpec((F, D), lambda i: (0, 0)),
                  pl.BlockSpec((1, D), lambda i: (0, 0)),
                  pl.BlockSpec((1, D), lambda i: (0, 0)),
                  pl.BlockSpec((1, D), lambda i: (0, 0))],
        out_specs=pl.BlockSpec((TM, D), lambda i: (i, 0)),
        compiler_params=pltpu.CompilerParams(dimension_semantics=("parallel",)),
    )(hp, W1, b1.reshape(1, F), W2, b2.reshape(1, D), gamma.reshape(1, D), beta.reshape(1, D))
    return out[:M] if Mp != M else out


def encoder_layer(h, lp, H, batchnorm):
    B, N, D = h.shape
    M = B * N
    y1 = pallas_enc_attn_residual(h, lp["Wqkv"], lp["bqkv"], lp["Wo"], lp["bo"], H, D)
    y1_2d = y1.reshape(M, D)
    if batchnorm:
        s1, ss1 = pallas_bn_stats(y1_2d)
        h1 = pallas_bn_apply(y1_2d, s1, ss1, lp["g1"], lp["be1"], count=M)
        y2 = pallas_ffn_residual(h1, lp["W1"], lp["b1"], lp["W2"], lp["b2"],
                                 lp["g2"], lp["be2"], fuse_ln=False)
        s2, ss2 = pallas_bn_stats(y2)
        h2 = pallas_bn_apply(y2, s2, ss2, lp["g2"], lp["be2"], count=M)
    else:
        h1 = pallas_ln_apply(y1_2d, lp["g1"], lp["be1"])
        h2 = pallas_ffn_residual(h1, lp["W1"], lp["b1"], lp["W2"], lp["b2"],
                                 lp["g2"], lp["be2"], fuse_ln=True)
    return h2.reshape(B, N, D)


# ----------------------------------------------------------------------------- #
# Decoder: one fused kernel per decode step (all layers + final clipped attention)
# ----------------------------------------------------------------------------- #
def _decoder_step_kernel(t_ref, h_ref, kat_ref, vat_ref, mask_ref, kc_ref, vc_ref,
                         wqkv_ref, bqkv_ref, w0sa_ref, b0sa_ref, gsa_ref, besa_ref,
                         wqa_ref, bqa_ref, w0a_ref, b0a_ref, ga_ref, bea_ref,
                         w1_ref, b1_ref, w2_ref, b2_ref, gm_ref, bem_ref,
                         wqf_ref, bqf_ref,
                         logp_ref, knew_ref, vnew_ref, *, H, D, L, clip):
    Lm1 = L - 1
    dh = D // H
    scale_h = 1.0 / math.sqrt(dh)
    t = t_ref[0]                                        # scalar-prefetched decode step
    h = h_ref[...]                                      # (TB, D) f32
    mask = mask_ref[...]                                # (TB, N) int32, 1 == visited
    Tc = kc_ref.shape[2]
    vis_neg = jnp.where(mask > 0, jnp.float32(-1e9), jnp.float32(0.0))[:, None, :]  # (TB,1,N)
    # cache slots < t hold the previously decoded tokens; the current token is handled
    # with a separate self term in the softmax (no full-cache blend, review item 1)
    tmask = jnp.where(jax.lax.broadcasted_iota(jnp.int32, (1, 1, Tc), 2) < t,
                      jnp.float32(0.0), jnp.float32(-1e9))                           # (1,1,Tc)

    def _ln(x, g, b):
        mu = jnp.mean(x, axis=-1, keepdims=True)
        var = jnp.mean((x - mu) ** 2, axis=-1, keepdims=True)
        return (x - mu) * jax.lax.rsqrt(var + 1e-5) * g + b

    def _mh_cross(q, K, V, add_mask, w0, b0):
        """Masked MHA of one query token against bf16 K/V; heads concatenated once and
        projected with a single (TB, D) @ (D, D) matmul."""
        qb = q.astype(jnp.bfloat16)
        heads = []
        for hd in range(H):
            lo = hd * dh
            qh = qb[:, None, lo:lo + dh]                                    # (TB,1,dh)
            s = jnp.einsum('bqd,bkd->bqk', qh, K[:, :, lo:lo + dh],
                           preferred_element_type=jnp.float32) * scale_h + add_mask
            s = s - jnp.max(s, axis=-1, keepdims=True)
            e = jnp.exp(s)
            p = (e * pl.reciprocal(jnp.sum(e, axis=-1, keepdims=True), approx=True)
                 ).astype(jnp.bfloat16)
            heads.append(jnp.einsum('bqk,bkd->bqd', p, V[:, :, lo:lo + dh],
                                    preferred_element_type=jnp.float32))
        o = jnp.concatenate(heads, axis=-1)[:, 0, :]                        # (TB, D)
        return jnp.dot(o, w0, preferred_element_type=jnp.float32) + b0

    for l in range(Lm1):
        # --- self-attention over the partial tour (cache slots < t  +  current token) ---
        qkv = jnp.dot(h, wqkv_ref[l], preferred_element_type=jnp.float32) + bqkv_ref[l]
        q_sa, k_sa, v_sa = qkv[:, :D], qkv[:, D:2 * D], qkv[:, 2 * D:]
        knew_ref[l] = k_sa.astype(knew_ref.dtype)        # only the new rows leave the kernel
        vnew_ref[l] = v_sa.astype(vnew_ref.dtype)
        Kc = kc_ref[l]                                   # (TB, Tc, D) bf16
        Vc = vc_ref[l]
        qb = q_sa.astype(jnp.bfloat16)
        heads = []
        for hd in range(H):
            lo = hd * dh
            qh = qb[:, None, lo:lo + dh]
            s = jnp.einsum('bqd,bkd->bqk', qh, Kc[:, :, lo:lo + dh],
                           preferred_element_type=jnp.float32) * scale_h + tmask     # (TB,1,Tc)
            s_self = jnp.sum(q_sa[:, lo:lo + dh] * k_sa[:, lo:lo + dh],
                             axis=-1, keepdims=True)[:, None, :] * scale_h           # (TB,1,1)
            m = jnp.maximum(jnp.max(s, axis=-1, keepdims=True), s_self)
            e = jnp.exp(s - m)
            e_self = jnp.exp(s_self - m)
            inv = pl.reciprocal(jnp.sum(e, axis=-1, keepdims=True) + e_self, approx=True)
            ctx = jnp.einsum('bqk,bkd->bqd', e.astype(jnp.bfloat16), Vc[:, :, lo:lo + dh],
                             preferred_element_type=jnp.float32)
            heads.append((ctx + e_self * v_sa[:, None, lo:lo + dh]) * inv)
        sa = jnp.concatenate(heads, axis=-1)[:, 0, :]
        sa = jnp.dot(sa, w0sa_ref[l], preferred_element_type=jnp.float32) + b0sa_ref[l]
        h = _ln(h + sa, gsa_ref[l], besa_ref[l])

        # --- masked cross-attention to this layer's encoder keys / values (bf16) ---
        q_a = jnp.dot(h, wqa_ref[l], preferred_element_type=jnp.float32) + bqa_ref[l]
        ca = _mh_cross(q_a, kat_ref[:, :, l * D:(l + 1) * D],
                       vat_ref[:, :, l * D:(l + 1) * D], vis_neg, w0a_ref[l], b0a_ref[l])
        h = _ln(h + ca, ga_ref[l], bea_ref[l])

        # --- MLP (dim_emb -> dim_emb -> dim_emb, as in the reference decoder layer) ---
        ff = jnp.maximum(jnp.dot(h, w1_ref[l], preferred_element_type=jnp.float32) + b1_ref[l], 0.0)
        ff = jnp.dot(ff, w2_ref[l], preferred_element_type=jnp.float32) + b2_ref[l]
        h = _ln(h + ff, gm_ref[l], bem_ref[l])

    # --- final single-head masked attention with 10*tanh clipping -> log-probabilities ---
    q_f = jnp.dot(h, wqf_ref[...], preferred_element_type=jnp.float32) + bqf_ref[...]
    Kf = kat_ref[:, :, (L - 1) * D:L * D].astype(jnp.float32)
    s = jnp.einsum('bqd,bkd->bqk', q_f[:, None, :], Kf,
                   preferred_element_type=jnp.float32)[:, 0, :] * (1.0 / math.sqrt(D))
    s = clip * jnp.tanh(s)
    s = jnp.where(mask > 0, jnp.float32(-1e9), s)
    s = s - jnp.max(s, axis=-1, keepdims=True)
    # exact log-softmax so sampled log-probs stay faithful (review item 12)
    logp_ref[...] = s - jnp.log(jnp.sum(jnp.exp(s), axis=-1, keepdims=True))


_DEC_WEIGHT_ORDER = ("Wqkv_sa", "bqkv_sa", "W0_sa", "b0_sa", "g_sa", "be_sa",
                     "Wq_att", "bq_att", "W0_att", "b0_att", "g_att", "be_att",
                     "W1", "b1", "W2", "b2", "g_mlp", "be_mlp",
                     "Wq_final", "bq_final")


def _decoder_step_call(t, h_t, kat, vat, mask, kc, vc, dw, *, H, D, L, TB):
    """One fused decode step over the (padded) batch.
    Returns (log_probs (Bp,N), new K rows (Lm1,Bp,D) bf16, new V rows (Lm1,Bp,D) bf16)."""
    Bp = h_t.shape[0]
    N = kat.shape[1]
    Lm1, _, Tc, _ = kc.shape
    weights = [dw[k] for k in _DEC_WEIGHT_ORDER]

    in_specs = [
        pl.BlockSpec((TB, D), lambda i, t_s: (i, 0)),
        pl.BlockSpec((TB, N, L * D), lambda i, t_s: (i, 0, 0)),
        pl.BlockSpec((TB, N, L * D), lambda i, t_s: (i, 0, 0)),
        pl.BlockSpec((TB, N), lambda i, t_s: (i, 0)),
        pl.BlockSpec((Lm1, TB, Tc, D), lambda i, t_s: (0, i, 0, 0)),
        pl.BlockSpec((Lm1, TB, Tc, D), lambda i, t_s: (0, i, 0, 0)),
    ] + [pl.BlockSpec(w.shape, _const_map(w.ndim)) for w in weights]
    out_specs = (
        pl.BlockSpec((TB, N), lambda i, t_s: (i, 0)),
        pl.BlockSpec((Lm1, TB, D), lambda i, t_s: (0, i, 0)),
        pl.BlockSpec((Lm1, TB, D), lambda i, t_s: (0, i, 0)),
    )
    out_shape = (
        jax.ShapeDtypeStruct((Bp, N), jnp.float32),
        jax.ShapeDtypeStruct((Lm1, Bp, D), jnp.bfloat16),
        jax.ShapeDtypeStruct((Lm1, Bp, D), jnp.bfloat16),
    )
    return pl.pallas_call(
        functools.partial(_decoder_step_kernel, H=H, D=D, L=L, clip=10.0),
        out_shape=out_shape,
        grid_spec=pltpu.PrefetchScalarGridSpec(
            num_scalar_prefetch=1,            # decode index t lives in SMEM (review item 11)
            grid=(Bp // TB,),
            in_specs=in_specs,
            out_specs=out_specs,
        ),
        compiler_params=pltpu.CompilerParams(
            dimension_semantics=("parallel",),
            vmem_limit_bytes=64 * 1024 * 1024,   # explicit VMEM budget (v7x note in review)
        ),
    )(t, h_t, kat, vat, mask, kc, vc, *weights)


# ----------------------------------------------------------------------------- #
# Full forward pass
# ----------------------------------------------------------------------------- #
def tspformer_forward(params, x, key=None, deterministic=False):
    cfg = params["cfg"]
    D, H, L = cfg["dim_emb"], cfg["nb_heads"], cfg["nb_layers_decoder"]
    Lm1 = L - 1
    B, n, din = x.shape
    N = n + 1
    zero_to_bsz = jnp.arange(B)
    if key is None:
        key = jax.random.PRNGKey(0)

    # node embedding + learnable start placeholder
    h = pallas_linear(x.reshape(B * n, din), params["W_in"], params["b_in"]).reshape(B, n, D)
    h = jnp.concatenate([h, jnp.broadcast_to(params["start"][None, None, :], (B, 1, D))], axis=1)

    # encoder
    for lp in params["enc_layers"]:
        h = encoder_layer(h, lp, H, cfg["batchnorm"])
    h_enc = h

    # fused per-decoder-layer keys / values; stored bf16 (review item 2: halve streaming)
    kv = pallas_linear(h_enc.reshape(B * N, D), params["WKV"], params["bKV"]).reshape(B, N, 2 * L * D)
    K_att = kv[:, :, :L * D].astype(jnp.bfloat16)
    V_att = kv[:, :, L * D:].astype(jnp.bfloat16)

    PE = params["PE"]

    # decoder batch tiling (review item 7).  TODO(synk): on v7x pick TB <= Bp//2 so both cores run.
    TB, Bp = _batch_tile(B, 64)
    if Bp != B:
        K_att = jnp.pad(K_att, ((0, Bp - B), (0, 0), (0, 0)))
        V_att = jnp.pad(V_att, ((0, Bp - B), (0, 0), (0, 0)))

    mask0 = jnp.zeros((Bp, N), jnp.int32).at[:, n].set(1)      # start placeholder is visited
    h0 = h_enc[:, n, :] + PE[0][None, :]
    if Bp != B:
        h0 = jnp.pad(h0, ((0, Bp - B), (0, 0)))
    Tc = n                                                     # max partial-tour length
    Kc0 = jnp.zeros((Lm1, Bp, Tc, D), jnp.bfloat16)
    Vc0 = jnp.zeros((Lm1, Bp, Tc, D), jnp.bfloat16)

    dw = params["dec"]

    def step(carry, xs_t):
        h_t, mask, Kc, Vc = carry
        t, pe_row, kk = xs_t
        logp_full, k_new, v_new = _decoder_step_call(
            jnp.reshape(t, (1,)), h_t, K_att, V_att, mask, Kc, Vc, dw, H=H, D=D, L=L, TB=TB)
        logp = logp_full[:B]                                   # (B, N) log-probabilities
        if deterministic:
            idx = jnp.argmax(logp, axis=1)
        else:
            # TODO(synk): RNG stream differs from torch.distributions.Categorical.
            idx = jax.random.categorical(kk, logp, axis=1)
        chosen_logp = logp[zero_to_bsz, idx]
        h_next = h_enc[zero_to_bsz, idx, :] + pe_row[None, :]
        if Bp > B:
            h_next = jnp.pad(h_next, ((0, Bp - B), (0, 0)))
        mask = mask.at[zero_to_bsz, idx].set(1)
        # review item 1: only the new slot is written back; XLA performs the update in place
        # on the donated scan carry (O((L-1)*B*D) HBM writeback per decode step).
        Kc = jax.lax.dynamic_update_slice_in_dim(Kc, k_new[:, :, None, :], t, axis=2)
        Vc = jax.lax.dynamic_update_slice_in_dim(Vc, v_new[:, :, None, :], t, axis=2)
        return (h_next, mask, Kc, Vc), (idx, chosen_logp)

    xs = (jnp.arange(n, dtype=jnp.int32), PE[1:n + 1], jax.random.split(key, n))
    _, (tours, logps) = jax.lax.scan(step, (h0, mask0, Kc0, Vc0), xs)
    return jnp.transpose(tours), jnp.sum(logps, axis=0)


# ----------------------------------------------------------------------------- #
# Deterministic parameter init
# ----------------------------------------------------------------------------- #
def _linear_init(key, fan_in, fan_out):
    kw, kb = jax.random.split(key)
    s = 1.0 / math.sqrt(fan_in)
    W = jax.random.uniform(kw, (fan_in, fan_out), jnp.float32, -s, s)
    b = jax.random.uniform(kb, (fan_out,), jnp.float32, -s, s)
    return W, b


def generate_positional_encoding(d_model, max_len):
    position = jnp.arange(max_len, dtype=jnp.float32)[:, None]
    div_term = jnp.exp(jnp.arange(0, d_model, 2, dtype=jnp.float32) * (-math.log(10000.0) / d_model))
    pe = jnp.zeros((max_len, d_model), jnp.float32)
    pe = pe.at[:, 0::2].set(jnp.sin(position * div_term))
    pe = pe.at[:, 1::2].set(jnp.cos(position * div_term))
    return pe


def init_params(key, dim_input_nodes, dim_emb, dim_ff, nb_layers_encoder,
                nb_layers_decoder, nb_heads, max_len_PE, batchnorm=True):
    assert dim_emb % nb_heads == 0
    assert nb_layers_decoder >= 2
    keys = iter(jax.random.split(key, 512))
    D, F, L = dim_emb, dim_ff, nb_layers_decoder
    Lm1 = L - 1
    p = {"cfg": dict(dim_emb=D, dim_ff=F, nb_layers_encoder=nb_layers_encoder,
                     nb_layers_decoder=L, nb_heads=nb_heads, batchnorm=batchnorm)}
    p["W_in"], p["b_in"] = _linear_init(next(keys), dim_input_nodes, D)
    p["start"] = jax.random.normal(next(keys), (D,), jnp.float32)

    enc_layers = []
    for _ in range(nb_layers_encoder):
        lp = {}
        lp["Wqkv"], lp["bqkv"] = _linear_init(next(keys), D, 3 * D)   # fused Q/K/V
        lp["Wo"], lp["bo"] = _linear_init(next(keys), D, D)
        lp["W1"], lp["b1"] = _linear_init(next(keys), D, F)
        lp["W2"], lp["b2"] = _linear_init(next(keys), F, D)
        lp["g1"], lp["be1"] = jnp.ones((D,), jnp.float32), jnp.zeros((D,), jnp.float32)
        lp["g2"], lp["be2"] = jnp.ones((D,), jnp.float32), jnp.zeros((D,), jnp.float32)
        enc_layers.append(lp)
    p["enc_layers"] = enc_layers

    # fused K/V projections for all decoder layers
    p["WKV"], p["bKV"] = _linear_init(next(keys), D, 2 * L * D)

    def stacked_linear(fan_in, fan_out):
        Ws, bs = [], []
        for _ in range(Lm1):
            W, b = _linear_init(next(keys), fan_in, fan_out)
            Ws.append(W)
            bs.append(b.reshape(1, fan_out))
        return jnp.stack(Ws, 0), jnp.stack(bs, 0)

    dec = {}
    dec["Wqkv_sa"], dec["bqkv_sa"] = stacked_linear(D, 3 * D)
    dec["W0_sa"], dec["b0_sa"] = stacked_linear(D, D)
    dec["Wq_att"], dec["bq_att"] = stacked_linear(D, D)
    dec["W0_att"], dec["b0_att"] = stacked_linear(D, D)
    # TODO(synk): reference Tspformer decoder MLP uses dim_emb -> dim_emb (not dim_ff).
    dec["W1"], dec["b1"] = stacked_linear(D, D)
    dec["W2"], dec["b2"] = stacked_linear(D, D)
    ones = jnp.ones((Lm1, 1, D), jnp.float32)
    zeros = jnp.zeros((Lm1, 1, D), jnp.float32)
    dec["g_sa"], dec["be_sa"] = ones, zeros
    dec["g_att"], dec["be_att"] = ones, zeros
    dec["g_mlp"], dec["be_mlp"] = ones, zeros
    Wqf, bqf = _linear_init(next(keys), D, D)
    dec["Wq_final"], dec["bq_final"] = Wqf, bqf.reshape(1, D)
    p["dec"] = dec
    p["PE"] = generate_positional_encoding(D, max_len_PE)
    return p


# ----------------------------------------------------------------------------- #
if __name__ == "__main__":
    key = jax.random.PRNGKey(0)
    kparam, kx, ksample = jax.random.split(key, 3)

    params = init_params(kparam, dim_input_nodes=2, dim_emb=32, dim_ff=64,
                         nb_layers_encoder=2, nb_layers_decoder=2, nb_heads=4,
                         max_len_PE=64, batchnorm=True)

    x = jax.random.uniform(kx, (2, 8, 2), jnp.float32)   # (batch, nb_nodes, 2-D coords)

    fwd = jax.jit(lambda xx, kk: tspformer_forward(params, xx, key=kk, deterministic=False))
    tours, sum_log_prob = fwd(x, ksample)
    jax.block_until_ready((tours, sum_log_prob))

    assert tours.shape == (2, 8) and sum_log_prob.shape == (2,)
    # masking correctness: every sampled tour must be a permutation of the 8 nodes
    assert bool(jnp.all(jnp.sort(tours, axis=1) == jnp.arange(8)[None, :]))
    assert bool(jnp.all(jnp.isfinite(sum_log_prob)))
    print("KERNEL_OK")
</pallas_src>

<mosaic_0001>
module attributes {stable_mosaic.version = 11 : i64} {
  func.func @_bn_stats_kernel(%arg0: i32, %arg1: memref<24x32xf32, #tpu.memory_space<vmem>>, %arg2: memref<1x32xf32, #tpu.memory_space<vmem>>, %arg3: memref<1x32xf32, #tpu.memory_space<vmem>>) attributes {dimension_semantics = [#tpu.dimension_semantics<arbitrary>], iteration_bounds = array<i64: 1>, scalar_prefetch = 0 : i64, scratch_operands = 0 : i64, tpu.core_type = #tpu.core_type<tc>, window_params = [{transform_indices = @transform_0, window_bounds = array<i64: 24, 32>}, {pipeline_mode = #tpu.pipeline_mode<synchronous>, transform_indices = @transform_1, window_bounds = array<i64: 1, 32>}, {pipeline_mode = #tpu.pipeline_mode<synchronous>, transform_indices = @transform_2, window_bounds = array<i64: 1, 32>}]} {
    %c0 = arith.constant 0 : index
    %c0_0 = arith.constant 0 : index
    %0 = vector.load %arg1[%c0, %c0_0] : memref<24x32xf32, #tpu.memory_space<vmem>>, vector<24x32xf32>
    %c0_i32 = arith.constant 0 : i32
    %1 = arith.cmpi eq, %arg0, %c0_i32 : i32
    %2 = arith.extui %1 : i1 to i32
    %c0_i32_1 = arith.constant 0 : i32
    %3 = arith.cmpi ne, %2, %c0_i32_1 : i32
    scf.if %3 {
      %cst_11 = arith.constant 0.000000e+00 : f32
      %15 = vector.broadcast %cst_11 : f32 to vector<1x32xf32>
      %c0_12 = arith.constant 0 : index
      %c0_13 = arith.constant 0 : index
      %16 = vector.load %arg2[%c0_12, %c0_13] : memref<1x32xf32, #tpu.memory_space<vmem>>, vector<1x32xf32>
      tpu.vector_store %arg2[%c0_12, %c0_13], %15 {strides = array<i32>} : memref<1x32xf32, #tpu.memory_space<vmem>>, vector<1x32xf32>,
      %cst_14 = arith.constant 0.000000e+00 : f32
      %17 = vector.broadcast %cst_14 : f32 to vector<1x32xf32>
      %c0_15 = arith.constant 0 : index
      %c0_16 = arith.constant 0 : index
      %18 = vector.load %arg3[%c0_15, %c0_16] : memref<1x32xf32, #tpu.memory_space<vmem>>, vector<1x32xf32>
      tpu.vector_store %arg3[%c0_15, %c0_16], %17 {strides = array<i32>} : memref<1x32xf32, #tpu.memory_space<vmem>>, vector<1x32xf32>,
    } else {
    }
    %c0_2 = arith.constant 0 : index
    %c0_3 = arith.constant 0 : index
    %4 = vector.load %arg2[%c0_2, %c0_3] : memref<1x32xf32, #tpu.memory_space<vmem>>, vector<1x32xf32>
    %cst = arith.constant dense<0.000000e+00> : vector<32xf32>
    %5 = vector.multi_reduction <add>, %0, %cst [0] : vector<24x32xf32> to vector<32xf32>
    %6 = vector.shape_cast %5 : vector<32xf32> to vector<1x32xf32>
    %7 = arith.addf %4, %6 : vector<1x32xf32>
    %c0_4 = arith.constant 0 : index
    %c0_5 = arith.constant 0 : index
    %8 = vector.load %arg2[%c0_4, %c0_5] : memref<1x32xf32, #tpu.memory_space<vmem>>, vector<1x32xf32>
    tpu.vector_store %arg2[%c0_4, %c0_5], %7 {strides = array<i32>} : memref<1x32xf32, #tpu.memory_space<vmem>>, vector<1x32xf32>,
    %c0_6 = arith.constant 0 : index
    %c0_7 = arith.constant 0 : index
    %9 = vector.load %arg3[%c0_6, %c0_7] : memref<1x32xf32, #tpu.memory_space<vmem>>, vector<1x32xf32>
    %10 = arith.mulf %0, %0 : vector<24x32xf32>
    %cst_8 = arith.constant dense<0.000000e+00> : vector<32xf32>
    %11 = vector.multi_reduction <add>, %10, %cst_8 [0] : vector<24x32xf32> to vector<32xf32>
    %12 = vector.shape_cast %11 : vector<32xf32> to vector<1x32xf32>
    %13 = arith.addf %9, %12 : vector<1x32xf32>
    %c0_9 = arith.constant 0 : index
    %c0_10 = arith.constant 0 : index
    %14 = vector.load %arg3[%c0_9, %c0_10] : memref<1x32xf32, #tpu.memory_space<vmem>>, vector<1x32xf32>
    tpu.vector_store %arg3[%c0_9, %c0_10], %13 {strides = array<i32>} : memref<1x32xf32, #tpu.memory_space<vmem>>, vector<1x32xf32>,
    return
  }
  func.func @transform_0(%arg0: i32) -> (i32, i32) {
    %c0_i32 = arith.constant 0 : i32
    %c0_i32_0 = arith.constant 0 : i32
    return %arg0, %c0_i32 : i32, i32
  }
  func.func @transform_1(%arg0: i32) -> (i32, i32) {
    %c0_i32 = arith.constant 0 : i32
    %c0_i32_0 = arith.constant 0 : i32
    %c0_i32_1 = arith.constant 0 : i32
    return %c0_i32, %c0_i32_0 : i32, i32
  }
  func.func @transform_2(%arg0: i32) -> (i32, i32) {
    %c0_i32 = arith.constant 0 : i32
    %c0_i32_0 = arith.constant 0 : i32
    %c0_i32_1 = arith.constant 0 : i32
    return %c0_i32, %c0_i32_0 : i32, i32
  }
}

module attributes {stable_mosaic.version = 11 : i64} {
  func.func @_bn_apply_kernel(%arg0: i32, %arg1: memref<24x32xf32, #tpu.memory_space<vmem>>, %arg2: memref<1x32xf32, #tpu.memory_space<vmem>>, %arg3: memref<1x32xf32, #tpu.memory_space<vmem>>, %arg4: memref<1x32xf32, #tpu.memory_space<vmem>>, %arg5: memref<1x32xf32, #tpu.memory_space<vmem>>, %arg6: memref<24x32xf32, #tpu.memory_space<vmem>>) attributes {dimension_semantics = [#tpu.dimension_semantics<parallel>], iteration_bounds = array<i64: 1>, scalar_prefetch = 0 : i64, scratch_operands = 0 : i64, tpu.core_type = #tpu.core_type<tc>, window_params = [{transform_indices = @transform_0, window_bounds = array<i64: 24, 32>}, {pipeline_mode = #tpu.pipeline_mode<synchronous>, transform_indices = @transform_1, window_bounds = array<i64: 1, 32>}, {pipeline_mode = #tpu.pipeline_mode<synchronous>, transform_indices = @transform_2, window_bounds = array<i64: 1, 32>}, {pipeline_mode = #tpu.pipeline_mode<synchronous>, transform_indices = @transform_3, window_bounds = array<i64: 1, 32>}, {pipeline_mode = #tpu.pipeline_mode<synchronous>, transform_indices = @transform_4, window_bounds = array<i64: 1, 32>}, {transform_indices = @transform_5, window_bounds = array<i64: 24, 32>}]} {
    %c0 = arith.constant 0 : index
    %c0_0 = arith.constant 0 : index
    %0 = vector.load %arg2[%c0, %c0_0] : memref<1x32xf32, #tpu.memory_space<vmem>>, vector<1x32xf32>
    %cst = arith.constant 0.055555556 : f32
    %1 = vector.broadcast %cst : f32 to vector<1x32xf32>
    %2 = arith.mulf %0, %1 : vector<1x32xf32>
    %c0_1 = arith.constant 0 : index
    %c0_2 = arith.constant 0 : index
    %3 = vector.load %arg3[%c0_1, %c0_2] : memref<1x32xf32, #tpu.memory_space<vmem>>, vector<1x32xf32>
    %cst_3 = arith.constant 0.055555556 : f32
    %4 = vector.broadcast %cst_3 : f32 to vector<1x32xf32>
    %5 = arith.mulf %3, %4 : vector<1x32xf32>
    %6 = arith.mulf %2, %2 : vector<1x32xf32>
    %7 = arith.subf %5, %6 : vector<1x32xf32>
    %c0_4 = arith.constant 0 : index
    %c0_5 = arith.constant 0 : index
    %8 = vector.load %arg1[%c0_4, %c0_5] : memref<24x32xf32, #tpu.memory_space<vmem>>, vector<24x32xf32>
    %9 = vector.broadcast %2 : vector<1x32xf32> to vector<24x32xf32>
    %10 = arith.subf %8, %9 : vector<24x32xf32>
    %cst_6 = arith.constant 9.99999974E-6 : f32
    %11 = vector.broadcast %cst_6 : f32 to vector<1x32xf32>
    %12 = arith.addf %7, %11 : vector<1x32xf32>
    %13 = math.rsqrt %12 : vector<1x32xf32>
    %14 = vector.broadcast %13 : vector<1x32xf32> to vector<24x32xf32>
    %15 = arith.mulf %10, %14 : vector<24x32xf32>
    %c0_7 = arith.constant 0 : index
    %c0_8 = arith.constant 0 : index
    %16 = vector.load %arg4[%c0_7, %c0_8] : memref<1x32xf32, #tpu.memory_space<vmem>>, vector<1x32xf32>
    %17 = vector.broadcast %16 : vector<1x32xf32> to vector<24x32xf32>
    %18 = arith.mulf %15, %17 : vector<24x32xf32>
    %c0_9 = arith.constant 0 : index
    %c0_10 = arith.constant 0 : index
    %19 = vector.load %arg5[%c0_9, %c0_10] : memref<1x32xf32, #tpu.memory_space<vmem>>, vector<1x32xf32>
    %20 = vector.broadcast %19 : vector<1x32xf32> to vector<24x32xf32>
    %21 = arith.addf %18, %20 : vector<24x32xf32>
    %c0_11 = arith.constant 0 : index
    %c0_12 = arith.constant 0 : index
    %22 = vector.load %arg6[%c0_11, %c0_12] : memref<24x32xf32, #tpu.memory_space<vmem>>, vector<24x32xf32>
    tpu.vector_store %arg6[%c0_11, %c0_12], %21 {strides = array<i32>} : memref<24x32xf32, #tpu.memory_space<vmem>>, vector<24x32xf32>,
    return
  }
  func.func @transform_0(%arg0: i32) -> (i32, i32) {
    %c0_i32 = arith.constant 0 : i32
    %c0_i32_0 = arith.constant 0 : i32
    return %arg0, %c0_i32 : i32, i32
  }
  func.func @transform_1(%arg0: i32) -> (i32, i32) {
    %c0_i32 = arith.constant 0 : i32
    %c0_i32_0 = arith.constant 0 : i32
    %c0_i32_1 = arith.constant 0 : i32
    return %c0_i32, %c0_i32_0 : i32, i32
  }
  func.func @transform_2(%arg0: i32) -> (i32, i32) {
    %c0_i32 = arith.constant 0 : i32
    %c0_i32_0 = arith.constant 0 : i32
    %c0_i32_1 = arith.constant 0 : i32
    return %c0_i32, %c0_i32_0 : i32, i32
  }
  func.func @transform_3(%arg0: i32) -> (i32, i32) {
    %c0_i32 = arith.constant 0 : i32
    %c0_i32_0 = arith.constant 0 : i32
    %c0_i32_1 = arith.constant 0 : i32
    return %c0_i32, %c0_i32_0 : i32, i32
  }
  func.func @transform_4(%arg0: i32) -> (i32, i32) {
    %c0_i32 = arith.constant 0 : i32
    %c0_i32_0 = arith.constant 0 : i32
    %c0_i32_1 = arith.constant 0 : i32
    return %c0_i32, %c0_i32_0 : i32, i32
  }
  func.func @transform_5(%arg0: i32) -> (i32, i32) {
    %c0_i32 = arith.constant 0 : i32
    %c0_i32_0 = arith.constant 0 : i32
    return %arg0, %c0_i32 : i32, i32
  }
}

module attributes {stable_mosaic.version = 11 : i64} {
  func.func @_linear_kernel(%arg0: i32, %arg1: memref<16x2xf32, #tpu.memory_space<vmem>>, %arg2: memref<2x32xf32, #tpu.memory_space<vmem>>, %arg3: memref<1x32xf32, #tpu.memory_space<vmem>>, %arg4: memref<16x32xf32, #tpu.memory_space<vmem>>) attributes {dimension_semantics = [#tpu.dimension_semantics<parallel>], iteration_bounds = array<i64: 1>, scalar_prefetch = 0 : i64, scratch_operands = 0 : i64, tpu.core_type = #tpu.core_type<tc>, window_params = [{transform_indices = @transform_0, window_bounds = array<i64: 16, 2>}, {pipeline_mode = #tpu.pipeline_mode<synchronous>, transform_indices = @transform_1, window_bounds = array<i64: 2, 32>}, {pipeline_mode = #tpu.pipeline_mode<synchronous>, transform_indices = @transform_2, window_bounds = array<i64: 1, 32>}, {transform_indices = @transform_3, window_bounds = array<i64: 16, 32>}]} {
    %c0 = arith.constant 0 : index
    %c0_0 = arith.constant 0 : index
    %0 = vector.load %arg1[%c0, %c0_0] : memref<16x2xf32, #tpu.memory_space<vmem>>, vector<16x2xf32>
    %c0_1 = arith.constant 0 : index
    %c0_2 = arith.constant 0 : index
    %1 = vector.load %arg2[%c0_1, %c0_2] : memref<2x32xf32, #tpu.memory_space<vmem>>, vector<2x32xf32>
    %cst = arith.constant dense<0.000000e+00> : vector<16x32xf32>
    %2 = tpu.matmul %0, %1, %cst {dimension_numbers = #tpu.dot_dimension_numbers<[1], [0], [0], [1], [0, 0, 1, 1], [], []>} : vector<16x2xf32>, vector<2x32xf32>, vector<16x32xf32> -> vector<16x32xf32>
    %c0_3 = arith.constant 0 : index
    %c0_4 = arith.constant 0 : index
    %3 = vector.load %arg3[%c0_3, %c0_4] : memref<1x32xf32, #tpu.memory_space<vmem>>, vector<1x32xf32>
    %4 = vector.broadcast %3 : vector<1x32xf32> to vector<16x32xf32>
    %5 = arith.addf %2, %4 : vector<16x32xf32>
    %c0_5 = arith.constant 0 : index
    %c0_6 = arith.constant 0 : index
    %6 = vector.load %arg4[%c0_5, %c0_6] : memref<16x32xf32, #tpu.memory_space<vmem>>, vector<16x32xf32>
    tpu.vector_store %arg4[%c0_5, %c0_6], %5 {strides = array<i32>} : memref<16x32xf32, #tpu.memory_space<vmem>>, vector<16x32xf32>,
    return
  }
  func.func @transform_0(%arg0: i32) -> (i32, i32) {
    %c0_i32 = arith.constant 0 : i32
    %c0_i32_0 = arith.constant 0 : i32
    return %arg0, %c0_i32 : i32, i32
  }
  func.func @transform_1(%arg0: i32) -> (i32, i32) {
    %c0_i32 = arith.constant 0 : i32
    %c0_i32_0 = arith.constant 0 : i32
    %c0_i32_1 = arith.constant 0 : i32
    return %c0_i32, %c0_i32_0 : i32, i32
  }
  func.func @transform_2(%arg0: i32) -> (i32, i32) {
    %c0_i32 = arith.constant 0 : i32
    %c0_i32_0 = arith.constant 0 : i32
    %c0_i32_1 = arith.constant 0 : i32
    return %c0_i32, %c0_i32_0 : i32, i32
  }
  func.func @transform_3(%arg0: i32) -> (i32, i32) {
    %c0_i32 = arith.constant 0 : i32
    %c0_i32_0 = arith.constant 0 : i32
    return %arg0, %c0_i32 : i32, i32
  }
}

module attributes {stable_mosaic.version = 11 : i64} {
  func.func @_enc_attn_kernel(%arg0: i32, %arg1: memref<2x9x32xf32, #tpu.memory_space<vmem>>, %arg2: memref<32x96xf32, #tpu.memory_space<vmem>>, %arg3: memref<1x96xf32, #tpu.memory_space<vmem>>, %arg4: memref<32x32xf32, #tpu.memory_space<vmem>>, %arg5: memref<1x32xf32, #tpu.memory_space<vmem>>, %arg6: memref<2x9x32xf32, #tpu.memory_space<vmem>>) attributes {dimension_semantics = [#tpu.dimension_semantics<parallel>], iteration_bounds = array<i64: 1>, scalar_prefetch = 0 : i64, scratch_operands = 0 : i64, tpu.core_type = #tpu.core_type<tc>, window_params = [{transform_indices = @transform_0, window_bounds = array<i64: 2, 9, 32>}, {pipeline_mode = #tpu.pipeline_mode<synchronous>, transform_indices = @transform_1, window_bounds = array<i64: 32, 96>}, {pipeline_mode = #tpu.pipeline_mode<synchronous>, transform_indices = @transform_2, window_bounds = array<i64: 1, 96>}, {pipeline_mode = #tpu.pipeline_mode<synchronous>, transform_indices = @transform_3, window_bounds = array<i64: 32, 32>}, {pipeline_mode = #tpu.pipeline_mode<synchronous>, transform_indices = @transform_4, window_bounds = array<i64: 1, 32>}, {transform_indices = @transform_5, window_bounds = array<i64: 2, 9, 32>}]} {
    %c0 = arith.constant 0 : index
    %c0_0 = arith.constant 0 : index
    %c0_1 = arith.constant 0 : index
    %0 = vector.load %arg1[%c0, %c0_0, %c0_1] : memref<2x9x32xf32, #tpu.memory_space<vmem>>, vector<2x9x32xf32>
    %1 = vector.shape_cast %0 : vector<2x9x32xf32> to vector<18x32xf32>
    %c0_2 = arith.constant 0 : index
    %c0_3 = arith.constant 0 : index
    %2 = vector.load %arg2[%c0_2, %c0_3] : memref<32x96xf32, #tpu.memory_space<vmem>>, vector<32x96xf32>
    %cst = arith.constant dense<0.000000e+00> : vector<18x96xf32>
    %3 = tpu.matmul %1, %2, %cst {dimension_numbers = #tpu.dot_dimension_numbers<[1], [0], [0], [1], [0, 0, 1, 1], [], []>} : vector<18x32xf32>, vector<32x96xf32>, vector<18x96xf32> -> vector<18x96xf32>
    %c0_4 = arith.constant 0 : index
    %c0_5 = arith.constant 0 : index
    %4 = vector.load %arg3[%c0_4, %c0_5] : memref<1x96xf32, #tpu.memory_space<vmem>>, vector<1x96xf32>
    %5 = vector.broadcast %4 : vector<1x96xf32> to vector<18x96xf32>
    %6 = arith.addf %3, %5 : vector<18x96xf32>
    %7 = vector.shape_cast %6 : vector<18x96xf32> to vector<2x9x96xf32>
    %8 = vector.extract_strided_slice %7 {offsets = [0, 0, 0], sizes = [2, 9, 8], strides = [1, 1, 1]} : vector<2x9x96xf32> to vector<2x9x8xf32>
    %9 = vector.extract_strided_slice %7 {offsets = [0, 0, 32], sizes = [2, 9, 8], strides = [1, 1, 1]} : vector<2x9x96xf32> to vector<2x9x8xf32>
    %10 = vector.extract_strided_slice %7 {offsets = [0, 0, 64], sizes = [2, 9, 8], strides = [1, 1, 1]} : vector<2x9x96xf32> to vector<2x9x8xf32>
    "tpu.trace_start"() <{level = 10 : i32, message = "bqd,bkd->bqk"}> : () -> ()
    %cst_6 = arith.constant dense<0.000000e+00> : vector<2x9x9xf32>
    %11 = tpu.matmul %8, %9, %cst_6 {dimension_numbers = #tpu.dot_dimension_numbers<[2], [2], [1], [1], [0, 0, 0, 1, 1, 1], [0], [0]>} : vector<2x9x8xf32>, vector<2x9x8xf32>, vector<2x9x9xf32> -> vector<2x9x9xf32>
    "tpu.trace_stop"() : () -> ()
    %cst_7 = arith.constant 0.353553385 : f32
    %12 = vector.broadcast %cst_7 : f32 to vector<2x9x9xf32>
    %13 = arith.mulf %11, %12 : vector<2x9x9xf32>
    %cst_8 = arith.constant dense<0xFF800000> : vector<2x9xf32>
    %14 = vector.multi_reduction <maximumf>, %13, %cst_8 [2] : vector<2x9x9xf32> to vector<2x9xf32>
    %15 = vector.shape_cast %14 : vector<2x9xf32> to vector<2x9x1xf32>
    %16 = vector.broadcast %15 : vector<2x9x1xf32> to vector<2x9x9xf32>
    %17 = arith.subf %13, %16 : vector<2x9x9xf32>
    %18 = math.exp %17 : vector<2x9x9xf32>
    %cst_9 = arith.constant dense<0.000000e+00> : vector<2x9xf32>
    %19 = vector.multi_reduction <add>, %18, %cst_9 [2] : vector<2x9x9xf32> to vector<2x9xf32>
    %20 = vector.shape_cast %19 : vector<2x9xf32> to vector<2x9x1xf32>
    %21 = tpu.reciprocal %20 {approx = true} : vector<2x9x1xf32> -> vector<2x9x1xf32>
    %22 = vector.broadcast %21 : vector<2x9x1xf32> to vector<2x9x9xf32>
    %23 = arith.mulf %18, %22 : vector<2x9x9xf32>
    "tpu.trace_start"() <{level = 10 : i32, message = "bqk,bkd->bqd"}> : () -> ()
    %cst_10 = arith.constant dense<0.000000e+00> : vector<2x9x8xf32>
    %24 = tpu.matmul %23, %10, %cst_10 {dimension_numbers = #tpu.dot_dimension_numbers<[2], [1], [1], [2], [0, 0, 0, 1, 1, 2], [0], [0]>} : vector<2x9x9xf32>, vector<2x9x8xf32>, vector<2x9x8xf32> -> vector<2x9x8xf32>
    "tpu.trace_stop"() : () -> ()
    %25 = vector.extract_strided_slice %7 {offsets = [0, 0, 8], sizes = [2, 9, 8], strides = [1, 1, 1]} : vector<2x9x96xf32> to vector<2x9x8xf32>
    %26 = vector.extract_strided_slice %7 {offsets = [0, 0, 40], sizes = [2, 9, 8], strides = [1, 1, 1]} : vector<2x9x96xf32> to vector<2x9x8xf32>
    %27 = vector.extract_strided_slice %7 {offsets = [0, 0, 72], sizes = [2, 9, 8], strides = [1, 1, 1]} : vector<2x9x96xf32> to vector<2x9x8xf32>
    "tpu.trace_start"() <{level = 10 : i32, message = "bqd,bkd->bqk"}> : () -> ()
    %cst_11 = arith.constant dense<0.000000e+00> : vector<2x9x9xf32>
    %28 = tpu.matmul %25, %26, %cst_11 {dimension_numbers = #tpu.dot_dimension_numbers<[2], [2], [1], [1], [0, 0, 0, 1, 1, 1], [0], [0]>} : vector<2x9x8xf32>, vector<2x9x8xf32>, vector<2x9x9xf32> -> vector<2x9x9xf32>
    "tpu.trace_stop"() : () -> ()
    %cst_12 = arith.constant 0.353553385 : f32
    %29 = vector.broadcast %cst_12 : f32 to vector<2x9x9xf32>
    %30 = arith.mulf %28, %29 : vector<2x9x9xf32>
    %cst_13 = arith.constant dense<0xFF800000> : vector<2x9xf32>
    %31 = vector.multi_reduction <maximumf>, %30, %cst_13 [2] : vector<2x9x9xf32> to vector<2x9xf32>
    %32 = vector.shape_cast %31 : vector<2x9xf32> to vector<2x9x1xf32>
    %33 = vector.broadcast %32 : vector<2x9x1xf32> to vector<2x9x9xf32>
    %34 = arith.subf %30, %33 : vector<2x9x9xf32>
    %35 = math.exp %34 : vector<2x9x9xf32>
    %cst_14 = arith.constant dense<0.000000e+00> : vector<2x9xf32>
    %36 = vector.multi_reduction <add>, %35, %cst_14 [2] : vector<2x9x9xf32> to vector<2x9xf32>
    %37 = vector.shape_cast %36 : vector<2x9xf32> to vector<2x9x1xf32>
    %38 = tpu.reciprocal %37 {approx = true} : vector<2x9x1xf32> -> vector<2x9x1xf32>
    %39 = vector.broadcast %38 : vector<2x9x1xf32> to vector<2x9x9xf32>
    %40 = arith.mulf %35, %39 : vector<2x9x9xf32>
    "tpu.trace_start"() <{level = 10 : i32, message = "bqk,bkd->bqd"}> : () -> ()
    %cst_15 = arith.constant dense<0.000000e+00> : vector<2x9x8xf32>
    %41 = tpu.matmul %40, %27, %cst_15 {dimension_numbers = #tpu.dot_dimension_numbers<[2], [1], [1], [2], [0, 0, 0, 1, 1, 2], [0], [0]>} : vector<2x9x9xf32>, vector<2x9x8xf32>, vector<2x9x8xf32> -> vector<2x9x8xf32>
    "tpu.trace_stop"() : () -> ()
    %42 = vector.extract_strided_slice %7 {offsets = [0, 0, 16], sizes = [2, 9, 8], strides = [1, 1, 1]} : vector<2x9x96xf32> to vector<2x9x8xf32>
    %43 = vector.extract_strided_slice %7 {offsets = [0, 0, 48], sizes = [2, 9, 8], strides = [1, 1, 1]} : vector<2x9x96xf32> to vector<2x9x8xf32>
    %44 = vector.extract_strided_slice %7 {offsets = [0, 0, 80], sizes = [2, 9, 8], strides = [1, 1, 1]} : vector<2x9x96xf32> to vector<2x9x8xf32>
    "tpu.trace_start"() <{level = 10 : i32, message = "bqd,bkd->bqk"}> : () -> ()
    %cst_16 = arith.constant dense<0.000000e+00> : vector<2x9x9xf32>
    %45 = tpu.matmul %42, %43, %cst_16 {dimension_numbers = #tpu.dot_dimension_numbers<[2], [2], [1], [1], [0, 0, 0, 1, 1, 1], [0], [0]>} : vector<2x9x8xf32>, vector<2x9x8xf32>, vector<2x9x9xf32> -> vector<2x9x9xf32>
    "tpu.trace_stop"() : () -> ()
    %cst_17 = arith.constant 0.353553385 : f32
    %46 = vector.broadcast %cst_17 : f32 to vector<2x9x9xf32>
    %47 = arith.mulf %45, %46 : vector<2x9x9xf32>
    %cst_18 = arith.constant dense<0xFF800000> : vector<2x9xf32>
    %48 = vector.multi_reduction <maximumf>, %47, %cst_18 [2] : vector<2x9x9xf32> to vector<2x9xf32>
    %49 = vector.shape_cast %48 : vector<2x9xf32> to vector<2x9x1xf32>
    %50 = vector.broadcast %49 : vector<2x9x1xf32> to vector<2x9x9xf32>
    %51 = arith.subf %47, %50 : vector<2x9x9xf32>
    %52 = math.exp %51 : vector<2x9x9xf32>
    %cst_19 = arith.constant dense<0.000000e+00> : vector<2x9xf32>
    %53 = vector.multi_reduction <add>, %52, %cst_19 [2] : vector<2x9x9xf32> to vector<2x9xf32>
    %54 = vector.shape_cast %53 : vector<2x9xf32> to vector<2x9x1xf32>
    %55 = tpu.reciprocal %54 {approx = true} : vector<2x9x1xf32> -> vector<2x9x1xf32>
    %56 = vector.broadcast %55 : vector<2x9x1xf32> to vector<2x9x9xf32>
    %57 = arith.mulf %52, %56 : vector<2x9x9xf32>
    "tpu.trace_start"() <{level = 10 : i32, message = "bqk,bkd->bqd"}> : () -> ()
    %cst_20 = arith.constant dense<0.000000e+00> : vector<2x9x8xf32>
    %58 = tpu.matmul %57, %44, %cst_20 {dimension_numbers = #tpu.dot_dimension_numbers<[2], [1], [1], [2], [0, 0, 0, 1, 1, 2], [0], [0]>} : vector<2x9x9xf32>, vector<2x9x8xf32>, vector<2x9x8xf32> -> vector<2x9x8xf32>
    "tpu.trace_stop"() : () -> ()
    %59 = vector.extract_strided_slice %7 {offsets = [0, 0, 24], sizes = [2, 9, 8], strides = [1, 1, 1]} : vector<2x9x96xf32> to vector<2x9x8xf32>
    %60 = vector.extract_strided_slice %7 {offsets = [0, 0, 56], sizes = [2, 9, 8], strides = [1, 1, 1]} : vector<2x9x96xf32> to vector<2x9x8xf32>
    %61 = vector.extract_strided_slice %7 {offsets = [0, 0, 88], sizes = [2, 9, 8], strides = [1, 1, 1]} : vector<2x9x96xf32> to vector<2x9x8xf32>
    "tpu.trace_start"() <{level = 10 : i32, message = "bqd,bkd->bqk"}> : () -> ()
    %cst_21 = arith.constant dense<0.000000e+00> : vector<2x9x9xf32>
    %62 = tpu.matmul %59, %60, %cst_21 {dimension_numbers = #tpu.dot_dimension_numbers<[2], [2], [1], [1], [0, 0, 0, 1, 1, 1], [0], [0]>} : vector<2x9x8xf32>, vector<2x9x8xf32>, vector<2x9x9xf32> -> vector<2x9x9xf32>
    "tpu.trace_stop"() : () -> ()
    %cst_22 = arith.constant 0.353553385 : f32
    %63 = vector.broadcast %cst_22 : f32 to vector<2x9x9xf32>
    %64 = arith.mulf %62, %63 : vector<2x9x9xf32>
    %cst_23 = arith.constant dense<0xFF800000> : vector<2x9xf32>
    %65 = vector.multi_reduction <maximumf>, %64, %cst_23 [2] : vector<2x9x9xf32> to vector<2x9xf32>
    %66 = vector.shape_cast %65 : vector<2x9xf32> to vector<2x9x1xf32>
    %67 = vector.broadcast %66 : vector<2x9x1xf32> to vector<2x9x9xf32>
    %68 = arith.subf %64, %67 : vector<2x9x9xf32>
    %69 = math.exp %68 : vector<2x9x9xf32>
    %cst_24 = arith.constant dense<0.000000e+00> : vector<2x9xf32>
    %70 = vector.multi_reduction <add>, %69, %cst_24 [2] : vector<2x9x9xf32> to vector<2x9xf32>
    %71 = vector.shape_cast %70 : vector<2x9xf32> to vector<2x9x1xf32>
    %72 = tpu.reciprocal %71 {approx = true} : vector<2x9x1xf32> -> vector<2x9x1xf32>
    %73 = vector.broadcast %72 : vector<2x9x1xf32> to vector<2x9x9xf32>
    %74 = arith.mulf %69, %73 : vector<2x9x9xf32>
    "tpu.trace_start"() <{level = 10 : i32, message = "bqk,bkd->bqd"}> : () -> ()
    %cst_25 = arith.constant dense<0.000000e+00> : vector<2x9x8xf32>
    %75 = tpu.matmul %74, %61, %cst_25 {dimension_numbers = #tpu.dot_dimension_numbers<[2], [1], [1], [2], [0, 0, 0, 1, 1, 2], [0], [0]>} : vector<2x9x9xf32>, vector<2x9x8xf32>, vector<2x9x8xf32> -> vector<2x9x8xf32>
    "tpu.trace_stop"() : () -> ()
    %76 = tpu.concatenate %24, %41, %58, %75 in 2 : vector<2x9x8xf32>, vector<2x9x8xf32>, vector<2x9x8xf32>, vector<2x9x8xf32> -> vector<2x9x32xf32>
    %77 = vector.shape_cast %76 : vector<2x9x32xf32> to vector<18x32xf32>
    %c0_26 = arith.constant 0 : index
    %c0_27 = arith.constant 0 : index
    %78 = vector.load %arg4[%c0_26, %c0_27] : memref<32x32xf32, #tpu.memory_space<vmem>>, vector<32x32xf32>
    %cst_28 = arith.constant dense<0.000000e+00> : vector<18x32xf32>
    %79 = tpu.matmul %77, %78, %cst_28 {dimension_numbers = #tpu.dot_dimension_numbers<[1], [0], [0], [1], [0, 0, 1, 1], [], []>} : vector<18x32xf32>, vector<32x32xf32>, vector<18x32xf32> -> vector<18x32xf32>
    %c0_29 = arith.constant 0 : index
    %c0_30 = arith.constant 0 : index
    %80 = vector.load %arg5[%c0_29, %c0_30] : memref<1x32xf32, #tpu.memory_space<vmem>>, vector<1x32xf32>
    %81 = vector.broadcast %80 : vector<1x32xf32> to vector<18x32xf32>
    %82 = arith.addf %79, %81 : vector<18x32xf32>
    %83 = arith.addf %1, %82 : vector<18x32xf32>
    %84 = vector.shape_cast %83 : vector<18x32xf32> to vector<2x9x32xf32>
    %c0_31 = arith.constant 0 : index
    %c0_32 = arith.constant 0 : index
    %c0_33 = arith.constant 0 : index
    %85 = vector.load %arg6[%c0_31, %c0_32, %c0_33] : memref<2x9x32xf32, #tpu.memory_space<vmem>>, vector<2x9x32xf32>
    tpu.vector_store %arg6[%c0_31, %c0_32, %c0_33], %84 {strides = array<i32>} : memref<2x9x32xf32, #tpu.memory_space<vmem>>, vector<2x9x32xf32>,
    return
  }
  func.func @transform_0(%arg0: i32) -> (i32, i32, i32) {
    %c0_i32 = arith.constant 0 : i32
    %c0_i32_0 = arith.constant 0 : i32
    %c0_i32_1 = arith.constant 0 : i32
    return %arg0, %c0_i32, %c0_i32_0 : i32, i32, i32
  }
  func.func @transform_1(%arg0: i32) -> (i32, i32) {
    %c0_i32 = arith.constant 0 : i32
    %c0_i32_0 = arith.constant 0 : i32
    %c0_i32_1 = arith.constant 0 : i32
    return %c0_i32, %c0_i32_0 : i32, i32
  }
  func.func @transform_2(%arg0: i32) -> (i32, i32) {
    %c0_i32 = arith.constant 0 : i32
    %c0_i32_0 = arith.constant 0 : i32
    %c0_i32_1 = arith.constant 0 : i32
    return %c0_i32, %c0_i32_0 : i32, i32
  }
  func.func @transform_3(%arg0: i32) -> (i32, i32) {
    %c0_i32 = arith.constant 0 : i32
    %c0_i32_0 = arith.constant 0 : i32
    %c0_i32_1 = arith.constant 0 : i32
    return %c0_i32, %c0_i32_0 : i32, i32
  }
  func.func @transform_4(%arg0: i32) -> (i32, i32) {
    %c0_i32 = arith.constant 0 : i32
    %c0_i32_0 = arith.constant 0 : i32
    %c0_i32_1 = arith.constant 0 : i32
    return %c0_i32, %c0_i32_0 : i32, i32
  }
  func.func @transform_5(%arg0: i32) -> (i32, i32, i32) {
    %c0_i32 = arith.constant 0 : i32
    %c0_i32_0 = arith.constant 0 : i32
    %c0_i32_1 = arith.constant 0 : i32
    return %arg0, %c0_i32, %c0_i32_0 : i32, i32, i32
  }
}

module attributes {stable_mosaic.version = 11 : i64} {
  func.func @_ffn_res_kernel(%arg0: i32, %arg1: memref<24x32xf32, #tpu.memory_space<vmem>>, %arg2: memref<32x64xf32, #tpu.memory_space<vmem>>, %arg3: memref<1x64xf32, #tpu.memory_space<vmem>>, %arg4: memref<64x32xf32, #tpu.memory_space<vmem>>, %arg5: memref<1x32xf32, #tpu.memory_space<vmem>>, %arg6: memref<1x32xf32, #tpu.memory_space<vmem>>, %arg7: memref<1x32xf32, #tpu.memory_space<vmem>>, %arg8: memref<24x32xf32, #tpu.memory_space<vmem>>) attributes {dimension_semantics = [#tpu.dimension_semantics<parallel>], iteration_bounds = array<i64: 1>, scalar_prefetch = 0 : i64, scratch_operands = 0 : i64, tpu.core_type = #tpu.core_type<tc>, window_params = [{transform_indices = @transform_0, window_bounds = array<i64: 24, 32>}, {pipeline_mode = #tpu.pipeline_mode<synchronous>, transform_indices = @transform_1, window_bounds = array<i64: 32, 64>}, {pipeline_mode = #tpu.pipeline_mode<synchronous>, transform_indices = @transform_2, window_bounds = array<i64: 1, 64>}, {pipeline_mode = #tpu.pipeline_mode<synchronous>, transform_indices = @transform_3, window_bounds = array<i64: 64, 32>}, {pipeline_mode = #tpu.pipeline_mode<synchronous>, transform_indices = @transform_4, window_bounds = array<i64: 1, 32>}, {pipeline_mode = #tpu.pipeline_mode<synchronous>, transform_indices = @transform_5, window_bounds = array<i64: 1, 32>}, {pipeline_mode = #tpu.pipeline_mode<synchronous>, transform_indices = @transform_6, window_bounds = array<i64: 1, 32>}, {transform_indices = @transform_7, window_bounds = array<i64: 24, 32>}]} {
    %c0 = arith.constant 0 : index
    %c0_0 = arith.constant 0 : index
    %0 = vector.load %arg1[%c0, %c0_0] : memref<24x32xf32, #tpu.memory_space<vmem>>, vector<24x32xf32>
    %c0_1 = arith.constant 0 : index
    %c0_2 = arith.constant 0 : index
    %1 = vector.load %arg2[%c0_1, %c0_2] : memref<32x64xf32, #tpu.memory_space<vmem>>, vector<32x64xf32>
    %cst = arith.constant dense<0.000000e+00> : vector<24x64xf32>
    %2 = tpu.matmul %0, %1, %cst {dimension_numbers = #tpu.dot_dimension_numbers<[1], [0], [0], [1], [0, 0, 1, 1], [], []>} : vector<24x32xf32>, vector<32x64xf32>, vector<24x64xf32> -> vector<24x64xf32>
    %c0_3 = arith.constant 0 : index
    %c0_4 = arith.constant 0 : index
    %3 = vector.load %arg3[%c0_3, %c0_4] : memref<1x64xf32, #tpu.memory_space<vmem>>, vector<1x64xf32>
    %4 = vector.broadcast %3 : vector<1x64xf32> to vector<24x64xf32>
    %5 = arith.addf %2, %4 : vector<24x64xf32>
    %cst_5 = arith.constant 0.000000e+00 : f32
    %6 = vector.broadcast %cst_5 : f32 to vector<24x64xf32>
    %7 = arith.maximumf %5, %6 : vector<24x64xf32>
    %c0_6 = arith.constant 0 : index
    %c0_7 = arith.constant 0 : index
    %8 = vector.load %arg4[%c0_6, %c0_7] : memref<64x32xf32, #tpu.memory_space<vmem>>, vector<64x32xf32>
    %cst_8 = arith.constant dense<0.000000e+00> : vector<24x32xf32>
    %9 = tpu.matmul %7, %8, %cst_8 {dimension_numbers = #tpu.dot_dimension_numbers<[1], [0], [0], [1], [0, 0, 1, 1], [], []>} : vector<24x64xf32>, vector<64x32xf32>, vector<24x32xf32> -> vector<24x32xf32>
    %10 = arith.addf %0, %9 : vector<24x32xf32>
    %c0_9 = arith.constant 0 : index
    %c0_10 = arith.constant 0 : index
    %11 = vector.load %arg5[%c0_9, %c0_10] : memref<1x32xf32, #tpu.memory_space<vmem>>, vector<1x32xf32>
    %12 = vector.broadcast %11 : vector<1x32xf32> to vector<24x32xf32>
    %13 = arith.addf %10, %12 : vector<24x32xf32>
    %c0_11 = arith.constant 0 : index
    %c0_12 = arith.constant 0 : index
    %14 = vector.load %arg8[%c0_11, %c0_12] : memref<24x32xf32, #tpu.memory_space<vmem>>, vector<24x32xf32>
    tpu.vector_store %arg8[%c0_11, %c0_12], %13 {strides = array<i32>} : memref<24x32xf32, #tpu.memory_space<vmem>>, vector<24x32xf32>,
    return
  }
  func.func @transform_0(%arg0: i32) -> (i32, i32) {
    %c0_i32 = arith.constant 0 : i32
    %c0_i32_0 = arith.constant 0 : i32
    return %arg0, %c0_i32 : i32, i32
  }
  func.func @transform_1(%arg0: i32) -> (i32, i32) {
    %c0_i32 = arith.constant 0 : i32
    %c0_i32_0 = arith.constant 0 : i32
    %c0_i32_1 = arith.constant 0 : i32
    return %c0_i32, %c0_i32_0 : i32, i32
  }
  func.func @transform_2(%arg0: i32) -> (i32, i32) {
    %c0_i32 = arith.constant 0 : i32
    %c0_i32_0 = arith.constant 0 : i32
    %c0_i32_1 = arith.constant 0 : i32
    return %c0_i32, %c0_i32_0 : i32, i32
  }
  func.func @transform_3(%arg0: i32) -> (i32, i32) {
    %c0_i32 = arith.constant 0 : i32
    %c0_i32_0 = arith.constant 0 : i32
    %c0_i32_1 = arith.constant 0 : i32
    return %c0_i32, %c0_i32_0 : i32, i32
  }
  func.func @transform_4(%arg0: i32) -> (i32, i32) {
    %c0_i32 = arith.constant 0 : i32
    %c0_i32_0 = arith.constant 0 : i32
    %c0_i32_1 = arith.constant 0 : i32
    return %c0_i32, %c0_i32_0 : i32, i32
  }
  func.func @transform_5(%arg0: i32) -> (i32, i32) {
    %c0_i32 = arith.constant 0 : i32
    %c0_i32_0 = arith.constant 0 : i32
    %c0_i32_1 = arith.constant 0 : i32
    return %c0_i32, %c0_i32_0 : i32, i32
  }
  func.func @transform_6(%arg0: i32) -> (i32, i32) {
    %c0_i32 = arith.constant 0 : i32
    %c0_i32_0 = arith.constant 0 : i32
    %c0_i32_1 = arith.constant 0 : i32
    return %c0_i32, %c0_i32_0 : i32, i32
  }
  func.func @transform_7(%arg0: i32) -> (i32, i32) {
    %c0_i32 = arith.constant 0 : i32
    %c0_i32_0 = arith.constant 0 : i32
    return %arg0, %c0_i32 : i32, i32
  }
}

module attributes {stable_mosaic.version = 11 : i64} {
  func.func @_linear_kernel(%arg0: i32, %arg1: memref<24x32xf32, #tpu.memory_space<vmem>>, %arg2: memref<32x128xf32, #tpu.memory_space<vmem>>, %arg3: memref<1x128xf32, #tpu.memory_space<vmem>>, %arg4: memref<24x128xf32, #tpu.memory_space<vmem>>) attributes {dimension_semantics = [#tpu.dimension_semantics<parallel>], iteration_bounds = array<i64: 1>, scalar_prefetch = 0 : i64, scratch_operands = 0 : i64, tpu.core_type = #tpu.core_type<tc>, window_params = [{transform_indices = @transform_0, window_bounds = array<i64: 24, 32>}, {pipeline_mode = #tpu.pipeline_mode<synchronous>, transform_indices = @transform_1, window_bounds = array<i64: 32, 128>}, {pipeline_mode = #tpu.pipeline_mode<synchronous>, transform_indices = @transform_2, window_bounds = array<i64: 1, 128>}, {transform_indices = @transform_3, window_bounds = array<i64: 24, 128>}]} {
    %c0 = arith.constant 0 : index
    %c0_0 = arith.constant 0 : index
    %0 = vector.load %arg1[%c0, %c0_0] : memref<24x32xf32, #tpu.memory_space<vmem>>, vector<24x32xf32>
    %c0_1 = arith.constant 0 : index
    %c0_2 = arith.constant 0 : index
    %1 = vector.load %arg2[%c0_1, %c0_2] : memref<32x128xf32, #tpu.memory_space<vmem>>, vector<32x128xf32>
    %cst = arith.constant dense<0.000000e+00> : vector<24x128xf32>
    %2 = tpu.matmul %0, %1, %cst {dimension_numbers = #tpu.dot_dimension_numbers<[1], [0], [0], [1], [0, 0, 1, 1], [], []>} : vector<24x32xf32>, vector<32x128xf32>, vector<24x128xf32> -> vector<24x128xf32>
    %c0_3 = arith.constant 0 : index
    %c0_4 = arith.constant 0 : index
    %3 = vector.load %arg3[%c0_3, %c0_4] : memref<1x128xf32, #tpu.memory_space<vmem>>, vector<1x128xf32>
    %4 = vector.broadcast %3 : vector<1x128xf32> to vector<24x128xf32>
    %5 = arith.addf %2, %4 : vector<24x128xf32>
    %c0_5 = arith.constant 0 : index
    %c0_6 = arith.constant 0 : index
    %6 = vector.load %arg4[%c0_5, %c0_6] : memref<24x128xf32, #tpu.memory_space<vmem>>, vector<24x128xf32>
    tpu.vector_store %arg4[%c0_5, %c0_6], %5 {strides = array<i32>} : memref<24x128xf32, #tpu.memory_space<vmem>>, vector<24x128xf32>,
    return
  }
  func.func @transform_0(%arg0: i32) -> (i32, i32) {
    %c0_i32 = arith.constant 0 : i32
    %c0_i32_0 = arith.constant 0 : i32
    return %arg0, %c0_i32 : i32, i32
  }
  func.func @transform_1(%arg0: i32) -> (i32, i32) {
    %c0_i32 = arith.constant 0 : i32
    %c0_i32_0 = arith.constant 0 : i32
    %c0_i32_1 = arith.constant 0 : i32
    return %c0_i32, %c0_i32_0 : i32, i32
  }
  func.func @transform_2(%arg0: i32) -> (i32, i32) {
    %c0_i32 = arith.constant 0 : i32
    %c0_i32_0 = arith.constant 0 : i32
    %c0_i32_1 = arith.constant 0 : i32
    return %c0_i32, %c0_i32_0 : i32, i32
  }
  func.func @transform_3(%arg0: i32) -> (i32, i32) {
    %c0_i32 = arith.constant 0 : i32
    %c0_i32_0 = arith.constant 0 : i32
    return %arg0, %c0_i32 : i32, i32
  }
}

module attributes {stable_mosaic.version = 11 : i64} {
  func.func @_decoder_step_kernel(%arg0: i32, %arg1: memref<1xi32, #tpu.memory_space<smem>>, %arg2: memref<2x32xf32, #tpu.memory_space<vmem>>, %arg3: memref<2x9x64xbf16, #tpu.memory_space<vmem>>, %arg4: memref<2x9x64xbf16, #tpu.memory_space<vmem>>, %arg5: memref<2x9xi32, #tpu.memory_space<vmem>>, %arg6: memref<1x2x8x32xbf16, #tpu.memory_space<vmem>>, %arg7: memref<1x2x8x32xbf16, #tpu.memory_space<vmem>>, %arg8: memref<1x32x96xf32, #tpu.memory_space<vmem>>, %arg9: memref<1x1x96xf32, #tpu.memory_space<vmem>>, %arg10: memref<1x32x32xf32, #tpu.memory_space<vmem>>, %arg11: memref<1x1x32xf32, #tpu.memory_space<vmem>>, %arg12: memref<1x1x32xf32, #tpu.memory_space<vmem>>, %arg13: memref<1x1x32xf32, #tpu.memory_space<vmem>>, %arg14: memref<1x32x32xf32, #tpu.memory_space<vmem>>, %arg15: memref<1x1x32xf32, #tpu.memory_space<vmem>>, %arg16: memref<1x32x32xf32, #tpu.memory_space<vmem>>, %arg17: memref<1x1x32xf32, #tpu.memory_space<vmem>>, %arg18: memref<1x1x32xf32, #tpu.memory_space<vmem>>, %arg19: memref<1x1x32xf32, #tpu.memory_space<vmem>>, %arg20: memref<1x32x32xf32, #tpu.memory_space<vmem>>, %arg21: memref<1x1x32xf32, #tpu.memory_space<vmem>>, %arg22: memref<1x32x32xf32, #tpu.memory_space<vmem>>, %arg23: memref<1x1x32xf32, #tpu.memory_space<vmem>>, %arg24: memref<1x1x32xf32, #tpu.memory_space<vmem>>, %arg25: memref<1x1x32xf32, #tpu.memory_space<vmem>>, %arg26: memref<32x32xf32, #tpu.memory_space<vmem>>, %arg27: memref<1x32xf32, #tpu.memory_space<vmem>>, %arg28: memref<2x9xf32, #tpu.memory_space<vmem>>, %arg29: memref<1x2x32xbf16, #tpu.memory_space<vmem>>, %arg30: memref<1x2x32xbf16, #tpu.memory_space<vmem>>) attributes {dimension_semantics = [#tpu.dimension_semantics<parallel>], iteration_bounds = array<i64: 1>, scalar_prefetch = 1 : i64, scratch_operands = 0 : i64, tpu.core_type = #tpu.core_type<tc>, window_params = [{transform_indices = @transform_0, window_bounds = array<i64: 2, 32>}, {transform_indices = @transform_1, window_bounds = array<i64: 2, 9, 64>}, {transform_indices = @transform_2, window_bounds = array<i64: 2, 9, 64>}, {transform_indices = @transform_3, window_bounds = array<i64: 2, 9>}, {transform_indices = @transform_4, window_bounds = array<i64: 1, 2, 8, 32>}, {transform_indices = @transform_5, window_bounds = array<i64: 1, 2, 8, 32>}, {pipeline_mode = #tpu.pipeline_mode<synchronous>, transform_indices = @transform_6, window_bounds = array<i64: 1, 32, 96>}, {pipeline_mode = #tpu.pipeline_mode<synchronous>, transform_indices = @transform_7, window_bounds = array<i64: 1, 1, 96>}, {pipeline_mode = #tpu.pipeline_mode<synchronous>, transform_indices = @transform_8, window_bounds = array<i64: 1, 32, 32>}, {pipeline_mode = #tpu.pipeline_mode<synchronous>, transform_indices = @transform_9, window_bounds = array<i64: 1, 1, 32>}, {pipeline_mode = #tpu.pipeline_mode<synchronous>, transform_indices = @transform_10, window_bounds = array<i64: 1, 1, 32>}, {pipeline_mode = #tpu.pipeline_mode<synchronous>, transform_indices = @transform_11, window_bounds = array<i64: 1, 1, 32>}, {pipeline_mode = #tpu.pipeline_mode<synchronous>, transform_indices = @transform_12, window_bounds = array<i64: 1, 32, 32>}, {pipeline_mode = #tpu.pipeline_mode<synchronous>, transform_indices = @transform_13, window_bounds = array<i64: 1, 1, 32>}, {pipeline_mode = #tpu.pipeline_mode<synchronous>, transform_indices = @transform_14, window_bounds = array<i64: 1, 32, 32>}, {pipeline_mode = #tpu.pipeline_mode<synchronous>, transform_indices = @transform_15, window_bounds = array<i64: 1, 1, 32>}, {pipeline_mode = #tpu.pipeline_mode<synchronous>, transform_indices = @transform_16, window_bounds = array<i64: 1, 1, 32>}, {pipeline_mode = #tpu.pipeline_mode<synchronous>, transform_indices = @transform_17, window_bounds = array<i64: 1, 1, 32>}, {pipeline_mode = #tpu.pipeline_mode<synchronous>, transform_indices = @transform_18, window_bounds = array<i64: 1, 32, 32>}, {pipeline_mode = #tpu.pipeline_mode<synchronous>, transform_indices = @transform_19, window_bounds = array<i64: 1, 1, 32>}, {pipeline_mode = #tpu.pipeline_mode<synchronous>, transform_indices = @transform_20, window_bounds = array<i64: 1, 32, 32>}, {pipeline_mode = #tpu.pipeline_mode<synchronous>, transform_indices = @transform_21, window_bounds = array<i64: 1, 1, 32>}, {pipeline_mode = #tpu.pipeline_mode<synchronous>, transform_indices = @transform_22, window_bounds = array<i64: 1, 1, 32>}, {pipeline_mode = #tpu.pipeline_mode<synchronous>, transform_indices = @transform_23, window_bounds = array<i64: 1, 1, 32>}, {pipeline_mode = #tpu.pipeline_mode<synchronous>, transform_indices = @transform_24, window_bounds = array<i64: 32, 32>}, {pipeline_mode = #tpu.pipeline_mode<synchronous>, transform_indices = @transform_25, window_bounds = array<i64: 1, 32>}, {transform_indices = @transform_26, window_bounds = array<i64: 2, 9>}, {transform_indices = @transform_27, window_bounds = array<i64: 1, 2, 32>}, {transform_indices = @transform_28, window_bounds = array<i64: 1, 2, 32>}]} {
    %c0 = arith.constant 0 : index
    %0 = memref.load %arg1[%c0] : memref<1xi32, #tpu.memory_space<smem>>
    %c0_0 = arith.constant 0 : index
    %c0_1 = arith.constant 0 : index
    %1 = vector.load %arg2[%c0_0, %c0_1] : memref<2x32xf32, #tpu.memory_space<vmem>>, vector<2x32xf32>
    %c0_2 = arith.constant 0 : index
    %c0_3 = arith.constant 0 : index
    %2 = vector.load %arg5[%c0_2, %c0_3] : memref<2x9xi32, #tpu.memory_space<vmem>>, vector<2x9xi32>
    %c0_i32 = arith.constant 0 : i32
    %3 = vector.broadcast %c0_i32 : i32 to vector<2x9xi32>
    %4 = arith.cmpi sgt, %2, %3 : vector<2x9xi32>
    %cst = arith.constant -1.000000e+09 : f32
    %cst_4 = arith.constant 0.000000e+00 : f32
    %5 = vector.broadcast %cst : f32 to vector<2x9xf32>
    %6 = vector.broadcast %cst_4 : f32 to vector<2x9xf32>
    %7 = arith.select %4, %5, %6 : vector<2x9xi1>, vector<2x9xf32>
    %8 = vector.shape_cast %7 : vector<2x9xf32> to vector<2x1x9xf32>
    %9 = tpu.iota {dimensions = array<i32: 2>} : vector<1x1x8xi32>
    %10 = vector.broadcast %0 : i32 to vector<1x1x8xi32>
    %11 = arith.cmpi slt, %9, %10 : vector<1x1x8xi32>
    %cst_5 = arith.constant 0.000000e+00 : f32
    %cst_6 = arith.constant -1.000000e+09 : f32
    %12 = vector.broadcast %cst_5 : f32 to vector<1x1x8xf32>
    %13 = vector.broadcast %cst_6 : f32 to vector<1x1x8xf32>
    %14 = arith.select %11, %12, %13 : vector<1x1x8xi1>, vector<1x1x8xf32>
    %c0_7 = arith.constant 0 : index
    %c0_8 = arith.constant 0 : index
    %c0_9 = arith.constant 0 : index
    %15 = vector.load %arg8[%c0_7, %c0_8, %c0_9] : memref<1x32x96xf32, #tpu.memory_space<vmem>>, vector<1x32x96xf32>
    %16 = vector.shape_cast %15 : vector<1x32x96xf32> to vector<32x96xf32>
    %cst_10 = arith.constant dense<0.000000e+00> : vector<2x96xf32>
    %17 = tpu.matmul %1, %16, %cst_10 {dimension_numbers = #tpu.dot_dimension_numbers<[1], [0], [0], [1], [0, 0, 1, 1], [], []>} : vector<2x32xf32>, vector<32x96xf32>, vector<2x96xf32> -> vector<2x96xf32>
    %c0_11 = arith.constant 0 : index
    %c0_12 = arith.constant 0 : index
    %c0_13 = arith.constant 0 : index
    %18 = vector.load %arg9[%c0_11, %c0_12, %c0_13] : memref<1x1x96xf32, #tpu.memory_space<vmem>>, vector<1x1x96xf32>
    %19 = vector.shape_cast %18 : vector<1x1x96xf32> to vector<1x96xf32>
    %20 = vector.broadcast %19 : vector<1x96xf32> to vector<2x96xf32>
    %21 = arith.addf %17, %20 : vector<2x96xf32>
    %22 = vector.extract_strided_slice %21 {offsets = [0, 0], sizes = [2, 32], strides = [1, 1]} : vector<2x96xf32> to vector<2x32xf32>
    %23 = vector.extract_strided_slice %21 {offsets = [0, 32], sizes = [2, 32], strides = [1, 1]} : vector<2x96xf32> to vector<2x32xf32>
    %24 = vector.extract_strided_slice %21 {offsets = [0, 64], sizes = [2, 32], strides = [1, 1]} : vector<2x96xf32> to vector<2x32xf32>
    %25 = arith.truncf %23 : vector<2x32xf32> to vector<2x32xbf16>
    %c0_14 = arith.constant 0 : index
    %c0_15 = arith.constant 0 : index
    %c0_16 = arith.constant 0 : index
    %26 = vector.load %arg29[%c0_14, %c0_15, %c0_16] : memref<1x2x32xbf16, #tpu.memory_space<vmem>>, vector<1x2x32xbf16>
    %27 = vector.shape_cast %26 : vector<1x2x32xbf16> to vector<2x32xbf16>
    %28 = vector.shape_cast %25 : vector<2x32xbf16> to vector<1x2x32xbf16>
    tpu.vector_store %arg29[%c0_14, %c0_15, %c0_16], %28 {strides = array<i32>} : memref<1x2x32xbf16, #tpu.memory_space<vmem>>, vector<1x2x32xbf16>,
    %29 = arith.truncf %24 : vector<2x32xf32> to vector<2x32xbf16>
    %c0_17 = arith.constant 0 : index
    %c0_18 = arith.constant 0 : index
    %c0_19 = arith.constant 0 : index
    %30 = vector.load %arg30[%c0_17, %c0_18, %c0_19] : memref<1x2x32xbf16, #tpu.memory_space<vmem>>, vector<1x2x32xbf16>
    %31 = vector.shape_cast %30 : vector<1x2x32xbf16> to vector<2x32xbf16>
    %32 = vector.shape_cast %29 : vector<2x32xbf16> to vector<1x2x32xbf16>
    tpu.vector_store %arg30[%c0_17, %c0_18, %c0_19], %32 {strides = array<i32>} : memref<1x2x32xbf16, #tpu.memory_space<vmem>>, vector<1x2x32xbf16>,
    %c0_20 = arith.constant 0 : index
    %c0_21 = arith.constant 0 : index
    %c0_22 = arith.constant 0 : index
    %c0_23 = arith.constant 0 : index
    %33 = vector.load %arg6[%c0_20, %c0_21, %c0_22, %c0_23] : memref<1x2x8x32xbf16, #tpu.memory_space<vmem>>, vector<1x2x8x32xbf16>
    %34 = vector.shape_cast %33 : vector<1x2x8x32xbf16> to vector<2x8x32xbf16>
    %c0_24 = arith.constant 0 : index
    %c0_25 = arith.constant 0 : index
    %c0_26 = arith.constant 0 : index
    %c0_27 = arith.constant 0 : index
    %35 = vector.load %arg7[%c0_24, %c0_25, %c0_26, %c0_27] : memref<1x2x8x32xbf16, #tpu.memory_space<vmem>>, vector<1x2x8x32xbf16>
    %36 = vector.shape_cast %35 : vector<1x2x8x32xbf16> to vector<2x8x32xbf16>
    %37 = arith.truncf %22 : vector<2x32xf32> to vector<2x32xbf16>
    %38 = vector.extract_strided_slice %37 {offsets = [0, 0], sizes = [2, 8], strides = [1, 1]} : vector<2x32xbf16> to vector<2x8xbf16>
    %39 = vector.shape_cast %38 : vector<2x8xbf16> to vector<2x1x8xbf16>
    %40 = vector.extract_strided_slice %34 {offsets = [0, 0, 0], sizes = [2, 8, 8], strides = [1, 1, 1]} : vector<2x8x32xbf16> to vector<2x8x8xbf16>
    "tpu.trace_start"() <{level = 10 : i32, message = "bqd,bkd->bqk"}> : () -> ()
    %cst_28 = arith.constant dense<0.000000e+00> : vector<2x1x8xf32>
    %41 = tpu.matmul %39, %40, %cst_28 {dimension_numbers = #tpu.dot_dimension_numbers<[2], [2], [1], [1], [0, 0, 0, 1, 1, 1], [0], [0]>} : vector<2x1x8xbf16>, vector<2x8x8xbf16>, vector<2x1x8xf32> -> vector<2x1x8xf32>
    "tpu.trace_stop"() : () -> ()
    %cst_29 = arith.constant 0.353553385 : f32
    %42 = vector.broadcast %cst_29 : f32 to vector<2x1x8xf32>
    %43 = arith.mulf %41, %42 : vector<2x1x8xf32>
    %44 = vector.broadcast %14 : vector<1x1x8xf32> to vector<2x1x8xf32>
    %45 = arith.addf %43, %44 : vector<2x1x8xf32>
    %46 = vector.extract_strided_slice %22 {offsets = [0, 0], sizes = [2, 8], strides = [1, 1]} : vector<2x32xf32> to vector<2x8xf32>
    %47 = vector.extract_strided_slice %23 {offsets = [0, 0], sizes = [2, 8], strides = [1, 1]} : vector<2x32xf32> to vector<2x8xf32>
    %48 = arith.mulf %46, %47 : vector<2x8xf32>
    %cst_30 = arith.constant dense<0.000000e+00> : vector<2xf32>
    %49 = vector.multi_reduction <add>, %48, %cst_30 [1] : vector<2x8xf32> to vector<2xf32>
    %50 = vector.shape_cast %49 : vector<2xf32> to vector<2x1xf32>
    %51 = vector.shape_cast %50 : vector<2x1xf32> to vector<2x1x1xf32>
    %cst_31 = arith.constant 0.353553385 : f32
    %52 = vector.broadcast %cst_31 : f32 to vector<2x1x1xf32>
    %53 = arith.mulf %51, %52 : vector<2x1x1xf32>
    %cst_32 = arith.constant dense<0xFF800000> : vector<2x1xf32>
    %54 = vector.multi_reduction <maximumf>, %45, %cst_32 [2] : vector<2x1x8xf32> to vector<2x1xf32>
    %55 = vector.shape_cast %54 : vector<2x1xf32> to vector<2x1x1xf32>
    %56 = arith.maximumf %55, %53 : vector<2x1x1xf32>
    %57 = vector.broadcast %56 : vector<2x1x1xf32> to vector<2x1x8xf32>
    %58 = arith.subf %45, %57 : vector<2x1x8xf32>
    %59 = math.exp %58 : vector<2x1x8xf32>
    %60 = arith.subf %53, %56 : vector<2x1x1xf32>
    %61 = math.exp %60 : vector<2x1x1xf32>
    %cst_33 = arith.constant dense<0.000000e+00> : vector<2x1xf32>
    %62 = vector.multi_reduction <add>, %59, %cst_33 [2] : vector<2x1x8xf32> to vector<2x1xf32>
    %63 = vector.shape_cast %62 : vector<2x1xf32> to vector<2x1x1xf32>
    %64 = arith.addf %63, %61 : vector<2x1x1xf32>
    %65 = tpu.reciprocal %64 {approx = true} : vector<2x1x1xf32> -> vector<2x1x1xf32>
    %66 = arith.truncf %59 : vector<2x1x8xf32> to vector<2x1x8xbf16>
    %67 = vector.extract_strided_slice %36 {offsets = [0, 0, 0], sizes = [2, 8, 8], strides = [1, 1, 1]} : vector<2x8x32xbf16> to vector<2x8x8xbf16>
    "tpu.trace_start"() <{level = 10 : i32, message = "bqk,bkd->bqd"}> : () -> ()
    %cst_34 = arith.constant dense<0.000000e+00> : vector<2x1x8xf32>
    %68 = tpu.matmul %66, %67, %cst_34 {dimension_numbers = #tpu.dot_dimension_numbers<[2], [1], [1], [2], [0, 0, 0, 1, 1, 2], [0], [0]>} : vector<2x1x8xbf16>, vector<2x8x8xbf16>, vector<2x1x8xf32> -> vector<2x1x8xf32>
    "tpu.trace_stop"() : () -> ()
    %69 = vector.extract_strided_slice %24 {offsets = [0, 0], sizes = [2, 8], strides = [1, 1]} : vector<2x32xf32> to vector<2x8xf32>
    %70 = vector.shape_cast %69 : vector<2x8xf32> to vector<2x1x8xf32>
    %71 = vector.broadcast %61 : vector<2x1x1xf32> to vector<2x1x8xf32>
    %72 = arith.mulf %71, %70 : vector<2x1x8xf32>
    %73 = arith.addf %68, %72 : vector<2x1x8xf32>
    %74 = vector.broadcast %65 : vector<2x1x1xf32> to vector<2x1x8xf32>
    %75 = arith.mulf %73, %74 : vector<2x1x8xf32>
    %76 = vector.extract_strided_slice %37 {offsets = [0, 8], sizes = [2, 8], strides = [1, 1]} : vector<2x32xbf16> to vector<2x8xbf16>
    %77 = vector.shape_cast %76 : vector<2x8xbf16> to vector<2x1x8xbf16>
    %78 = vector.extract_strided_slice %34 {offsets = [0, 0, 8], sizes = [2, 8, 8], strides = [1, 1, 1]} : vector<2x8x32xbf16> to vector<2x8x8xbf16>
    "tpu.trace_start"() <{level = 10 : i32, message = "bqd,bkd->bqk"}> : () -> ()
    %cst_35 = arith.constant dense<0.000000e+00> : vector<2x1x8xf32>
    %79 = tpu.matmul %77, %78, %cst_35 {dimension_numbers = #tpu.dot_dimension_numbers<[2], [2], [1], [1], [0, 0, 0, 1, 1, 1], [0], [0]>} : vector<2x1x8xbf16>, vector<2x8x8xbf16>, vector<2x1x8xf32> -> vector<2x1x8xf32>
    "tpu.trace_stop"() : () -> ()
    %cst_36 = arith.constant 0.353553385 : f32
    %80 = vector.broadcast %cst_36 : f32 to vector<2x1x8xf32>
    %81 = arith.mulf %79, %80 : vector<2x1x8xf32>
    %82 = vector.broadcast %14 : vector<1x1x8xf32> to vector<2x1x8xf32>
    %83 = arith.addf %81, %82 : vector<2x1x8xf32>
    %84 = vector.extract_strided_slice %22 {offsets = [0, 8], sizes = [2, 8], strides = [1, 1]} : vector<2x32xf32> to vector<2x8xf32>
    %85 = vector.extract_strided_slice %23 {offsets = [0, 8], sizes = [2, 8], strides = [1, 1]} : vector<2x32xf32> to vector<2x8xf32>
    %86 = arith.mulf %84, %85 : vector<2x8xf32>
    %cst_37 = arith.constant dense<0.000000e+00> : vector<2xf32>
    %87 = vector.multi_reduction <add>, %86, %cst_37 [1] : vector<2x8xf32> to vector<2xf32>
    %88 = vector.shape_cast %87 : vector<2xf32> to vector<2x1xf32>
    %89 = vector.shape_cast %88 : vector<2x1xf32> to vector<2x1x1xf32>
    %cst_38 = arith.constant 0.353553385 : f32
    %90 = vector.broadcast %cst_38 : f32 to vector<2x1x1xf32>
    %91 = arith.mulf %89, %90 : vector<2x1x1xf32>
    %cst_39 = arith.constant dense<0xFF800000> : vector<2x1xf32>
    %92 = vector.multi_reduction <maximumf>, %83, %cst_39 [2] : vector<2x1x8xf32> to vector<2x1xf32>
    %93 = vector.shape_cast %92 : vector<2x1xf32> to vector<2x1x1xf32>
    %94 = arith.maximumf %93, %91 : vector<2x1x1xf32>
    %95 = vector.broadcast %94 : vector<2x1x1xf32> to vector<2x1x8xf32>
    %96 = arith.subf %83, %95 : vector<2x1x8xf32>
    %97 = math.exp %96 : vector<2x1x8xf32>
    %98 = arith.subf %91, %94 : vector<2x1x1xf32>
    %99 = math.exp %98 : vector<2x1x1xf32>
    %cst_40 = arith.constant dense<0.000000e+00> : vector<2x1xf32>
    %100 = vector.multi_reduction <add>, %97, %cst_40 [2] : vector<2x1x8xf32> to vector<2x1xf32>
    %101 = vector.shape_cast %100 : vector<2x1xf32> to vector<2x1x1xf32>
    %102 = arith.addf %101, %99 : vector<2x1x1xf32>
    %103 = tpu.reciprocal %102 {approx = true} : vector<2x1x1xf32> -> vector<2x1x1xf32>
    %104 = arith.truncf %97 : vector<2x1x8xf32> to vector<2x1x8xbf16>
    %105 = vector.extract_strided_slice %36 {offsets = [0, 0, 8], sizes = [2, 8, 8], strides = [1, 1, 1]} : vector<2x8x32xbf16> to vector<2x8x8xbf16>
    "tpu.trace_start"() <{level = 10 : i32, message = "bqk,bkd->bqd"}> : () -> ()
    %cst_41 = arith.constant dense<0.000000e+00> : vector<2x1x8xf32>
    %106 = tpu.matmul %104, %105, %cst_41 {dimension_numbers = #tpu.dot_dimension_numbers<[2], [1], [1], [2], [0, 0, 0, 1, 1, 2], [0], [0]>} : vector<2x1x8xbf16>, vector<2x8x8xbf16>, vector<2x1x8xf32> -> vector<2x1x8xf32>
    "tpu.trace_stop"() : () -> ()
    %107 = vector.extract_strided_slice %24 {offsets = [0, 8], sizes = [2, 8], strides = [1, 1]} : vector<2x32xf32> to vector<2x8xf32>
    %108 = vector.shape_cast %107 : vector<2x8xf32> to vector<2x1x8xf32>
    %109 = vector.broadcast %99 : vector<2x1x1xf32> to vector<2x1x8xf32>
    %110 = arith.mulf %109, %108 : vector<2x1x8xf32>
    %111 = arith.addf %106, %110 : vector<2x1x8xf32>
    %112 = vector.broadcast %103 : vector<2x1x1xf32> to vector<2x1x8xf32>
    %113 = arith.mulf %111, %112 : vector<2x1x8xf32>
    %114 = vector.extract_strided_slice %37 {offsets = [0, 16], sizes = [2, 8], strides = [1, 1]} : vector<2x32xbf16> to vector<2x8xbf16>
    %115 = vector.shape_cast %114 : vector<2x8xbf16> to vector<2x1x8xbf16>
    %116 = vector.extract_strided_slice %34 {offsets = [0, 0, 16], sizes = [2, 8, 8], strides = [1, 1, 1]} : vector<2x8x32xbf16> to vector<2x8x8xbf16>
    "tpu.trace_start"() <{level = 10 : i32, message = "bqd,bkd->bqk"}> : () -> ()
    %cst_42 = arith.constant dense<0.000000e+00> : vector<2x1x8xf32>
    %117 = tpu.matmul %115, %116, %cst_42 {dimension_numbers = #tpu.dot_dimension_numbers<[2], [2], [1], [1], [0, 0, 0, 1, 1, 1], [0], [0]>} : vector<2x1x8xbf16>, vector<2x8x8xbf16>, vector<2x1x8xf32> -> vector<2x1x8xf32>
    "tpu.trace_stop"() : () -> ()
    %cst_43 = arith.constant 0.353553385 : f32
    %118 = vector.broadcast %cst_43 : f32 to vector<2x1x8xf32>
    %119 = arith.mulf %117, %118 : vector<2x1x8xf32>
    %120 = vector.broadcast %14 : vector<1x1x8xf32> to vector<2x1x8xf32>
    %121 = arith.addf %119, %120 : vector<2x1x8xf32>
    %122 = vector.extract_strided_slice %22 {offsets = [0, 16], sizes = [2, 8], strides = [1, 1]} : vector<2x32xf32> to vector<2x8xf32>
    %123 = vector.extract_strided_slice %23 {offsets = [0, 16], sizes = [2, 8], strides = [1, 1]} : vector<2x32xf32> to vector<2x8xf32>
    %124 = arith.mulf %122, %123 : vector<2x8xf32>
    %cst_44 = arith.constant dense<0.000000e+00> : vector<2xf32>
    %125 = vector.multi_reduction <add>, %124, %cst_44 [1] : vector<2x8xf32> to vector<2xf32>
    %126 = vector.shape_cast %125 : vector<2xf32> to vector<2x1xf32>
    %127 = vector.shape_cast %126 : vector<2x1xf32> to vector<2x1x1xf32>
    %cst_45 = arith.constant 0.353553385 : f32
    %128 = vector.broadcast %cst_45 : f32 to vector<2x1x1xf32>
    %129 = arith.mulf %127, %128 : vector<2x1x1xf32>
    %cst_46 = arith.constant dense<0xFF800000> : vector<2x1xf32>
    %130 = vector.multi_reduction <maximumf>, %121, %cst_46 [2] : vector<2x1x8xf32> to vector<2x1xf32>
    %131 = vector.shape_cast %130 : vector<2x1xf32> to vector<2x1x1xf32>
    %132 = arith.maximumf %131, %129 : vector<2x1x1xf32>
    %133 = vector.broadcast %132 : vector<2x1x1xf32> to vector<2x1x8xf32>
    %134 = arith.subf %121, %133 : vector<2x1x8xf32>
    %135 = math.exp %134 : vector<2x1x8xf32>
    %136 = arith.subf %129, %132 : vector<2x1x1xf32>
    %137 = math.exp %136 : vector<2x1x1xf32>
    %cst_47 = arith.constant dense<0.000000e+00> : vector<2x1xf32>
    %138 = vector.multi_reduction <add>, %135, %cst_47 [2] : vector<2x1x8xf32> to vector<2x1xf32>
    %139 = vector.shape_cast %138 : vector<2x1xf32> to vector<2x1x1xf32>
    %140 = arith.addf %139, %137 : vector<2x1x1xf32>
    %141 = tpu.reciprocal %140 {approx = true} : vector<2x1x1xf32> -> vector<2x1x1xf32>
    %142 = arith.truncf %135 : vector<2x1x8xf32> to vector<2x1x8xbf16>
    %143 = vector.extract_strided_slice %36 {offsets = [0, 0, 16], sizes = [2, 8, 8], strides = [1, 1, 1]} : vector<2x8x32xbf16> to vector<2x8x8xbf16>
    "tpu.trace_start"() <{level = 10 : i32, message = "bqk,bkd->bqd"}> : () -> ()
    %cst_48 = arith.constant dense<0.000000e+00> : vector<2x1x8xf32>
    %144 = tpu.matmul %142, %143, %cst_48 {dimension_numbers = #tpu.dot_dimension_numbers<[2], [1], [1], [2], [0, 0, 0, 1, 1, 2], [0], [0]>} : vector<2x1x8xbf16>, vector<2x8x8xbf16>, vector<2x1x8xf32> -> vector<2x1x8xf32>
    "tpu.trace_stop"() : () -> ()
    %145 = vector.extract_strided_slice %24 {offsets = [0, 16], sizes = [2, 8], strides = [1, 1]} : vector<2x32xf32> to vector<2x8xf32>
    %146 = vector.shape_cast %145 : vector<2x8xf32> to vector<2x1x8xf32>
    %147 = vector.broadcast %137 : vector<2x1x1xf32> to vector<2x1x8xf32>
    %148 = arith.mulf %147, %146 : vector<2x1x8xf32>
    %149 = arith.addf %144, %148 : vector<2x1x8xf32>
    %150 = vector.broadcast %141 : vector<2x1x1xf32> to vector<2x1x8xf32>
    %151 = arith.mulf %149, %150 : vector<2x1x8xf32>
    %152 = vector.extract_strided_slice %37 {offsets = [0, 24], sizes = [2, 8], strides = [1, 1]} : vector<2x32xbf16> to vector<2x8xbf16>
    %153 = vector.shape_cast %152 : vector<2x8xbf16> to vector<2x1x8xbf16>
    %154 = vector.extract_strided_slice %34 {offsets = [0, 0, 24], sizes = [2, 8, 8], strides = [1, 1, 1]} : vector<2x8x32xbf16> to vector<2x8x8xbf16>
    "tpu.trace_start"() <{level = 10 : i32, message = "bqd,bkd->bqk"}> : () -> ()
    %cst_49 = arith.constant dense<0.000000e+00> : vector<2x1x8xf32>
    %155 = tpu.matmul %153, %154, %cst_49 {dimension_numbers = #tpu.dot_dimension_numbers<[2], [2], [1], [1], [0, 0, 0, 1, 1, 1], [0], [0]>} : vector<2x1x8xbf16>, vector<2x8x8xbf16>, vector<2x1x8xf32> -> vector<2x1x8xf32>
    "tpu.trace_stop"() : () -> ()
    %cst_50 = arith.constant 0.353553385 : f32
    %156 = vector.broadcast %cst_50 : f32 to vector<2x1x8xf32>
    %157 = arith.mulf %155, %156 : vector<2x1x8xf32>
    %158 = vector.broadcast %14 : vector<1x1x8xf32> to vector<2x1x8xf32>
    %159 = arith.addf %157, %158 : vector<2x1x8xf32>
    %160 = vector.extract_strided_slice %22 {offsets = [0, 24], sizes = [2, 8], strides = [1, 1]} : vector<2x32xf32> to vector<2x8xf32>
    %161 = vector.extract_strided_slice %23 {offsets = [0, 24], sizes = [2, 8], strides = [1, 1]} : vector<2x32xf32> to vector<2x8xf32>
    %162 = arith.mulf %160, %161 : vector<2x8xf32>
    %cst_51 = arith.constant dense<0.000000e+00> : vector<2xf32>
    %163 = vector.multi_reduction <add>, %162, %cst_51 [1] : vector<2x8xf32> to vector<2xf32>
    %164 = vector.shape_cast %163 : vector<2xf32> to vector<2x1xf32>
    %165 = vector.shape_cast %164 : vector<2x1xf32> to vector<2x1x1xf32>
    %cst_52 = arith.constant 0.353553385 : f32
    %166 = vector.broadcast %cst_52 : f32 to vector<2x1x1xf32>
    %167 = arith.mulf %165, %166 : vector<2x1x1xf32>
    %cst_53 = arith.constant dense<0xFF800000> : vector<2x1xf32>
    %168 = vector.multi_reduction <maximumf>, %159, %cst_53 [2] : vector<2x1x8xf32> to vector<2x1xf32>
    %169 = vector.shape_cast %168 : vector<2x1xf32> to vector<2x1x1xf32>
    %170 = arith.maximumf %169, %167 : vector<2x1x1xf32>
    %171 = vector.broadcast %170 : vector<2x1x1xf32> to vector<2x1x8xf32>
    %172 = arith.subf %159, %171 : vector<2x1x8xf32>
    %173 = math.exp %172 : vector<2x1x8xf32>
    %174 = arith.subf %167, %170 : vector<2x1x1xf32>
    %175 = math.exp %174 : vector<2x1x1xf32>
    %cst_54 = arith.constant dense<0.000000e+00> : vector<2x1xf32>
    %176 = vector.multi_reduction <add>, %173, %cst_54 [2] : vector<2x1x8xf32> to vector<2x1xf32>
    %177 = vector.shape_cast %176 : vector<2x1xf32> to vector<2x1x1xf32>
    %178 = arith.addf %177, %175 : vector<2x1x1xf32>
    %179 = tpu.reciprocal %178 {approx = true} : vector<2x1x1xf32> -> vector<2x1x1xf32>
    %180 = arith.truncf %173 : vector<2x1x8xf32> to vector<2x1x8xbf16>
    %181 = vector.extract_strided_slice %36 {offsets = [0, 0, 24], sizes = [2, 8, 8], strides = [1, 1, 1]} : vector<2x8x32xbf16> to vector<2x8x8xbf16>
    "tpu.trace_start"() <{level = 10 : i32, message = "bqk,bkd->bqd"}> : () -> ()
    %cst_55 = arith.constant dense<0.000000e+00> : vector<2x1x8xf32>
    %182 = tpu.matmul %180, %181, %cst_55 {dimension_numbers = #tpu.dot_dimension_numbers<[2], [1], [1], [2], [0, 0, 0, 1, 1, 2], [0], [0]>} : vector<2x1x8xbf16>, vector<2x8x8xbf16>, vector<2x1x8xf32> -> vector<2x1x8xf32>
    "tpu.trace_stop"() : () -> ()
    %183 = vector.extract_strided_slice %24 {offsets = [0, 24], sizes = [2, 8], strides = [1, 1]} : vector<2x32xf32> to vector<2x8xf32>
    %184 = vector.shape_cast %183 : vector<2x8xf32> to vector<2x1x8xf32>
    %185 = vector.broadcast %175 : vector<2x1x1xf32> to vector<2x1x8xf32>
    %186 = arith.mulf %185, %184 : vector<2x1x8xf32>
    %187 = arith.addf %182, %186 : vector<2x1x8xf32>
    %188 = vector.broadcast %179 : vector<2x1x1xf32> to vector<2x1x8xf32>
    %189 = arith.mulf %187, %188 : vector<2x1x8xf32>
    %190 = tpu.concatenate %75, %113, %151, %189 in 2 : vector<2x1x8xf32>, vector<2x1x8xf32>, vector<2x1x8xf32>, vector<2x1x8xf32> -> vector<2x1x32xf32>
    %191 = vector.shape_cast %190 : vector<2x1x32xf32> to vector<2x32xf32>
    %c0_56 = arith.constant 0 : index
    %c0_57 = arith.constant 0 : index
    %c0_58 = arith.constant 0 : index
    %192 = vector.load %arg10[%c0_56, %c0_57, %c0_58] : memref<1x32x32xf32, #tpu.memory_space<vmem>>, vector<1x32x32xf32>
    %193 = vector.shape_cast %192 : vector<1x32x32xf32> to vector<32x32xf32>
    %cst_59 = arith.constant dense<0.000000e+00> : vector<2x32xf32>
    %194 = tpu.matmul %191, %193, %cst_59 {dimension_numbers = #tpu.dot_dimension_numbers<[1], [0], [0], [1], [0, 0, 1, 1], [], []>} : vector<2x32xf32>, vector<32x32xf32>, vector<2x32xf32> -> vector<2x32xf32>
    %c0_60 = arith.constant 0 : index
    %c0_61 = arith.constant 0 : index
    %c0_62 = arith.constant 0 : index
    %195 = vector.load %arg11[%c0_60, %c0_61, %c0_62] : memref<1x1x32xf32, #tpu.memory_space<vmem>>, vector<1x1x32xf32>
    %196 = vector.shape_cast %195 : vector<1x1x32xf32> to vector<1x32xf32>
    %197 = vector.broadcast %196 : vector<1x32xf32> to vector<2x32xf32>
    %198 = arith.addf %194, %197 : vector<2x32xf32>
    %199 = arith.addf %1, %198 : vector<2x32xf32>
    %c0_63 = arith.constant 0 : index
    %c0_64 = arith.constant 0 : index
    %c0_65 = arith.constant 0 : index
    %200 = vector.load %arg12[%c0_63, %c0_64, %c0_65] : memref<1x1x32xf32, #tpu.memory_space<vmem>>, vector<1x1x32xf32>
    %201 = vector.shape_cast %200 : vector<1x1x32xf32> to vector<1x32xf32>
    %c0_66 = arith.constant 0 : index
    %c0_67 = arith.constant 0 : index
    %c0_68 = arith.constant 0 : index
    %202 = vector.load %arg13[%c0_66, %c0_67, %c0_68] : memref<1x1x32xf32, #tpu.memory_space<vmem>>, vector<1x1x32xf32>
    %203 = vector.shape_cast %202 : vector<1x1x32xf32> to vector<1x32xf32>
    %cst_69 = arith.constant dense<0.000000e+00> : vector<2xf32>
    %204 = vector.multi_reduction <add>, %199, %cst_69 [1] : vector<2x32xf32> to vector<2xf32>
    %205 = vector.shape_cast %204 : vector<2xf32> to vector<2x1xf32>
    %cst_70 = arith.constant 3.200000e+01 : f32
    %206 = vector.broadcast %cst_70 : f32 to vector<2x1xf32>
    %207 = arith.divf %205, %206 : vector<2x1xf32>
    %208 = vector.broadcast %207 : vector<2x1xf32> to vector<2x32xf32>
    %209 = arith.subf %199, %208 : vector<2x32xf32>
    %210 = arith.mulf %209, %209 : vector<2x32xf32>
    %cst_71 = arith.constant dense<0.000000e+00> : vector<2xf32>
    %211 = vector.multi_reduction <add>, %210, %cst_71 [1] : vector<2x32xf32> to vector<2xf32>
    %212 = vector.shape_cast %211 : vector<2xf32> to vector<2x1xf32>
    %cst_72 = arith.constant 3.200000e+01 : f32
    %213 = vector.broadcast %cst_72 : f32 to vector<2x1xf32>
    %214 = arith.divf %212, %213 : vector<2x1xf32>
    %215 = vector.broadcast %207 : vector<2x1xf32> to vector<2x32xf32>
    %216 = arith.subf %199, %215 : vector<2x32xf32>
    %cst_73 = arith.constant 9.99999974E-6 : f32
    %217 = vector.broadcast %cst_73 : f32 to vector<2x1xf32>
    %218 = arith.addf %214, %217 : vector<2x1xf32>
    %219 = math.rsqrt %218 : vector<2x1xf32>
    %220 = vector.broadcast %219 : vector<2x1xf32> to vector<2x32xf32>
    %221 = arith.mulf %216, %220 : vector<2x32xf32>
    %222 = vector.broadcast %201 : vector<1x32xf32> to vector<2x32xf32>
    %223 = arith.mulf %221, %222 : vector<2x32xf32>
    %224 = vector.broadcast %203 : vector<1x32xf32> to vector<2x32xf32>
    %225 = arith.addf %223, %224 : vector<2x32xf32>
    %c0_74 = arith.constant 0 : index
    %c0_75 = arith.constant 0 : index
    %c0_76 = arith.constant 0 : index
    %226 = vector.load %arg14[%c0_74, %c0_75, %c0_76] : memref<1x32x32xf32, #tpu.memory_space<vmem>>, vector<1x32x32xf32>
    %227 = vector.shape_cast %226 : vector<1x32x32xf32> to vector<32x32xf32>
    %cst_77 = arith.constant dense<0.000000e+00> : vector<2x32xf32>
    %228 = tpu.matmul %225, %227, %cst_77 {dimension_numbers = #tpu.dot_dimension_numbers<[1], [0], [0], [1], [0, 0, 1, 1], [], []>} : vector<2x32xf32>, vector<32x32xf32>, vector<2x32xf32> -> vector<2x32xf32>
    %c0_78 = arith.constant 0 : index
    %c0_79 = arith.constant 0 : index
    %c0_80 = arith.constant 0 : index
    %229 = vector.load %arg15[%c0_78, %c0_79, %c0_80] : memref<1x1x32xf32, #tpu.memory_space<vmem>>, vector<1x1x32xf32>
    %230 = vector.shape_cast %229 : vector<1x1x32xf32> to vector<1x32xf32>
    %231 = vector.broadcast %230 : vector<1x32xf32> to vector<2x32xf32>
    %232 = arith.addf %228, %231 : vector<2x32xf32>
    %c0_81 = arith.constant 0 : index
    %c0_82 = arith.constant 0 : index
    %c0_83 = arith.constant 0 : index
    %233 = vector.load %arg3[%c0_81, %c0_82, %c0_83] : memref<2x9x64xbf16, #tpu.memory_space<vmem>>, vector<2x9x32xbf16>
    %c0_84 = arith.constant 0 : index
    %c0_85 = arith.constant 0 : index
    %c0_86 = arith.constant 0 : index
    %234 = vector.load %arg4[%c0_84, %c0_85, %c0_86] : memref<2x9x64xbf16, #tpu.memory_space<vmem>>, vector<2x9x32xbf16>
    %c0_87 = arith.constant 0 : index
    %c0_88 = arith.constant 0 : index
    %c0_89 = arith.constant 0 : index
    %235 = vector.load %arg16[%c0_87, %c0_88, %c0_89] : memref<1x32x32xf32, #tpu.memory_space<vmem>>, vector<1x32x32xf32>
    %236 = vector.shape_cast %235 : vector<1x32x32xf32> to vector<32x32xf32>
    %c0_90 = arith.constant 0 : index
    %c0_91 = arith.constant 0 : index
    %c0_92 = arith.constant 0 : index
    %237 = vector.load %arg17[%c0_90, %c0_91, %c0_92] : memref<1x1x32xf32, #tpu.memory_space<vmem>>, vector<1x1x32xf32>
    %238 = vector.shape_cast %237 : vector<1x1x32xf32> to vector<1x32xf32>
    %239 = arith.truncf %232 : vector<2x32xf32> to vector<2x32xbf16>
    %240 = vector.extract_strided_slice %239 {offsets = [0, 0], sizes = [2, 8], strides = [1, 1]} : vector<2x32xbf16> to vector<2x8xbf16>
    %241 = vector.shape_cast %240 : vector<2x8xbf16> to vector<2x1x8xbf16>
    %242 = vector.extract_strided_slice %233 {offsets = [0, 0, 0], sizes = [2, 9, 8], strides = [1, 1, 1]} : vector<2x9x32xbf16> to vector<2x9x8xbf16>
    "tpu.trace_start"() <{level = 10 : i32, message = "bqd,bkd->bqk"}> : () -> ()
    %cst_93 = arith.constant dense<0.000000e+00> : vector<2x1x9xf32>
    %243 = tpu.matmul %241, %242, %cst_93 {dimension_numbers = #tpu.dot_dimension_numbers<[2], [2], [1], [1], [0, 0, 0, 1, 1, 1], [0], [0]>} : vector<2x1x8xbf16>, vector<2x9x8xbf16>, vector<2x1x9xf32> -> vector<2x1x9xf32>
    "tpu.trace_stop"() : () -> ()
    %cst_94 = arith.constant 0.353553385 : f32
    %244 = vector.broadcast %cst_94 : f32 to vector<2x1x9xf32>
    %245 = arith.mulf %243, %244 : vector<2x1x9xf32>
    %246 = arith.addf %245, %8 : vector<2x1x9xf32>
    %cst_95 = arith.constant dense<0xFF800000> : vector<2x1xf32>
    %247 = vector.multi_reduction <maximumf>, %246, %cst_95 [2] : vector<2x1x9xf32> to vector<2x1xf32>
    %248 = vector.shape_cast %247 : vector<2x1xf32> to vector<2x1x1xf32>
    %249 = vector.broadcast %248 : vector<2x1x1xf32> to vector<2x1x9xf32>
    %250 = arith.subf %246, %249 : vector<2x1x9xf32>
    %251 = math.exp %250 : vector<2x1x9xf32>
    %cst_96 = arith.constant dense<0.000000e+00> : vector<2x1xf32>
    %252 = vector.multi_reduction <add>, %251, %cst_96 [2] : vector<2x1x9xf32> to vector<2x1xf32>
    %253 = vector.shape_cast %252 : vector<2x1xf32> to vector<2x1x1xf32>
    %254 = tpu.reciprocal %253 {approx = true} : vector<2x1x1xf32> -> vector<2x1x1xf32>
    %255 = vector.broadcast %254 : vector<2x1x1xf32> to vector<2x1x9xf32>
    %256 = arith.mulf %251, %255 : vector<2x1x9xf32>
    %257 = arith.truncf %256 : vector<2x1x9xf32> to vector<2x1x9xbf16>
    %258 = vector.extract_strided_slice %234 {offsets = [0, 0, 0], sizes = [2, 9, 8], strides = [1, 1, 1]} : vector<2x9x32xbf16> to vector<2x9x8xbf16>
    "tpu.trace_start"() <{level = 10 : i32, message = "bqk,bkd->bqd"}> : () -> ()
    %cst_97 = arith.constant dense<0.000000e+00> : vector<2x1x8xf32>
    %259 = tpu.matmul %257, %258, %cst_97 {dimension_numbers = #tpu.dot_dimension_numbers<[2], [1], [1], [2], [0, 0, 0, 1, 1, 2], [0], [0]>} : vector<2x1x9xbf16>, vector<2x9x8xbf16>, vector<2x1x8xf32> -> vector<2x1x8xf32>
    "tpu.trace_stop"() : () -> ()
    %260 = vector.extract_strided_slice %239 {offsets = [0, 8], sizes = [2, 8], strides = [1, 1]} : vector<2x32xbf16> to vector<2x8xbf16>
    %261 = vector.shape_cast %260 : vector<2x8xbf16> to vector<2x1x8xbf16>
    %262 = vector.extract_strided_slice %233 {offsets = [0, 0, 8], sizes = [2, 9, 8], strides = [1, 1, 1]} : vector<2x9x32xbf16> to vector<2x9x8xbf16>
    "tpu.trace_start"() <{level = 10 : i32, message = "bqd,bkd->bqk"}> : () -> ()
    %cst_98 = arith.constant dense<0.000000e+00> : vector<2x1x9xf32>
    %263 = tpu.matmul %261, %262, %cst_98 {dimension_numbers = #tpu.dot_dimension_numbers<[2], [2], [1], [1], [0, 0, 0, 1, 1, 1], [0], [0]>} : vector<2x1x8xbf16>, vector<2x9x8xbf16>, vector<2x1x9xf32> -> vector<2x1x9xf32>
    "tpu.trace_stop"() : () -> ()
    %cst_99 = arith.constant 0.353553385 : f32
    %264 = vector.broadcast %cst_99 : f32 to vector<2x1x9xf32>
    %265 = arith.mulf %263, %264 : vector<2x1x9xf32>
    %266 = arith.addf %265, %8 : vector<2x1x9xf32>
    %cst_100 = arith.constant dense<0xFF800000> : vector<2x1xf32>
    %267 = vector.multi_reduction <maximumf>, %266, %cst_100 [2] : vector<2x1x9xf32> to vector<2x1xf32>
    %268 = vector.shape_cast %267 : vector<2x1xf32> to vector<2x1x1xf32>
    %269 = vector.broadcast %268 : vector<2x1x1xf32> to vector<2x1x9xf32>
    %270 = arith.subf %266, %269 : vector<2x1x9xf32>
    %271 = math.exp %270 : vector<2x1x9xf32>
    %cst_101 = arith.constant dense<0.000000e+00> : vector<2x1xf32>
    %272 = vector.multi_reduction <add>, %271, %cst_101 [2] : vector<2x1x9xf32> to vector<2x1xf32>
    %273 = vector.shape_cast %272 : vector<2x1xf32> to vector<2x1x1xf32>
    %274 = tpu.reciprocal %273 {approx = true} : vector<2x1x1xf32> -> vector<2x1x1xf32>
    %275 = vector.broadcast %274 : vector<2x1x1xf32> to vector<2x1x9xf32>
    %276 = arith.mulf %271, %275 : vector<2x1x9xf32>
    %277 = arith.truncf %276 : vector<2x1x9xf32> to vector<2x1x9xbf16>
    %278 = vector.extract_strided_slice %234 {offsets = [0, 0, 8], sizes = [2, 9, 8], strides = [1, 1, 1]} : vector<2x9x32xbf16> to vector<2x9x8xbf16>
    "tpu.trace_start"() <{level = 10 : i32, message = "bqk,bkd->bqd"}> : () -> ()
    %cst_102 = arith.constant dense<0.000000e+00> : vector<2x1x8xf32>
    %279 = tpu.matmul %277, %278, %cst_102 {dimension_numbers = #tpu.dot_dimension_numbers<[2], [1], [1], [2], [0, 0, 0, 1, 1, 2], [0], [0]>} : vector<2x1x9xbf16>, vector<2x9x8xbf16>, vector<2x1x8xf32> -> vector<2x1x8xf32>
    "tpu.trace_stop"() : () -> ()
    %280 = vector.extract_strided_slice %239 {offsets = [0, 16], sizes = [2, 8], strides = [1, 1]} : vector<2x32xbf16> to vector<2x8xbf16>
    %281 = vector.shape_cast %280 : vector<2x8xbf16> to vector<2x1x8xbf16>
    %282 = vector.extract_strided_slice %233 {offsets = [0, 0, 16], sizes = [2, 9, 8], strides = [1, 1, 1]} : vector<2x9x32xbf16> to vector<2x9x8xbf16>
    "tpu.trace_start"() <{level = 10 : i32, message = "bqd,bkd->bqk"}> : () -> ()
    %cst_103 = arith.constant dense<0.000000e+00> : vector<2x1x9xf32>
    %283 = tpu.matmul %281, %282, %cst_103 {dimension_numbers = #tpu.dot_dimension_numbers<[2], [2], [1], [1], [0, 0, 0, 1, 1, 1], [0], [0]>} : vector<2x1x8xbf16>, vector<2x9x8xbf16>, vector<2x1x9xf32> -> vector<2x1x9xf32>
    "tpu.trace_stop"() : () -> ()
    %cst_104 = arith.constant 0.353553385 : f32
    %284 = vector.broadcast %cst_104 : f32 to vector<2x1x9xf32>
    %285 = arith.mulf %283, %284 : vector<2x1x9xf32>
    %286 = arith.addf %285, %8 : vector<2x1x9xf32>
    %cst_105 = arith.constant dense<0xFF800000> : vector<2x1xf32>
    %287 = vector.multi_reduction <maximumf>, %286, %cst_105 [2] : vector<2x1x9xf32> to vector<2x1xf32>
    %288 = vector.shape_cast %287 : vector<2x1xf32> to vector<2x1x1xf32>
    %289 = vector.broadcast %288 : vector<2x1x1xf32> to vector<2x1x9xf32>
    %290 = arith.subf %286, %289 : vector<2x1x9xf32>
    %291 = math.exp %290 : vector<2x1x9xf32>
    %cst_106 = arith.constant dense<0.000000e+00> : vector<2x1xf32>
    %292 = vector.multi_reduction <add>, %291, %cst_106 [2] : vector<2x1x9xf32> to vector<2x1xf32>
    %293 = vector.shape_cast %292 : vector<2x1xf32> to vector<2x1x1xf32>
    %294 = tpu.reciprocal %293 {approx = true} : vector<2x1x1xf32> -> vector<2x1x1xf32>
    %295 = vector.broadcast %294 : vector<2x1x1xf32> to vector<2x1x9xf32>
    %296 = arith.mulf %291, %295 : vector<2x1x9xf32>
    %297 = arith.truncf %296 : vector<2x1x9xf32> to vector<2x1x9xbf16>
    %298 = vector.extract_strided_slice %234 {offsets = [0, 0, 16], sizes = [2, 9, 8], strides = [1, 1, 1]} : vector<2x9x32xbf16> to vector<2x9x8xbf16>
    "tpu.trace_start"() <{level = 10 : i32, message = "bqk,bkd->bqd"}> : () -> ()
    %cst_107 = arith.constant dense<0.000000e+00> : vector<2x1x8xf32>
    %299 = tpu.matmul %297, %298, %cst_107 {dimension_numbers = #tpu.dot_dimension_numbers<[2], [1], [1], [2], [0, 0, 0, 1, 1, 2], [0], [0]>} : vector<2x1x9xbf16>, vector<2x9x8xbf16>, vector<2x1x8xf32> -> vector<2x1x8xf32>
    "tpu.trace_stop"() : () -> ()
    %300 = vector.extract_strided_slice %239 {offsets = [0, 24], sizes = [2, 8], strides = [1, 1]} : vector<2x32xbf16> to vector<2x8xbf16>
    %301 = vector.shape_cast %300 : vector<2x8xbf16> to vector<2x1x8xbf16>
    %302 = vector.extract_strided_slice %233 {offsets = [0, 0, 24], sizes = [2, 9, 8], strides = [1, 1, 1]} : vector<2x9x32xbf16> to vector<2x9x8xbf16>
    "tpu.trace_start"() <{level = 10 : i32, message = "bqd,bkd->bqk"}> : () -> ()
    %cst_108 = arith.constant dense<0.000000e+00> : vector<2x1x9xf32>
    %303 = tpu.matmul %301, %302, %cst_108 {dimension_numbers = #tpu.dot_dimension_numbers<[2], [2], [1], [1], [0, 0, 0, 1, 1, 1], [0], [0]>} : vector<2x1x8xbf16>, vector<2x9x8xbf16>, vector<2x1x9xf32> -> vector<2x1x9xf32>
    "tpu.trace_stop"() : () -> ()
    %cst_109 = arith.constant 0.353553385 : f32
    %304 = vector.broadcast %cst_109 : f32 to vector<2x1x9xf32>
    %305 = arith.mulf %303, %304 : vector<2x1x9xf32>
    %306 = arith.addf %305, %8 : vector<2x1x9xf32>
    %cst_110 = arith.constant dense<0xFF800000> : vector<2x1xf32>
    %307 = vector.multi_reduction <maximumf>, %306, %cst_110 [2] : vector<2x1x9xf32> to vector<2x1xf32>
    %308 = vector.shape_cast %307 : vector<2x1xf32> to vector<2x1x1xf32>
    %309 = vector.broadcast %308 : vector<2x1x1xf32> to vector<2x1x9xf32>
    %310 = arith.subf %306, %309 : vector<2x1x9xf32>
    %311 = math.exp %310 : vector<2x1x9xf32>
    %cst_111 = arith.constant dense<0.000000e+00> : vector<2x1xf32>
    %312 = vector.multi_reduction <add>, %311, %cst_111 [2] : vector<2x1x9xf32> to vector<2x1xf32>
    %313 = vector.shape_cast %312 : vector<2x1xf32> to vector<2x1x1xf32>
    %314 = tpu.reciprocal %313 {approx = true} : vector<2x1x1xf32> -> vector<2x1x1xf32>
    %315 = vector.broadcast %314 : vector<2x1x1xf32> to vector<2x1x9xf32>
    %316 = arith.mulf %311, %315 : vector<2x1x9xf32>
    %317 = arith.truncf %316 : vector<2x1x9xf32> to vector<2x1x9xbf16>
    %318 = vector.extract_strided_slice %234 {offsets = [0, 0, 24], sizes = [2, 9, 8], strides = [1, 1, 1]} : vector<2x9x32xbf16> to vector<2x9x8xbf16>
    "tpu.trace_start"() <{level = 10 : i32, message = "bqk,bkd->bqd"}> : () -> ()
    %cst_112 = arith.constant dense<0.000000e+00> : vector<2x1x8xf32>
    %319 = tpu.matmul %317, %318, %cst_112 {dimension_numbers = #tpu.dot_dimension_numbers<[2], [1], [1], [2], [0, 0, 0, 1, 1, 2], [0], [0]>} : vector<2x1x9xbf16>, vector<2x9x8xbf16>, vector<2x1x8xf32> -> vector<2x1x8xf32>
    "tpu.trace_stop"() : () -> ()
    %320 = tpu.concatenate %259, %279, %299, %319 in 2 : vector<2x1x8xf32>, vector<2x1x8xf32>, vector<2x1x8xf32>, vector<2x1x8xf32> -> vector<2x1x32xf32>
    %321 = vector.shape_cast %320 : vector<2x1x32xf32> to vector<2x32xf32>
    %cst_113 = arith.constant dense<0.000000e+00> : vector<2x32xf32>
    %322 = tpu.matmul %321, %236, %cst_113 {dimension_numbers = #tpu.dot_dimension_numbers<[1], [0], [0], [1], [0, 0, 1, 1], [], []>} : vector<2x32xf32>, vector<32x32xf32>, vector<2x32xf32> -> vector<2x32xf32>
    %323 = vector.broadcast %238 : vector<1x32xf32> to vector<2x32xf32>
    %324 = arith.addf %322, %323 : vector<2x32xf32>
    %325 = arith.addf %225, %324 : vector<2x32xf32>
    %c0_114 = arith.constant 0 : index
    %c0_115 = arith.constant 0 : index
    %c0_116 = arith.constant 0 : index
    %326 = vector.load %arg18[%c0_114, %c0_115, %c0_116] : memref<1x1x32xf32, #tpu.memory_space<vmem>>, vector<1x1x32xf32>
    %327 = vector.shape_cast %326 : vector<1x1x32xf32> to vector<1x32xf32>
    %c0_117 = arith.constant 0 : index
    %c0_118 = arith.constant 0 : index
    %c0_119 = arith.constant 0 : index
    %328 = vector.load %arg19[%c0_117, %c0_118, %c0_119] : memref<1x1x32xf32, #tpu.memory_space<vmem>>, vector<1x1x32xf32>
    %329 = vector.shape_cast %328 : vector<1x1x32xf32> to vector<1x32xf32>
    %cst_120 = arith.constant dense<0.000000e+00> : vector<2xf32>
    %330 = vector.multi_reduction <add>, %325, %cst_120 [1] : vector<2x32xf32> to vector<2xf32>
    %331 = vector.shape_cast %330 : vector<2xf32> to vector<2x1xf32>
    %cst_121 = arith.constant 3.200000e+01 : f32
    %332 = vector.broadcast %cst_121 : f32 to vector<2x1xf32>
    %333 = arith.divf %331, %332 : vector<2x1xf32>
    %334 = vector.broadcast %333 : vector<2x1xf32> to vector<2x32xf32>
    %335 = arith.subf %325, %334 : vector<2x32xf32>
    %336 = arith.mulf %335, %335 : vector<2x32xf32>
    %cst_122 = arith.constant dense<0.000000e+00> : vector<2xf32>
    %337 = vector.multi_reduction <add>, %336, %cst_122 [1] : vector<2x32xf32> to vector<2xf32>
    %338 = vector.shape_cast %337 : vector<2xf32> to vector<2x1xf32>
    %cst_123 = arith.constant 3.200000e+01 : f32
    %339 = vector.broadcast %cst_123 : f32 to vector<2x1xf32>
    %340 = arith.divf %338, %339 : vector<2x1xf32>
    %341 = vector.broadcast %333 : vector<2x1xf32> to vector<2x32xf32>
    %342 = arith.subf %325, %341 : vector<2x32xf32>
    %cst_124 = arith.constant 9.99999974E-6 : f32
    %343 = vector.broadcast %cst_124 : f32 to vector<2x1xf32>
    %344 = arith.addf %340, %343 : vector<2x1xf32>
    %345 = math.rsqrt %344 : vector<2x1xf32>
    %346 = vector.broadcast %345 : vector<2x1xf32> to vector<2x32xf32>
    %347 = arith.mulf %342, %346 : vector<2x32xf32>
    %348 = vector.broadcast %327 : vector<1x32xf32> to vector<2x32xf32>
    %349 = arith.mulf %347, %348 : vector<2x32xf32>
    %350 = vector.broadcast %329 : vector<1x32xf32> to vector<2x32xf32>
    %351 = arith.addf %349, %350 : vector<2x32xf32>
    %c0_125 = arith.constant 0 : index
    %c0_126 = arith.constant 0 : index
    %c0_127 = arith.constant 0 : index
    %352 = vector.load %arg20[%c0_125, %c0_126, %c0_127] : memref<1x32x32xf32, #tpu.memory_space<vmem>>, vector<1x32x32xf32>
    %353 = vector.shape_cast %352 : vector<1x32x32xf32> to vector<32x32xf32>
    %cst_128 = arith.constant dense<0.000000e+00> : vector<2x32xf32>
    %354 = tpu.matmul %351, %353, %cst_128 {dimension_numbers = #tpu.dot_dimension_numbers<[1], [0], [0], [1], [0, 0, 1, 1], [], []>} : vector<2x32xf32>, vector<32x32xf32>, vector<2x32xf32> -> vector<2x32xf32>
    %c0_129 = arith.constant 0 : index
    %c0_130 = arith.constant 0 : index
    %c0_131 = arith.constant 0 : index
    %355 = vector.load %arg21[%c0_129, %c0_130, %c0_131] : memref<1x1x32xf32, #tpu.memory_space<vmem>>, vector<1x1x32xf32>
    %356 = vector.shape_cast %355 : vector<1x1x32xf32> to vector<1x32xf32>
    %357 = vector.broadcast %356 : vector<1x32xf32> to vector<2x32xf32>
    %358 = arith.addf %354, %357 : vector<2x32xf32>
    %cst_132 = arith.constant 0.000000e+00 : f32
    %359 = vector.broadcast %cst_132 : f32 to vector<2x32xf32>
    %360 = arith.maximumf %358, %359 : vector<2x32xf32>
    %c0_133 = arith.constant 0 : index
    %c0_134 = arith.constant 0 : index
    %c0_135 = arith.constant 0 : index
    %361 = vector.load %arg22[%c0_133, %c0_134, %c0_135] : memref<1x32x32xf32, #tpu.memory_space<vmem>>, vector<1x32x32xf32>
    %362 = vector.shape_cast %361 : vector<1x32x32xf32> to vector<32x32xf32>
    %cst_136 = arith.constant dense<0.000000e+00> : vector<2x32xf32>
    %363 = tpu.matmul %360, %362, %cst_136 {dimension_numbers = #tpu.dot_dimension_numbers<[1], [0], [0], [1], [0, 0, 1, 1], [], []>} : vector<2x32xf32>, vector<32x32xf32>, vector<2x32xf32> -> vector<2x32xf32>
    %c0_137 = arith.constant 0 : index
    %c0_138 = arith.constant 0 : index
    %c0_139 = arith.constant 0 : index
    %364 = vector.load %arg23[%c0_137, %c0_138, %c0_139] : memref<1x1x32xf32, #tpu.memory_space<vmem>>, vector<1x1x32xf32>
    %365 = vector.shape_cast %364 : vector<1x1x32xf32> to vector<1x32xf32>
    %366 = vector.broadcast %365 : vector<1x32xf32> to vector<2x32xf32>
    %367 = arith.addf %363, %366 : vector<2x32xf32>
    %368 = arith.addf %351, %367 : vector<2x32xf32>
    %c0_140 = arith.constant 0 : index
    %c0_141 = arith.constant 0 : index
    %c0_142 = arith.constant 0 : index
    %369 = vector.load %arg24[%c0_140, %c0_141, %c0_142] : memref<1x1x32xf32, #tpu.memory_space<vmem>>, vector<1x1x32xf32>
    %370 = vector.shape_cast %369 : vector<1x1x32xf32> to vector<1x32xf32>
    %c0_143 = arith.constant 0 : index
    %c0_144 = arith.constant 0 : index
    %c0_145 = arith.constant 0 : index
    %371 = vector.load %arg25[%c0_143, %c0_144, %c0_145] : memref<1x1x32xf32, #tpu.memory_space<vmem>>, vector<1x1x32xf32>
    %372 = vector.shape_cast %371 : vector<1x1x32xf32> to vector<1x32xf32>
    %cst_146 = arith.constant dense<0.000000e+00> : vector<2xf32>
    %373 = vector.multi_reduction <add>, %368, %cst_146 [1] : vector<2x32xf32> to vector<2xf32>
    %374 = vector.shape_cast %373 : vector<2xf32> to vector<2x1xf32>
    %cst_147 = arith.constant 3.200000e+01 : f32
    %375 = vector.broadcast %cst_147 : f32 to vector<2x1xf32>
    %376 = arith.divf %374, %375 : vector<2x1xf32>
    %377 = vector.broadcast %376 : vector<2x1xf32> to vector<2x32xf32>
    %378 = arith.subf %368, %377 : vector<2x32xf32>
    %379 = arith.mulf %378, %378 : vector<2x32xf32>
    %cst_148 = arith.constant dense<0.000000e+00> : vector<2xf32>
    %380 = vector.multi_reduction <add>, %379, %cst_148 [1] : vector<2x32xf32> to vector<2xf32>
    %381 = vector.shape_cast %380 : vector<2xf32> to vector<2x1xf32>
    %cst_149 = arith.constant 3.200000e+01 : f32
    %382 = vector.broadcast %cst_149 : f32 to vector<2x1xf32>
    %383 = arith.divf %381, %382 : vector<2x1xf32>
    %384 = vector.broadcast %376 : vector<2x1xf32> to vector<2x32xf32>
    %385 = arith.subf %368, %384 : vector<2x32xf32>
    %cst_150 = arith.constant 9.99999974E-6 : f32
    %386 = vector.broadcast %cst_150 : f32 to vector<2x1xf32>
    %387 = arith.addf %383, %386 : vector<2x1xf32>
    %388 = math.rsqrt %387 : vector<2x1xf32>
    %389 = vector.broadcast %388 : vector<2x1xf32> to vector<2x32xf32>
    %390 = arith.mulf %385, %389 : vector<2x32xf32>
    %391 = vector.broadcast %370 : vector<1x32xf32> to vector<2x32xf32>
    %392 = arith.mulf %390, %391 : vector<2x32xf32>
    %393 = vector.broadcast %372 : vector<1x32xf32> to vector<2x32xf32>
    %394 = arith.addf %392, %393 : vector<2x32xf32>
    %c0_151 = arith.constant 0 : index
    %c0_152 = arith.constant 0 : index
    %395 = vector.load %arg26[%c0_151, %c0_152] : memref<32x32xf32, #tpu.memory_space<vmem>>, vector<32x32xf32>
    %cst_153 = arith.constant dense<0.000000e+00> : vector<2x32xf32>
    %396 = tpu.matmul %394, %395, %cst_153 {dimension_numbers = #tpu.dot_dimension_numbers<[1], [0], [0], [1], [0, 0, 1, 1], [], []>} : vector<2x32xf32>, vector<32x32xf32>, vector<2x32xf32> -> vector<2x32xf32>
    %c0_154 = arith.constant 0 : index
    %c0_155 = arith.constant 0 : index
    %397 = vector.load %arg27[%c0_154, %c0_155] : memref<1x32xf32, #tpu.memory_space<vmem>>, vector<1x32xf32>
    %398 = vector.broadcast %397 : vector<1x32xf32> to vector<2x32xf32>
    %399 = arith.addf %396, %398 : vector<2x32xf32>
    %c0_156 = arith.constant 0 : index
    %c0_157 = arith.constant 0 : index
    %c32 = arith.constant 32 : index
    %400 = vector.load %arg3[%c0_156, %c0_157, %c32] : memref<2x9x64xbf16, #tpu.memory_space<vmem>>, vector<2x9x32xbf16>
    %401 = arith.extf %400 : vector<2x9x32xbf16> to vector<2x9x32xf32>
    %402 = vector.shape_cast %399 : vector<2x32xf32> to vector<2x1x32xf32>
    "tpu.trace_start"() <{level = 10 : i32, message = "bqd,bkd->bqk"}> : () -> ()
    %cst_158 = arith.constant dense<0.000000e+00> : vector<2x1x9xf32>
    %403 = tpu.matmul %402, %401, %cst_158 {dimension_numbers = #tpu.dot_dimension_numbers<[2], [2], [1], [1], [0, 0, 0, 1, 1, 1], [0], [0]>} : vector<2x1x32xf32>, vector<2x9x32xf32>, vector<2x1x9xf32> -> vector<2x1x9xf32>
    "tpu.trace_stop"() : () -> ()
    %404 = vector.shape_cast %403 : vector<2x1x9xf32> to vector<2x9xf32>
    %cst_159 = arith.constant 0.176776692 : f32
    %405 = vector.broadcast %cst_159 : f32 to vector<2x9xf32>
    %406 = arith.mulf %404, %405 : vector<2x9xf32>
    %407 = math.tanh %406 : vector<2x9xf32>
    %cst_160 = arith.constant 1.000000e+01 : f32
    %408 = vector.broadcast %cst_160 : f32 to vector<2x9xf32>
    %409 = arith.mulf %408, %407 : vector<2x9xf32>
    %c0_i32_161 = arith.constant 0 : i32
    %410 = vector.broadcast %c0_i32_161 : i32 to vector<2x9xi32>
    %411 = arith.cmpi sgt, %2, %410 : vector<2x9xi32>
    %cst_162 = arith.constant -1.000000e+09 : f32
    %412 = vector.broadcast %cst_162 : f32 to vector<2x9xf32>
    %413 = arith.select %411, %412, %409 : vector<2x9xi1>, vector<2x9xf32>
    %cst_163 = arith.constant dense<0xFF800000> : vector<2xf32>
    %414 = vector.multi_reduction <maximumf>, %413, %cst_163 [1] : vector<2x9xf32> to vector<2xf32>
    %415 = vector.shape_cast %414 : vector<2xf32> to vector<2x1xf32>
    %416 = vector.broadcast %415 : vector<2x1xf32> to vector<2x9xf32>
    %417 = arith.subf %413, %416 : vector<2x9xf32>
    %418 = math.exp %417 : vector<2x9xf32>
    %cst_164 = arith.constant dense<0.000000e+00> : vector<2xf32>
    %419 = vector.multi_reduction <add>, %418, %cst_164 [1] : vector<2x9xf32> to vector<2xf32>
    %420 = vector.shape_cast %419 : vector<2xf32> to vector<2x1xf32>
    %421 = math.log %420 : vector<2x1xf32>
    %422 = vector.broadcast %421 : vector<2x1xf32> to vector<2x9xf32>
    %423 = arith.subf %417, %422 : vector<2x9xf32>
    %c0_165 = arith.constant 0 : index
    %c0_166 = arith.constant 0 : index
    %424 = vector.load %arg28[%c0_165, %c0_166] : memref<2x9xf32, #tpu.memory_space<vmem>>, vector<2x9xf32>
    tpu.vector_store %arg28[%c0_165, %c0_166], %423 {strides = array<i32>} : memref<2x9xf32, #tpu.memory_space<vmem>>, vector<2x9xf32>,
    return
  }
  func.func @transform_0(%arg0: i32, %arg1: memref<1xi32, #tpu.memory_space<smem>>) -> (i32, i32) {
    %c0_i32 = arith.constant 0 : i32
    %c0_i32_0 = arith.constant 0 : i32
    return %arg0, %c0_i32 : i32, i32
  }
  func.func @transform_1(%arg0: i32, %arg1: memref<1xi32, #tpu.memory_space<smem>>) -> (i32, i32, i32) {
    %c0_i32 = arith.constant 0 : i32
    %c0_i32_0 = arith.constant 0 : i32
    %c0_i32_1 = arith.constant 0 : i32
    return %arg0, %c0_i32, %c0_i32_0 : i32, i32, i32
  }
  func.func @transform_2(%arg0: i32, %arg1: memref<1xi32, #tpu.memory_space<smem>>) -> (i32, i32, i32) {
    %c0_i32 = arith.constant 0 : i32
    %c0_i32_0 = arith.constant 0 : i32
    %c0_i32_1 = arith.constant 0 : i32
    return %arg0, %c0_i32, %c0_i32_0 : i32, i32, i32
  }
  func.func @transform_3(%arg0: i32, %arg1: memref<1xi32, #tpu.memory_space<smem>>) -> (i32, i32) {
    %c0_i32 = arith.constant 0 : i32
    %c0_i32_0 = arith.constant 0 : i32
    return %arg0, %c0_i32 : i32, i32
  }
  func.func @transform_4(%arg0: i32, %arg1: memref<1xi32, #tpu.memory_space<smem>>) -> (i32, i32, i32, i32) {
    %c0_i32 = arith.constant 0 : i32
    %c0_i32_0 = arith.constant 0 : i32
    %c0_i32_1 = arith.constant 0 : i32
    %c0_i32_2 = arith.constant 0 : i32
    return %c0_i32, %arg0, %c0_i32_0, %c0_i32_1 : i32, i32, i32, i32
  }
  func.func @transform_5(%arg0: i32, %arg1: memref<1xi32, #tpu.memory_space<smem>>) -> (i32, i32, i32, i32) {
    %c0_i32 = arith.constant 0 : i32
    %c0_i32_0 = arith.constant 0 : i32
    %c0_i32_1 = arith.constant 0 : i32
    %c0_i32_2 = arith.constant 0 : i32
    return %c0_i32, %arg0, %c0_i32_0, %c0_i32_1 : i32, i32, i32, i32
  }
  func.func @transform_6(%arg0: i32, %arg1: memref<1xi32, #tpu.memory_space<smem>>) -> (i32, i32, i32) {
    %c0_i32 = arith.constant 0 : i32
    %c0_i32_0 = arith.constant 0 : i32
    %c0_i32_1 = arith.constant 0 : i32
    %c0_i32_2 = arith.constant 0 : i32
    return %c0_i32, %c0_i32_0, %c0_i32_1 : i32, i32, i32
  }
  func.func @transform_7(%arg0: i32, %arg1: memref<1xi32, #tpu.memory_space<smem>>) -> (i32, i32, i32) {
    %c0_i32 = arith.constant 0 : i32
    %c0_i32_0 = arith.constant 0 : i32
    %c0_i32_1 = arith.constant 0 : i32
    %c0_i32_2 = arith.constant 0 : i32
    return %c0_i32, %c0_i32_0, %c0_i32_1 : i32, i32, i32
  }
  func.func @transform_8(%arg0: i32, %arg1: memref<1xi32, #tpu.memory_space<smem>>) -> (i32, i32, i32) {
    %c0_i32 = arith.constant 0 : i32
    %c0_i32_0 = arith.constant 0 : i32
    %c0_i32_1 = arith.constant 0 : i32
    %c0_i32_2 = arith.constant 0 : i32
    return %c0_i32, %c0_i32_0, %c0_i32_1 : i32, i32, i32
  }
  func.func @transform_9(%arg0: i32, %arg1: memref<1xi32, #tpu.memory_space<smem>>) -> (i32, i32, i32) {
    %c0_i32 = arith.constant 0 : i32
    %c0_i32_0 = arith.constant 0 : i32
    %c0_i32_1 = arith.constant 0 : i32
    %c0_i32_2 = arith.constant 0 : i32
    return %c0_i32, %c0_i32_0, %c0_i32_1 : i32, i32, i32
  }
  func.func @transform_10(%arg0: i32, %arg1: memref<1xi32, #tpu.memory_space<smem>>) -> (i32, i32, i32) {
    %c0_i32 = arith.constant 0 : i32
    %c0_i32_0 = arith.constant 0 : i32
    %c0_i32_1 = arith.constant 0 : i32
    %c0_i32_2 = arith.constant 0 : i32
    return %c0_i32, %c0_i32_0, %c0_i32_1 : i32, i32, i32
  }
  func.func @transform_11(%arg0: i32, %arg1: memref<1xi32, #tpu.memory_space<smem>>) -> (i32, i32, i32) {
    %c0_i32 = arith.constant 0 : i32
    %c0_i32_0 = arith.constant 0 : i32
    %c0_i32_1 = arith.constant 0 : i32
    %c0_i32_2 = arith.constant 0 : i32
    return %c0_i32, %c0_i32_0, %c0_i32_1 : i32, i32, i32
  }
  func.func @transform_12(%arg0: i32, %arg1: memref<1xi32, #tpu.memory_space<smem>>) -> (i32, i32, i32) {
    %c0_i32 = arith.constant 0 : i32
    %c0_i32_0 = arith.constant 0 : i32
    %c0_i32_1 = arith.constant 0 : i32
    %c0_i32_2 = arith.constant 0 : i32
    return %c0_i32, %c0_i32_0, %c0_i32_1 : i32, i32, i32
  }
  func.func @transform_13(%arg0: i32, %arg1: memref<1xi32, #tpu.memory_space<smem>>) -> (i32, i32, i32) {
    %c0_i32 = arith.constant 0 : i32
    %c0_i32_0 = arith.constant 0 : i32
    %c0_i32_1 = arith.constant 0 : i32
    %c0_i32_2 = arith.constant 0 : i32
    return %c0_i32, %c0_i32_0, %c0_i32_1 : i32, i32, i32
  }
  func.func @transform_14(%arg0: i32, %arg1: memref<1xi32, #tpu.memory_space<smem>>) -> (i32, i32, i32) {
    %c0_i32 = arith.constant 0 : i32
    %c0_i32_0 = arith.constant 0 : i32
    %c0_i32_1 = arith.constant 0 : i32
    %c0_i32_2 = arith.constant 0 : i32
    return %c0_i32, %c0_i32_0, %c0_i32_1 : i32, i32, i32
  }
  func.func @transform_15(%arg0: i32, %arg1: memref<1xi32, #tpu.memory_space<smem>>) -> (i32, i32, i32) {
    %c0_i32 = arith.constant 0 : i32
    %c0_i32_0 = arith.constant 0 : i32
    %c0_i32_1 = arith.constant 0 : i32
    %c0_i32_2 = arith.constant 0 : i32
    return %c0_i32, %c0_i32_0, %c0_i32_1 : i32, i32, i32
  }
  func.func @transform_16(%arg0: i32, %arg1: memref<1xi32, #tpu.memory_space<smem>>) -> (i32, i32, i32) {
    %c0_i32 = arith.constant 0 : i32
    %c0_i32_0 = arith.constant 0 : i32
    %c0_i32_1 = arith.constant 0 : i32
    %c0_i32_2 = arith.constant 0 : i32
    return %c0_i32, %c0_i32_0, %c0_i32_1 : i32, i32, i32
  }
  func.func @transform_17(%arg0: i32, %arg1: memref<1xi32, #tpu.memory_space<smem>>) -> (i32, i32, i32) {
    %c0_i32 = arith.constant 0 : i32
    %c0_i32_0 = arith.constant 0 : i32
    %c0_i32_1 = arith.constant 0 : i32
    %c0_i32_2 = arith.constant 0 : i32
    return %c0_i32, %c0_i32_0, %c0_i32_1 : i32, i32, i32
  }
  func.func @transform_18(%arg0: i32, %arg1: memref<1xi32, #tpu.memory_space<smem>>) -> (i32, i32, i32) {
    %c0_i32 = arith.constant 0 : i32
    %c0_i32_0 = arith.constant 0 : i32
    %c0_i32_1 = arith.constant 0 : i32
    %c0_i32_2 = arith.constant 0 : i32
    return %c0_i32, %c0_i32_0, %c0_i32_1 : i32, i32, i32
  }
  func.func @transform_19(%arg0: i32, %arg1: memref<1xi32, #tpu.memory_space<smem>>) -> (i32, i32, i32) {
    %c0_i32 = arith.constant 0 : i32
    %c0_i32_0 = arith.constant 0 : i32
    %c0_i32_1 = arith.constant 0 : i32
    %c0_i32_2 = arith.constant 0 : i32
    return %c0_i32, %c0_i32_0, %c0_i32_1 : i32, i32, i32
  }
  func.func @transform_20(%arg0: i32, %arg1: memref<1xi32, #tpu.memory_space<smem>>) -> (i32, i32, i32) {
    %c0_i32 = arith.constant 0 : i32
    %c0_i32_0 = arith.constant 0 : i32
    %c0_i32_1 = arith.constant 0 : i32
    %c0_i32_2 = arith.constant 0 : i32
    return %c0_i32, %c0_i32_0, %c0_i32_1 : i32, i32, i32
  }
  func.func @transform_21(%arg0: i32, %arg1: memref<1xi32, #tpu.memory_space<smem>>) -> (i32, i32, i32) {
    %c0_i32 = arith.constant 0 : i32
    %c0_i32_0 = arith.constant 0 : i32
    %c0_i32_1 = arith.constant 0 : i32
    %c0_i32_2 = arith.constant 0 : i32
    return %c0_i32, %c0_i32_0, %c0_i32_1 : i32, i32, i32
  }
  func.func @transform_22(%arg0: i32, %arg1: memref<1xi32, #tpu.memory_space<smem>>) -> (i32, i32, i32) {
    %c0_i32 = arith.constant 0 : i32
    %c0_i32_0 = arith.constant 0 : i32
    %c0_i32_1 = arith.constant 0 : i32
    %c0_i32_2 = arith.constant 0 : i32
    return %c0_i32, %c0_i32_0, %c0_i32_1 : i32, i32, i32
  }
  func.func @transform_23(%arg0: i32, %arg1: memref<1xi32, #tpu.memory_space<smem>>) -> (i32, i32, i32) {
    %c0_i32 = arith.constant 0 : i32
    %c0_i32_0 = arith.constant 0 : i32
    %c0_i32_1 = arith.constant 0 : i32
    %c0_i32_2 = arith.constant 0 : i32
    return %c0_i32, %c0_i32_0, %c0_i32_1 : i32, i32, i32
  }
  func.func @transform_24(%arg0: i32, %arg1: memref<1xi32, #tpu.memory_space<smem>>) -> (i32, i32) {
    %c0_i32 = arith.constant 0 : i32
    %c0_i32_0 = arith.constant 0 : i32
    %c0_i32_1 = arith.constant 0 : i32
    return %c0_i32, %c0_i32_0 : i32, i32
  }
  func.func @transform_25(%arg0: i32, %arg1: memref<1xi32, #tpu.memory_space<smem>>) -> (i32, i32) {
    %c0_i32 = arith.constant 0 : i32
    %c0_i32_0 = arith.constant 0 : i32
    %c0_i32_1 = arith.constant 0 : i32
    return %c0_i32, %c0_i32_0 : i32, i32
  }
  func.func @transform_26(%arg0: i32, %arg1: memref<1xi32, #tpu.memory_space<smem>>) -> (i32, i32) {
    %c0_i32 = arith.constant 0 : i32
    %c0_i32_0 = arith.constant 0 : i32
    return %arg0, %c0_i32 : i32, i32
  }
  func.func @transform_27(%arg0: i32, %arg1: memref<1xi32, #tpu.memory_space<smem>>) -> (i32, i32, i32) {
    %c0_i32 = arith.constant 0 : i32
    %c0_i32_0 = arith.constant 0 : i32
    %c0_i32_1 = arith.constant 0 : i32
    return %c0_i32, %arg0, %c0_i32_0 : i32, i32, i32
  }
  func.func @transform_28(%arg0: i32, %arg1: memref<1xi32, #tpu.memory_space<smem>>) -> (i32, i32, i32) {
    %c0_i32 = arith.constant 0 : i32
    %c0_i32_0 = arith.constant 0 : i32
    %c0_i32_1 = arith.constant 0 : i32
    return %c0_i32, %arg0, %c0_i32_0 : i32, i32, i32
  }
}

</mosaic_0001>

<llo_original>
// kernel: custom-call.10
$region0: #{custom-call.10}
  %s0 = inlined_call_operand.hbm [shape: f32[8,2], index: 0, kind: output, shape index: {}]

// kernel: custom-call.9
$region0: #{custom-call.9}
  %s0 = inlined_call_operand.hbm [shape: s32[8,2], index: 0, kind: output, shape index: {}]

// kernel: _lambda_.14
$region0: #{_lambda_.14}
  #allocation0 [shape = 'u32[]', space=smem, size = 0x4, offset = 0x4, fixed_abs, tag = 'smem constant byte address 0x4 - core index']
  #allocation1 [shape = 'u32[144,128]{1,0:T(1,128)}', space=vmem, size = 0x12000, scoped, tag = 'internal scratch']
  %s0 = inlined_call_operand.vmem [shape: f32[16,2], index: 0, kind: input, shape index: {}]
  %s1 = inlined_call_operand.vmem [shape: f32[2,32], index: 1, kind: input, shape index: {}]
  %s2 = inlined_call_operand.vmem [shape: f32[1,32], index: 2, kind: input, shape index: {}]
  %s3 = inlined_call_operand.vmem [shape: f32[16,32], index: 3, kind: output, shape index: {}]
  %s4 = sld [smem:[#allocation0]]
  $region22: #{_lambda_.14} parent=0
    _
  %s6 = ssub.s32 1, %s4
  %s7 = scalar_select 0, %s6, %s4
  // Predicated region
  $region2: #{_lambda_.14} parent=0 // pred_check
    _
  $region3: #{_lambda_.14} parent=0 // pred_check_branch
    %9 = sbr.rel (0) target = $region5
  $region4: #{_lambda_.14} parent=0 // pred_region
    _
  $region5: #{_lambda_.14} parent=0 // pred_fallthru
    _
  // Predicated region
  $region6: #{_lambda_.14} parent=0 // pred_check
    _
  $region7: #{_lambda_.14} parent=0 // pred_check_branch
    %11 = sbr.rel (0) target = $region9
  $region8: #{_lambda_.14} parent=0 // pred_region
    _
  $region9: #{_lambda_.14} parent=0 // pred_fallthru
    _
  // Predicated region
  $region10: #{_lambda_.14} parent=0 // pred_check
    _
  $region11: #{_lambda_.14} parent=0 // pred_check_branch
    %13 = sbr.rel (0) target = $region13
  $region12: #{_lambda_.14} parent=0 // pred_region
    _
  $region13: #{_lambda_.14} parent=0 // pred_fallthru
    _
  %v14 = vld [vmem:[%s0] sm:$0xff]
  %v15 = vld [vmem:[%s0 + $0x8] sm:$0xff]
  %v16 = vld [vmem:[%s1] sm:$0x3]
  %v17 = vld [vmem:[%s2] sm:$0x1]
  %v19 = vlaneseq
  %v20 = vshrl.u32 %v19, 7
  %v21 = vsub.s32 0, %v20
  %v22 = vrot.slane %v17, %v21
  %vm24 = vcmask 15360
  %v26 = vsel %vm24, %v14, 0
  %v29 = vsel %vm24, %v15, 0
  %vm31 = vcmask 1041408
  %v33 = vsel %vm31, %v16, 0
  %35 = vmatprep.subr.mxu0 0.0
  %36 = vmatpush1.msra.mxu0 %v33
  %37 = vmatprep.subr.mxu0 0.0
  %38 = vmatpush1.msra.mxu0 0.0
  %39 = vmatprep.subr.mxu0 0.0
  %40 = vmatpush1.msra.mxu0 0.0
  %41 = vmatprep.subr.mxu0 0.0
  %42 = vmatpush1.msra.mxu0 0.0
  %43 = vmatprep.subr.mxu0 0.0
  %44 = vmatpush1.msra.mxu0 0.0
  %45 = vmatprep.subr.mxu0 0.0
  %46 = vmatpush1.msra.mxu0 0.0
  %47 = vmatprep.subr.mxu0 0.0
  %48 = vmatpush1.msra.mxu0 0.0
  %49 = vmatprep.subr.mxu0 0.0
  %50 = vmatpush1.msra.mxu0 0.0
  %51 = vmatprep.subr.mxu0 0.0
  %52 = vmatpush1.msra.mxu0 0.0
  %53 = vmatprep.subr.mxu0 0.0
  %54 = vmatpush1.msra.mxu0 0.0
  %55 = vmatprep.subr.mxu0 0.0
  %56 = vmatpush1.msra.mxu0 0.0
  %57 = vmatprep.subr.mxu0 0.0
  %58 = vmatpush1.msra.mxu0 0.0
  %59 = vmatprep.subr.mxu0 0.0
  %60 = vmatpush1.msra.mxu0 0.0
  %61 = vmatprep.subr.mxu0 0.0
  %62 = vmatpush1.msra.mxu0 0.0
  %63 = vmatprep.subr.mxu0 0.0
  %64 = vmatpush1.msra.mxu0 0.0
  %65 = vmatprep.subr.mxu0 0.0
  %66 = vmatpush1.msra.mxu0 0.0
  %67 = vmatprep.subr.mxu0 0.0
  %68 = vmatpush1.msra.mxu0 0.0
  %69 = vmatprep.subr.mxu0 0.0
  %70 = vmatpush1.msra.mxu0 0.0
  %71 = vmatprep.subr.mxu0 0.0
  %72 = vmatpush1.msra.mxu0 0.0
  %73 = vmatprep.subr.mxu0 0.0
  %74 = vmatpush1.msra.mxu0 0.0
  %75 = vmatprep.subr.mxu0 0.0
  %76 = vmatpush1.msra.mxu0 0.0
  %77 = vmatprep.subr.mxu0 0.0
  %78 = vmatpush1.msra.mxu0 0.0
  %79 = vmatprep.subr.mxu0 0.0
  %80 = vmatpush1.msra.mxu0 0.0
  %81 = vmatprep.subr.mxu0 0.0
  %82 = vmatpush1.msra.mxu0 0.0
  %83 = vmatprep.subr.mxu0 0.0
  %84 = vmatpush1.msra.mxu0 0.0
  %85 = vmatprep.subr.mxu0 0.0
  %86 = vmatpush1.msra.mxu0 0.0
  %87 = vmatprep.subr.mxu0 0.0
  %88 = vmatpush1.msra.mxu0 0.0
  %89 = vmatprep.subr.mxu0 0.0
  %90 = vmatpush1.msra.mxu0 0.0
  %91 = vmatprep.subr.mxu0 0.0
  %92 = vmatpush1.msra.mxu0 0.0
  %93 = vmatprep.subr.mxu0 0.0
  %94 = vmatpush1.msra.mxu0 0.0
  %95 = vmatprep.subr.mxu0 0.0
  %96 = vmatpush1.msra.mxu0 0.0
  %97 = vmatprep.subr.mxu0 0.0
  %98 = vmatpush1.msra.mxu0 0.0
  %99 = vmatprep.mubr.f32.mxu0 0.0
  %100 = vmatmul.mubr.f32.gmra.mrb[0].mxu0 %v26
  %v101 = vpop.f32.mrb[0].mxu0
  %v102 = vadd.f32 %v22, %v101
  %v103 = vpop.f32.mrb[0].mxu0
  %104 = vmatprep.mubr.f32.mxu0 0.0
  %105 = vmatmul.mubr.f32.gmra.mrb[0].mxu0 %v29
  %v106 = vpop.f32.mrb[0].mxu0
  %v107 = vadd.f32 %v22, %v106
  %v108 = vpop.f32.mrb[0].mxu0
  %109 = vdwg.mxu0
  %vm110 = vcmask 261120
  %111 = vst.msk [vmem:[%s3] sm:$0xff] %vm110, %v102
  %112 = vst.msk [vmem:[%s3 + $0x8] sm:$0xff] %vm110, %v107
  // Predicated region
  $region14: #{_lambda_.14} parent=0 // pred_check
    _
  $region15: #{_lambda_.14} parent=0 // pred_check_branch
    %114 = sbr.rel (0) target = $region17
  $region16: #{_lambda_.14} parent=0 // pred_region
    _
  $region17: #{_lambda_.14} parent=0 // pred_fallthru
    _
  // Predicated region
  $region18: #{_lambda_.14} parent=0 // pred_check
    _
  $region19: #{_lambda_.14} parent=0 // pred_check_branch
    %116 = sbr.rel (0) target = $region21
  $region20: #{_lambda_.14} parent=0 // pred_region
    _
  $region21: #{_lambda_.14} parent=0 // pred_fallthru
    _

// kernel: _lambda_.16
$region0: #{_lambda_.16}
  #allocation0 [shape = 'u32[]', space=smem, size = 0x4, offset = 0x4, fixed_abs, tag = 'smem constant byte address 0x4 - core index']
  #allocation1 [shape = 'u32[144,128]{1,0:T(1,128)}', space=vmem, size = 0x12000, scoped, tag = 'internal scratch']
  %s0 = inlined_call_operand.vmem [shape: f32[24,32], index: 0, kind: input, shape index: {}]
  %s1 = inlined_call_operand.vmem [shape: f32[1,32], index: 1, kind: output, shape index: {0}]
  %s2 = inlined_call_operand.vmem [shape: f32[1,32], index: 2, kind: output, shape index: {1}]
  %3 = xla_tuple %s1, %s2
  %s4 = sld [smem:[#allocation0]]
  $region26: #{_lambda_.16} parent=0
    _
  %s6 = ssub.s32 1, %s4
  %s7 = scalar_select 0, %s6, %s4
  // Predicated region
  $region2: #{_lambda_.16} parent=0 // pred_check
    _
  $region3: #{_lambda_.16} parent=0 // pred_check_branch
    %9 = sbr.rel (0) target = $region5
  $region4: #{_lambda_.16} parent=0 // pred_region
    _
  $region5: #{_lambda_.16} parent=0 // pred_fallthru
    _
  %v10 = vld [vmem:[%s0] sm:$0xff]
  %v11 = vld [vmem:[%s0 + $0x8] sm:$0xff]
  %v12 = vld [vmem:[%s0 + $0x10] sm:$0xff]
  %p13 = scmp.eq.s32.totalorder 0, 0
  // Predicated region
  $region6: #{_lambda_.16} parent=0 // pred_check
    %p14 = pneg %p13
  $region7: #{_lambda_.16} parent=0 // pred_check_branch
    %16 = sbr.rel (%p14) target = $region9
  $region8: #{_lambda_.16} parent=0 // pred_region
    %vm17 = vcmask 253952
    %18 = vst.msk [vmem:[%s1] sm:$0x1] %vm17, 0.0
    %19 = vst.msk [vmem:[%s2] sm:$0x1] %vm17, 0.0
  $region9: #{_lambda_.16} parent=0 // pred_fallthru
    _
  %v20 = vld [vmem:[%s1] sm:$0x1]
  %vm21 = vcmask 261120
  %v22 = vsel %vm21, %v10, 0.0
  %v23 = vsel %vm21, %v11, 0.0
  %v24 = vadd.f32 %v22, %v23
  %v25 = vsel %vm21, %v12, 0.0
  %v26 = vadd.f32 %v24, %v25
  %v27 = vrot.slane %v26, 4
  %v28 = vadd.f32 %v26, %v27
  %v29 = vrot.slane %v28, 2
  %v30 = vadd.f32 %v28, %v29
  %v31 = vrot.slane %v30, 1
  %v32 = vadd.f32 %v30, %v31
  %v33 = vadd.f32 %v20, %v32
  %vm34 = vcmask 253952
  %35 = vst.msk [vmem:[%s1] sm:$0x1] %vm34, %v33
  %v36 = vld [vmem:[%s2] sm:$0x1]
  %v37 = vmul.f32 %v10, %v10
  %v38 = vmul.f32 %v11, %v11
  %v39 = vmul.f32 %v12, %v12
  %v40 = vsel %vm21, %v37, 0.0
  %v41 = vsel %vm21, %v38, 0.0
  %v42 = vadd.f32 %v40, %v41
  %v43 = vsel %vm21, %v39, 0.0
  %v44 = vadd.f32 %v42, %v43
  %v45 = vrot.slane %v44, 4
  %v46 = vadd.f32 %v44, %v45
  %v47 = vrot.slane %v46, 2
  %v48 = vadd.f32 %v46, %v47
  %v49 = vrot.slane %v48, 1
  %v50 = vadd.f32 %v48, %v49
  %v51 = vadd.f32 %v36, %v50
  %52 = vst.msk [vmem:[%s2] sm:$0x1] %vm34, %v51
  // Predicated region
  $region10: #{_lambda_.16} parent=0 // pred_check
    _
  $region11: #{_lambda_.16} parent=0 // pred_check_branch
    %54 = sbr.rel (0) target = $region13
  $region12: #{_lambda_.16} parent=0 // pred_region
    _
  $region13: #{_lambda_.16} parent=0 // pred_fallthru
    _
  // Predicated region
  $region14: #{_lambda_.16} parent=0 // pred_check
    _
  $region15: #{_lambda_.16} parent=0 // pred_check_branch
    %56 = sbr.rel (0) target = $region17
  $region16: #{_lambda_.16} parent=0 // pred_region
    _
  $region17: #{_lambda_.16} parent=0 // pred_fallthru
    _
  // Predicated region
  $region18: #{_lambda_.16} parent=0 // pred_check
    _
  $region19: #{_lambda_.16} parent=0 // pred_check_branch
    %58 = sbr.rel (0) target = $region21
  $region20: #{_lambda_.16} parent=0 // pred_region
    _
  $region21: #{_lambda_.16} parent=0 // pred_fallthru
    _
  // Predicated region
  $region22: #{_lambda_.16} parent=0 // pred_check
    _
  $region23: #{_lambda_.16} parent=0 // pred_check_branch
    %60 = sbr.rel (0) target = $region25
  $region24: #{_lambda_.16} parent=0 // pred_region
    _
  $region25: #{_lambda_.16} parent=0 // pred_fallthru
    _

// kernel: _lambda_.17
$region0: #{_lambda_.17}
  #allocation0 [shape = 'u32[]', space=smem, size = 0x4, offset = 0x4, fixed_abs, tag = 'smem constant byte address 0x4 - core index']
  #allocation1 [shape = 'u32[144,128]{1,0:T(1,128)}', space=vmem, size = 0x12000, scoped, tag = 'internal scratch']
  %s0 = inlined_call_operand.vmem [shape: f32[24,32], index: 0, kind: input, shape index: {}]
  %s1 = inlined_call_operand.vmem [shape: f32[1,32], index: 1, kind: input, shape index: {}]
  %s2 = inlined_call_operand.vmem [shape: f32[1,32], index: 2, kind: input, shape index: {}]
  %s3 = inlined_call_operand.vmem [shape: f32[1,32], index: 3, kind: input, shape index: {}]
  %s4 = inlined_call_operand.vmem [shape: f32[1,32], index: 4, kind: input, shape index: {}]
  %s5 = inlined_call_operand.vmem [shape: f32[24,32], index: 5, kind: output, shape index: {}]
  %s6 = sld [smem:[#allocation0]]
  $region30: #{_lambda_.17} parent=0
    _
  %s8 = ssub.s32 1, %s6
  %s9 = scalar_select 0, %s8, %s6
  // Predicated region
  $region2: #{_lambda_.17} parent=0 // pred_check
    _
  $region3: #{_lambda_.17} parent=0 // pred_check_branch
    %11 = sbr.rel (0) target = $region5
  $region4: #{_lambda_.17} parent=0 // pred_region
    _
  $region5: #{_lambda_.17} parent=0 // pred_fallthru
    _
  // Predicated region
  $region6: #{_lambda_.17} parent=0 // pred_check
    _
  $region7: #{_lambda_.17} parent=0 // pred_check_branch
    %13 = sbr.rel (0) target = $region9
  $region8: #{_lambda_.17} parent=0 // pred_region
    _
  $region9: #{_lambda_.17} parent=0 // pred_fallthru
    _
  // Predicated region
  $region10: #{_lambda_.17} parent=0 // pred_check
    _
  $region11: #{_lambda_.17} parent=0 // pred_check_branch
    %15 = sbr.rel (0) target = $region13
  $region12: #{_lambda_.17} parent=0 // pred_region
    _
  $region13: #{_lambda_.17} parent=0 // pred_fallthru
    _
  // Predicated region
  $region14: #{_lambda_.17} parent=0 // pred_check
    _
  $region15: #{_lambda_.17} parent=0 // pred_check_branch
    %17 = sbr.rel (0) target = $region17
  $region16: #{_lambda_.17} parent=0 // pred_region
    _
  $region17: #{_lambda_.17} parent=0 // pred_fallthru
    _
  // Predicated region
  $region18: #{_lambda_.17} parent=0 // pred_check
    _
  $region19: #{_lambda_.17} parent=0 // pred_check_branch
    %19 = sbr.rel (0) target = $region21
  $region20: #{_lambda_.17} parent=0 // pred_region
    _
  $region21: #{_lambda_.17} parent=0 // pred_fallthru
    _
  %v20 = vld [vmem:[%s1] sm:$0x1]
  %v21 = vmul.f32 %v20, 0.055555556
  %v22 = vld [vmem:[%s2] sm:$0x1]
  %v23 = vmul.f32 %v22, 0.055555556
  %v24 = vmul.f32 %v21, %v21
  %v25 = vsub.f32 %v23, %v24
  %v26 = vld [vmem:[%s0] sm:$0xff]
  %v27 = vld [vmem:[%s0 + $0x8] sm:$0xff]
  %v28 = vld [vmem:[%s0 + $0x10] sm:$0xff]
  %v30 = vlaneseq
  %v31 = vshrl.u32 %v30, 7
  %v32 = vsub.s32 0, %v31
  %v33 = vrot.slane %v21, %v32
  %v35 = vsub.f32 %v26, %v33
  %v36 = vsub.f32 %v27, %v33
  %v37 = vsub.f32 %v28, %v33
  %v38 = vadd.f32 %v25, 1e-05
  %v39 = vrsqrt.pop %v38
  %v41 = vlaneseq
  %v42 = vshrl.u32 %v41, 7
  %v43 = vsub.s32 0, %v42
  %v44 = vrot.slane %v39, %v43
  %v46 = vmul.f32 %v35, %v44
  %v47 = vmul.f32 %v36, %v44
  %v48 = vmul.f32 %v37, %v44
  %v49 = vld [vmem:[%s3] sm:$0x1]
  %v51 = vlaneseq
  %v52 = vshrl.u32 %v51, 7
  %v53 = vsub.s32 0, %v52
  %v54 = vrot.slane %v49, %v53
  %v56 = vmul.f32 %v46, %v54
  %v57 = vmul.f32 %v47, %v54
  %v58 = vmul.f32 %v48, %v54
  %v59 = vld [vmem:[%s4] sm:$0x1]
  %v61 = vlaneseq
  %v62 = vshrl.u32 %v61, 7
  %v63 = vsub.s32 0, %v62
  %v64 = vrot.slane %v59, %v63
  %v66 = vadd.f32 %v56, %v64
  %v67 = vadd.f32 %v57, %v64
  %v68 = vadd.f32 %v58, %v64
  %vm69 = vcmask 261120
  %70 = vst.msk [vmem:[%s5] sm:$0xff] %vm69, %v66
  %71 = vst.msk [vmem:[%s5 + $0x8] sm:$0xff] %vm69, %v67
  %72 = vst.msk [vmem:[%s5 + $0x10] sm:$0xff] %vm69, %v68
  // Predicated region
  $region22: #{_lambda_.17} parent=0 // pred_check
    _
  $region23: #{_lambda_.17} parent=0 // pred_check_branch
    %74 = sbr.rel (0) target = $region25
  $region24: #{_lambda_.17} parent=0 // pred_region
    _
  $region25: #{_lambda_.17} parent=0 // pred_fallthru
    _
  // Predicated region
  $region26: #{_lambda_.17} parent=0 // pred_check
    _
  $region27: #{_lambda_.17} parent=0 // pred_check_branch
    %76 = sbr.rel (0) target = $region29
  $region28: #{_lambda_.17} parent=0 // pred_region
    _
  $region29: #{_lambda_.17} parent=0 // pred_fallthru
    _

// kernel: _lambda_.18
$region0: #{_lambda_.18}
  #allocation0 [shape = 'u32[]', space=smem, size = 0x4, offset = 0x4, fixed_abs, tag = 'smem constant byte address 0x4 - core index']
  #allocation1 [shape = 'u32[144,128]{1,0:T(1,128)}', space=vmem, size = 0x12000, scoped, tag = 'internal scratch']
  %s0 = inlined_call_operand.vmem [shape: f32[24,32], index: 0, kind: input, shape index: {}]
  %s1 = inlined_call_operand.vmem [shape: f32[32,64], index: 1, kind: input, shape index: {}]
  %s2 = inlined_call_operand.vmem [shape: f32[1,64], index: 2, kind: input, shape index: {}]
  %s3 = inlined_call_operand.vmem [shape: f32[64,32], index: 3, kind: input, shape index: {}]
  %s4 = inlined_call_operand.vmem [shape: f32[1,32], index: 4, kind: input, shape index: {}]
  %s5 = inlined_call_operand.vmem [shape: f32[1,32], index: 5, kind: input, shape index: {}]
  %s6 = inlined_call_operand.vmem [shape: f32[1,32], index: 6, kind: input, shape index: {}]
  %s7 = inlined_call_operand.vmem [shape: f32[24,32], index: 7, kind: output, shape index: {}]
  %s8 = sld [smem:[#allocation0]]
  $region38: #{_lambda_.18} parent=0
    _
  %s10 = ssub.s32 1, %s8
  %s11 = scalar_select 0, %s10, %s8
  // Predicated region
  $region2: #{_lambda_.18} parent=0 // pred_check
    _
  $region3: #{_lambda_.18} parent=0 // pred_check_branch
    %13 = sbr.rel (0) target = $region5
  $region4: #{_lambda_.18} parent=0 // pred_region
    _
  $region5: #{_lambda_.18} parent=0 // pred_fallthru
    _
  // Predicated region
  $region6: #{_lambda_.18} parent=0 // pred_check
    _
  $region7: #{_lambda_.18} parent=0 // pred_check_branch
    %15 = sbr.rel (0) target = $region9
  $region8: #{_lambda_.18} parent=0 // pred_region
    _
  $region9: #{_lambda_.18} parent=0 // pred_fallthru
    _
  // Predicated region
  $region10: #{_lambda_.18} parent=0 // pred_check
    _
  $region11: #{_lambda_.18} parent=0 // pred_check_branch
    %17 = sbr.rel (0) target = $region13
  $region12: #{_lambda_.18} parent=0 // pred_region
    _
  $region13: #{_lambda_.18} parent=0 // pred_fallthru
    _
  // Predicated region
  $region14: #{_lambda_.18} parent=0 // pred_check
    _
  $region15: #{_lambda_.18} parent=0 // pred_check_branch
    %19 = sbr.rel (0) target = $region17
  $region16: #{_lambda_.18} parent=0 // pred_region
    _
  $region17: #{_lambda_.18} parent=0 // pred_fallthru
    _
  // Predicated region
  $region18: #{_lambda_.18} parent=0 // pred_check
    _
  $region19: #{_lambda_.18} parent=0 // pred_check_branch
    %21 = sbr.rel (0) target = $region21
  $region20: #{_lambda_.18} parent=0 // pred_region
    _
  $region21: #{_lambda_.18} parent=0 // pred_fallthru
    _
  // Predicated region
  $region22: #{_lambda_.18} parent=0 // pred_check
    _
  $region23: #{_lambda_.18} parent=0 // pred_check_branch
    %23 = sbr.rel (0) target = $region25
  $region24: #{_lambda_.18} parent=0 // pred_region
    _
  $region25: #{_lambda_.18} parent=0 // pred_fallthru
    _
  // Predicated region
  $region26: #{_lambda_.18} parent=0 // pred_check
    _
  $region27: #{_lambda_.18} parent=0 // pred_check_branch
    %25 = sbr.rel (0) target = $region29
  $region28: #{_lambda_.18} parent=0 // pred_region
    _
  $region29: #{_lambda_.18} parent=0 // pred_fallthru
    _
  %v26 = vld [vmem:[%s0] sm:$0xff]
  %v27 = vld [vmem:[%s0 + $0x8] sm:$0xff]
  %v28 = vld [vmem:[%s0 + $0x10] sm:$0xff]
  %v29 = vld [vmem:[%s1] sm:$0xff]
  %v30 = vld [vmem:[%s1 + $0x8] sm:$0xff]
  %v31 = vld [vmem:[%s1 + $0x10] sm:$0xff]
  %v32 = vld [vmem:[%s1 + $0x18] sm:$0xff]
  %v33 = vld [vmem:[%s2] sm:$0x1]
  %v35 = vlaneseq
  %v36 = vshrl.u32 %v35, 7
  %v37 = vsub.s32 0, %v36
  %v38 = vrot.slane %v33, %v37
  %vm40 = vcmask 261120
  %v42 = vsel %vm40, %v26, 0
  %v45 = vsel %vm40, %v27, 0
  %v48 = vsel %vm40, %v28, 0
  %50 = vmatprep.subr.mxu0 0.0
  %51 = vmatpush1.msra.mxu0 %v29
  %52 = vmatprep.subr.mxu0 0.0
  %53 = vmatpush1.msra.mxu0 %v30
  %54 = vmatprep.subr.mxu0 0.0
  %55 = vmatpush1.msra.mxu0 %v31
  %56 = vmatprep.subr.mxu0 0.0
  %57 = vmatpush1.msra.mxu0 %v32
  %58 = vmatprep.subr.mxu0 0.0
  %59 = vmatpush1.msra.mxu0 0.0
  %60 = vmatprep.subr.mxu0 0.0
  %61 = vmatpush1.msra.mxu0 0.0
  %62 = vmatprep.subr.mxu0 0.0
  %63 = vmatpush1.msra.mxu0 0.0
  %64 = vmatprep.subr.mxu0 0.0
  %65 = vmatpush1.msra.mxu0 0.0
  %66 = vmatprep.subr.mxu0 0.0
  %67 = vmatpush1.msra.mxu0 0.0
  %68 = vmatprep.subr.mxu0 0.0
  %69 = vmatpush1.msra.mxu0 0.0
  %70 = vmatprep.subr.mxu0 0.0
  %71 = vmatpush1.msra.mxu0 0.0
  %72 = vmatprep.subr.mxu0 0.0
  %73 = vmatpush1.msra.mxu0 0.0
  %74 = vmatprep.subr.mxu0 0.0
  %75 = vmatpush1.msra.mxu0 0.0
  %76 = vmatprep.subr.mxu0 0.0
  %77 = vmatpush1.msra.mxu0 0.0
  %78 = vmatprep.subr.mxu0 0.0
  %79 = vmatpush1.msra.mxu0 0.0
  %80 = vmatprep.subr.mxu0 0.0
  %81 = vmatpush1.msra.mxu0 0.0
  %82 = vmatprep.subr.mxu0 0.0
  %83 = vmatpush1.msra.mxu0 0.0
  %84 = vmatprep.subr.mxu0 0.0
  %85 = vmatpush1.msra.mxu0 0.0
  %86 = vmatprep.subr.mxu0 0.0
  %87 = vmatpush1.msra.mxu0 0.0
  %88 = vmatprep.subr.mxu0 0.0
  %89 = vmatpush1.msra.mxu0 0.0
  %90 = vmatprep.subr.mxu0 0.0
  %91 = vmatpush1.msra.mxu0 0.0
  %92 = vmatprep.subr.mxu0 0.0
  %93 = vmatpush1.msra.mxu0 0.0
  %94 = vmatprep.subr.mxu0 0.0
  %95 = vmatpush1.msra.mxu0 0.0
  %96 = vmatprep.subr.mxu0 0.0
  %97 = vmatpush1.msra.mxu0 0.0
  %98 = vmatprep.subr.mxu0 0.0
  %99 = vmatpush1.msra.mxu0 0.0
  %100 = vmatprep.subr.mxu0 0.0
  %101 = vmatpush1.msra.mxu0 0.0
  %102 = vmatprep.subr.mxu0 0.0
  %103 = vmatpush1.msra.mxu0 0.0
  %104 = vmatprep.subr.mxu0 0.0
  %105 = vmatpush1.msra.mxu0 0.0
  %106 = vmatprep.subr.mxu0 0.0
  %107 = vmatpush1.msra.mxu0 0.0
  %108 = vmatprep.subr.mxu0 0.0
  %109 = vmatpush1.msra.mxu0 0.0
  %110 = vmatprep.subr.mxu0 0.0
  %111 = vmatpush1.msra.mxu0 0.0
  %112 = vmatprep.subr.mxu0 0.0
  %113 = vmatpush1.msra.mxu0 0.0
  %114 = vmatprep.mubr.f32.mxu0 0.0
  %115 = vmatmul.mubr.f32.gmra.mrb[0].mxu0 %v42
  %v116 = vpop.f32.mrb[0].mxu0
  %v117 = vadd.f32 %v38, %v116
  %v118 = vpop.f32.mrb[0].mxu0
  %119 = vmatprep.mubr.f32.mxu0 0.0
  %120 = vmatmul.mubr.f32.gmra.mrb[0].mxu0 %v45
  %v121 = vpop.f32.mrb[0].mxu0
  %v122 = vadd.f32 %v38, %v121
  %v123 = vpop.f32.mrb[0].mxu0
  %124 = vmatprep.mubr.f32.mxu0 0.0
  %125 = vmatmul.mubr.f32.gmra.mrb[0].mxu0 %v48
  %v126 = vpop.f32.mrb[0].mxu0
  %v127 = vadd.f32 %v38, %v126
  %v128 = vpop.f32.mrb[0].mxu0
  %129 = vdwg.mxu0
  %v130 = vmax.f32 %v117, 0.0
  %v131 = vmax.f32 %v122, 0.0
  %v132 = vmax.f32 %v127, 0.0
  %v133 = vld [vmem:[%s3] sm:$0xff]
  %v134 = vld [vmem:[%s3 + $0x8] sm:$0xff]
  %v135 = vld [vmem:[%s3 + $0x10] sm:$0xff]
  %v136 = vld [vmem:[%s3 + $0x18] sm:$0xff]
  %v137 = vld [vmem:[%s3 + $0x20] sm:$0xff]
  %v138 = vld [vmem:[%s3 + $0x28] sm:$0xff]
  %v139 = vld [vmem:[%s3 + $0x30] sm:$0xff]
  %v140 = vld [vmem:[%s3 + $0x38] sm:$0xff]
  %vm141 = vcmask 523264
  %v143 = vsel %vm141, %v130, 0
  %v146 = vsel %vm141, %v131, 0
  %v149 = vsel %vm141, %v132, 0
  %151 = vmatprep.subr.mxu0 0.0
  %152 = vmatpush1.msra.mxu0 %v133
  %153 = vmatprep.subr.mxu0 0.0
  %154 = vmatpush1.msra.mxu0 %v134
  %155 = vmatprep.subr.mxu0 0.0
  %156 = vmatpush1.msra.mxu0 %v135
  %157 = vmatprep.subr.mxu0 0.0
  %158 = vmatpush1.msra.mxu0 %v136
  %159 = vmatprep.subr.mxu0 0.0
  %160 = vmatpush1.msra.mxu0 %v137
  %161 = vmatprep.subr.mxu0 0.0
  %162 = vmatpush1.msra.mxu0 %v138
  %163 = vmatprep.subr.mxu0 0.0
  %164 = vmatpush1.msra.mxu0 %v139
  %165 = vmatprep.subr.mxu0 0.0
  %166 = vmatpush1.msra.mxu0 %v140
  %167 = vmatprep.subr.mxu0 0.0
  %168 = vmatpush1.msra.mxu0 0.0
  %169 = vmatprep.subr.mxu0 0.0
  %170 = vmatpush1.msra.mxu0 0.0
  %171 = vmatprep.subr.mxu0 0.0
  %172 = vmatpush1.msra.mxu0 0.0
  %173 = vmatprep.subr.mxu0 0.0
  %174 = vmatpush1.msra.mxu0 0.0
  %175 = vmatprep.subr.mxu0 0.0
  %176 = vmatpush1.msra.mxu0 0.0
  %177 = vmatprep.subr.mxu0 0.0
  %178 = vmatpush1.msra.mxu0 0.0
  %179 = vmatprep.subr.mxu0 0.0
  %180 = vmatpush1.msra.mxu0 0.0
  %181 = vmatprep.subr.mxu0 0.0
  %182 = vmatpush1.msra.mxu0 0.0
  %183 = vmatprep.subr.mxu0 0.0
  %184 = vmatpush1.msra.mxu0 0.0
  %185 = vmatprep.subr.mxu0 0.0
  %186 = vmatpush1.msra.mxu0 0.0
  %187 = vmatprep.subr.mxu0 0.0
  %188 = vmatpush1.msra.mxu0 0.0
  %189 = vmatprep.subr.mxu0 0.0
  %190 = vmatpush1.msra.mxu0 0.0
  %191 = vmatprep.subr.mxu0 0.0
  %192 = vmatpush1.msra.mxu0 0.0
  %193 = vmatprep.subr.mxu0 0.0
  %194 = vmatpush1.msra.mxu0 0.0
  %195 = vmatprep.subr.mxu0 0.0
  %196 = vmatpush1.msra.mxu0 0.0
  %197 = vmatprep.subr.mxu0 0.0
  %198 = vmatpush1.msra.mxu0 0.0
  %199 = vmatprep.subr.mxu0 0.0
  %200 = vmatpush1.msra.mxu0 0.0
  %201 = vmatprep.subr.mxu0 0.0
  %202 = vmatpush1.msra.mxu0 0.0
  %203 = vmatprep.subr.mxu0 0.0
  %204 = vmatpush1.msra.mxu0 0.0
  %205 = vmatprep.subr.mxu0 0.0
  %206 = vmatpush1.msra.mxu0 0.0
  %207 = vmatprep.subr.mxu0 0.0
  %208 = vmatpush1.msra.mxu0 0.0
  %209 = vmatprep.subr.mxu0 0.0
  %210 = vmatpush1.msra.mxu0 0.0
  %211 = vmatprep.subr.mxu0 0.0
  %212 = vmatpush1.msra.mxu0 0.0
  %213 = vmatprep.subr.mxu0 0.0
  %214 = vmatpush1.msra.mxu0 0.0
  %215 = vmatprep.mubr.f32.mxu0 0.0
  %216 = vmatmul.mubr.f32.gmra.mrb[0].mxu0 %v143
  %v217 = vpop.f32.mrb[0].mxu0
  %v218 = vadd.f32 0.0, %v217
  %v219 = vpop.f32.mrb[0].mxu0
  %220 = vmatprep.mubr.f32.mxu0 0.0
  %221 = vmatmul.mubr.f32.gmra.mrb[0].mxu0 %v146
  %v222 = vpop.f32.mrb[0].mxu0
  %v223 = vadd.f32 0.0, %v222
  %v224 = vpop.f32.mrb[0].mxu0
  %225 = vmatprep.mubr.f32.mxu0 0.0
  %226 = vmatmul.mubr.f32.gmra.mrb[0].mxu0 %v149
  %v227 = vpop.f32.mrb[0].mxu0
  %v228 = vadd.f32 0.0, %v227
  %v229 = vpop.f32.mrb[0].mxu0
  %230 = vdwg.mxu0
  %v231 = vadd.f32 %v26, %v218
  %v232 = vadd.f32 %v27, %v223
  %v233 = vadd.f32 %v28, %v228
  %v234 = vld [vmem:[%s4] sm:$0x1]
  %v236 = vlaneseq
  %v237 = vshrl.u32 %v236, 7
  %v238 = vsub.s32 0, %v237
  %v239 = vrot.slane %v234, %v238
  %v241 = vadd.f32 %v231, %v239
  %v242 = vadd.f32 %v232, %v239
  %v243 = vadd.f32 %v233, %v239
  %244 = vst.msk [vmem:[%s7] sm:$0xff] %vm40, %v241
  %245 = vst.msk [vmem:[%s7 + $0x8] sm:$0xff] %vm40, %v242
  %246 = vst.msk [vmem:[%s7 + $0x10] sm:$0xff] %vm40, %v243
  // Predicated region
  $region30: #{_lambda_.18} parent=0 // pred_check
    _
  $region31: #{_lambda_.18} parent=0 // pred_check_branch
    %248 = sbr.rel (0) target = $region33
  $region32: #{_lambda_.18} parent=0 // pred_region
    _
  $region33: #{_lambda_.18} parent=0 // pred_fallthru
    _
  // Predicated region
  $region34: #{_lambda_.18} parent=0 // pred_check
    _
  $region35: #{_lambda_.18} parent=0 // pred_check_branch
    %250 = sbr.rel (0) target = $region37
  $region36: #{_lambda_.18} parent=0 // pred_region
    _
  $region37: #{_lambda_.18} parent=0 // pred_fallthru
    _

// kernel: _lambda_.27
$region0: #{_lambda_.27}
  #allocation0 [shape = 'u32[]', space=smem, size = 0x4, offset = 0x4, fixed_abs, tag = 'smem constant byte address 0x4 - core index']
  #allocation1 [shape = 'u32[144,128]{1,0:T(1,128)}', space=vmem, size = 0x12000, scoped, tag = 'internal scratch']
  %s0 = inlined_call_operand.vmem [shape: f32[24,32], index: 0, kind: input, shape index: {}]
  %s1 = inlined_call_operand.vmem [shape: f32[32,128], index: 1, kind: input, shape index: {}]
  %s2 = inlined_call_operand.vmem [shape: f32[1,128], index: 2, kind: input, shape index: {}]
  %s3 = inlined_call_operand.vmem [shape: f32[24,128], index: 3, kind: output, shape index: {}]
  %s4 = sld [smem:[#allocation0]]
  $region22: #{_lambda_.27} parent=0
    _
  %s6 = ssub.s32 1, %s4
  %s7 = scalar_select 0, %s6, %s4
  // Predicated region
  $region2: #{_lambda_.27} parent=0 // pred_check
    _
  $region3: #{_lambda_.27} parent=0 // pred_check_branch
    %9 = sbr.rel (0) target = $region5
  $region4: #{_lambda_.27} parent=0 // pred_region
    _
  $region5: #{_lambda_.27} parent=0 // pred_fallthru
    _
  // Predicated region
  $region6: #{_lambda_.27} parent=0 // pred_check
    _
  $region7: #{_lambda_.27} parent=0 // pred_check_branch
    %11 = sbr.rel (0) target = $region9
  $region8: #{_lambda_.27} parent=0 // pred_region
    _
  $region9: #{_lambda_.27} parent=0 // pred_fallthru
    _
  // Predicated region
  $region10: #{_lambda_.27} parent=0 // pred_check
    _
  $region11: #{_lambda_.27} parent=0 // pred_check_branch
    %13 = sbr.rel (0) target = $region13
  $region12: #{_lambda_.27} parent=0 // pred_region
    _
  $region13: #{_lambda_.27} parent=0 // pred_fallthru
    _
  %v14 = vld [vmem:[%s0] sm:$0xff]
  %v15 = vld [vmem:[%s0 + $0x8] sm:$0xff]
  %v16 = vld [vmem:[%s0 + $0x10] sm:$0xff]
  %v17 = vld [vmem:[%s1] sm:$0xff]
  %v18 = vld [vmem:[%s1 + $0x8] sm:$0xff]
  %v19 = vld [vmem:[%s1 + $0x10] sm:$0xff]
  %v20 = vld [vmem:[%s1 + $0x18] sm:$0xff]
  %v21 = vld [vmem:[%s2] sm:$0x1]
  %v23 = vlaneseq
  %v24 = vshrl.u32 %v23, 7
  %v25 = vsub.s32 0, %v24
  %v26 = vrot.slane %v21, %v25
  %vm28 = vcmask 261120
  %v30 = vsel %vm28, %v14, 0
  %v33 = vsel %vm28, %v15, 0
  %v36 = vsel %vm28, %v16, 0
  %38 = vmatprep.subr.mxu0 0.0
  %39 = vmatpush1.msra.mxu0 %v17
  %40 = vmatprep.subr.mxu0 0.0
  %41 = vmatpush1.msra.mxu0 %v18
  %42 = vmatprep.subr.mxu0 0.0
  %43 = vmatpush1.msra.mxu0 %v19
  %44 = vmatprep.subr.mxu0 0.0
  %45 = vmatpush1.msra.mxu0 %v20
  %46 = vmatprep.subr.mxu0 0.0
  %47 = vmatpush1.msra.mxu0 0.0
  %48 = vmatprep.subr.mxu0 0.0
  %49 = vmatpush1.msra.mxu0 0.0
  %50 = vmatprep.subr.mxu0 0.0
  %51 = vmatpush1.msra.mxu0 0.0
  %52 = vmatprep.subr.mxu0 0.0
  %53 = vmatpush1.msra.mxu0 0.0
  %54 = vmatprep.subr.mxu0 0.0
  %55 = vmatpush1.msra.mxu0 0.0
  %56 = vmatprep.subr.mxu0 0.0
  %57 = vmatpush1.msra.mxu0 0.0
  %58 = vmatprep.subr.mxu0 0.0
  %59 = vmatpush1.msra.mxu0 0.0
  %60 = vmatprep.subr.mxu0 0.0
  %61 = vmatpush1.msra.mxu0 0.0
  %62 = vmatprep.subr.mxu0 0.0
  %63 = vmatpush1.msra.mxu0 0.0
  %64 = vmatprep.subr.mxu0 0.0
  %65 = vmatpush1.msra.mxu0 0.0
  %66 = vmatprep.subr.mxu0 0.0
  %67 = vmatpush1.msra.mxu0 0.0
  %68 = vmatprep.subr.mxu0 0.0
  %69 = vmatpush1.msra.mxu0 0.0
  %70 = vmatprep.subr.mxu0 0.0
  %71 = vmatpush1.msra.mxu0 0.0
  %72 = vmatprep.subr.mxu0 0.0
  %73 = vmatpush1.msra.mxu0 0.0
  %74 = vmatprep.subr.mxu0 0.0
  %75 = vmatpush1.msra.mxu0 0.0
  %76 = vmatprep.subr.mxu0 0.0
  %77 = vmatpush1.msra.mxu0 0.0
  %78 = vmatprep.subr.mxu0 0.0
  %79 = vmatpush1.msra.mxu0 0.0
  %80 = vmatprep.subr.mxu0 0.0
  %81 = vmatpush1.msra.mxu0 0.0
  %82 = vmatprep.subr.mxu0 0.0
  %83 = vmatpush1.msra.mxu0 0.0
  %84 = vmatprep.subr.mxu0 0.0
  %85 = vmatpush1.msra.mxu0 0.0
  %86 = vmatprep.subr.mxu0 0.0
  %87 = vmatpush1.msra.mxu0 0.0
  %88 = vmatprep.subr.mxu0 0.0
  %89 = vmatpush1.msra.mxu0 0.0
  %90 = vmatprep.subr.mxu0 0.0
  %91 = vmatpush1.msra.mxu0 0.0
  %92 = vmatprep.subr.mxu0 0.0
  %93 = vmatpush1.msra.mxu0 0.0
  %94 = vmatprep.subr.mxu0 0.0
  %95 = vmatpush1.msra.mxu0 0.0
  %96 = vmatprep.subr.mxu0 0.0
  %97 = vmatpush1.msra.mxu0 0.0
  %98 = vmatprep.subr.mxu0 0.0
  %99 = vmatpush1.msra.mxu0 0.0
  %100 = vmatprep.subr.mxu0 0.0
  %101 = vmatpush1.msra.mxu0 0.0
  %102 = vmatprep.mubr.f32.mxu0 0.0
  %103 = vmatmul.mubr.f32.gmra.mrb[0].mxu0 %v30
  %v104 = vpop.f32.mrb[0].mxu0
  %v105 = vadd.f32 %v26, %v104
  %v106 = vpop.f32.mrb[0].mxu0
  %107 = vmatprep.mubr.f32.mxu0 0.0
  %108 = vmatmul.mubr.f32.gmra.mrb[0].mxu0 %v33
  %v109 = vpop.f32.mrb[0].mxu0
  %v110 = vadd.f32 %v26, %v109
  %v111 = vpop.f32.mrb[0].mxu0
  %112 = vmatprep.mubr.f32.mxu0 0.0
  %113 = vmatmul.mubr.f32.gmra.mrb[0].mxu0 %v36
  %v114 = vpop.f32.mrb[0].mxu0
  %v115 = vadd.f32 %v26, %v114
  %v116 = vpop.f32.mrb[0].mxu0
  %117 = vdwg.mxu0
  %118 = vst [vmem:[%s3] sm:$0xff] %v105
  %119 = vst [vmem:[%s3 + $0x8] sm:$0xff] %v110
  %120 = vst [vmem:[%s3 + $0x10] sm:$0xff] %v115
  // Predicated region
  $region14: #{_lambda_.27} parent=0 // pred_check
    _
  $region15: #{_lambda_.27} parent=0 // pred_check_branch
    %122 = sbr.rel (0) target = $region17
  $region16: #{_lambda_.27} parent=0 // pred_region
    _
  $region17: #{_lambda_.27} parent=0 // pred_fallthru
    _
  // Predicated region
  $region18: #{_lambda_.27} parent=0 // pred_check
    _
  $region19: #{_lambda_.27} parent=0 // pred_check_branch
    %124 = sbr.rel (0) target = $region21
  $region20: #{_lambda_.27} parent=0 // pred_region
    _
  $region21: #{_lambda_.27} parent=0 // pred_fallthru
    _

// kernel: _lambda_.15
$region0: #{_lambda_.15}
  #allocation0 [shape = 'u32[]', space=smem, size = 0x4, offset = 0x4, fixed_abs, tag = 'smem constant byte address 0x4 - core index']
  #allocation1 [shape = 'u32[144,128]{1,0:T(1,128)}', space=vmem, size = 0x12000, scoped, tag = 'internal scratch']
  %s0 = inlined_call_operand.vmem [shape: f32[2,9,32], index: 0, kind: input, shape index: {}]
  %s1 = inlined_call_operand.vmem [shape: f32[32,96], index: 1, kind: input, shape index: {}]
  %s2 = inlined_call_operand.vmem [shape: f32[1,96], index: 2, kind: input, shape index: {}]
  %s3 = inlined_call_operand.vmem [shape: f32[32,32], index: 3, kind: input, shape index: {}]
  %s4 = inlined_call_operand.vmem [shape: f32[1,32], index: 4, kind: input, shape index: {}]
  %s5 = inlined_call_operand.vmem [shape: f32[2,9,32], index: 5, kind: output, shape index: {}]
  %s6 = sld [smem:[#allocation0]]
  $region30: #{_lambda_.15} parent=0
    _
  %s8 = ssub.s32 1, %s6
  %s9 = scalar_select 0, %s8, %s6
  // Predicated region
  $region2: #{_lambda_.15} parent=0 // pred_check
    _
  $region3: #{_lambda_.15} parent=0 // pred_check_branch
    %11 = sbr.rel (0) target = $region5
  $region4: #{_lambda_.15} parent=0 // pred_region
    _
  $region5: #{_lambda_.15} parent=0 // pred_fallthru
    _
  // Predicated region
  $region6: #{_lambda_.15} parent=0 // pred_check
    _
  $region7: #{_lambda_.15} parent=0 // pred_check_branch
    %13 = sbr.rel (0) target = $region9
  $region8: #{_lambda_.15} parent=0 // pred_region
    _
  $region9: #{_lambda_.15} parent=0 // pred_fallthru
    _
  // Predicated region
  $region10: #{_lambda_.15} parent=0 // pred_check
    _
  $region11: #{_lambda_.15} parent=0 // pred_check_branch
    %15 = sbr.rel (0) target = $region13
  $region12: #{_lambda_.15} parent=0 // pred_region
    _
  $region13: #{_lambda_.15} parent=0 // pred_fallthru
    _
  // Predicated region
  $region14: #{_lambda_.15} parent=0 // pred_check
    _
  $region15: #{_lambda_.15} parent=0 // pred_check_branch
    %17 = sbr.rel (0) target = $region17
  $region16: #{_lambda_.15} parent=0 // pred_region
    _
  $region17: #{_lambda_.15} parent=0 // pred_fallthru
    _
  // Predicated region
  $region18: #{_lambda_.15} parent=0 // pred_check
    _
  $region19: #{_lambda_.15} parent=0 // pred_check_branch
    %19 = sbr.rel (0) target = $region21
  $region20: #{_lambda_.15} parent=0 // pred_region
    _
  $region21: #{_lambda_.15} parent=0 // pred_fallthru
    _
  %v20 = vld [vmem:[%s0] sm:$0xff]
  %v21 = vld [vmem:[%s0 + $0x8] sm:$0x1]
  %v22 = vld [vmem:[%s0 + $0x10] sm:$0xff]
  %v23 = vld [vmem:[%s0 + $0x18] sm:$0x1]
  %v28 = vcombine.high %v20, %v20
  %v30 = vunpack.c.l.s4 1966171168
  %v31 = vunpack.c.0.s8 %v30
  %v32 = vlaneseq
  %v33 = vshrl.u32 %v32, 7
  %v34 = vsub.s32 %v31, %v33
  %v35 = vrot.slane %v20, %v34
  %v37 = vunpack.c.l.s4 1966171168
  %v38 = vunpack.c.0.s8 %v37
  %v39 = vlaneseq
  %v40 = vshrl.u32 %v39, 7
  %v41 = vsub.s32 %v38, %v40
  %v42 = vrot.slane %v28, %v41
  %v43 = vcombine.high %v35, %v35
  %v44 = vcombine.high %v42, %v42
  %v46 = vunpack.c.l.s4 1966171168
  %v47 = vunpack.c.0.s8 %v46
  %v48 = vlaneseq
  %v49 = vshrl.u32 %v48, 7
  %v50 = vsub.s32 %v47, %v49
  %v51 = vrot.slane %v35, %v50
  %v53 = vunpack.c.l.s4 1966171168
  %v54 = vunpack.c.0.s8 %v53
  %v55 = vlaneseq
  %v56 = vshrl.u32 %v55, 7
  %v57 = vsub.s32 %v54, %v56
  %v58 = vrot.slane %v42, %v57
  %v60 = vunpack.c.l.s4 1966171168
  %v61 = vunpack.c.0.s8 %v60
  %v62 = vlaneseq
  %v63 = vshrl.u32 %v62, 7
  %v64 = vsub.s32 %v61, %v63
  %v65 = vrot.slane %v43, %v64
  %v67 = vunpack.c.l.s4 1966171168
  %v68 = vunpack.c.0.s8 %v67
  %v69 = vlaneseq
  %v70 = vshrl.u32 %v69, 7
  %v71 = vsub.s32 %v68, %v70
  %v72 = vrot.slane %v44, %v71
  %v73 = vcombine.high %v51, %v51
  %v74 = vcombine.high %v58, %v58
  %v75 = vcombine.high %v65, %v65
  %v76 = vcombine.high %v72, %v72
  %v78 = vunpack.c.l.s4 1966171168
  %v79 = vunpack.c.0.s8 %v78
  %v80 = vlaneseq
  %v81 = vshrl.u32 %v80, 7
  %v82 = vsub.s32 %v79, %v81
  %v83 = vrot.slane %v21, %v82
  %v85 = vunpack.c.l.s4 1966171168
  %v86 = vunpack.c.0.s8 %v85
  %v87 = vlaneseq
  %v88 = vshrl.u32 %v87, 7
  %v89 = vsub.s32 %v86, %v88
  %v90 = vrot.slane %v83, %v89
  %v91 = vcombine.high %v22, %v22
  %v93 = vunpack.c.l.s4 1966171168
  %v94 = vunpack.c.0.s8 %v93
  %v95 = vlaneseq
  %v96 = vshrl.u32 %v95, 7
  %v97 = vsub.s32 %v94, %v96
  %v98 = vrot.slane %v22, %v97
  %v100 = vunpack.c.l.s4 1966171168
  %v101 = vunpack.c.0.s8 %v100
  %v102 = vlaneseq
  %v103 = vshrl.u32 %v102, 7
  %v104 = vsub.s32 %v101, %v103
  %v105 = vrot.slane %v91, %v104
  %v106 = vcombine.high %v98, %v98
  %v107 = vcombine.high %v105, %v105
  %v109 = vunpack.c.l.s4 1966171168
  %v110 = vunpack.c.0.s8 %v109
  %v111 = vlaneseq
  %v112 = vshrl.u32 %v111, 7
  %v113 = vsub.s32 %v110, %v112
  %v114 = vrot.slane %v98, %v113
  %v116 = vunpack.c.l.s4 1966171168
  %v117 = vunpack.c.0.s8 %v116
  %v118 = vlaneseq
  %v119 = vshrl.u32 %v118, 7
  %v120 = vsub.s32 %v117, %v119
  %v121 = vrot.slane %v105, %v120
  %v123 = vunpack.c.l.s4 1966171168
  %v124 = vunpack.c.0.s8 %v123
  %v125 = vlaneseq
  %v126 = vshrl.u32 %v125, 7
  %v127 = vsub.s32 %v124, %v126
  %v128 = vrot.slane %v106, %v127
  %v130 = vunpack.c.l.s4 1966171168
  %v131 = vunpack.c.0.s8 %v130
  %v132 = vlaneseq
  %v133 = vshrl.u32 %v132, 7
  %v134 = vsub.s32 %v131, %v133
  %v135 = vrot.slane %v107, %v134
  %v136 = vcombine.high %v114, %v114
  %v137 = vcombine.high %v121, %v121
  %v138 = vcombine.high %v128, %v128
  %v139 = vcombine.high %v135, %v135
  %v141 = vunpack.c.l.s4 1966171168
  %v142 = vunpack.c.0.s8 %v141
  %v143 = vlaneseq
  %v144 = vshrl.u32 %v143, 7
  %v145 = vsub.s32 %v142, %v144
  %v146 = vrot.slane %v23, %v145
  %v148 = vunpack.c.l.s4 1966171168
  %v149 = vunpack.c.0.s8 %v148
  %v150 = vlaneseq
  %v151 = vshrl.u32 %v150, 7
  %v152 = vsub.s32 %v149, %v151
  %v153 = vrot.slane %v146, %v152
  %v172 = vld [vmem:[%s1] sm:$0xff]
  %v173 = vld [vmem:[%s1 + $0x8] sm:$0xff]
  %v174 = vld [vmem:[%s1 + $0x10] sm:$0xff]
  %v175 = vld [vmem:[%s1 + $0x18] sm:$0xff]
  %v176 = vld [vmem:[%s2] sm:$0x1]
  %v178 = vlaneseq
  %v179 = vshrl.u32 %v178, 7
  %v180 = vsub.s32 0, %v179
  %v181 = vrot.slane %v176, %v180
  %v183 = vcombine.low %v51, %v65
  %v184 = vcombine.low %v73, %v75
  %v185 = vcombine.low %v58, %v72
  %v186 = vcombine.low %v74, %v76
  %v188 = vunpack.c.l.s4 1966171168
  %v189 = vunpack.c.0.s8 %v188
  %v190 = vlaneseq
  %v191 = vshrl.u32 %v190, 7
  %v192 = vsub.s32 %v189, %v191
  %v193 = vrot.slane %v183, %v192
  %v195 = vunpack.c.l.s4 1966171168
  %v196 = vunpack.c.0.s8 %v195
  %v197 = vlaneseq
  %v198 = vshrl.u32 %v197, 7
  %v199 = vsub.s32 %v196, %v198
  %v200 = vrot.slane %v184, %v199
  %v202 = vunpack.c.l.s4 1966171168
  %v203 = vunpack.c.0.s8 %v202
  %v204 = vlaneseq
  %v205 = vshrl.u32 %v204, 7
  %v206 = vsub.s32 %v203, %v205
  %v207 = vrot.slane %v185, %v206
  %v209 = vunpack.c.l.s4 1966171168
  %v210 = vunpack.c.0.s8 %v209
  %v211 = vlaneseq
  %v212 = vshrl.u32 %v211, 7
  %v213 = vsub.s32 %v210, %v212
  %v214 = vrot.slane %v186, %v213
  %v215 = vcombine.low %v193, %v200
  %v216 = vcombine.low %v207, %v214
  %v218 = vunpack.c.l.s4 1966171168
  %v219 = vunpack.c.0.s8 %v218
  %v220 = vlaneseq
  %v221 = vshrl.u32 %v220, 7
  %v222 = vsub.s32 %v219, %v221
  %v223 = vrot.slane %v215, %v222
  %v225 = vunpack.c.l.s4 1966171168
  %v226 = vunpack.c.0.s8 %v225
  %v227 = vlaneseq
  %v228 = vshrl.u32 %v227, 7
  %v229 = vsub.s32 %v226, %v228
  %v230 = vrot.slane %v216, %v229
  %v231 = vcombine.low %v223, %v230
  %v232 = vcombine.low %v90, %v114
  %v233 = vcombine.low %v128, %v136
  %v234 = vcombine.low %v138, %v121
  %v235 = vcombine.low %v135, %v137
  %v237 = vunpack.c.l.s4 1966171168
  %v238 = vunpack.c.0.s8 %v237
  %v239 = vlaneseq
  %v240 = vshrl.u32 %v239, 7
  %v241 = vsub.s32 %v238, %v240
  %v242 = vrot.slane %v232, %v241
  %v244 = vunpack.c.l.s4 1966171168
  %v245 = vunpack.c.0.s8 %v244
  %v246 = vlaneseq
  %v247 = vshrl.u32 %v246, 7
  %v248 = vsub.s32 %v245, %v247
  %v249 = vrot.slane %v233, %v248
  %v251 = vunpack.c.l.s4 1966171168
  %v252 = vunpack.c.0.s8 %v251
  %v253 = vlaneseq
  %v254 = vshrl.u32 %v253, 7
  %v255 = vsub.s32 %v252, %v254
  %v256 = vrot.slane %v234, %v255
  %v258 = vunpack.c.l.s4 1966171168
  %v259 = vunpack.c.0.s8 %v258
  %v260 = vlaneseq
  %v261 = vshrl.u32 %v260, 7
  %v262 = vsub.s32 %v259, %v261
  %v263 = vrot.slane %v235, %v262
  %v264 = vcombine.low %v242, %v249
  %v265 = vcombine.low %v256, %v263
  %v267 = vunpack.c.l.s4 1966171168
  %v268 = vunpack.c.0.s8 %v267
  %v269 = vlaneseq
  %v270 = vshrl.u32 %v269, 7
  %v271 = vsub.s32 %v268, %v270
  %v272 = vrot.slane %v264, %v271
  %v274 = vunpack.c.l.s4 1966171168
  %v275 = vunpack.c.0.s8 %v274
  %v276 = vlaneseq
  %v277 = vshrl.u32 %v276, 7
  %v278 = vsub.s32 %v275, %v277
  %v279 = vrot.slane %v265, %v278
  %v280 = vcombine.low %v272, %v279
  %v281 = vcombine.low %v139, %v153
  %v283 = vunpack.c.l.s4 1966171168
  %v284 = vunpack.c.0.s8 %v283
  %v285 = vlaneseq
  %v286 = vshrl.u32 %v285, 7
  %v287 = vsub.s32 %v284, %v286
  %v288 = vrot.slane %v281, %v287
  %v290 = vunpack.c.l.s4 1966171168
  %v291 = vunpack.c.0.s8 %v290
  %v292 = vlaneseq
  %v293 = vshrl.u32 %v292, 7
  %v294 = vsub.s32 %v291, %v293
  %v295 = vrot.slane %v288, %v294
  %vm296 = vcmask 261120
  %v297 = vsel %vm296, %v231, 0
  %v299 = vsel %vm296, %v280, 0
  %v301 = vsel %vm296, %v295, 0
  %303 = vmatprep.subr.mxu0 0.0
  %304 = vmatpush1.msra.mxu0 %v172
  %305 = vmatprep.subr.mxu0 0.0
  %306 = vmatpush1.msra.mxu0 %v173
  %307 = vmatprep.subr.mxu0 0.0
  %308 = vmatpush1.msra.mxu0 %v174
  %309 = vmatprep.subr.mxu0 0.0
  %310 = vmatpush1.msra.mxu0 %v175
  %311 = vmatprep.subr.mxu0 0.0
  %312 = vmatpush1.msra.mxu0 0.0
  %313 = vmatprep.subr.mxu0 0.0
  %314 = vmatpush1.msra.mxu0 0.0
  %315 = vmatprep.subr.mxu0 0.0
  %316 = vmatpush1.msra.mxu0 0.0
  %317 = vmatprep.subr.mxu0 0.0
  %318 = vmatpush1.msra.mxu0 0.0
  %319 = vmatprep.subr.mxu0 0.0
  %320 = vmatpush1.msra.mxu0 0.0
  %321 = vmatprep.subr.mxu0 0.0
  %322 = vmatpush1.msra.mxu0 0.0
  %323 = vmatprep.subr.mxu0 0.0
  %324 = vmatpush1.msra.mxu0 0.0
  %325 = vmatprep.subr.mxu0 0.0
  %326 = vmatpush1.msra.mxu0 0.0
  %327 = vmatprep.subr.mxu0 0.0
  %328 = vmatpush1.msra.mxu0 0.0
  %329 = vmatprep.subr.mxu0 0.0
  %330 = vmatpush1.msra.mxu0 0.0
  %331 = vmatprep.subr.mxu0 0.0
  %332 = vmatpush1.msra.mxu0 0.0
  %333 = vmatprep.subr.mxu0 0.0
  %334 = vmatpush1.msra.mxu0 0.0
  %335 = vmatprep.subr.mxu0 0.0
  %336 = vmatpush1.msra.mxu0 0.0
  %337 = vmatprep.subr.mxu0 0.0
  %338 = vmatpush1.msra.mxu0 0.0
  %339 = vmatprep.subr.mxu0 0.0
  %340 = vmatpush1.msra.mxu0 0.0
  %341 = vmatprep.subr.mxu0 0.0
  %342 = vmatpush1.msra.mxu0 0.0
  %343 = vmatprep.subr.mxu0 0.0
  %344 = vmatpush1.msra.mxu0 0.0
  %345 = vmatprep.subr.mxu0 0.0
  %346 = vmatpush1.msra.mxu0 0.0
  %347 = vmatprep.subr.mxu0 0.0
  %348 = vmatpush1.msra.mxu0 0.0
  %349 = vmatprep.subr.mxu0 0.0
  %350 = vmatpush1.msra.mxu0 0.0
  %351 = vmatprep.subr.mxu0 0.0
  %352 = vmatpush1.msra.mxu0 0.0
  %353 = vmatprep.subr.mxu0 0.0
  %354 = vmatpush1.msra.mxu0 0.0
  %355 = vmatprep.subr.mxu0 0.0
  %356 = vmatpush1.msra.mxu0 0.0
  %357 = vmatprep.subr.mxu0 0.0
  %358 = vmatpush1.msra.mxu0 0.0
  %359 = vmatprep.subr.mxu0 0.0
  %360 = vmatpush1.msra.mxu0 0.0
  %361 = vmatprep.subr.mxu0 0.0
  %362 = vmatpush1.msra.mxu0 0.0
  %363 = vmatprep.subr.mxu0 0.0
  %364 = vmatpush1.msra.mxu0 0.0
  %365 = vmatprep.subr.mxu0 0.0
  %366 = vmatpush1.msra.mxu0 0.0
  %367 = vmatprep.mubr.f32.mxu0 0.0
  %368 = vmatmul.mubr.f32.gmra.mrb[0].mxu0 %v297
  %v369 = vpop.f32.mrb[0].mxu0
  %v370 = vadd.f32 %v181, %v369
  %v371 = vpop.f32.mrb[0].mxu0
  %372 = vmatprep.mubr.f32.mxu0 0.0
  %373 = vmatmul.mubr.f32.gmra.mrb[0].mxu0 %v299
  %v374 = vpop.f32.mrb[0].mxu0
  %v375 = vadd.f32 %v181, %v374
  %v376 = vpop.f32.mrb[0].mxu0
  %377 = vmatprep.mubr.f32.mxu0 0.0
  %378 = vmatmul.mubr.f32.gmra.mrb[0].mxu0 %v301
  %v379 = vpop.f32.mrb[0].mxu0
  %v380 = vadd.f32 %v181, %v379
  %v381 = vpop.f32.mrb[0].mxu0
  %382 = vdwg.mxu0
  %v386 = vcombine.high %v370, %v370
  %v388 = vunpack.c.l.s4 1966171168
  %v389 = vunpack.c.0.s8 %v388
  %v390 = vlaneseq
  %v391 = vshrl.u32 %v390, 7
  %v392 = vsub.s32 %v389, %v391
  %v393 = vrot.slane %v370, %v392
  %v395 = vunpack.c.l.s4 1966171168
  %v396 = vunpack.c.0.s8 %v395
  %v397 = vlaneseq
  %v398 = vshrl.u32 %v397, 7
  %v399 = vsub.s32 %v396, %v398
  %v400 = vrot.slane %v386, %v399
  %v401 = vcombine.high %v393, %v393
  %v402 = vcombine.high %v400, %v400
  %v404 = vunpack.c.l.s4 1966171168
  %v405 = vunpack.c.0.s8 %v404
  %v406 = vlaneseq
  %v407 = vshrl.u32 %v406, 7
  %v408 = vsub.s32 %v405, %v407
  %v409 = vrot.slane %v393, %v408
  %v411 = vunpack.c.l.s4 1966171168
  %v412 = vunpack.c.0.s8 %v411
  %v413 = vlaneseq
  %v414 = vshrl.u32 %v413, 7
  %v415 = vsub.s32 %v412, %v414
  %v416 = vrot.slane %v400, %v415
  %v418 = vunpack.c.l.s4 1966171168
  %v419 = vunpack.c.0.s8 %v418
  %v420 = vlaneseq
  %v421 = vshrl.u32 %v420, 7
  %v422 = vsub.s32 %v419, %v421
  %v423 = vrot.slane %v401, %v422
  %v425 = vunpack.c.l.s4 1966171168
  %v426 = vunpack.c.0.s8 %v425
  %v427 = vlaneseq
  %v428 = vshrl.u32 %v427, 7
  %v429 = vsub.s32 %v426, %v428
  %v430 = vrot.slane %v402, %v429
  %v431 = vcombine.high %v409, %v409
  %v432 = vcombine.high %v416, %v416
  %v433 = vcombine.high %v423, %v423
  %v434 = vcombine.high %v430, %v430
  %v435 = vcombine.high %v375, %v375
  %v437 = vunpack.c.l.s4 1966171168
  %v438 = vunpack.c.0.s8 %v437
  %v439 = vlaneseq
  %v440 = vshrl.u32 %v439, 7
  %v441 = vsub.s32 %v438, %v440
  %v442 = vrot.slane %v375, %v441
  %v444 = vunpack.c.l.s4 1966171168
  %v445 = vunpack.c.0.s8 %v444
  %v446 = vlaneseq
  %v447 = vshrl.u32 %v446, 7
  %v448 = vsub.s32 %v445, %v447
  %v449 = vrot.slane %v435, %v448
  %v450 = vcombine.high %v442, %v442
  %v451 = vcombine.high %v449, %v449
  %v453 = vunpack.c.l.s4 1966171168
  %v454 = vunpack.c.0.s8 %v453
  %v455 = vlaneseq
  %v456 = vshrl.u32 %v455, 7
  %v457 = vsub.s32 %v454, %v456
  %v458 = vrot.slane %v442, %v457
  %v460 = vunpack.c.l.s4 1966171168
  %v461 = vunpack.c.0.s8 %v460
  %v462 = vlaneseq
  %v463 = vshrl.u32 %v462, 7
  %v464 = vsub.s32 %v461, %v463
  %v465 = vrot.slane %v449, %v464
  %v467 = vunpack.c.l.s4 1966171168
  %v468 = vunpack.c.0.s8 %v467
  %v469 = vlaneseq
  %v470 = vshrl.u32 %v469, 7
  %v471 = vsub.s32 %v468, %v470
  %v472 = vrot.slane %v450, %v471
  %v474 = vunpack.c.l.s4 1966171168
  %v475 = vunpack.c.0.s8 %v474
  %v476 = vlaneseq
  %v477 = vshrl.u32 %v476, 7
  %v478 = vsub.s32 %v475, %v477
  %v479 = vrot.slane %v451, %v478
  %v480 = vcombine.high %v458, %v458
  %v481 = vcombine.high %v465, %v465
  %v482 = vcombine.high %v472, %v472
  %v483 = vcombine.high %v479, %v479
  %v485 = vunpack.c.l.s4 1966171168
  %v486 = vunpack.c.0.s8 %v485
  %v487 = vlaneseq
  %v488 = vshrl.u32 %v487, 7
  %v489 = vsub.s32 %v486, %v488
  %v490 = vrot.slane %v380, %v489
  %v491 = vcombine.high %v490, %v490
  %v493 = vunpack.c.l.s4 1966171168
  %v494 = vunpack.c.0.s8 %v493
  %v495 = vlaneseq
  %v496 = vshrl.u32 %v495, 7
  %v497 = vsub.s32 %v494, %v496
  %v498 = vrot.slane %v490, %v497
  %v500 = vunpack.c.l.s4 1966171168
  %v501 = vunpack.c.0.s8 %v500
  %v502 = vlaneseq
  %v503 = vshrl.u32 %v502, 7
  %v504 = vsub.s32 %v501, %v503
  %v505 = vrot.slane %v491, %v504
  %v506 = vcombine.low %v409, %v423
  %v507 = vcombine.low %v431, %v433
  %v508 = vcombine.low %v416, %v430
  %v509 = vcombine.low %v432, %v434
  %v511 = vunpack.c.l.s4 1966171168
  %v512 = vunpack.c.0.s8 %v511
  %v513 = vlaneseq
  %v514 = vshrl.u32 %v513, 7
  %v515 = vsub.s32 %v512, %v514
  %v516 = vrot.slane %v506, %v515
  %v518 = vunpack.c.l.s4 1966171168
  %v519 = vunpack.c.0.s8 %v518
  %v520 = vlaneseq
  %v521 = vshrl.u32 %v520, 7
  %v522 = vsub.s32 %v519, %v521
  %v523 = vrot.slane %v507, %v522
  %v525 = vunpack.c.l.s4 1966171168
  %v526 = vunpack.c.0.s8 %v525
  %v527 = vlaneseq
  %v528 = vshrl.u32 %v527, 7
  %v529 = vsub.s32 %v526, %v528
  %v530 = vrot.slane %v508, %v529
  %v532 = vunpack.c.l.s4 1966171168
  %v533 = vunpack.c.0.s8 %v532
  %v534 = vlaneseq
  %v535 = vshrl.u32 %v534, 7
  %v536 = vsub.s32 %v533, %v535
  %v537 = vrot.slane %v509, %v536
  %v538 = vcombine.low %v516, %v523
  %v539 = vcombine.low %v530, %v537
  %v541 = vunpack.c.l.s4 1966171168
  %v542 = vunpack.c.0.s8 %v541
  %v543 = vlaneseq
  %v544 = vshrl.u32 %v543, 7
  %v545 = vsub.s32 %v542, %v544
  %v546 = vrot.slane %v538, %v545
  %v548 = vunpack.c.l.s4 1966171168
  %v549 = vunpack.c.0.s8 %v548
  %v550 = vlaneseq
  %v551 = vshrl.u32 %v550, 7
  %v552 = vsub.s32 %v549, %v551
  %v553 = vrot.slane %v539, %v552
  %v554 = vcombine.low %v546, %v553
  %v556 = vunpack.c.l.s4 1966171168
  %v557 = vunpack.c.0.s8 %v556
  %v558 = vlaneseq
  %v559 = vshrl.u32 %v558, 7
  %v560 = vsub.s32 %v557, %v559
  %v561 = vrot.slane %v458, %v560
  %v563 = vunpack.c.l.s4 1966171168
  %v564 = vunpack.c.0.s8 %v563
  %v565 = vlaneseq
  %v566 = vshrl.u32 %v565, 7
  %v567 = vsub.s32 %v564, %v566
  %v568 = vrot.slane %v561, %v567
  %569 = vrot.lane.b32.xlu0 %v554, 96
  %v570 = vpop.permute.xlu0 %569
  %571 = vrot.lane.b32.xlu0 %v568, 96
  %v572 = vpop.permute.xlu0 %571
  %vm573 = vcmask 64512
  %v574 = vsel %vm573, %v554, 0
  %v576 = vsel %vm573, %v568, 0
  %v578 = vsel %vm573, %v570, 0
  %v580 = vsel %vm573, %v572, 0
  %582 = vmatprep.subr.mxu0 0.0
  %583 = vmatpush1.xpose.msra.mxu0 %v578
  %584 = vmatprep.subr.mxu0 0.0
  %585 = vmatpush1.xpose.msra.mxu0 %v580
  %586 = vmatprep.subr.mxu0 0.0
  %587 = vmatpush1.xpose.msra.mxu0 0.0
  %588 = vmatprep.subr.mxu0 0.0
  %589 = vmatpush1.xpose.msra.mxu0 0.0
  %590 = vmatprep.subr.mxu0 0.0
  %591 = vmatpush1.xpose.msra.mxu0 0.0
  %592 = vmatprep.subr.mxu0 0.0
  %593 = vmatpush1.xpose.msra.mxu0 0.0
  %594 = vmatprep.subr.mxu0 0.0
  %595 = vmatpush1.xpose.msra.mxu0 0.0
  %596 = vmatprep.subr.mxu0 0.0
  %597 = vmatpush1.xpose.msra.mxu0 0.0
  %598 = vmatprep.subr.mxu0 0.0
  %599 = vmatpush1.xpose.msra.mxu0 0.0
  %600 = vmatprep.subr.mxu0 0.0
  %601 = vmatpush1.xpose.msra.mxu0 0.0
  %602 = vmatprep.subr.mxu0 0.0
  %603 = vmatpush1.xpose.msra.mxu0 0.0
  %604 = vmatprep.subr.mxu0 0.0
  %605 = vmatpush1.xpose.msra.mxu0 0.0
  %606 = vmatprep.subr.mxu0 0.0
  %607 = vmatpush1.xpose.msra.mxu0 0.0
  %608 = vmatprep.subr.mxu0 0.0
  %609 = vmatpush1.xpose.msra.mxu0 0.0
  %610 = vmatprep.subr.mxu0 0.0
  %611 = vmatpush1.xpose.msra.mxu0 0.0
  %612 = vmatprep.subr.mxu0 0.0
  %613 = vmatpush1.xpose.msra.mxu0 0.0
  %614 = vmatprep.subr.mxu0 0.0
  %615 = vmatpush1.xpose.msra.mxu0 0.0
  %616 = vmatprep.subr.mxu0 0.0
  %617 = vmatpush1.xpose.msra.mxu0 0.0
  %618 = vmatprep.subr.mxu0 0.0
  %619 = vmatpush1.xpose.msra.mxu0 0.0
  %620 = vmatprep.subr.mxu0 0.0
  %621 = vmatpush1.xpose.msra.mxu0 0.0
  %622 = vmatprep.subr.mxu0 0.0
  %623 = vmatpush1.xpose.msra.mxu0 0.0
  %624 = vmatprep.subr.mxu0 0.0
  %625 = vmatpush1.xpose.msra.mxu0 0.0
  %626 = vmatprep.subr.mxu0 0.0
  %627 = vmatpush1.xpose.msra.mxu0 0.0
  %628 = vmatprep.subr.mxu0 0.0
  %629 = vmatpush1.xpose.msra.mxu0 0.0
  %630 = vmatprep.subr.mxu0 0.0
  %631 = vmatpush1.xpose.msra.mxu0 0.0
  %632 = vmatprep.subr.mxu0 0.0
  %633 = vmatpush1.xpose.msra.mxu0 0.0
  %634 = vmatprep.subr.mxu0 0.0
  %635 = vmatpush1.xpose.msra.mxu0 0.0
  %636 = vmatprep.subr.mxu0 0.0
  %637 = vmatpush1.xpose.msra.mxu0 0.0
  %638 = vmatprep.subr.mxu0 0.0
  %639 = vmatpush1.xpose.msra.mxu0 0.0
  %640 = vmatprep.subr.mxu0 0.0
  %641 = vmatpush1.xpose.msra.mxu0 0.0
  %642 = vmatprep.subr.mxu0 0.0
  %643 = vmatpush1.xpose.msra.mxu0 0.0
  %644 = vmatprep.subr.mxu0 0.0
  %645 = vmatpush1.xpose.msra.mxu0 0.0
  %646 = vmatprep.mubr.f32.mxu0 0.0
  %647 = vmatmul.mubr.f32.gmra.mrb[0].mxu0 %v574
  %v648 = vpop.f32.mrb[0].mxu0
  %v649 = vadd.f32 0.0, %v648
  %v650 = vpop.f32.mrb[0].mxu0
  %651 = vmatprep.mubr.f32.mxu0 0.0
  %652 = vmatmul.mubr.f32.gmra.mrb[0].mxu0 %v576
  %v653 = vpop.f32.mrb[0].mxu0
  %v654 = vadd.f32 0.0, %v653
  %v655 = vpop.f32.mrb[0].mxu0
  %656 = vdwg.mxu0
  %v657 = vcombine.low %v472, %v480
  %v658 = vcombine.low %v482, %v465
  %v659 = vcombine.low %v479, %v481
  %v660 = vcombine.low %v483, %v498
  %v662 = vunpack.c.l.s4 1966171168
  %v663 = vunpack.c.0.s8 %v662
  %v664 = vlaneseq
  %v665 = vshrl.u32 %v664, 7
  %v666 = vsub.s32 %v663, %v665
  %v667 = vrot.slane %v657, %v666
  %v669 = vunpack.c.l.s4 1966171168
  %v670 = vunpack.c.0.s8 %v669
  %v671 = vlaneseq
  %v672 = vshrl.u32 %v671, 7
  %v673 = vsub.s32 %v670, %v672
  %v674 = vrot.slane %v658, %v673
  %v676 = vunpack.c.l.s4 1966171168
  %v677 = vunpack.c.0.s8 %v676
  %v678 = vlaneseq
  %v679 = vshrl.u32 %v678, 7
  %v680 = vsub.s32 %v677, %v679
  %v681 = vrot.slane %v659, %v680
  %v683 = vunpack.c.l.s4 1966171168
  %v684 = vunpack.c.0.s8 %v683
  %v685 = vlaneseq
  %v686 = vshrl.u32 %v685, 7
  %v687 = vsub.s32 %v684, %v686
  %v688 = vrot.slane %v660, %v687
  %v689 = vcombine.low %v667, %v674
  %v690 = vcombine.low %v681, %v688
  %v692 = vunpack.c.l.s4 1966171168
  %v693 = vunpack.c.0.s8 %v692
  %v694 = vlaneseq
  %v695 = vshrl.u32 %v694, 7
  %v696 = vsub.s32 %v693, %v695
  %v697 = vrot.slane %v689, %v696
  %v699 = vunpack.c.l.s4 1966171168
  %v700 = vunpack.c.0.s8 %v699
  %v701 = vlaneseq
  %v702 = vshrl.u32 %v701, 7
  %v703 = vsub.s32 %v700, %v702
  %v704 = vrot.slane %v690, %v703
  %v705 = vcombine.low %v697, %v704
  %v707 = vunpack.c.l.s4 1966171168
  %v708 = vunpack.c.0.s8 %v707
  %v709 = vlaneseq
  %v710 = vshrl.u32 %v709, 7
  %v711 = vsub.s32 %v708, %v710
  %v712 = vrot.slane %v505, %v711
  %v714 = vunpack.c.l.s4 1966171168
  %v715 = vunpack.c.0.s8 %v714
  %v716 = vlaneseq
  %v717 = vshrl.u32 %v716, 7
  %v718 = vsub.s32 %v715, %v717
  %v719 = vrot.slane %v712, %v718
  %720 = vrot.lane.b32.xlu0 %v705, 96
  %v721 = vpop.permute.xlu0 %720
  %722 = vrot.lane.b32.xlu0 %v719, 96
  %v723 = vpop.permute.xlu0 %722
  %v724 = vsel %vm573, %v705, 0
  %v726 = vsel %vm573, %v719, 0
  %v728 = vsel %vm573, %v721, 0
  %v730 = vsel %vm573, %v723, 0
  %732 = vmatprep.subr.mxu0 0.0
  %733 = vmatpush1.xpose.msra.mxu0 %v728
  %734 = vmatprep.subr.mxu0 0.0
  %735 = vmatpush1.xpose.msra.mxu0 %v730
  %736 = vmatprep.subr.mxu0 0.0
  %737 = vmatpush1.xpose.msra.mxu0 0.0
  %738 = vmatprep.subr.mxu0 0.0
  %739 = vmatpush1.xpose.msra.mxu0 0.0
  %740 = vmatprep.subr.mxu0 0.0
  %741 = vmatpush1.xpose.msra.mxu0 0.0
  %742 = vmatprep.subr.mxu0 0.0
  %743 = vmatpush1.xpose.msra.mxu0 0.0
  %744 = vmatprep.subr.mxu0 0.0
  %745 = vmatpush1.xpose.msra.mxu0 0.0
  %746 = vmatprep.subr.mxu0 0.0
  %747 = vmatpush1.xpose.msra.mxu0 0.0
  %748 = vmatprep.subr.mxu0 0.0
  %749 = vmatpush1.xpose.msra.mxu0 0.0
  %750 = vmatprep.subr.mxu0 0.0
  %751 = vmatpush1.xpose.msra.mxu0 0.0
  %752 = vmatprep.subr.mxu0 0.0
  %753 = vmatpush1.xpose.msra.mxu0 0.0
  %754 = vmatprep.subr.mxu0 0.0
  %755 = vmatpush1.xpose.msra.mxu0 0.0
  %756 = vmatprep.subr.mxu0 0.0
  %757 = vmatpush1.xpose.msra.mxu0 0.0
  %758 = vmatprep.subr.mxu0 0.0
  %759 = vmatpush1.xpose.msra.mxu0 0.0
  %760 = vmatprep.subr.mxu0 0.0
  %761 = vmatpush1.xpose.msra.mxu0 0.0
  %762 = vmatprep.subr.mxu0 0.0
  %763 = vmatpush1.xpose.msra.mxu0 0.0
  %764 = vmatprep.subr.mxu0 0.0
  %765 = vmatpush1.xpose.msra.mxu0 0.0
  %766 = vmatprep.subr.mxu0 0.0
  %767 = vmatpush1.xpose.msra.mxu0 0.0
  %768 = vmatprep.subr.mxu0 0.0
  %769 = vmatpush1.xpose.msra.mxu0 0.0
  %770 = vmatprep.subr.mxu0 0.0
  %771 = vmatpush1.xpose.msra.mxu0 0.0
  %772 = vmatprep.subr.mxu0 0.0
  %773 = vmatpush1.xpose.msra.mxu0 0.0
  %774 = vmatprep.subr.mxu0 0.0
  %775 = vmatpush1.xpose.msra.mxu0 0.0
  %776 = vmatprep.subr.mxu0 0.0
  %777 = vmatpush1.xpose.msra.mxu0 0.0
  %778 = vmatprep.subr.mxu0 0.0
  %779 = vmatpush1.xpose.msra.mxu0 0.0
  %780 = vmatprep.subr.mxu0 0.0
  %781 = vmatpush1.xpose.msra.mxu0 0.0
  %782 = vmatprep.subr.mxu0 0.0
  %783 = vmatpush1.xpose.msra.mxu0 0.0
  %784 = vmatprep.subr.mxu0 0.0
  %785 = vmatpush1.xpose.msra.mxu0 0.0
  %786 = vmatprep.subr.mxu0 0.0
  %787 = vmatpush1.xpose.msra.mxu0 0.0
  %788 = vmatprep.subr.mxu0 0.0
  %789 = vmatpush1.xpose.msra.mxu0 0.0
  %790 = vmatprep.subr.mxu0 0.0
  %791 = vmatpush1.xpose.msra.mxu0 0.0
  %792 = vmatprep.subr.mxu0 0.0
  %793 = vmatpush1.xpose.msra.mxu0 0.0
  %794 = vmatprep.subr.mxu0 0.0
  %795 = vmatpush1.xpose.msra.mxu0 0.0
  %796 = vmatprep.mubr.f32.mxu0 0.0
  %797 = vmatmul.mubr.f32.gmra.mrb[0].mxu0 %v724
  %v798 = vpop.f32.mrb[0].mxu0
  %v799 = vadd.f32 0.0, %v798
  %v800 = vpop.f32.mrb[0].mxu0
  %801 = vmatprep.mubr.f32.mxu0 0.0
  %802 = vmatmul.mubr.f32.gmra.mrb[0].mxu0 %v726
  %v803 = vpop.f32.mrb[0].mxu0
  %v804 = vadd.f32 0.0, %v803
  %v805 = vpop.f32.mrb[0].mxu0
  %806 = vdwg.mxu0
  %v807 = vmul.f32 %v649, 0.35355338
  %v808 = vmul.f32 %v654, 0.35355338
  %v809 = vmul.f32 %v799, 0.35355338
  %v810 = vmul.f32 %v804, 0.35355338
  %vm811 = vcmask 72704
  %v812 = vsel %vm811, %v807, -inf
  %813 = vmax.xlane.f32.xlu0 %v812
  %v814 = vpop.xlane.xlu0 %813
  %vm815 = vcmask 65536
  %v816 = vsel %vm815, %v808, -inf
  %817 = vmax.xlane.f32.xlu0 %v816
  %v818 = vpop.xlane.xlu0 %817
  %v819 = vsel %vm811, %v809, -inf
  %820 = vmax.xlane.f32.xlu0 %v819
  %v821 = vpop.xlane.xlu0 %820
  %v822 = vsel %vm815, %v810, -inf
  %823 = vmax.xlane.f32.xlu0 %v822
  %v824 = vpop.xlane.xlu0 %823
  %v825 = vsub.f32 %v807, %v814
  %v826 = vsub.f32 %v808, %v818
  %v827 = vsub.f32 %v809, %v821
  %v828 = vsub.f32 %v810, %v824
  %v829 = vmul.f32 %v825, 1.442695
  %v830 = vpow.pop %v829
  %v831 = vmul.f32 %v826, 1.442695
  %v832 = vpow.pop %v831
  %v833 = vmul.f32 %v827, 1.442695
  %v834 = vpow.pop %v833
  %v835 = vmul.f32 %v828, 1.442695
  %v836 = vpow.pop %v835
  %v837 = vsel %vm811, %v830, 0.0
  %838 = vadd.xlane.f32.xlu0 %v837
  %v839 = vpop.xlane.xlu0 %838
  %v840 = vsel %vm815, %v832, 0.0
  %841 = vadd.xlane.f32.xlu0 %v840
  %v842 = vpop.xlane.xlu0 %841
  %v843 = vsel %vm811, %v834, 0.0
  %844 = vadd.xlane.f32.xlu0 %v843
  %v845 = vpop.xlane.xlu0 %844
  %v846 = vsel %vm815, %v836, 0.0
  %847 = vadd.xlane.f32.xlu0 %v846
  %v848 = vpop.xlane.xlu0 %847
  %v849 = vrcp.pop %v839
  %v850 = vrcp.pop %v842
  %v851 = vrcp.pop %v845
  %v852 = vrcp.pop %v848
  %v853 = vmul.f32 %v830, %v849
  %v854 = vmul.f32 %v832, %v850
  %v855 = vmul.f32 %v834, %v851
  %v856 = vmul.f32 %v836, %v852
  %857 = vrot.lane.b32.xlu0 %v554, 64
  %v858 = vpop.permute.xlu0 %857
  %859 = vrot.lane.b32.xlu0 %v568, 64
  %v860 = vpop.permute.xlu0 %859
  %v863 = vsel %vm811, %v853, 0
  %v866 = vsel %vm811, %v854, 0
  %vm868 = vcmask 1040384
  %v869 = vsel %vm868, %v860, 0
  %871 = vmatprep.subr.mxu0 0.0
  %872 = vmatpush1.msra.mxu0 %v858
  %873 = vmatprep.subr.mxu0 0.0
  %874 = vmatpush1.msra.mxu0 %v869
  %875 = vmatprep.subr.mxu0 0.0
  %876 = vmatpush1.msra.mxu0 0.0
  %877 = vmatprep.subr.mxu0 0.0
  %878 = vmatpush1.msra.mxu0 0.0
  %879 = vmatprep.subr.mxu0 0.0
  %880 = vmatpush1.msra.mxu0 0.0
  %881 = vmatprep.subr.mxu0 0.0
  %882 = vmatpush1.msra.mxu0 0.0
  %883 = vmatprep.subr.mxu0 0.0
  %884 = vmatpush1.msra.mxu0 0.0
  %885 = vmatprep.subr.mxu0 0.0
  %886 = vmatpush1.msra.mxu0 0.0
  %887 = vmatprep.subr.mxu0 0.0
  %888 = vmatpush1.msra.mxu0 0.0
  %889 = vmatprep.subr.mxu0 0.0
  %890 = vmatpush1.msra.mxu0 0.0
  %891 = vmatprep.subr.mxu0 0.0
  %892 = vmatpush1.msra.mxu0 0.0
  %893 = vmatprep.subr.mxu0 0.0
  %894 = vmatpush1.msra.mxu0 0.0
  %895 = vmatprep.subr.mxu0 0.0
  %896 = vmatpush1.msra.mxu0 0.0
  %897 = vmatprep.subr.mxu0 0.0
  %898 = vmatpush1.msra.mxu0 0.0
  %899 = vmatprep.subr.mxu0 0.0
  %900 = vmatpush1.msra.mxu0 0.0
  %901 = vmatprep.subr.mxu0 0.0
  %902 = vmatpush1.msra.mxu0 0.0
  %903 = vmatprep.subr.mxu0 0.0
  %904 = vmatpush1.msra.mxu0 0.0
  %905 = vmatprep.subr.mxu0 0.0
  %906 = vmatpush1.msra.mxu0 0.0
  %907 = vmatprep.subr.mxu0 0.0
  %908 = vmatpush1.msra.mxu0 0.0
  %909 = vmatprep.subr.mxu0 0.0
  %910 = vmatpush1.msra.mxu0 0.0
  %911 = vmatprep.subr.mxu0 0.0
  %912 = vmatpush1.msra.mxu0 0.0
  %913 = vmatprep.subr.mxu0 0.0
  %914 = vmatpush1.msra.mxu0 0.0
  %915 = vmatprep.subr.mxu0 0.0
  %916 = vmatpush1.msra.mxu0 0.0
  %917 = vmatprep.subr.mxu0 0.0
  %918 = vmatpush1.msra.mxu0 0.0
  %919 = vmatprep.subr.mxu0 0.0
  %920 = vmatpush1.msra.mxu0 0.0
  %921 = vmatprep.subr.mxu0 0.0
  %922 = vmatpush1.msra.mxu0 0.0
  %923 = vmatprep.subr.mxu0 0.0
  %924 = vmatpush1.msra.mxu0 0.0
  %925 = vmatprep.subr.mxu0 0.0
  %926 = vmatpush1.msra.mxu0 0.0
  %927 = vmatprep.subr.mxu0 0.0
  %928 = vmatpush1.msra.mxu0 0.0
  %929 = vmatprep.subr.mxu0 0.0
  %930 = vmatpush1.msra.mxu0 0.0
  %931 = vmatprep.subr.mxu0 0.0
  %932 = vmatpush1.msra.mxu0 0.0
  %933 = vmatprep.subr.mxu0 0.0
  %934 = vmatpush1.msra.mxu0 0.0
  %935 = vmatprep.mubr.f32.mxu0 0.0
  %936 = vmatmul.mubr.f32.gmra.mrb[0].mxu0 %v863
  %v937 = vpop.f32.mrb[0].mxu0
  %v938 = vadd.f32 0.0, %v937
  %v939 = vpop.f32.mrb[0].mxu0
  %940 = vmatprep.mubr.f32.mxu0 0.0
  %941 = vmatmul.mubr.f32.gmra.mrb[0].mxu0 %v866
  %v942 = vpop.f32.mrb[0].mxu0
  %v943 = vadd.f32 0.0, %v942
  %v944 = vpop.f32.mrb[0].mxu0
  %945 = vdwg.mxu0
  %946 = vrot.lane.b32.xlu0 %v705, 64
  %v947 = vpop.permute.xlu0 %946
  %948 = vrot.lane.b32.xlu0 %v719, 64
  %v949 = vpop.permute.xlu0 %948
  %v952 = vsel %vm811, %v855, 0
  %v955 = vsel %vm811, %v856, 0
  %v957 = vsel %vm868, %v949, 0
  %959 = vmatprep.subr.mxu0 0.0
  %960 = vmatpush1.msra.mxu0 %v947
  %961 = vmatprep.subr.mxu0 0.0
  %962 = vmatpush1.msra.mxu0 %v957
  %963 = vmatprep.subr.mxu0 0.0
  %964 = vmatpush1.msra.mxu0 0.0
  %965 = vmatprep.subr.mxu0 0.0
  %966 = vmatpush1.msra.mxu0 0.0
  %967 = vmatprep.subr.mxu0 0.0
  %968 = vmatpush1.msra.mxu0 0.0
  %969 = vmatprep.subr.mxu0 0.0
  %970 = vmatpush1.msra.mxu0 0.0
  %971 = vmatprep.subr.mxu0 0.0
  %972 = vmatpush1.msra.mxu0 0.0
  %973 = vmatprep.subr.mxu0 0.0
  %974 = vmatpush1.msra.mxu0 0.0
  %975 = vmatprep.subr.mxu0 0.0
  %976 = vmatpush1.msra.mxu0 0.0
  %977 = vmatprep.subr.mxu0 0.0
  %978 = vmatpush1.msra.mxu0 0.0
  %979 = vmatprep.subr.mxu0 0.0
  %980 = vmatpush1.msra.mxu0 0.0
  %981 = vmatprep.subr.mxu0 0.0
  %982 = vmatpush1.msra.mxu0 0.0
  %983 = vmatprep.subr.mxu0 0.0
  %984 = vmatpush1.msra.mxu0 0.0
  %985 = vmatprep.subr.mxu0 0.0
  %986 = vmatpush1.msra.mxu0 0.0
  %987 = vmatprep.subr.mxu0 0.0
  %988 = vmatpush1.msra.mxu0 0.0
  %989 = vmatprep.subr.mxu0 0.0
  %990 = vmatpush1.msra.mxu0 0.0
  %991 = vmatprep.subr.mxu0 0.0
  %992 = vmatpush1.msra.mxu0 0.0
  %993 = vmatprep.subr.mxu0 0.0
  %994 = vmatpush1.msra.mxu0 0.0
  %995 = vmatprep.subr.mxu0 0.0
  %996 = vmatpush1.msra.mxu0 0.0
  %997 = vmatprep.subr.mxu0 0.0
  %998 = vmatpush1.msra.mxu0 0.0
  %999 = vmatprep.subr.mxu0 0.0
  %1000 = vmatpush1.msra.mxu0 0.0
  %1001 = vmatprep.subr.mxu0 0.0
  %1002 = vmatpush1.msra.mxu0 0.0
  %1003 = vmatprep.subr.mxu0 0.0
  %1004 = vmatpush1.msra.mxu0 0.0
  %1005 = vmatprep.subr.mxu0 0.0
  %1006 = vmatpush1.msra.mxu0 0.0
  %1007 = vmatprep.subr.mxu0 0.0
  %1008 = vmatpush1.msra.mxu0 0.0
  %1009 = vmatprep.subr.mxu0 0.0
  %1010 = vmatpush1.msra.mxu0 0.0
  %1011 = vmatprep.subr.mxu0 0.0
  %1012 = vmatpush1.msra.mxu0 0.0
  %1013 = vmatprep.subr.mxu0 0.0
  %1014 = vmatpush1.msra.mxu0 0.0
  %1015 = vmatprep.subr.mxu0 0.0
  %1016 = vmatpush1.msra.mxu0 0.0
  %1017 = vmatprep.subr.mxu0 0.0
  %1018 = vmatpush1.msra.mxu0 0.0
  %1019 = vmatprep.subr.mxu0 0.0
  %1020 = vmatpush1.msra.mxu0 0.0
  %1021 = vmatprep.subr.mxu0 0.0
  %1022 = vmatpush1.msra.mxu0 0.0
  %1023 = vmatprep.mubr.f32.mxu0 0.0
  %1024 = vmatmul.mubr.f32.gmra.mrb[0].mxu0 %v952
  %v1025 = vpop.f32.mrb[0].mxu0
  %v1026 = vadd.f32 0.0, %v1025
  %v1027 = vpop.f32.mrb[0].mxu0
  %1028 = vmatprep.mubr.f32.mxu0 0.0
  %1029 = vmatmul.mubr.f32.gmra.mrb[0].mxu0 %v955
  %v1030 = vpop.f32.mrb[0].mxu0
  %v1031 = vadd.f32 0.0, %v1030
  %v1032 = vpop.f32.mrb[0].mxu0
  %1033 = vdwg.mxu0
  %1034 = vrot.lane.b32.xlu0 %v554, 120
  %v1035 = vpop.permute.xlu0 %1034
  %1036 = vrot.lane.b32.xlu0 %v568, 120
  %v1037 = vpop.permute.xlu0 %1036
  %1038 = vrot.lane.b32.xlu0 %v554, 88
  %v1039 = vpop.permute.xlu0 %1038
  %1040 = vrot.lane.b32.xlu0 %v568, 88
  %v1041 = vpop.permute.xlu0 %1040
  %v1042 = vsel %vm573, %v1035, 0
  %v1044 = vsel %vm573, %v1037, 0
  %v1046 = vsel %vm573, %v1039, 0
  %v1048 = vsel %vm573, %v1041, 0
  %1050 = vmatprep.subr.mxu0 0.0
  %1051 = vmatpush1.xpose.msra.mxu0 %v1046
  %1052 = vmatprep.subr.mxu0 0.0
  %1053 = vmatpush1.xpose.msra.mxu0 %v1048
  %1054 = vmatprep.subr.mxu0 0.0
  %1055 = vmatpush1.xpose.msra.mxu0 0.0
  %1056 = vmatprep.subr.mxu0 0.0
  %1057 = vmatpush1.xpose.msra.mxu0 0.0
  %1058 = vmatprep.subr.mxu0 0.0
  %1059 = vmatpush1.xpose.msra.mxu0 0.0
  %1060 = vmatprep.subr.mxu0 0.0
  %1061 = vmatpush1.xpose.msra.mxu0 0.0
  %1062 = vmatprep.subr.mxu0 0.0
  %1063 = vmatpush1.xpose.msra.mxu0 0.0
  %1064 = vmatprep.subr.mxu0 0.0
  %1065 = vmatpush1.xpose.msra.mxu0 0.0
  %1066 = vmatprep.subr.mxu0 0.0
  %1067 = vmatpush1.xpose.msra.mxu0 0.0
  %1068 = vmatprep.subr.mxu0 0.0
  %1069 = vmatpush1.xpose.msra.mxu0 0.0
  %1070 = vmatprep.subr.mxu0 0.0
  %1071 = vmatpush1.xpose.msra.mxu0 0.0
  %1072 = vmatprep.subr.mxu0 0.0
  %1073 = vmatpush1.xpose.msra.mxu0 0.0
  %1074 = vmatprep.subr.mxu0 0.0
  %1075 = vmatpush1.xpose.msra.mxu0 0.0
  %1076 = vmatprep.subr.mxu0 0.0
  %1077 = vmatpush1.xpose.msra.mxu0 0.0
  %1078 = vmatprep.subr.mxu0 0.0
  %1079 = vmatpush1.xpose.msra.mxu0 0.0
  %1080 = vmatprep.subr.mxu0 0.0
  %1081 = vmatpush1.xpose.msra.mxu0 0.0
  %1082 = vmatprep.subr.mxu0 0.0
  %1083 = vmatpush1.xpose.msra.mxu0 0.0
  %1084 = vmatprep.subr.mxu0 0.0
  %1085 = vmatpush1.xpose.msra.mxu0 0.0
  %1086 = vmatprep.subr.mxu0 0.0
  %1087 = vmatpush1.xpose.msra.mxu0 0.0
  %1088 = vmatprep.subr.mxu0 0.0
  %1089 = vmatpush1.xpose.msra.mxu0 0.0
  %1090 = vmatprep.subr.mxu0 0.0
  %1091 = vmatpush1.xpose.msra.mxu0 0.0
  %1092 = vmatprep.subr.mxu0 0.0
  %1093 = vmatpush1.xpose.msra.mxu0 0.0
  %1094 = vmatprep.subr.mxu0 0.0
  %1095 = vmatpush1.xpose.msra.mxu0 0.0
  %1096 = vmatprep.subr.mxu0 0.0
  %1097 = vmatpush1.xpose.msra.mxu0 0.0
  %1098 = vmatprep.subr.mxu0 0.0
  %1099 = vmatpush1.xpose.msra.mxu0 0.0
  %1100 = vmatprep.subr.mxu0 0.0
  %1101 = vmatpush1.xpose.msra.mxu0 0.0
  %1102 = vmatprep.subr.mxu0 0.0
  %1103 = vmatpush1.xpose.msra.mxu0 0.0
  %1104 = vmatprep.subr.mxu0 0.0
  %1105 = vmatpush1.xpose.msra.mxu0 0.0
  %1106 = vmatprep.subr.mxu0 0.0
  %1107 = vmatpush1.xpose.msra.mxu0 0.0
  %1108 = vmatprep.subr.mxu0 0.0
  %1109 = vmatpush1.xpose.msra.mxu0 0.0
  %1110 = vmatprep.subr.mxu0 0.0
  %1111 = vmatpush1.xpose.msra.mxu0 0.0
  %1112 = vmatprep.subr.mxu0 0.0
  %1113 = vmatpush1.xpose.msra.mxu0 0.0
  %1114 = vmatprep.mubr.f32.mxu0 0.0
  %1115 = vmatmul.mubr.f32.gmra.mrb[0].mxu0 %v1042
  %v1116 = vpop.f32.mrb[0].mxu0
  %v1117 = vadd.f32 0.0, %v1116
  %v1118 = vpop.f32.mrb[0].mxu0
  %1119 = vmatprep.mubr.f32.mxu0 0.0
  %1120 = vmatmul.mubr.f32.gmra.mrb[0].mxu0 %v1044
  %v1121 = vpop.f32.mrb[0].mxu0
  %v1122 = vadd.f32 0.0, %v1121
  %v1123 = vpop.f32.mrb[0].mxu0
  %1124 = vdwg.mxu0
  %1125 = vrot.lane.b32.xlu0 %v705, 120
  %v1126 = vpop.permute.xlu0 %1125
  %1127 = vrot.lane.b32.xlu0 %v719, 120
  %v1128 = vpop.permute.xlu0 %1127
  %1129 = vrot.lane.b32.xlu0 %v705, 88
  %v1130 = vpop.permute.xlu0 %1129
  %1131 = vrot.lane.b32.xlu0 %v719, 88
  %v1132 = vpop.permute.xlu0 %1131
  %v1133 = vsel %vm573, %v1126, 0
  %v1135 = vsel %vm573, %v1128, 0
  %v1137 = vsel %vm573, %v1130, 0
  %v1139 = vsel %vm573, %v1132, 0
  %1141 = vmatprep.subr.mxu0 0.0
  %1142 = vmatpush1.xpose.msra.mxu0 %v1137
  %1143 = vmatprep.subr.mxu0 0.0
  %1144 = vmatpush1.xpose.msra.mxu0 %v1139
  %1145 = vmatprep.subr.mxu0 0.0
  %1146 = vmatpush1.xpose.msra.mxu0 0.0
  %1147 = vmatprep.subr.mxu0 0.0
  %1148 = vmatpush1.xpose.msra.mxu0 0.0
  %1149 = vmatprep.subr.mxu0 0.0
  %1150 = vmatpush1.xpose.msra.mxu0 0.0
  %1151 = vmatprep.subr.mxu0 0.0
  %1152 = vmatpush1.xpose.msra.mxu0 0.0
  %1153 = vmatprep.subr.mxu0 0.0
  %1154 = vmatpush1.xpose.msra.mxu0 0.0
  %1155 = vmatprep.subr.mxu0 0.0
  %1156 = vmatpush1.xpose.msra.mxu0 0.0
  %1157 = vmatprep.subr.mxu0 0.0
  %1158 = vmatpush1.xpose.msra.mxu0 0.0
  %1159 = vmatprep.subr.mxu0 0.0
  %1160 = vmatpush1.xpose.msra.mxu0 0.0
  %1161 = vmatprep.subr.mxu0 0.0
  %1162 = vmatpush1.xpose.msra.mxu0 0.0
  %1163 = vmatprep.subr.mxu0 0.0
  %1164 = vmatpush1.xpose.msra.mxu0 0.0
  %1165 = vmatprep.subr.mxu0 0.0
  %1166 = vmatpush1.xpose.msra.mxu0 0.0
  %1167 = vmatprep.subr.mxu0 0.0
  %1168 = vmatpush1.xpose.msra.mxu0 0.0
  %1169 = vmatprep.subr.mxu0 0.0
  %1170 = vmatpush1.xpose.msra.mxu0 0.0
  %1171 = vmatprep.subr.mxu0 0.0
  %1172 = vmatpush1.xpose.msra.mxu0 0.0
  %1173 = vmatprep.subr.mxu0 0.0
  %1174 = vmatpush1.xpose.msra.mxu0 0.0
  %1175 = vmatprep.subr.mxu0 0.0
  %1176 = vmatpush1.xpose.msra.mxu0 0.0
  %1177 = vmatprep.subr.mxu0 0.0
  %1178 = vmatpush1.xpose.msra.mxu0 0.0
  %1179 = vmatprep.subr.mxu0 0.0
  %1180 = vmatpush1.xpose.msra.mxu0 0.0
  %1181 = vmatprep.subr.mxu0 0.0
  %1182 = vmatpush1.xpose.msra.mxu0 0.0
  %1183 = vmatprep.subr.mxu0 0.0
  %1184 = vmatpush1.xpose.msra.mxu0 0.0
  %1185 = vmatprep.subr.mxu0 0.0
  %1186 = vmatpush1.xpose.msra.mxu0 0.0
  %1187 = vmatprep.subr.mxu0 0.0
  %1188 = vmatpush1.xpose.msra.mxu0 0.0
  %1189 = vmatprep.subr.mxu0 0.0
  %1190 = vmatpush1.xpose.msra.mxu0 0.0
  %1191 = vmatprep.subr.mxu0 0.0
  %1192 = vmatpush1.xpose.msra.mxu0 0.0
  %1193 = vmatprep.subr.mxu0 0.0
  %1194 = vmatpush1.xpose.msra.mxu0 0.0
  %1195 = vmatprep.subr.mxu0 0.0
  %1196 = vmatpush1.xpose.msra.mxu0 0.0
  %1197 = vmatprep.subr.mxu0 0.0
  %1198 = vmatpush1.xpose.msra.mxu0 0.0
  %1199 = vmatprep.subr.mxu0 0.0
  %1200 = vmatpush1.xpose.msra.mxu0 0.0
  %1201 = vmatprep.subr.mxu0 0.0
  %1202 = vmatpush1.xpose.msra.mxu0 0.0
  %1203 = vmatprep.subr.mxu0 0.0
  %1204 = vmatpush1.xpose.msra.mxu0 0.0
  %1205 = vmatprep.mubr.f32.mxu0 0.0
  %1206 = vmatmul.mubr.f32.gmra.mrb[0].mxu0 %v1133
  %v1207 = vpop.f32.mrb[0].mxu0
  %v1208 = vadd.f32 0.0, %v1207
  %v1209 = vpop.f32.mrb[0].mxu0
  %1210 = vmatprep.mubr.f32.mxu0 0.0
  %1211 = vmatmul.mubr.f32.gmra.mrb[0].mxu0 %v1135
  %v1212 = vpop.f32.mrb[0].mxu0
  %v1213 = vadd.f32 0.0, %v1212
  %v1214 = vpop.f32.mrb[0].mxu0
  %1215 = vdwg.mxu0
  %v1216 = vmul.f32 %v1117, 0.35355338
  %v1217 = vmul.f32 %v1122, 0.35355338
  %v1218 = vmul.f32 %v1208, 0.35355338
  %v1219 = vmul.f32 %v1213, 0.35355338
  %v1220 = vsel %vm811, %v1216, -inf
  %1221 = vmax.xlane.f32.xlu0 %v1220
  %v1222 = vpop.xlane.xlu0 %1221
  %v1223 = vsel %vm815, %v1217, -inf
  %1224 = vmax.xlane.f32.xlu0 %v1223
  %v1225 = vpop.xlane.xlu0 %1224
  %v1226 = vsel %vm811, %v1218, -inf
  %1227 = vmax.xlane.f32.xlu0 %v1226
  %v1228 = vpop.xlane.xlu0 %1227
  %v1229 = vsel %vm815, %v1219, -inf
  %1230 = vmax.xlane.f32.xlu0 %v1229
  %v1231 = vpop.xlane.xlu0 %1230
  %v1232 = vsub.f32 %v1216, %v1222
  %v1233 = vsub.f32 %v1217, %v1225
  %v1234 = vsub.f32 %v1218, %v1228
  %v1235 = vsub.f32 %v1219, %v1231
  %v1236 = vmul.f32 %v1232, 1.442695
  %v1237 = vpow.pop %v1236
  %v1238 = vmul.f32 %v1233, 1.442695
  %v1239 = vpow.pop %v1238
  %v1240 = vmul.f32 %v1234, 1.442695
  %v1241 = vpow.pop %v1240
  %v1242 = vmul.f32 %v1235, 1.442695
  %v1243 = vpow.pop %v1242
  %v1244 = vsel %vm811, %v1237, 0.0
  %1245 = vadd.xlane.f32.xlu0 %v1244
  %v1246 = vpop.xlane.xlu0 %1245
  %v1247 = vsel %vm815, %v1239, 0.0
  %1248 = vadd.xlane.f32.xlu0 %v1247
  %v1249 = vpop.xlane.xlu0 %1248
  %v1250 = vsel %vm811, %v1241, 0.0
  %1251 = vadd.xlane.f32.xlu0 %v1250
  %v1252 = vpop.xlane.xlu0 %1251
  %v1253 = vsel %vm815, %v1243, 0.0
  %1254 = vadd.xlane.f32.xlu0 %v1253
  %v1255 = vpop.xlane.xlu0 %1254
  %v1256 = vrcp.pop %v1246
  %v1257 = vrcp.pop %v1249
  %v1258 = vrcp.pop %v1252
  %v1259 = vrcp.pop %v1255
  %v1260 = vmul.f32 %v1237, %v1256
  %v1261 = vmul.f32 %v1239, %v1257
  %v1262 = vmul.f32 %v1241, %v1258
  %v1263 = vmul.f32 %v1243, %v1259
  %1264 = vrot.lane.b32.xlu0 %v554, 56
  %v1265 = vpop.permute.xlu0 %1264
  %1266 = vrot.lane.b32.xlu0 %v568, 56
  %v1267 = vpop.permute.xlu0 %1266
  %v1270 = vsel %vm811, %v1260, 0
  %v1273 = vsel %vm811, %v1261, 0
  %v1275 = vsel %vm868, %v1267, 0
  %1277 = vmatprep.subr.mxu0 0.0
  %1278 = vmatpush1.msra.mxu0 %v1265
  %1279 = vmatprep.subr.mxu0 0.0
  %1280 = vmatpush1.msra.mxu0 %v1275
  %1281 = vmatprep.subr.mxu0 0.0
  %1282 = vmatpush1.msra.mxu0 0.0
  %1283 = vmatprep.subr.mxu0 0.0
  %1284 = vmatpush1.msra.mxu0 0.0
  %1285 = vmatprep.subr.mxu0 0.0
  %1286 = vmatpush1.msra.mxu0 0.0
  %1287 = vmatprep.subr.mxu0 0.0
  %1288 = vmatpush1.msra.mxu0 0.0
  %1289 = vmatprep.subr.mxu0 0.0
  %1290 = vmatpush1.msra.mxu0 0.0
  %1291 = vmatprep.subr.mxu0 0.0
  %1292 = vmatpush1.msra.mxu0 0.0
  %1293 = vmatprep.subr.mxu0 0.0
  %1294 = vmatpush1.msra.mxu0 0.0
  %1295 = vmatprep.subr.mxu0 0.0
  %1296 = vmatpush1.msra.mxu0 0.0
  %1297 = vmatprep.subr.mxu0 0.0
  %1298 = vmatpush1.msra.mxu0 0.0
  %1299 = vmatprep.subr.mxu0 0.0
  %1300 = vmatpush1.msra.mxu0 0.0
  %1301 = vmatprep.subr.mxu0 0.0
  %1302 = vmatpush1.msra.mxu0 0.0
  %1303 = vmatprep.subr.mxu0 0.0
  %1304 = vmatpush1.msra.mxu0 0.0
  %1305 = vmatprep.subr.mxu0 0.0
  %1306 = vmatpush1.msra.mxu0 0.0
  %1307 = vmatprep.subr.mxu0 0.0
  %1308 = vmatpush1.msra.mxu0 0.0
  %1309 = vmatprep.subr.mxu0 0.0
  %1310 = vmatpush1.msra.mxu0 0.0
  %1311 = vmatprep.subr.mxu0 0.0
  %1312 = vmatpush1.msra.mxu0 0.0
  %1313 = vmatprep.subr.mxu0 0.0
  %1314 = vmatpush1.msra.mxu0 0.0
  %1315 = vmatprep.subr.mxu0 0.0
  %1316 = vmatpush1.msra.mxu0 0.0
  %1317 = vmatprep.subr.mxu0 0.0
  %1318 = vmatpush1.msra.mxu0 0.0
  %1319 = vmatprep.subr.mxu0 0.0
  %1320 = vmatpush1.msra.mxu0 0.0
  %1321 = vmatprep.subr.mxu0 0.0
  %1322 = vmatpush1.msra.mxu0 0.0
  %1323 = vmatprep.subr.mxu0 0.0
  %1324 = vmatpush1.msra.mxu0 0.0
  %1325 = vmatprep.subr.mxu0 0.0
  %1326 = vmatpush1.msra.mxu0 0.0
  %1327 = vmatprep.subr.mxu0 0.0
  %1328 = vmatpush1.msra.mxu0 0.0
  %1329 = vmatprep.subr.mxu0 0.0
  %1330 = vmatpush1.msra.mxu0 0.0
  %1331 = vmatprep.subr.mxu0 0.0
  %1332 = vmatpush1.msra.mxu0 0.0
  %1333 = vmatprep.subr.mxu0 0.0
  %1334 = vmatpush1.msra.mxu0 0.0
  %1335 = vmatprep.subr.mxu0 0.0
  %1336 = vmatpush1.msra.mxu0 0.0
  %1337 = vmatprep.subr.mxu0 0.0
  %1338 = vmatpush1.msra.mxu0 0.0
  %1339 = vmatprep.subr.mxu0 0.0
  %1340 = vmatpush1.msra.mxu0 0.0
  %1341 = vmatprep.mubr.f32.mxu0 0.0
  %1342 = vmatmul.mubr.f32.gmra.mrb[0].mxu0 %v1270
  %v1343 = vpop.f32.mrb[0].mxu0
  %v1344 = vadd.f32 0.0, %v1343
  %v1345 = vpop.f32.mrb[0].mxu0
  %1346 = vmatprep.mubr.f32.mxu0 0.0
  %1347 = vmatmul.mubr.f32.gmra.mrb[0].mxu0 %v1273
  %v1348 = vpop.f32.mrb[0].mxu0
  %v1349 = vadd.f32 0.0, %v1348
  %v1350 = vpop.f32.mrb[0].mxu0
  %1351 = vdwg.mxu0
  %1352 = vrot.lane.b32.xlu0 %v705, 56
  %v1353 = vpop.permute.xlu0 %1352
  %1354 = vrot.lane.b32.xlu0 %v719, 56
  %v1355 = vpop.permute.xlu0 %1354
  %v1358 = vsel %vm811, %v1262, 0
  %v1361 = vsel %vm811, %v1263, 0
  %v1363 = vsel %vm868, %v1355, 0
  %1365 = vmatprep.subr.mxu0 0.0
  %1366 = vmatpush1.msra.mxu0 %v1353
  %1367 = vmatprep.subr.mxu0 0.0
  %1368 = vmatpush1.msra.mxu0 %v1363
  %1369 = vmatprep.subr.mxu0 0.0
  %1370 = vmatpush1.msra.mxu0 0.0
  %1371 = vmatprep.subr.mxu0 0.0
  %1372 = vmatpush1.msra.mxu0 0.0
  %1373 = vmatprep.subr.mxu0 0.0
  %1374 = vmatpush1.msra.mxu0 0.0
  %1375 = vmatprep.subr.mxu0 0.0
  %1376 = vmatpush1.msra.mxu0 0.0
  %1377 = vmatprep.subr.mxu0 0.0
  %1378 = vmatpush1.msra.mxu0 0.0
  %1379 = vmatprep.subr.mxu0 0.0
  %1380 = vmatpush1.msra.mxu0 0.0
  %1381 = vmatprep.subr.mxu0 0.0
  %1382 = vmatpush1.msra.mxu0 0.0
  %1383 = vmatprep.subr.mxu0 0.0
  %1384 = vmatpush1.msra.mxu0 0.0
  %1385 = vmatprep.subr.mxu0 0.0
  %1386 = vmatpush1.msra.mxu0 0.0
  %1387 = vmatprep.subr.mxu0 0.0
  %1388 = vmatpush1.msra.mxu0 0.0
  %1389 = vmatprep.subr.mxu0 0.0
  %1390 = vmatpush1.msra.mxu0 0.0
  %1391 = vmatprep.subr.mxu0 0.0
  %1392 = vmatpush1.msra.mxu0 0.0
  %1393 = vmatprep.subr.mxu0 0.0
  %1394 = vmatpush1.msra.mxu0 0.0
  %1395 = vmatprep.subr.mxu0 0.0
  %1396 = vmatpush1.msra.mxu0 0.0
  %1397 = vmatprep.subr.mxu0 0.0
  %1398 = vmatpush1.msra.mxu0 0.0
  %1399 = vmatprep.subr.mxu0 0.0
  %1400 = vmatpush1.msra.mxu0 0.0
  %1401 = vmatprep.subr.mxu0 0.0
  %1402 = vmatpush1.msra.mxu0 0.0
  %1403 = vmatprep.subr.mxu0 0.0
  %1404 = vmatpush1.msra.mxu0 0.0
  %1405 = vmatprep.subr.mxu0 0.0
  %1406 = vmatpush1.msra.mxu0 0.0
  %1407 = vmatprep.subr.mxu0 0.0
  %1408 = vmatpush1.msra.mxu0 0.0
  %1409 = vmatprep.subr.mxu0 0.0
  %1410 = vmatpush1.msra.mxu0 0.0
  %1411 = vmatprep.subr.mxu0 0.0
  %1412 = vmatpush1.msra.mxu0 0.0
  %1413 = vmatprep.subr.mxu0 0.0
  %1414 = vmatpush1.msra.mxu0 0.0
  %1415 = vmatprep.subr.mxu0 0.0
  %1416 = vmatpush1.msra.mxu0 0.0
  %1417 = vmatprep.subr.mxu0 0.0
  %1418 = vmatpush1.msra.mxu0 0.0
  %1419 = vmatprep.subr.mxu0 0.0
  %1420 = vmatpush1.msra.mxu0 0.0
  %1421 = vmatprep.subr.mxu0 0.0
  %1422 = vmatpush1.msra.mxu0 0.0
  %1423 = vmatprep.subr.mxu0 0.0
  %1424 = vmatpush1.msra.mxu0 0.0
  %1425 = vmatprep.subr.mxu0 0.0
  %1426 = vmatpush1.msra.mxu0 0.0
  %1427 = vmatprep.subr.mxu0 0.0
  %1428 = vmatpush1.msra.mxu0 0.0
  %1429 = vmatprep.mubr.f32.mxu0 0.0
  %1430 = vmatmul.mubr.f32.gmra.mrb[0].mxu0 %v1358
  %v1431 = vpop.f32.mrb[0].mxu0
  %v1432 = vadd.f32 0.0, %v1431
  %v1433 = vpop.f32.mrb[0].mxu0
  %1434 = vmatprep.mubr.f32.mxu0 0.0
  %1435 = vmatmul.mubr.f32.gmra.mrb[0].mxu0 %v1361
  %v1436 = vpop.f32.mrb[0].mxu0
  %v1437 = vadd.f32 0.0, %v1436
  %v1438 = vpop.f32.mrb[0].mxu0
  %1439 = vdwg.mxu0
  %1440 = vrot.lane.b32.xlu0 %v554, 112
  %v1441 = vpop.permute.xlu0 %1440
  %1442 = vrot.lane.b32.xlu0 %v568, 112
  %v1443 = vpop.permute.xlu0 %1442
  %1444 = vrot.lane.b32.xlu0 %v554, 80
  %v1445 = vpop.permute.xlu0 %1444
  %1446 = vrot.lane.b32.xlu0 %v568, 80
  %v1447 = vpop.permute.xlu0 %1446
  %v1448 = vsel %vm573, %v1441, 0
  %v1450 = vsel %vm573, %v1443, 0
  %v1452 = vsel %vm573, %v1445, 0
  %v1454 = vsel %vm573, %v1447, 0
  %1456 = vmatprep.subr.mxu0 0.0
  %1457 = vmatpush1.xpose.msra.mxu0 %v1452
  %1458 = vmatprep.subr.mxu0 0.0
  %1459 = vmatpush1.xpose.msra.mxu0 %v1454
  %1460 = vmatprep.subr.mxu0 0.0
  %1461 = vmatpush1.xpose.msra.mxu0 0.0
  %1462 = vmatprep.subr.mxu0 0.0
  %1463 = vmatpush1.xpose.msra.mxu0 0.0
  %1464 = vmatprep.subr.mxu0 0.0
  %1465 = vmatpush1.xpose.msra.mxu0 0.0
  %1466 = vmatprep.subr.mxu0 0.0
  %1467 = vmatpush1.xpose.msra.mxu0 0.0
  %1468 = vmatprep.subr.mxu0 0.0
  %1469 = vmatpush1.xpose.msra.mxu0 0.0
  %1470 = vmatprep.subr.mxu0 0.0
  %1471 = vmatpush1.xpose.msra.mxu0 0.0
  %1472 = vmatprep.subr.mxu0 0.0
  %1473 = vmatpush1.xpose.msra.mxu0 0.0
  %1474 = vmatprep.subr.mxu0 0.0
  %1475 = vmatpush1.xpose.msra.mxu0 0.0
  %1476 = vmatprep.subr.mxu0 0.0
  %1477 = vmatpush1.xpose.msra.mxu0 0.0
  %1478 = vmatprep.subr.mxu0 0.0
  %1479 = vmatpush1.xpose.msra.mxu0 0.0
  %1480 = vmatprep.subr.mxu0 0.0
  %1481 = vmatpush1.xpose.msra.mxu0 0.0
  %1482 = vmatprep.subr.mxu0 0.0
  %1483 = vmatpush1.xpose.msra.mxu0 0.0
  %1484 = vmatprep.subr.mxu0 0.0
  %1485 = vmatpush1.xpose.msra.mxu0 0.0
  %1486 = vmatprep.subr.mxu0 0.0
  %1487 = vmatpush1.xpose.msra.mxu0 0.0
  %1488 = vmatprep.subr.mxu0 0.0
  %1489 = vmatpush1.xpose.msra.mxu0 0.0
  %1490 = vmatprep.subr.mxu0 0.0
  %1491 = vmatpush1.xpose.msra.mxu0 0.0
  %1492 = vmatprep.subr.mxu0 0.0
  %1493 = vmatpush1.xpose.msra.mxu0 0.0
  %1494 = vmatprep.subr.mxu0 0.0
  %1495 = vmatpush1.xpose.msra.mxu0 0.0
  %1496 = vmatprep.subr.mxu0 0.0
  %1497 = vmatpush1.xpose.msra.mxu0 0.0
  %1498 = vmatprep.subr.mxu0 0.0
  %1499 = vmatpush1.xpose.msra.mxu0 0.0
  %1500 = vmatprep.subr.mxu0 0.0
  %1501 = vmatpush1.xpose.msra.mxu0 0.0
  %1502 = vmatprep.subr.mxu0 0.0
  %1503 = vmatpush1.xpose.msra.mxu0 0.0
  %1504 = vmatprep.subr.mxu0 0.0
  %1505 = vmatpush1.xpose.msra.mxu0 0.0
  %1506 = vmatprep.subr.mxu0 0.0
  %1507 = vmatpush1.xpose.msra.mxu0 0.0
  %1508 = vmatprep.subr.mxu0 0.0
  %1509 = vmatpush1.xpose.msra.mxu0 0.0
  %1510 = vmatprep.subr.mxu0 0.0
  %1511 = vmatpush1.xpose.msra.mxu0 0.0
  %1512 = vmatprep.subr.mxu0 0.0
  %1513 = vmatpush1.xpose.msra.mxu0 0.0
  %1514 = vmatprep.subr.mxu0 0.0
  %1515 = vmatpush1.xpose.msra.mxu0 0.0
  %1516 = vmatprep.subr.mxu0 0.0
  %1517 = vmatpush1.xpose.msra.mxu0 0.0
  %1518 = vmatprep.subr.mxu0 0.0
  %1519 = vmatpush1.xpose.msra.mxu0 0.0
  %1520 = vmatprep.mubr.f32.mxu0 0.0
  %1521 = vmatmul.mubr.f32.gmra.mrb[0].mxu0 %v1448
  %v1522 = vpop.f32.mrb[0].mxu0
  %v1523 = vadd.f32 0.0, %v1522
  %v1524 = vpop.f32.mrb[0].mxu0
  %1525 = vmatprep.mubr.f32.mxu0 0.0
  %1526 = vmatmul.mubr.f32.gmra.mrb[0].mxu0 %v1450
  %v1527 = vpop.f32.mrb[0].mxu0
  %v1528 = vadd.f32 0.0, %v1527
  %v1529 = vpop.f32.mrb[0].mxu0
  %1530 = vdwg.mxu0
  %1531 = vrot.lane.b32.xlu0 %v705, 112
  %v1532 = vpop.permute.xlu0 %1531
  %1533 = vrot.lane.b32.xlu0 %v719, 112
  %v1534 = vpop.permute.xlu0 %1533
  %1535 = vrot.lane.b32.xlu0 %v705, 80
  %v1536 = vpop.permute.xlu0 %1535
  %1537 = vrot.lane.b32.xlu0 %v719, 80
  %v1538 = vpop.permute.xlu0 %1537
  %v1539 = vsel %vm573, %v1532, 0
  %v1541 = vsel %vm573, %v1534, 0
  %v1543 = vsel %vm573, %v1536, 0
  %v1545 = vsel %vm573, %v1538, 0
  %1547 = vmatprep.subr.mxu0 0.0
  %1548 = vmatpush1.xpose.msra.mxu0 %v1543
  %1549 = vmatprep.subr.mxu0 0.0
  %1550 = vmatpush1.xpose.msra.mxu0 %v1545
  %1551 = vmatprep.subr.mxu0 0.0
  %1552 = vmatpush1.xpose.msra.mxu0 0.0
  %1553 = vmatprep.subr.mxu0 0.0
  %1554 = vmatpush1.xpose.msra.mxu0 0.0
  %1555 = vmatprep.subr.mxu0 0.0
  %1556 = vmatpush1.xpose.msra.mxu0 0.0
  %1557 = vmatprep.subr.mxu0 0.0
  %1558 = vmatpush1.xpose.msra.mxu0 0.0
  %1559 = vmatprep.subr.mxu0 0.0
  %1560 = vmatpush1.xpose.msra.mxu0 0.0
  %1561 = vmatprep.subr.mxu0 0.0
  %1562 = vmatpush1.xpose.msra.mxu0 0.0
  %1563 = vmatprep.subr.mxu0 0.0
  %1564 = vmatpush1.xpose.msra.mxu0 0.0
  %1565 = vmatprep.subr.mxu0 0.0
  %1566 = vmatpush1.xpose.msra.mxu0 0.0
  %1567 = vmatprep.subr.mxu0 0.0
  %1568 = vmatpush1.xpose.msra.mxu0 0.0
  %1569 = vmatprep.subr.mxu0 0.0
  %1570 = vmatpush1.xpose.msra.mxu0 0.0
  %1571 = vmatprep.subr.mxu0 0.0
  %1572 = vmatpush1.xpose.msra.mxu0 0.0
  %1573 = vmatprep.subr.mxu0 0.0
  %1574 = vmatpush1.xpose.msra.mxu0 0.0
  %1575 = vmatprep.subr.mxu0 0.0
  %1576 = vmatpush1.xpose.msra.mxu0 0.0
  %1577 = vmatprep.subr.mxu0 0.0
  %1578 = vmatpush1.xpose.msra.mxu0 0.0
  %1579 = vmatprep.subr.mxu0 0.0
  %1580 = vmatpush1.xpose.msra.mxu0 0.0
  %1581 = vmatprep.subr.mxu0 0.0
  %1582 = vmatpush1.xpose.msra.mxu0 0.0
  %1583 = vmatprep.subr.mxu0 0.0
  %1584 = vmatpush1.xpose.msra.mxu0 0.0
  %1585 = vmatprep.subr.mxu0 0.0
  %1586 = vmatpush1.xpose.msra.mxu0 0.0
  %1587 = vmatprep.subr.mxu0 0.0
  %1588 = vmatpush1.xpose.msra.mxu0 0.0
  %1589 = vmatprep.subr.mxu0 0.0
  %1590 = vmatpush1.xpose.msra.mxu0 0.0
  %1591 = vmatprep.subr.mxu0 0.0
  %1592 = vmatpush1.xpose.msra.mxu0 0.0
  %1593 = vmatprep.subr.mxu0 0.0
  %1594 = vmatpush1.xpose.msra.mxu0 0.0
  %1595 = vmatprep.subr.mxu0 0.0
  %1596 = vmatpush1.xpose.msra.mxu0 0.0
  %1597 = vmatprep.subr.mxu0 0.0
  %1598 = vmatpush1.xpose.msra.mxu0 0.0
  %1599 = vmatprep.subr.mxu0 0.0
  %1600 = vmatpush1.xpose.msra.mxu0 0.0
  %1601 = vmatprep.subr.mxu0 0.0
  %1602 = vmatpush1.xpose.msra.mxu0 0.0
  %1603 = vmatprep.subr.mxu0 0.0
  %1604 = vmatpush1.xpose.msra.mxu0 0.0
  %1605 = vmatprep.subr.mxu0 0.0
  %1606 = vmatpush1.xpose.msra.mxu0 0.0
  %1607 = vmatprep.subr.mxu0 0.0
  %1608 = vmatpush1.xpose.msra.mxu0 0.0
  %1609 = vmatprep.subr.mxu0 0.0
  %1610 = vmatpush1.xpose.msra.mxu0 0.0
  %1611 = vmatprep.mubr.f32.mxu0 0.0
  %1612 = vmatmul.mubr.f32.gmra.mrb[0].mxu0 %v1539
  %v1613 = vpop.f32.mrb[0].mxu0
  %v1614 = vadd.f32 0.0, %v1613
  %v1615 = vpop.f32.mrb[0].mxu0
  %1616 = vmatprep.mubr.f32.mxu0 0.0
  %1617 = vmatmul.mubr.f32.gmra.mrb[0].mxu0 %v1541
  %v1618 = vpop.f32.mrb[0].mxu0
  %v1619 = vadd.f32 0.0, %v1618
  %v1620 = vpop.f32.mrb[0].mxu0
  %1621 = vdwg.mxu0
  %v1622 = vmul.f32 %v1523, 0.35355338
  %v1623 = vmul.f32 %v1528, 0.35355338
  %v1624 = vmul.f32 %v1614, 0.35355338
  %v1625 = vmul.f32 %v1619, 0.35355338
  %v1626 = vsel %vm811, %v1622, -inf
  %1627 = vmax.xlane.f32.xlu0 %v1626
  %v1628 = vpop.xlane.xlu0 %1627
  %v1629 = vsel %vm815, %v1623, -inf
  %1630 = vmax.xlane.f32.xlu0 %v1629
  %v1631 = vpop.xlane.xlu0 %1630
  %v1632 = vsel %vm811, %v1624, -inf
  %1633 = vmax.xlane.f32.xlu0 %v1632
  %v1634 = vpop.xlane.xlu0 %1633
  %v1635 = vsel %vm815, %v1625, -inf
  %1636 = vmax.xlane.f32.xlu0 %v1635
  %v1637 = vpop.xlane.xlu0 %1636
  %v1638 = vsub.f32 %v1622, %v1628
  %v1639 = vsub.f32 %v1623, %v1631
  %v1640 = vsub.f32 %v1624, %v1634
  %v1641 = vsub.f32 %v1625, %v1637
  %v1642 = vmul.f32 %v1638, 1.442695
  %v1643 = vpow.pop %v1642
  %v1644 = vmul.f32 %v1639, 1.442695
  %v1645 = vpow.pop %v1644
  %v1646 = vmul.f32 %v1640, 1.442695
  %v1647 = vpow.pop %v1646
  %v1648 = vmul.f32 %v1641, 1.442695
  %v1649 = vpow.pop %v1648
  %v1650 = vsel %vm811, %v1643, 0.0
  %1651 = vadd.xlane.f32.xlu0 %v1650
  %v1652 = vpop.xlane.xlu0 %1651
  %v1653 = vsel %vm815, %v1645, 0.0
  %1654 = vadd.xlane.f32.xlu0 %v1653
  %v1655 = vpop.xlane.xlu0 %1654
  %v1656 = vsel %vm811, %v1647, 0.0
  %1657 = vadd.xlane.f32.xlu0 %v1656
  %v1658 = vpop.xlane.xlu0 %1657
  %v1659 = vsel %vm815, %v1649, 0.0
  %1660 = vadd.xlane.f32.xlu0 %v1659
  %v1661 = vpop.xlane.xlu0 %1660
  %v1662 = vrcp.pop %v1652
  %v1663 = vrcp.pop %v1655
  %v1664 = vrcp.pop %v1658
  %v1665 = vrcp.pop %v1661
  %v1666 = vmul.f32 %v1643, %v1662
  %v1667 = vmul.f32 %v1645, %v1663
  %v1668 = vmul.f32 %v1647, %v1664
  %v1669 = vmul.f32 %v1649, %v1665
  %1670 = vrot.lane.b32.xlu0 %v554, 48
  %v1671 = vpop.permute.xlu0 %1670
  %1672 = vrot.lane.b32.xlu0 %v568, 48
  %v1673 = vpop.permute.xlu0 %1672
  %v1676 = vsel %vm811, %v1666, 0
  %v1679 = vsel %vm811, %v1667, 0
  %v1681 = vsel %vm868, %v1673, 0
  %1683 = vmatprep.subr.mxu0 0.0
  %1684 = vmatpush1.msra.mxu0 %v1671
  %1685 = vmatprep.subr.mxu0 0.0
  %1686 = vmatpush1.msra.mxu0 %v1681
  %1687 = vmatprep.subr.mxu0 0.0
  %1688 = vmatpush1.msra.mxu0 0.0
  %1689 = vmatprep.subr.mxu0 0.0
  %1690 = vmatpush1.msra.mxu0 0.0
  %1691 = vmatprep.subr.mxu0 0.0
  %1692 = vmatpush1.msra.mxu0 0.0
  %1693 = vmatprep.subr.mxu0 0.0
  %1694 = vmatpush1.msra.mxu0 0.0
  %1695 = vmatprep.subr.mxu0 0.0
  %1696 = vmatpush1.msra.mxu0 0.0
  %1697 = vmatprep.subr.mxu0 0.0
  %1698 = vmatpush1.msra.mxu0 0.0
  %1699 = vmatprep.subr.mxu0 0.0
  %1700 = vmatpush1.msra.mxu0 0.0
  %1701 = vmatprep.subr.mxu0 0.0
  %1702 = vmatpush1.msra.mxu0 0.0
  %1703 = vmatprep.subr.mxu0 0.0
  %1704 = vmatpush1.msra.mxu0 0.0
  %1705 = vmatprep.subr.mxu0 0.0
  %1706 = vmatpush1.msra.mxu0 0.0
  %1707 = vmatprep.subr.mxu0 0.0
  %1708 = vmatpush1.msra.mxu0 0.0
  %1709 = vmatprep.subr.mxu0 0.0
  %1710 = vmatpush1.msra.mxu0 0.0
  %1711 = vmatprep.subr.mxu0 0.0
  %1712 = vmatpush1.msra.mxu0 0.0
  %1713 = vmatprep.subr.mxu0 0.0
  %1714 = vmatpush1.msra.mxu0 0.0
  %1715 = vmatprep.subr.mxu0 0.0
  %1716 = vmatpush1.msra.mxu0 0.0
  %1717 = vmatprep.subr.mxu0 0.0
  %1718 = vmatpush1.msra.mxu0 0.0
  %1719 = vmatprep.subr.mxu0 0.0
  %1720 = vmatpush1.msra.mxu0 0.0
  %1721 = vmatprep.subr.mxu0 0.0
  %1722 = vmatpush1.msra.mxu0 0.0
  %1723 = vmatprep.subr.mxu0 0.0
  %1724 = vmatpush1.msra.mxu0 0.0
  %1725 = vmatprep.subr.mxu0 0.0
  %1726 = vmatpush1.msra.mxu0 0.0
  %1727 = vmatprep.subr.mxu0 0.0
  %1728 = vmatpush1.msra.mxu0 0.0
  %1729 = vmatprep.subr.mxu0 0.0
  %1730 = vmatpush1.msra.mxu0 0.0
  %1731 = vmatprep.subr.mxu0 0.0
  %1732 = vmatpush1.msra.mxu0 0.0
  %1733 = vmatprep.subr.mxu0 0.0
  %1734 = vmatpush1.msra.mxu0 0.0
  %1735 = vmatprep.subr.mxu0 0.0
  %1736 = vmatpush1.msra.mxu0 0.0
  %1737 = vmatprep.subr.mxu0 0.0
  %1738 = vmatpush1.msra.mxu0 0.0
  %1739 = vmatprep.subr.mxu0 0.0
  %1740 = vmatpush1.msra.mxu0 0.0
  %1741 = vmatprep.subr.mxu0 0.0
  %1742 = vmatpush1.msra.mxu0 0.0
  %1743 = vmatprep.subr.mxu0 0.0
  %1744 = vmatpush1.msra.mxu0 0.0
  %1745 = vmatprep.subr.mxu0 0.0
  %1746 = vmatpush1.msra.mxu0 0.0
  %1747 = vmatprep.mubr.f32.mxu0 0.0
  %1748 = vmatmul.mubr.f32.gmra.mrb[0].mxu0 %v1676
  %v1749 = vpop.f32.mrb[0].mxu0
  %v1750 = vadd.f32 0.0, %v1749
  %v1751 = vpop.f32.mrb[0].mxu0
  %1752 = vmatprep.mubr.f32.mxu0 0.0
  %1753 = vmatmul.mubr.f32.gmra.mrb[0].mxu0 %v1679
  %v1754 = vpop.f32.mrb[0].mxu0
  %v1755 = vadd.f32 0.0, %v1754
  %v1756 = vpop.f32.mrb[0].mxu0
  %1757 = vdwg.mxu0
  %1758 = vrot.lane.b32.xlu0 %v705, 48
  %v1759 = vpop.permute.xlu0 %1758
  %1760 = vrot.lane.b32.xlu0 %v719, 48
  %v1761 = vpop.permute.xlu0 %1760
  %v1764 = vsel %vm811, %v1668, 0
  %v1767 = vsel %vm811, %v1669, 0
  %v1769 = vsel %vm868, %v1761, 0
  %1771 = vmatprep.subr.mxu0 0.0
  %1772 = vmatpush1.msra.mxu0 %v1759
  %1773 = vmatprep.subr.mxu0 0.0
  %1774 = vmatpush1.msra.mxu0 %v1769
  %1775 = vmatprep.subr.mxu0 0.0
  %1776 = vmatpush1.msra.mxu0 0.0
  %1777 = vmatprep.subr.mxu0 0.0
  %1778 = vmatpush1.msra.mxu0 0.0
  %1779 = vmatprep.subr.mxu0 0.0
  %1780 = vmatpush1.msra.mxu0 0.0
  %1781 = vmatprep.subr.mxu0 0.0
  %1782 = vmatpush1.msra.mxu0 0.0
  %1783 = vmatprep.subr.mxu0 0.0
  %1784 = vmatpush1.msra.mxu0 0.0
  %1785 = vmatprep.subr.mxu0 0.0
  %1786 = vmatpush1.msra.mxu0 0.0
  %1787 = vmatprep.subr.mxu0 0.0
  %1788 = vmatpush1.msra.mxu0 0.0
  %1789 = vmatprep.subr.mxu0 0.0
  %1790 = vmatpush1.msra.mxu0 0.0
  %1791 = vmatprep.subr.mxu0 0.0
  %1792 = vmatpush1.msra.mxu0 0.0
  %1793 = vmatprep.subr.mxu0 0.0
  %1794 = vmatpush1.msra.mxu0 0.0
  %1795 = vmatprep.subr.mxu0 0.0
  %1796 = vmatpush1.msra.mxu0 0.0
  %1797 = vmatprep.subr.mxu0 0.0
  %1798 = vmatpush1.msra.mxu0 0.0
  %1799 = vmatprep.subr.mxu0 0.0
  %1800 = vmatpush1.msra.mxu0 0.0
  %1801 = vmatprep.subr.mxu0 0.0
  %1802 = vmatpush1.msra.mxu0 0.0
  %1803 = vmatprep.subr.mxu0 0.0
  %1804 = vmatpush1.msra.mxu0 0.0
  %1805 = vmatprep.subr.mxu0 0.0
  %1806 = vmatpush1.msra.mxu0 0.0
  %1807 = vmatprep.subr.mxu0 0.0
  %1808 = vmatpush1.msra.mxu0 0.0
  %1809 = vmatprep.subr.mxu0 0.0
  %1810 = vmatpush1.msra.mxu0 0.0
  %1811 = vmatprep.subr.mxu0 0.0
  %1812 = vmatpush1.msra.mxu0 0.0
  %1813 = vmatprep.subr.mxu0 0.0
  %1814 = vmatpush1.msra.mxu0 0.0
  %1815 = vmatprep.subr.mxu0 0.0
  %1816 = vmatpush1.msra.mxu0 0.0
  %1817 = vmatprep.subr.mxu0 0.0
  %1818 = vmatpush1.msra.mxu0 0.0
  %1819 = vmatprep.subr.mxu0 0.0
  %1820 = vmatpush1.msra.mxu0 0.0
  %1821 = vmatprep.subr.mxu0 0.0
  %1822 = vmatpush1.msra.mxu0 0.0
  %1823 = vmatprep.subr.mxu0 0.0
  %1824 = vmatpush1.msra.mxu0 0.0
  %1825 = vmatprep.subr.mxu0 0.0
  %1826 = vmatpush1.msra.mxu0 0.0
  %1827 = vmatprep.subr.mxu0 0.0
  %1828 = vmatpush1.msra.mxu0 0.0
  %1829 = vmatprep.subr.mxu0 0.0
  %1830 = vmatpush1.msra.mxu0 0.0
  %1831 = vmatprep.subr.mxu0 0.0
  %1832 = vmatpush1.msra.mxu0 0.0
  %1833 = vmatprep.subr.mxu0 0.0
  %1834 = vmatpush1.msra.mxu0 0.0
  %1835 = vmatprep.mubr.f32.mxu0 0.0
  %1836 = vmatmul.mubr.f32.gmra.mrb[0].mxu0 %v1764
  %v1837 = vpop.f32.mrb[0].mxu0
  %v1838 = vadd.f32 0.0, %v1837
  %v1839 = vpop.f32.mrb[0].mxu0
  %1840 = vmatprep.mubr.f32.mxu0 0.0
  %1841 = vmatmul.mubr.f32.gmra.mrb[0].mxu0 %v1767
  %v1842 = vpop.f32.mrb[0].mxu0
  %v1843 = vadd.f32 0.0, %v1842
  %v1844 = vpop.f32.mrb[0].mxu0
  %1845 = vdwg.mxu0
  %1846 = vrot.lane.b32.xlu0 %v554, 104
  %v1847 = vpop.permute.xlu0 %1846
  %1848 = vrot.lane.b32.xlu0 %v568, 104
  %v1849 = vpop.permute.xlu0 %1848
  %1850 = vrot.lane.b32.xlu0 %v554, 72
  %v1851 = vpop.permute.xlu0 %1850
  %1852 = vrot.lane.b32.xlu0 %v568, 72
  %v1853 = vpop.permute.xlu0 %1852
  %v1854 = vsel %vm573, %v1847, 0
  %v1856 = vsel %vm573, %v1849, 0
  %v1858 = vsel %vm573, %v1851, 0
  %v1860 = vsel %vm573, %v1853, 0
  %1862 = vmatprep.subr.mxu0 0.0
  %1863 = vmatpush1.xpose.msra.mxu0 %v1858
  %1864 = vmatprep.subr.mxu0 0.0
  %1865 = vmatpush1.xpose.msra.mxu0 %v1860
  %1866 = vmatprep.subr.mxu0 0.0
  %1867 = vmatpush1.xpose.msra.mxu0 0.0
  %1868 = vmatprep.subr.mxu0 0.0
  %1869 = vmatpush1.xpose.msra.mxu0 0.0
  %1870 = vmatprep.subr.mxu0 0.0
  %1871 = vmatpush1.xpose.msra.mxu0 0.0
  %1872 = vmatprep.subr.mxu0 0.0
  %1873 = vmatpush1.xpose.msra.mxu0 0.0
  %1874 = vmatprep.subr.mxu0 0.0
  %1875 = vmatpush1.xpose.msra.mxu0 0.0
  %1876 = vmatprep.subr.mxu0 0.0
  %1877 = vmatpush1.xpose.msra.mxu0 0.0
  %1878 = vmatprep.subr.mxu0 0.0
  %1879 = vmatpush1.xpose.msra.mxu0 0.0
  %1880 = vmatprep.subr.mxu0 0.0
  %1881 = vmatpush1.xpose.msra.mxu0 0.0
  %1882 = vmatprep.subr.mxu0 0.0
  %1883 = vmatpush1.xpose.msra.mxu0 0.0
  %1884 = vmatprep.subr.mxu0 0.0
  %1885 = vmatpush1.xpose.msra.mxu0 0.0
  %1886 = vmatprep.subr.mxu0 0.0
  %1887 = vmatpush1.xpose.msra.mxu0 0.0
  %1888 = vmatprep.subr.mxu0 0.0
  %1889 = vmatpush1.xpose.msra.mxu0 0.0
  %1890 = vmatprep.subr.mxu0 0.0
  %1891 = vmatpush1.xpose.msra.mxu0 0.0
  %1892 = vmatprep.subr.mxu0 0.0
  %1893 = vmatpush1.xpose.msra.mxu0 0.0
  %1894 = vmatprep.subr.mxu0 0.0
  %1895 = vmatpush1.xpose.msra.mxu0 0.0
  %1896 = vmatprep.subr.mxu0 0.0
  %1897 = vmatpush1.xpose.msra.mxu0 0.0
  %1898 = vmatprep.subr.mxu0 0.0
  %1899 = vmatpush1.xpose.msra.mxu0 0.0
  %1900 = vmatprep.subr.mxu0 0.0
  %1901 = vmatpush1.xpose.msra.mxu0 0.0
  %1902 = vmatprep.subr.mxu0 0.0
  %1903 = vmatpush1.xpose.msra.mxu0 0.0
  %1904 = vmatprep.subr.mxu0 0.0
  %1905 = vmatpush1.xpose.msra.mxu0 0.0
  %1906 = vmatprep.subr.mxu0 0.0
  %1907 = vmatpush1.xpose.msra.mxu0 0.0
  %1908 = vmatprep.subr.mxu0 0.0
  %1909 = vmatpush1.xpose.msra.mxu0 0.0
  %1910 = vmatprep.subr.mxu0 0.0
  %1911 = vmatpush1.xpose.msra.mxu0 0.0
  %1912 = vmatprep.subr.mxu0 0.0
  %1913 = vmatpush1.xpose.msra.mxu0 0.0
  %1914 = vmatprep.subr.mxu0 0.0
  %1915 = vmatpush1.xpose.msra.mxu0 0.0
  %1916 = vmatprep.subr.mxu0 0.0
  %1917 = vmatpush1.xpose.msra.mxu0 0.0
  %1918 = vmatprep.subr.mxu0 0.0
  %1919 = vmatpush1.xpose.msra.mxu0 0.0
  %1920 = vmatprep.subr.mxu0 0.0
  %1921 = vmatpush1.xpose.msra.mxu0 0.0
  %1922 = vmatprep.subr.mxu0 0.0
  %1923 = vmatpush1.xpose.msra.mxu0 0.0
  %1924 = vmatprep.subr.mxu0 0.0
  %1925 = vmatpush1.xpose.msra.mxu0 0.0
  %1926 = vmatprep.mubr.f32.mxu0 0.0
  %1927 = vmatmul.mubr.f32.gmra.mrb[0].mxu0 %v1854
  %v1928 = vpop.f32.mrb[0].mxu0
  %v1929 = vadd.f32 0.0, %v1928
  %v1930 = vpop.f32.mrb[0].mxu0
  %1931 = vmatprep.mubr.f32.mxu0 0.0
  %1932 = vmatmul.mubr.f32.gmra.mrb[0].mxu0 %v1856
  %v1933 = vpop.f32.mrb[0].mxu0
  %v1934 = vadd.f32 0.0, %v1933
  %v1935 = vpop.f32.mrb[0].mxu0
  %1936 = vdwg.mxu0
  %1937 = vrot.lane.b32.xlu0 %v705, 104
  %v1938 = vpop.permute.xlu0 %1937
  %1939 = vrot.lane.b32.xlu0 %v719, 104
  %v1940 = vpop.permute.xlu0 %1939
  %1941 = vrot.lane.b32.xlu0 %v705, 72
  %v1942 = vpop.permute.xlu0 %1941
  %1943 = vrot.lane.b32.xlu0 %v719, 72
  %v1944 = vpop.permute.xlu0 %1943
  %v1945 = vsel %vm573, %v1938, 0
  %v1947 = vsel %vm573, %v1940, 0
  %v1949 = vsel %vm573, %v1942, 0
  %v1951 = vsel %vm573, %v1944, 0
  %1953 = vmatprep.subr.mxu0 0.0
  %1954 = vmatpush1.xpose.msra.mxu0 %v1949
  %1955 = vmatprep.subr.mxu0 0.0
  %1956 = vmatpush1.xpose.msra.mxu0 %v1951
  %1957 = vmatprep.subr.mxu0 0.0
  %1958 = vmatpush1.xpose.msra.mxu0 0.0
  %1959 = vmatprep.subr.mxu0 0.0
  %1960 = vmatpush1.xpose.msra.mxu0 0.0
  %1961 = vmatprep.subr.mxu0 0.0
  %1962 = vmatpush1.xpose.msra.mxu0 0.0
  %1963 = vmatprep.subr.mxu0 0.0
  %1964 = vmatpush1.xpose.msra.mxu0 0.0
  %1965 = vmatprep.subr.mxu0 0.0
  %1966 = vmatpush1.xpose.msra.mxu0 0.0
  %1967 = vmatprep.subr.mxu0 0.0
  %1968 = vmatpush1.xpose.msra.mxu0 0.0
  %1969 = vmatprep.subr.mxu0 0.0
  %1970 = vmatpush1.xpose.msra.mxu0 0.0
  %1971 = vmatprep.subr.mxu0 0.0
  %1972 = vmatpush1.xpose.msra.mxu0 0.0
  %1973 = vmatprep.subr.mxu0 0.0
  %1974 = vmatpush1.xpose.msra.mxu0 0.0
  %1975 = vmatprep.subr.mxu0 0.0
  %1976 = vmatpush1.xpose.msra.mxu0 0.0
  %1977 = vmatprep.subr.mxu0 0.0
  %1978 = vmatpush1.xpose.msra.mxu0 0.0
  %1979 = vmatprep.subr.mxu0 0.0
  %1980 = vmatpush1.xpose.msra.mxu0 0.0
  %1981 = vmatprep.subr.mxu0 0.0
  %1982 = vmatpush1.xpose.msra.mxu0 0.0
  %1983 = vmatprep.subr.mxu0 0.0
  %1984 = vmatpush1.xpose.msra.mxu0 0.0
  %1985 = vmatprep.subr.mxu0 0.0
  %1986 = vmatpush1.xpose.msra.mxu0 0.0
  %1987 = vmatprep.subr.mxu0 0.0
  %1988 = vmatpush1.xpose.msra.mxu0 0.0
  %1989 = vmatprep.subr.mxu0 0.0
  %1990 = vmatpush1.xpose.msra.mxu0 0.0
  %1991 = vmatprep.subr.mxu0 0.0
  %1992 = vmatpush1.xpose.msra.mxu0 0.0
  %1993 = vmatprep.subr.mxu0 0.0
  %1994 = vmatpush1.xpose.msra.mxu0 0.0
  %1995 = vmatprep.subr.mxu0 0.0
  %1996 = vmatpush1.xpose.msra.mxu0 0.0
  %1997 = vmatprep.subr.mxu0 0.0
  %1998 = vmatpush1.xpose.msra.mxu0 0.0
  %1999 = vmatprep.subr.mxu0 0.0
  %2000 = vmatpush1.xpose.msra.mxu0 0.0
  %2001 = vmatprep.subr.mxu0 0.0
  %2002 = vmatpush1.xpose.msra.mxu0 0.0
  %2003 = vmatprep.subr.mxu0 0.0
  %2004 = vmatpush1.xpose.msra.mxu0 0.0
  %2005 = vmatprep.subr.mxu0 0.0
  %2006 = vmatpush1.xpose.msra.mxu0 0.0
  %2007 = vmatprep.subr.mxu0 0.0
  %2008 = vmatpush1.xpose.msra.mxu0 0.0
  %2009 = vmatprep.subr.mxu0 0.0
  %2010 = vmatpush1.xpose.msra.mxu0 0.0
  %2011 = vmatprep.subr.mxu0 0.0
  %2012 = vmatpush1.xpose.msra.mxu0 0.0
  %2013 = vmatprep.subr.mxu0 0.0
  %2014 = vmatpush1.xpose.msra.mxu0 0.0
  %2015 = vmatprep.subr.mxu0 0.0
  %2016 = vmatpush1.xpose.msra.mxu0 0.0
  %2017 = vmatprep.mubr.f32.mxu0 0.0
  %2018 = vmatmul.mubr.f32.gmra.mrb[0].mxu0 %v1945
  %v2019 = vpop.f32.mrb[0].mxu0
  %v2020 = vadd.f32 0.0, %v2019
  %v2021 = vpop.f32.mrb[0].mxu0
  %2022 = vmatprep.mubr.f32.mxu0 0.0
  %2023 = vmatmul.mubr.f32.gmra.mrb[0].mxu0 %v1947
  %v2024 = vpop.f32.mrb[0].mxu0
  %v2025 = vadd.f32 0.0, %v2024
  %v2026 = vpop.f32.mrb[0].mxu0
  %2027 = vdwg.mxu0
  %v2028 = vmul.f32 %v1929, 0.35355338
  %v2029 = vmul.f32 %v1934, 0.35355338
  %v2030 = vmul.f32 %v2020, 0.35355338
  %v2031 = vmul.f32 %v2025, 0.35355338
  %v2032 = vsel %vm811, %v2028, -inf
  %2033 = vmax.xlane.f32.xlu0 %v2032
  %v2034 = vpop.xlane.xlu0 %2033
  %v2035 = vsel %vm815, %v2029, -inf
  %2036 = vmax.xlane.f32.xlu0 %v2035
  %v2037 = vpop.xlane.xlu0 %2036
  %v2038 = vsel %vm811, %v2030, -inf
  %2039 = vmax.xlane.f32.xlu0 %v2038
  %v2040 = vpop.xlane.xlu0 %2039
  %v2041 = vsel %vm815, %v2031, -inf
  %2042 = vmax.xlane.f32.xlu0 %v2041
  %v2043 = vpop.xlane.xlu0 %2042
  %v2044 = vsub.f32 %v2028, %v2034
  %v2045 = vsub.f32 %v2029, %v2037
  %v2046 = vsub.f32 %v2030, %v2040
  %v2047 = vsub.f32 %v2031, %v2043
  %v2048 = vmul.f32 %v2044, 1.442695
  %v2049 = vpow.pop %v2048
  %v2050 = vmul.f32 %v2045, 1.442695
  %v2051 = vpow.pop %v2050
  %v2052 = vmul.f32 %v2046, 1.442695
  %v2053 = vpow.pop %v2052
  %v2054 = vmul.f32 %v2047, 1.442695
  %v2055 = vpow.pop %v2054
  %v2056 = vsel %vm811, %v2049, 0.0
  %2057 = vadd.xlane.f32.xlu0 %v2056
  %v2058 = vpop.xlane.xlu0 %2057
  %v2059 = vsel %vm815, %v2051, 0.0
  %2060 = vadd.xlane.f32.xlu0 %v2059
  %v2061 = vpop.xlane.xlu0 %2060
  %v2062 = vsel %vm811, %v2053, 0.0
  %2063 = vadd.xlane.f32.xlu0 %v2062
  %v2064 = vpop.xlane.xlu0 %2063
  %v2065 = vsel %vm815, %v2055, 0.0
  %2066 = vadd.xlane.f32.xlu0 %v2065
  %v2067 = vpop.xlane.xlu0 %2066
  %v2068 = vrcp.pop %v2058
  %v2069 = vrcp.pop %v2061
  %v2070 = vrcp.pop %v2064
  %v2071 = vrcp.pop %v2067
  %v2072 = vmul.f32 %v2049, %v2068
  %v2073 = vmul.f32 %v2051, %v2069
  %v2074 = vmul.f32 %v2053, %v2070
  %v2075 = vmul.f32 %v2055, %v2071
  %2076 = vrot.lane.b32.xlu0 %v554, 40
  %v2077 = vpop.permute.xlu0 %2076
  %2078 = vrot.lane.b32.xlu0 %v568, 40
  %v2079 = vpop.permute.xlu0 %2078
  %v2082 = vsel %vm811, %v2072, 0
  %v2085 = vsel %vm811, %v2073, 0
  %v2087 = vsel %vm868, %v2079, 0
  %2089 = vmatprep.subr.mxu0 0.0
  %2090 = vmatpush1.msra.mxu0 %v2077
  %2091 = vmatprep.subr.mxu0 0.0
  %2092 = vmatpush1.msra.mxu0 %v2087
  %2093 = vmatprep.subr.mxu0 0.0
  %2094 = vmatpush1.msra.mxu0 0.0
  %2095 = vmatprep.subr.mxu0 0.0
  %2096 = vmatpush1.msra.mxu0 0.0
  %2097 = vmatprep.subr.mxu0 0.0
  %2098 = vmatpush1.msra.mxu0 0.0
  %2099 = vmatprep.subr.mxu0 0.0
  %2100 = vmatpush1.msra.mxu0 0.0
  %2101 = vmatprep.subr.mxu0 0.0
  %2102 = vmatpush1.msra.mxu0 0.0
  %2103 = vmatprep.subr.mxu0 0.0
  %2104 = vmatpush1.msra.mxu0 0.0
  %2105 = vmatprep.subr.mxu0 0.0
  %2106 = vmatpush1.msra.mxu0 0.0
  %2107 = vmatprep.subr.mxu0 0.0
  %2108 = vmatpush1.msra.mxu0 0.0
  %2109 = vmatprep.subr.mxu0 0.0
  %2110 = vmatpush1.msra.mxu0 0.0
  %2111 = vmatprep.subr.mxu0 0.0
  %2112 = vmatpush1.msra.mxu0 0.0
  %2113 = vmatprep.subr.mxu0 0.0
  %2114 = vmatpush1.msra.mxu0 0.0
  %2115 = vmatprep.subr.mxu0 0.0
  %2116 = vmatpush1.msra.mxu0 0.0
  %2117 = vmatprep.subr.mxu0 0.0
  %2118 = vmatpush1.msra.mxu0 0.0
  %2119 = vmatprep.subr.mxu0 0.0
  %2120 = vmatpush1.msra.mxu0 0.0
  %2121 = vmatprep.subr.mxu0 0.0
  %2122 = vmatpush1.msra.mxu0 0.0
  %2123 = vmatprep.subr.mxu0 0.0
  %2124 = vmatpush1.msra.mxu0 0.0
  %2125 = vmatprep.subr.mxu0 0.0
  %2126 = vmatpush1.msra.mxu0 0.0
  %2127 = vmatprep.subr.mxu0 0.0
  %2128 = vmatpush1.msra.mxu0 0.0
  %2129 = vmatprep.subr.mxu0 0.0
  %2130 = vmatpush1.msra.mxu0 0.0
  %2131 = vmatprep.subr.mxu0 0.0
  %2132 = vmatpush1.msra.mxu0 0.0
  %2133 = vmatprep.subr.mxu0 0.0
  %2134 = vmatpush1.msra.mxu0 0.0
  %2135 = vmatprep.subr.mxu0 0.0
  %2136 = vmatpush1.msra.mxu0 0.0
  %2137 = vmatprep.subr.mxu0 0.0
  %2138 = vmatpush1.msra.mxu0 0.0
  %2139 = vmatprep.subr.mxu0 0.0
  %2140 = vmatpush1.msra.mxu0 0.0
  %2141 = vmatprep.subr.mxu0 0.0
  %2142 = vmatpush1.msra.mxu0 0.0
  %2143 = vmatprep.subr.mxu0 0.0
  %2144 = vmatpush1.msra.mxu0 0.0
  %2145 = vmatprep.subr.mxu0 0.0
  %2146 = vmatpush1.msra.mxu0 0.0
  %2147 = vmatprep.subr.mxu0 0.0
  %2148 = vmatpush1.msra.mxu0 0.0
  %2149 = vmatprep.subr.mxu0 0.0
  %2150 = vmatpush1.msra.mxu0 0.0
  %2151 = vmatprep.subr.mxu0 0.0
  %2152 = vmatpush1.msra.mxu0 0.0
  %2153 = vmatprep.mubr.f32.mxu0 0.0
  %2154 = vmatmul.mubr.f32.gmra.mrb[0].mxu0 %v2082
  %v2155 = vpop.f32.mrb[0].mxu0
  %v2156 = vadd.f32 0.0, %v2155
  %v2157 = vpop.f32.mrb[0].mxu0
  %2158 = vmatprep.mubr.f32.mxu0 0.0
  %2159 = vmatmul.mubr.f32.gmra.mrb[0].mxu0 %v2085
  %v2160 = vpop.f32.mrb[0].mxu0
  %v2161 = vadd.f32 0.0, %v2160
  %v2162 = vpop.f32.mrb[0].mxu0
  %2163 = vdwg.mxu0
  %2164 = vrot.lane.b32.xlu0 %v705, 40
  %v2165 = vpop.permute.xlu0 %2164
  %2166 = vrot.lane.b32.xlu0 %v719, 40
  %v2167 = vpop.permute.xlu0 %2166
  %v2170 = vsel %vm811, %v2074, 0
  %v2173 = vsel %vm811, %v2075, 0
  %v2175 = vsel %vm868, %v2167, 0
  %2177 = vmatprep.subr.mxu0 0.0
  %2178 = vmatpush1.msra.mxu0 %v2165
  %2179 = vmatprep.subr.mxu0 0.0
  %2180 = vmatpush1.msra.mxu0 %v2175
  %2181 = vmatprep.subr.mxu0 0.0
  %2182 = vmatpush1.msra.mxu0 0.0
  %2183 = vmatprep.subr.mxu0 0.0
  %2184 = vmatpush1.msra.mxu0 0.0
  %2185 = vmatprep.subr.mxu0 0.0
  %2186 = vmatpush1.msra.mxu0 0.0
  %2187 = vmatprep.subr.mxu0 0.0
  %2188 = vmatpush1.msra.mxu0 0.0
  %2189 = vmatprep.subr.mxu0 0.0
  %2190 = vmatpush1.msra.mxu0 0.0
  %2191 = vmatprep.subr.mxu0 0.0
  %2192 = vmatpush1.msra.mxu0 0.0
  %2193 = vmatprep.subr.mxu0 0.0
  %2194 = vmatpush1.msra.mxu0 0.0
  %2195 = vmatprep.subr.mxu0 0.0
  %2196 = vmatpush1.msra.mxu0 0.0
  %2197 = vmatprep.subr.mxu0 0.0
  %2198 = vmatpush1.msra.mxu0 0.0
  %2199 = vmatprep.subr.mxu0 0.0
  %2200 = vmatpush1.msra.mxu0 0.0
  %2201 = vmatprep.subr.mxu0 0.0
  %2202 = vmatpush1.msra.mxu0 0.0
  %2203 = vmatprep.subr.mxu0 0.0
  %2204 = vmatpush1.msra.mxu0 0.0
  %2205 = vmatprep.subr.mxu0 0.0
  %2206 = vmatpush1.msra.mxu0 0.0
  %2207 = vmatprep.subr.mxu0 0.0
  %2208 = vmatpush1.msra.mxu0 0.0
  %2209 = vmatprep.subr.mxu0 0.0
  %2210 = vmatpush1.msra.mxu0 0.0
  %2211 = vmatprep.subr.mxu0 0.0
  %2212 = vmatpush1.msra.mxu0 0.0
  %2213 = vmatprep.subr.mxu0 0.0
  %2214 = vmatpush1.msra.mxu0 0.0
  %2215 = vmatprep.subr.mxu0 0.0
  %2216 = vmatpush1.msra.mxu0 0.0
  %2217 = vmatprep.subr.mxu0 0.0
  %2218 = vmatpush1.msra.mxu0 0.0
  %2219 = vmatprep.subr.mxu0 0.0
  %2220 = vmatpush1.msra.mxu0 0.0
  %2221 = vmatprep.subr.mxu0 0.0
  %2222 = vmatpush1.msra.mxu0 0.0
  %2223 = vmatprep.subr.mxu0 0.0
  %2224 = vmatpush1.msra.mxu0 0.0
  %2225 = vmatprep.subr.mxu0 0.0
  %2226 = vmatpush1.msra.mxu0 0.0
  %2227 = vmatprep.subr.mxu0 0.0
  %2228 = vmatpush1.msra.mxu0 0.0
  %2229 = vmatprep.subr.mxu0 0.0
  %2230 = vmatpush1.msra.mxu0 0.0
  %2231 = vmatprep.subr.mxu0 0.0
  %2232 = vmatpush1.msra.mxu0 0.0
  %2233 = vmatprep.subr.mxu0 0.0
  %2234 = vmatpush1.msra.mxu0 0.0
  %2235 = vmatprep.subr.mxu0 0.0
  %2236 = vmatpush1.msra.mxu0 0.0
  %2237 = vmatprep.subr.mxu0 0.0
  %2238 = vmatpush1.msra.mxu0 0.0
  %2239 = vmatprep.subr.mxu0 0.0
  %2240 = vmatpush1.msra.mxu0 0.0
  %2241 = vmatprep.mubr.f32.mxu0 0.0
  %2242 = vmatmul.mubr.f32.gmra.mrb[0].mxu0 %v2170
  %v2243 = vpop.f32.mrb[0].mxu0
  %v2244 = vadd.f32 0.0, %v2243
  %v2245 = vpop.f32.mrb[0].mxu0
  %2246 = vmatprep.mubr.f32.mxu0 0.0
  %2247 = vmatmul.mubr.f32.gmra.mrb[0].mxu0 %v2173
  %v2248 = vpop.f32.mrb[0].mxu0
  %v2249 = vadd.f32 0.0, %v2248
  %v2250 = vpop.f32.mrb[0].mxu0
  %2251 = vdwg.mxu0
  %2256 = vrot.lane.b32.xlu0 %v1344, 8
  %v2257 = vpop.permute.xlu0 %2256
  %2258 = vrot.lane.b32.xlu0 %v1349, 8
  %v2259 = vpop.permute.xlu0 %2258
  %2260 = vrot.lane.b32.xlu0 %v1432, 8
  %v2261 = vpop.permute.xlu0 %2260
  %2262 = vrot.lane.b32.xlu0 %v1437, 8
  %v2263 = vpop.permute.xlu0 %2262
  %2272 = vrot.lane.b32.xlu0 %v1750, 16
  %v2273 = vpop.permute.xlu0 %2272
  %2274 = vrot.lane.b32.xlu0 %v1755, 16
  %v2275 = vpop.permute.xlu0 %2274
  %2276 = vrot.lane.b32.xlu0 %v1838, 16
  %v2277 = vpop.permute.xlu0 %2276
  %2278 = vrot.lane.b32.xlu0 %v1843, 16
  %v2279 = vpop.permute.xlu0 %2278
  %2288 = vrot.lane.b32.xlu0 %v2156, 24
  %v2289 = vpop.permute.xlu0 %2288
  %2290 = vrot.lane.b32.xlu0 %v2161, 24
  %v2291 = vpop.permute.xlu0 %2290
  %2292 = vrot.lane.b32.xlu0 %v2244, 24
  %v2293 = vpop.permute.xlu0 %2292
  %2294 = vrot.lane.b32.xlu0 %v2249, 24
  %v2295 = vpop.permute.xlu0 %2294
  %v2300 = vsel %vm573, %v938, %v2257
  %v2301 = vsel %vm573, %v943, %v2259
  %v2302 = vsel %vm573, %v1026, %v2261
  %v2303 = vsel %vm573, %v1031, %v2263
  %vm2304 = vcmask 130048
  %v2305 = vsel %vm2304, %v2300, %v2273
  %v2306 = vsel %vm2304, %v2301, %v2275
  %v2307 = vsel %vm2304, %v2302, %v2277
  %v2308 = vsel %vm2304, %v2303, %v2279
  %vm2309 = vcmask 195584
  %v2310 = vsel %vm2309, %v2305, %v2289
  %v2311 = vsel %vm2309, %v2306, %v2291
  %v2312 = vsel %vm2309, %v2307, %v2293
  %v2313 = vsel %vm2309, %v2308, %v2295
  %v2318 = vcombine.high %v2310, %v2310
  %v2320 = vunpack.c.l.s4 1966171168
  %v2321 = vunpack.c.0.s8 %v2320
  %v2322 = vlaneseq
  %v2323 = vshrl.u32 %v2322, 7
  %v2324 = vsub.s32 %v2321, %v2323
  %v2325 = vrot.slane %v2310, %v2324
  %v2327 = vunpack.c.l.s4 1966171168
  %v2328 = vunpack.c.0.s8 %v2327
  %v2329 = vlaneseq
  %v2330 = vshrl.u32 %v2329, 7
  %v2331 = vsub.s32 %v2328, %v2330
  %v2332 = vrot.slane %v2318, %v2331
  %v2333 = vcombine.high %v2325, %v2325
  %v2334 = vcombine.high %v2332, %v2332
  %v2336 = vunpack.c.l.s4 1966171168
  %v2337 = vunpack.c.0.s8 %v2336
  %v2338 = vlaneseq
  %v2339 = vshrl.u32 %v2338, 7
  %v2340 = vsub.s32 %v2337, %v2339
  %v2341 = vrot.slane %v2325, %v2340
  %v2343 = vunpack.c.l.s4 1966171168
  %v2344 = vunpack.c.0.s8 %v2343
  %v2345 = vlaneseq
  %v2346 = vshrl.u32 %v2345, 7
  %v2347 = vsub.s32 %v2344, %v2346
  %v2348 = vrot.slane %v2332, %v2347
  %v2350 = vunpack.c.l.s4 1966171168
  %v2351 = vunpack.c.0.s8 %v2350
  %v2352 = vlaneseq
  %v2353 = vshrl.u32 %v2352, 7
  %v2354 = vsub.s32 %v2351, %v2353
  %v2355 = vrot.slane %v2333, %v2354
  %v2357 = vunpack.c.l.s4 1966171168
  %v2358 = vunpack.c.0.s8 %v2357
  %v2359 = vlaneseq
  %v2360 = vshrl.u32 %v2359, 7
  %v2361 = vsub.s32 %v2358, %v2360
  %v2362 = vrot.slane %v2334, %v2361
  %v2363 = vcombine.high %v2341, %v2341
  %v2364 = vcombine.high %v2348, %v2348
  %v2365 = vcombine.high %v2355, %v2355
  %v2366 = vcombine.high %v2362, %v2362
  %v2368 = vunpack.c.l.s4 1966171168
  %v2369 = vunpack.c.0.s8 %v2368
  %v2370 = vlaneseq
  %v2371 = vshrl.u32 %v2370, 7
  %v2372 = vsub.s32 %v2369, %v2371
  %v2373 = vrot.slane %v2311, %v2372
  %v2375 = vunpack.c.l.s4 1966171168
  %v2376 = vunpack.c.0.s8 %v2375
  %v2377 = vlaneseq
  %v2378 = vshrl.u32 %v2377, 7
  %v2379 = vsub.s32 %v2376, %v2378
  %v2380 = vrot.slane %v2373, %v2379
  %v2381 = vcombine.high %v2312, %v2312
  %v2383 = vunpack.c.l.s4 1966171168
  %v2384 = vunpack.c.0.s8 %v2383
  %v2385 = vlaneseq
  %v2386 = vshrl.u32 %v2385, 7
  %v2387 = vsub.s32 %v2384, %v2386
  %v2388 = vrot.slane %v2312, %v2387
  %v2390 = vunpack.c.l.s4 1966171168
  %v2391 = vunpack.c.0.s8 %v2390
  %v2392 = vlaneseq
  %v2393 = vshrl.u32 %v2392, 7
  %v2394 = vsub.s32 %v2391, %v2393
  %v2395 = vrot.slane %v2381, %v2394
  %v2396 = vcombine.high %v2388, %v2388
  %v2397 = vcombine.high %v2395, %v2395
  %v2399 = vunpack.c.l.s4 1966171168
  %v2400 = vunpack.c.0.s8 %v2399
  %v2401 = vlaneseq
  %v2402 = vshrl.u32 %v2401, 7
  %v2403 = vsub.s32 %v2400, %v2402
  %v2404 = vrot.slane %v2388, %v2403
  %v2406 = vunpack.c.l.s4 1966171168
  %v2407 = vunpack.c.0.s8 %v2406
  %v2408 = vlaneseq
  %v2409 = vshrl.u32 %v2408, 7
  %v2410 = vsub.s32 %v2407, %v2409
  %v2411 = vrot.slane %v2395, %v2410
  %v2413 = vunpack.c.l.s4 1966171168
  %v2414 = vunpack.c.0.s8 %v2413
  %v2415 = vlaneseq
  %v2416 = vshrl.u32 %v2415, 7
  %v2417 = vsub.s32 %v2414, %v2416
  %v2418 = vrot.slane %v2396, %v2417
  %v2420 = vunpack.c.l.s4 1966171168
  %v2421 = vunpack.c.0.s8 %v2420
  %v2422 = vlaneseq
  %v2423 = vshrl.u32 %v2422, 7
  %v2424 = vsub.s32 %v2421, %v2423
  %v2425 = vrot.slane %v2397, %v2424
  %v2426 = vcombine.high %v2404, %v2404
  %v2427 = vcombine.high %v2411, %v2411
  %v2428 = vcombine.high %v2418, %v2418
  %v2429 = vcombine.high %v2425, %v2425
  %v2431 = vunpack.c.l.s4 1966171168
  %v2432 = vunpack.c.0.s8 %v2431
  %v2433 = vlaneseq
  %v2434 = vshrl.u32 %v2433, 7
  %v2435 = vsub.s32 %v2432, %v2434
  %v2436 = vrot.slane %v2313, %v2435
  %v2438 = vunpack.c.l.s4 1966171168
  %v2439 = vunpack.c.0.s8 %v2438
  %v2440 = vlaneseq
  %v2441 = vshrl.u32 %v2440, 7
  %v2442 = vsub.s32 %v2439, %v2441
  %v2443 = vrot.slane %v2436, %v2442
  %v2444 = vld [vmem:[%s3] sm:$0xff]
  %v2445 = vld [vmem:[%s3 + $0x8] sm:$0xff]
  %v2446 = vld [vmem:[%s3 + $0x10] sm:$0xff]
  %v2447 = vld [vmem:[%s3 + $0x18] sm:$0xff]
  %v2448 = vld [vmem:[%s4] sm:$0x1]
  %v2450 = vlaneseq
  %v2451 = vshrl.u32 %v2450, 7
  %v2452 = vsub.s32 0, %v2451
  %v2453 = vrot.slane %v2448, %v2452
  %v2455 = vcombine.low %v2341, %v2355
  %v2456 = vcombine.low %v2363, %v2365
  %v2457 = vcombine.low %v2348, %v2362
  %v2458 = vcombine.low %v2364, %v2366
  %v2460 = vunpack.c.l.s4 1966171168
  %v2461 = vunpack.c.0.s8 %v2460
  %v2462 = vlaneseq
  %v2463 = vshrl.u32 %v2462, 7
  %v2464 = vsub.s32 %v2461, %v2463
  %v2465 = vrot.slane %v2455, %v2464
  %v2467 = vunpack.c.l.s4 1966171168
  %v2468 = vunpack.c.0.s8 %v2467
  %v2469 = vlaneseq
  %v2470 = vshrl.u32 %v2469, 7
  %v2471 = vsub.s32 %v2468, %v2470
  %v2472 = vrot.slane %v2456, %v2471
  %v2474 = vunpack.c.l.s4 1966171168
  %v2475 = vunpack.c.0.s8 %v2474
  %v2476 = vlaneseq
  %v2477 = vshrl.u32 %v2476, 7
  %v2478 = vsub.s32 %v2475, %v2477
  %v2479 = vrot.slane %v2457, %v2478
  %v2481 = vunpack.c.l.s4 1966171168
  %v2482 = vunpack.c.0.s8 %v2481
  %v2483 = vlaneseq
  %v2484 = vshrl.u32 %v2483, 7
  %v2485 = vsub.s32 %v2482, %v2484
  %v2486 = vrot.slane %v2458, %v2485
  %v2487 = vcombine.low %v2465, %v2472
  %v2488 = vcombine.low %v2479, %v2486
  %v2490 = vunpack.c.l.s4 1966171168
  %v2491 = vunpack.c.0.s8 %v2490
  %v2492 = vlaneseq
  %v2493 = vshrl.u32 %v2492, 7
  %v2494 = vsub.s32 %v2491, %v2493
  %v2495 = vrot.slane %v2487, %v2494
  %v2497 = vunpack.c.l.s4 1966171168
  %v2498 = vunpack.c.0.s8 %v2497
  %v2499 = vlaneseq
  %v2500 = vshrl.u32 %v2499, 7
  %v2501 = vsub.s32 %v2498, %v2500
  %v2502 = vrot.slane %v2488, %v2501
  %v2503 = vcombine.low %v2495, %v2502
  %v2504 = vcombine.low %v2380, %v2404
  %v2505 = vcombine.low %v2418, %v2426
  %v2506 = vcombine.low %v2428, %v2411
  %v2507 = vcombine.low %v2425, %v2427
  %v2509 = vunpack.c.l.s4 1966171168
  %v2510 = vunpack.c.0.s8 %v2509
  %v2511 = vlaneseq
  %v2512 = vshrl.u32 %v2511, 7
  %v2513 = vsub.s32 %v2510, %v2512
  %v2514 = vrot.slane %v2504, %v2513
  %v2516 = vunpack.c.l.s4 1966171168
  %v2517 = vunpack.c.0.s8 %v2516
  %v2518 = vlaneseq
  %v2519 = vshrl.u32 %v2518, 7
  %v2520 = vsub.s32 %v2517, %v2519
  %v2521 = vrot.slane %v2505, %v2520
  %v2523 = vunpack.c.l.s4 1966171168
  %v2524 = vunpack.c.0.s8 %v2523
  %v2525 = vlaneseq
  %v2526 = vshrl.u32 %v2525, 7
  %v2527 = vsub.s32 %v2524, %v2526
  %v2528 = vrot.slane %v2506, %v2527
  %v2530 = vunpack.c.l.s4 1966171168
  %v2531 = vunpack.c.0.s8 %v2530
  %v2532 = vlaneseq
  %v2533 = vshrl.u32 %v2532, 7
  %v2534 = vsub.s32 %v2531, %v2533
  %v2535 = vrot.slane %v2507, %v2534
  %v2536 = vcombine.low %v2514, %v2521
  %v2537 = vcombine.low %v2528, %v2535
  %v2539 = vunpack.c.l.s4 1966171168
  %v2540 = vunpack.c.0.s8 %v2539
  %v2541 = vlaneseq
  %v2542 = vshrl.u32 %v2541, 7
  %v2543 = vsub.s32 %v2540, %v2542
  %v2544 = vrot.slane %v2536, %v2543
  %v2546 = vunpack.c.l.s4 1966171168
  %v2547 = vunpack.c.0.s8 %v2546
  %v2548 = vlaneseq
  %v2549 = vshrl.u32 %v2548, 7
  %v2550 = vsub.s32 %v2547, %v2549
  %v2551 = vrot.slane %v2537, %v2550
  %v2552 = vcombine.low %v2544, %v2551
  %v2553 = vcombine.low %v2429, %v2443
  %v2555 = vunpack.c.l.s4 1966171168
  %v2556 = vunpack.c.0.s8 %v2555
  %v2557 = vlaneseq
  %v2558 = vshrl.u32 %v2557, 7
  %v2559 = vsub.s32 %v2556, %v2558
  %v2560 = vrot.slane %v2553, %v2559
  %v2562 = vunpack.c.l.s4 1966171168
  %v2563 = vunpack.c.0.s8 %v2562
  %v2564 = vlaneseq
  %v2565 = vshrl.u32 %v2564, 7
  %v2566 = vsub.s32 %v2563, %v2565
  %v2567 = vrot.slane %v2560, %v2566
  %v2568 = vsel %vm296, %v2503, 0
  %v2570 = vsel %vm296, %v2552, 0
  %v2572 = vsel %vm296, %v2567, 0
  %2574 = vmatprep.subr.mxu0 0.0
  %2575 = vmatpush1.msra.mxu0 %v2444
  %2576 = vmatprep.subr.mxu0 0.0
  %2577 = vmatpush1.msra.mxu0 %v2445
  %2578 = vmatprep.subr.mxu0 0.0
  %2579 = vmatpush1.msra.mxu0 %v2446
  %2580 = vmatprep.subr.mxu0 0.0
  %2581 = vmatpush1.msra.mxu0 %v2447
  %2582 = vmatprep.subr.mxu0 0.0
  %2583 = vmatpush1.msra.mxu0 0.0
  %2584 = vmatprep.subr.mxu0 0.0
  %2585 = vmatpush1.msra.mxu0 0.0
  %2586 = vmatprep.subr.mxu0 0.0
  %2587 = vmatpush1.msra.mxu0 0.0
  %2588 = vmatprep.subr.mxu0 0.0
  %2589 = vmatpush1.msra.mxu0 0.0
  %2590 = vmatprep.subr.mxu0 0.0
  %2591 = vmatpush1.msra.mxu0 0.0
  %2592 = vmatprep.subr.mxu0 0.0
  %2593 = vmatpush1.msra.mxu0 0.0
  %2594 = vmatprep.subr.mxu0 0.0
  %2595 = vmatpush1.msra.mxu0 0.0
  %2596 = vmatprep.subr.mxu0 0.0
  %2597 = vmatpush1.msra.mxu0 0.0
  %2598 = vmatprep.subr.mxu0 0.0
  %2599 = vmatpush1.msra.mxu0 0.0
  %2600 = vmatprep.subr.mxu0 0.0
  %2601 = vmatpush1.msra.mxu0 0.0
  %2602 = vmatprep.subr.mxu0 0.0
  %2603 = vmatpush1.msra.mxu0 0.0
  %2604 = vmatprep.subr.mxu0 0.0
  %2605 = vmatpush1.msra.mxu0 0.0
  %2606 = vmatprep.subr.mxu0 0.0
  %2607 = vmatpush1.msra.mxu0 0.0
  %2608 = vmatprep.subr.mxu0 0.0
  %2609 = vmatpush1.msra.mxu0 0.0
  %2610 = vmatprep.subr.mxu0 0.0
  %2611 = vmatpush1.msra.mxu0 0.0
  %2612 = vmatprep.subr.mxu0 0.0
  %2613 = vmatpush1.msra.mxu0 0.0
  %2614 = vmatprep.subr.mxu0 0.0
  %2615 = vmatpush1.msra.mxu0 0.0
  %2616 = vmatprep.subr.mxu0 0.0
  %2617 = vmatpush1.msra.mxu0 0.0
  %2618 = vmatprep.subr.mxu0 0.0
  %2619 = vmatpush1.msra.mxu0 0.0
  %2620 = vmatprep.subr.mxu0 0.0
  %2621 = vmatpush1.msra.mxu0 0.0
  %2622 = vmatprep.subr.mxu0 0.0
  %2623 = vmatpush1.msra.mxu0 0.0
  %2624 = vmatprep.subr.mxu0 0.0
  %2625 = vmatpush1.msra.mxu0 0.0
  %2626 = vmatprep.subr.mxu0 0.0
  %2627 = vmatpush1.msra.mxu0 0.0
  %2628 = vmatprep.subr.mxu0 0.0
  %2629 = vmatpush1.msra.mxu0 0.0
  %2630 = vmatprep.subr.mxu0 0.0
  %2631 = vmatpush1.msra.mxu0 0.0
  %2632 = vmatprep.subr.mxu0 0.0
  %2633 = vmatpush1.msra.mxu0 0.0
  %2634 = vmatprep.subr.mxu0 0.0
  %2635 = vmatpush1.msra.mxu0 0.0
  %2636 = vmatprep.subr.mxu0 0.0
  %2637 = vmatpush1.msra.mxu0 0.0
  %2638 = vmatprep.mubr.f32.mxu0 0.0
  %2639 = vmatmul.mubr.f32.gmra.mrb[0].mxu0 %v2568
  %v2640 = vpop.f32.mrb[0].mxu0
  %v2641 = vadd.f32 %v2453, %v2640
  %v2642 = vpop.f32.mrb[0].mxu0
  %2643 = vmatprep.mubr.f32.mxu0 0.0
  %2644 = vmatmul.mubr.f32.gmra.mrb[0].mxu0 %v2570
  %v2645 = vpop.f32.mrb[0].mxu0
  %v2646 = vadd.f32 %v2453, %v2645
  %v2647 = vpop.f32.mrb[0].mxu0
  %2648 = vmatprep.mubr.f32.mxu0 0.0
  %2649 = vmatmul.mubr.f32.gmra.mrb[0].mxu0 %v2572
  %v2650 = vpop.f32.mrb[0].mxu0
  %v2651 = vadd.f32 %v2453, %v2650
  %v2652 = vpop.f32.mrb[0].mxu0
  %2653 = vdwg.mxu0
  %v2657 = vcombine.high %v2641, %v2641
  %v2659 = vunpack.c.l.s4 1966171168
  %v2660 = vunpack.c.0.s8 %v2659
  %v2661 = vlaneseq
  %v2662 = vshrl.u32 %v2661, 7
  %v2663 = vsub.s32 %v2660, %v2662
  %v2664 = vrot.slane %v2641, %v2663
  %v2666 = vunpack.c.l.s4 1966171168
  %v2667 = vunpack.c.0.s8 %v2666
  %v2668 = vlaneseq
  %v2669 = vshrl.u32 %v2668, 7
  %v2670 = vsub.s32 %v2667, %v2669
  %v2671 = vrot.slane %v2657, %v2670
  %v2672 = vcombine.high %v2664, %v2664
  %v2673 = vcombine.high %v2671, %v2671
  %v2675 = vunpack.c.l.s4 1966171168
  %v2676 = vunpack.c.0.s8 %v2675
  %v2677 = vlaneseq
  %v2678 = vshrl.u32 %v2677, 7
  %v2679 = vsub.s32 %v2676, %v2678
  %v2680 = vrot.slane %v2664, %v2679
  %v2682 = vunpack.c.l.s4 1966171168
  %v2683 = vunpack.c.0.s8 %v2682
  %v2684 = vlaneseq
  %v2685 = vshrl.u32 %v2684, 7
  %v2686 = vsub.s32 %v2683, %v2685
  %v2687 = vrot.slane %v2671, %v2686
  %v2689 = vunpack.c.l.s4 1966171168
  %v2690 = vunpack.c.0.s8 %v2689
  %v2691 = vlaneseq
  %v2692 = vshrl.u32 %v2691, 7
  %v2693 = vsub.s32 %v2690, %v2692
  %v2694 = vrot.slane %v2672, %v2693
  %v2696 = vunpack.c.l.s4 1966171168
  %v2697 = vunpack.c.0.s8 %v2696
  %v2698 = vlaneseq
  %v2699 = vshrl.u32 %v2698, 7
  %v2700 = vsub.s32 %v2697, %v2699
  %v2701 = vrot.slane %v2673, %v2700
  %v2702 = vcombine.high %v2680, %v2680
  %v2703 = vcombine.high %v2687, %v2687
  %v2704 = vcombine.high %v2694, %v2694
  %v2705 = vcombine.high %v2701, %v2701
  %v2706 = vcombine.high %v2646, %v2646
  %v2708 = vunpack.c.l.s4 1966171168
  %v2709 = vunpack.c.0.s8 %v2708
  %v2710 = vlaneseq
  %v2711 = vshrl.u32 %v2710, 7
  %v2712 = vsub.s32 %v2709, %v2711
  %v2713 = vrot.slane %v2646, %v2712
  %v2715 = vunpack.c.l.s4 1966171168
  %v2716 = vunpack.c.0.s8 %v2715
  %v2717 = vlaneseq
  %v2718 = vshrl.u32 %v2717, 7
  %v2719 = vsub.s32 %v2716, %v2718
  %v2720 = vrot.slane %v2706, %v2719
  %v2721 = vcombine.high %v2713, %v2713
  %v2722 = vcombine.high %v2720, %v2720
  %v2724 = vunpack.c.l.s4 1966171168
  %v2725 = vunpack.c.0.s8 %v2724
  %v2726 = vlaneseq
  %v2727 = vshrl.u32 %v2726, 7
  %v2728 = vsub.s32 %v2725, %v2727
  %v2729 = vrot.slane %v2713, %v2728
  %v2731 = vunpack.c.l.s4 1966171168
  %v2732 = vunpack.c.0.s8 %v2731
  %v2733 = vlaneseq
  %v2734 = vshrl.u32 %v2733, 7
  %v2735 = vsub.s32 %v2732, %v2734
  %v2736 = vrot.slane %v2720, %v2735
  %v2738 = vunpack.c.l.s4 1966171168
  %v2739 = vunpack.c.0.s8 %v2738
  %v2740 = vlaneseq
  %v2741 = vshrl.u32 %v2740, 7
  %v2742 = vsub.s32 %v2739, %v2741
  %v2743 = vrot.slane %v2721, %v2742
  %v2745 = vunpack.c.l.s4 1966171168
  %v2746 = vunpack.c.0.s8 %v2745
  %v2747 = vlaneseq
  %v2748 = vshrl.u32 %v2747, 7
  %v2749 = vsub.s32 %v2746, %v2748
  %v2750 = vrot.slane %v2722, %v2749
  %v2751 = vcombine.high %v2729, %v2729
  %v2752 = vcombine.high %v2736, %v2736
  %v2753 = vcombine.high %v2743, %v2743
  %v2754 = vcombine.high %v2750, %v2750
  %v2756 = vunpack.c.l.s4 1966171168
  %v2757 = vunpack.c.0.s8 %v2756
  %v2758 = vlaneseq
  %v2759 = vshrl.u32 %v2758, 7
  %v2760 = vsub.s32 %v2757, %v2759
  %v2761 = vrot.slane %v2651, %v2760
  %v2762 = vcombine.high %v2761, %v2761
  %v2764 = vunpack.c.l.s4 1966171168
  %v2765 = vunpack.c.0.s8 %v2764
  %v2766 = vlaneseq
  %v2767 = vshrl.u32 %v2766, 7
  %v2768 = vsub.s32 %v2765, %v2767
  %v2769 = vrot.slane %v2761, %v2768
  %v2771 = vunpack.c.l.s4 1966171168
  %v2772 = vunpack.c.0.s8 %v2771
  %v2773 = vlaneseq
  %v2774 = vshrl.u32 %v2773, 7
  %v2775 = vsub.s32 %v2772, %v2774
  %v2776 = vrot.slane %v2762, %v2775
  %v2795 = vadd.f32 %v51, %v2680
  %v2796 = vadd.f32 %v65, %v2694
  %v2797 = vadd.f32 %v73, %v2702
  %v2798 = vadd.f32 %v75, %v2704
  %v2799 = vadd.f32 %v58, %v2687
  %v2800 = vadd.f32 %v72, %v2701
  %v2801 = vadd.f32 %v74, %v2703
  %v2802 = vadd.f32 %v76, %v2705
  %v2803 = vadd.f32 %v90, %v2729
  %v2804 = vadd.f32 %v114, %v2743
  %v2805 = vadd.f32 %v128, %v2751
  %v2806 = vadd.f32 %v136, %v2753
  %v2807 = vadd.f32 %v138, %v2736
  %v2808 = vadd.f32 %v121, %v2750
  %v2809 = vadd.f32 %v135, %v2752
  %v2810 = vadd.f32 %v137, %v2754
  %v2811 = vadd.f32 %v139, %v2769
  %v2812 = vadd.f32 %v153, %v2776
  %v2831 = vcombine.low %v2795, %v2796
  %v2832 = vcombine.low %v2797, %v2798
  %v2833 = vcombine.low %v2799, %v2800
  %v2834 = vcombine.low %v2801, %v2802
  %v2836 = vunpack.c.l.s4 1966171168
  %v2837 = vunpack.c.0.s8 %v2836
  %v2838 = vlaneseq
  %v2839 = vshrl.u32 %v2838, 7
  %v2840 = vsub.s32 %v2837, %v2839
  %v2841 = vrot.slane %v2831, %v2840
  %v2843 = vunpack.c.l.s4 1966171168
  %v2844 = vunpack.c.0.s8 %v2843
  %v2845 = vlaneseq
  %v2846 = vshrl.u32 %v2845, 7
  %v2847 = vsub.s32 %v2844, %v2846
  %v2848 = vrot.slane %v2832, %v2847
  %v2850 = vunpack.c.l.s4 1966171168
  %v2851 = vunpack.c.0.s8 %v2850
  %v2852 = vlaneseq
  %v2853 = vshrl.u32 %v2852, 7
  %v2854 = vsub.s32 %v2851, %v2853
  %v2855 = vrot.slane %v2833, %v2854
  %v2857 = vunpack.c.l.s4 1966171168
  %v2858 = vunpack.c.0.s8 %v2857
  %v2859 = vlaneseq
  %v2860 = vshrl.u32 %v2859, 7
  %v2861 = vsub.s32 %v2858, %v2860
  %v2862 = vrot.slane %v2834, %v2861
  %v2863 = vcombine.low %v2841, %v2848
  %v2864 = vcombine.low %v2855, %v2862
  %v2866 = vunpack.c.l.s4 1966171168
  %v2867 = vunpack.c.0.s8 %v2866
  %v2868 = vlaneseq
  %v2869 = vshrl.u32 %v2868, 7
  %v2870 = vsub.s32 %v2867, %v2869
  %v2871 = vrot.slane %v2863, %v2870
  %v2873 = vunpack.c.l.s4 1966171168
  %v2874 = vunpack.c.0.s8 %v2873
  %v2875 = vlaneseq
  %v2876 = vshrl.u32 %v2875, 7
  %v2877 = vsub.s32 %v2874, %v2876
  %v2878 = vrot.slane %v2864, %v2877
  %v2879 = vcombine.low %v2871, %v2878
  %v2881 = vunpack.c.l.s4 1966171168
  %v2882 = vunpack.c.0.s8 %v2881
  %v2883 = vlaneseq
  %v2884 = vshrl.u32 %v2883, 7
  %v2885 = vsub.s32 %v2882, %v2884
  %v2886 = vrot.slane %v2803, %v2885
  %v2888 = vunpack.c.l.s4 1966171168
  %v2889 = vunpack.c.0.s8 %v2888
  %v2890 = vlaneseq
  %v2891 = vshrl.u32 %v2890, 7
  %v2892 = vsub.s32 %v2889, %v2891
  %v2893 = vrot.slane %v2886, %v2892
  %v2894 = vcombine.low %v2804, %v2805
  %v2895 = vcombine.low %v2806, %v2807
  %v2896 = vcombine.low %v2808, %v2809
  %v2897 = vcombine.low %v2810, %v2811
  %v2899 = vunpack.c.l.s4 1966171168
  %v2900 = vunpack.c.0.s8 %v2899
  %v2901 = vlaneseq
  %v2902 = vshrl.u32 %v2901, 7
  %v2903 = vsub.s32 %v2900, %v2902
  %v2904 = vrot.slane %v2894, %v2903
  %v2906 = vunpack.c.l.s4 1966171168
  %v2907 = vunpack.c.0.s8 %v2906
  %v2908 = vlaneseq
  %v2909 = vshrl.u32 %v2908, 7
  %v2910 = vsub.s32 %v2907, %v2909
  %v2911 = vrot.slane %v2895, %v2910
  %v2913 = vunpack.c.l.s4 1966171168
  %v2914 = vunpack.c.0.s8 %v2913
  %v2915 = vlaneseq
  %v2916 = vshrl.u32 %v2915, 7
  %v2917 = vsub.s32 %v2914, %v2916
  %v2918 = vrot.slane %v2896, %v2917
  %v2920 = vunpack.c.l.s4 1966171168
  %v2921 = vunpack.c.0.s8 %v2920
  %v2922 = vlaneseq
  %v2923 = vshrl.u32 %v2922, 7
  %v2924 = vsub.s32 %v2921, %v2923
  %v2925 = vrot.slane %v2897, %v2924
  %v2926 = vcombine.low %v2904, %v2911
  %v2927 = vcombine.low %v2918, %v2925
  %v2929 = vunpack.c.l.s4 1966171168
  %v2930 = vunpack.c.0.s8 %v2929
  %v2931 = vlaneseq
  %v2932 = vshrl.u32 %v2931, 7
  %v2933 = vsub.s32 %v2930, %v2932
  %v2934 = vrot.slane %v2926, %v2933
  %v2936 = vunpack.c.l.s4 1966171168
  %v2937 = vunpack.c.0.s8 %v2936
  %v2938 = vlaneseq
  %v2939 = vshrl.u32 %v2938, 7
  %v2940 = vsub.s32 %v2937, %v2939
  %v2941 = vrot.slane %v2927, %v2940
  %v2942 = vcombine.low %v2934, %v2941
  %v2944 = vunpack.c.l.s4 1966171168
  %v2945 = vunpack.c.0.s8 %v2944
  %v2946 = vlaneseq
  %v2947 = vshrl.u32 %v2946, 7
  %v2948 = vsub.s32 %v2945, %v2947
  %v2949 = vrot.slane %v2812, %v2948
  %v2951 = vunpack.c.l.s4 1966171168
  %v2952 = vunpack.c.0.s8 %v2951
  %v2953 = vlaneseq
  %v2954 = vshrl.u32 %v2953, 7
  %v2955 = vsub.s32 %v2952, %v2954
  %v2956 = vrot.slane %v2949, %v2955
  %2961 = vst.msk [vmem:[%s5] sm:$0xff] %vm296, %v2879
  %vm2962 = vcmask 253952
  %2963 = vst.msk [vmem:[%s5 + $0x8] sm:$0x1] %vm2962, %v2893
  %2964 = vst.msk [vmem:[%s5 + $0x10] sm:$0xff] %vm296, %v2942
  %2965 = vst.msk [vmem:[%s5 + $0x18] sm:$0x1] %vm2962, %v2956
  // Predicated region
  $region22: #{_lambda_.15} parent=0 // pred_check
    _
  $region23: #{_lambda_.15} parent=0 // pred_check_branch
    %2967 = sbr.rel (0) target = $region25
  $region24: #{_lambda_.15} parent=0 // pred_region
    _
  $region25: #{_lambda_.15} parent=0 // pred_fallthru
    _
  // Predicated region
  $region26: #{_lambda_.15} parent=0 // pred_check
    _
  $region27: #{_lambda_.15} parent=0 // pred_check_branch
    %2969 = sbr.rel (0) target = $region29
  $region28: #{_lambda_.15} parent=0 // pred_region
    _
  $region29: #{_lambda_.15} parent=0 // pred_fallthru
    _

// kernel: closed_call.25
$region0: #{closed_call.25}
  #allocation0 [shape = 'u32[]', space=smem, size = 0x4, offset = 0x4, fixed_abs, tag = 'smem constant byte address 0x4 - core index']
  #allocation1 [shape = 'u32[144,128]{1,0:T(1,128)}', space=vmem, size = 0x12000, scoped, tag = 'internal scratch']
  #allocation2 [shape = 's32[1]{0}', space=sflag, size = 0x4, scoped, tag = 'scoped memory for closed_call.25']
  #allocation3 [shape = 's32[1]{0:T(128)S(6)}', space=smem, size = 0x200, scoped, tag = 'prefetched SMEM operand 0']
  %s0 = inlined_call_operand.smem [shape: u32[30], index: -1, kind: input, shape index: {}]
  %s1 = sld [smem:[%s0]]
  %s2 = scalar_lea.smem %s0, 1
  %s3 = sld [smem:[%s2]]
  %s4 = scalar_lea.smem %s0, 2
  %s5 = sld [smem:[%s4]]
  %s6 = scalar_lea.smem %s0, 3
  %s7 = sld [smem:[%s6]]
  %s8 = scalar_lea.smem %s0, 4
  %s9 = sld [smem:[%s8]]
  %s10 = scalar_lea.smem %s0, 5
  %s11 = sld [smem:[%s10]]
  %s12 = scalar_lea.smem %s0, 6
  %s13 = sld [smem:[%s12]]
  %s14 = scalar_lea.smem %s0, 7
  %s15 = sld [smem:[%s14]]
  %s16 = scalar_lea.smem %s0, 8
  %s17 = sld [smem:[%s16]]
  %s18 = scalar_lea.smem %s0, 9
  %s19 = sld [smem:[%s18]]
  %s20 = scalar_lea.smem %s0, 10
  %s21 = sld [smem:[%s20]]
  %s22 = scalar_lea.smem %s0, 11
  %s23 = sld [smem:[%s22]]
  %s24 = scalar_lea.smem %s0, 12
  %s25 = sld [smem:[%s24]]
  %s26 = scalar_lea.smem %s0, 13
  %s27 = sld [smem:[%s26]]
  %s28 = scalar_lea.smem %s0, 14
  %s29 = sld [smem:[%s28]]
  %s30 = scalar_lea.smem %s0, 15
  %s31 = sld [smem:[%s30]]
  %s32 = scalar_lea.smem %s0, 16
  %s33 = sld [smem:[%s32]]
  %s34 = scalar_lea.smem %s0, 17
  %s35 = sld [smem:[%s34]]
  %s36 = scalar_lea.smem %s0, 18
  %s37 = sld [smem:[%s36]]
  %s38 = scalar_lea.smem %s0, 19
  %s39 = sld [smem:[%s38]]
  %s40 = scalar_lea.smem %s0, 20
  %s41 = sld [smem:[%s40]]
  %s42 = scalar_lea.smem %s0, 21
  %s43 = sld [smem:[%s42]]
  %s44 = scalar_lea.smem %s0, 22
  %s45 = sld [smem:[%s44]]
  %s46 = scalar_lea.smem %s0, 23
  %s47 = sld [smem:[%s46]]
  %s48 = scalar_lea.smem %s0, 24
  %s49 = sld [smem:[%s48]]
  %s50 = scalar_lea.smem %s0, 25
  %s51 = sld [smem:[%s50]]
  %s52 = scalar_lea.smem %s0, 26
  %s53 = sld [smem:[%s52]]
  %s54 = scalar_lea.smem %s0, 27
  %s55 = sld [smem:[%s54]]
  %s56 = scalar_lea.smem %s0, 28
  %s57 = sld [smem:[%s56]]
  %s58 = scalar_lea.smem %s0, 29
  %s59 = sld [smem:[%s58]]
  %60 = xla_tuple %s55, %s57, %s59
  %s61 = sld [smem:[#allocation0]]
  $region234: #{closed_call.25} parent=0
    _
  %s63 = ssub.s32 1, %s61
  %s64 = scalar_select 0, %s63, %s61
  %65 = sst [smem:[#allocation3]] %s1
  $region1: #{closed_call.25} parent=0
    #allocation4 [shape = 'u8[1024]{0}', space=vmem, size = 0x400, scoped, tag = 'input window, operand 1, single buffered']
    #allocation5 [shape = 's32[1]{0}', space=sflag, size = 0x4, scoped, tag = 'scoped memory for closed_call.25']
    #allocation6 [shape = 's32[1]{0}', space=sflag, size = 0x4, scoped, tag = 'scoped memory for closed_call.25']
    #allocation7 [shape = 'u8[8192]{0}', space=vmem, size = 0x2000, scoped, tag = 'input window, operand 2, single buffered']
    #allocation8 [shape = 's32[1]{0}', space=sflag, size = 0x4, scoped, tag = 'scoped memory for closed_call.25']
    #allocation9 [shape = 'u8[8192]{0}', space=vmem, size = 0x2000, scoped, tag = 'input window, operand 3, single buffered']
    #allocation10 [shape = 'u8[1024]{0}', space=vmem, size = 0x400, scoped, tag = 'input window, operand 4, single buffered']
    #allocation11 [shape = 's32[1]{0}', space=sflag, size = 0x4, scoped, tag = 'scoped memory for closed_call.25']
    #allocation12 [shape = 'u8[4096]{0}', space=vmem, size = 0x1000, scoped, tag = 'input window, operand 5, single buffered']
    #allocation13 [shape = 'u8[4096]{0}', space=vmem, size = 0x1000, scoped, tag = 'input window, operand 6, single buffered']
    #allocation14 [shape = 's32[1]{0}', space=sflag, size = 0x4, scoped, tag = 'scoped memory for closed_call.25']
    #allocation15 [shape = 'u8[16384]{0}', space=vmem, size = 0x4000, scoped, tag = 'input window, operand 7, single buffered']
    #allocation16 [shape = 'u8[512]{0}', space=vmem, size = 0x400, scoped, tag = 'input window, operand 8, single buffered']
    #allocation17 [shape = 's32[1]{0}', space=sflag, size = 0x4, scoped, tag = 'scoped memory for closed_call.25']
    #allocation18 [shape = 'u8[16384]{0}', space=vmem, size = 0x4000, scoped, tag = 'input window, operand 9, single buffered']
    #allocation19 [shape = 'u8[512]{0}', space=vmem, size = 0x400, scoped, tag = 'input window, operand 10, single buffered']
    #allocation20 [shape = 's32[1]{0}', space=sflag, size = 0x4, scoped, tag = 'scoped memory for closed_call.25']
    #allocation21 [shape = 'u8[512]{0}', space=vmem, size = 0x400, scoped, tag = 'input window, operand 11, single buffered']
    #allocation22 [shape = 'u8[512]{0}', space=vmem, size = 0x400, scoped, tag = 'input window, operand 12, single buffered']
    #allocation23 [shape = 's32[1]{0}', space=sflag, size = 0x4, scoped, tag = 'scoped memory for closed_call.25']
    #allocation24 [shape = 'u8[16384]{0}', space=vmem, size = 0x4000, scoped, tag = 'input window, operand 13, single buffered']
    #allocation25 [shape = 'u8[512]{0}', space=vmem, size = 0x400, scoped, tag = 'input window, operand 14, single buffered']
    #allocation26 [shape = 's32[1]{0}', space=sflag, size = 0x4, scoped, tag = 'scoped memory for closed_call.25']
    #allocation27 [shape = 'u8[16384]{0}', space=vmem, size = 0x4000, scoped, tag = 'input window, operand 15, single buffered']
    #allocation28 [shape = 'u8[512]{0}', space=vmem, size = 0x400, scoped, tag = 'input window, operand 16, single buffered']
    #allocation29 [shape = 's32[1]{0}', space=sflag, size = 0x4, scoped, tag = 'scoped memory for closed_call.25']
    #allocation30 [shape = 'u8[512]{0}', space=vmem, size = 0x400, scoped, tag = 'input window, operand 17, single buffered']
    #allocation31 [shape = 'u8[512]{0}', space=vmem, size = 0x400, scoped, tag = 'input window, operand 18, single buffered']
    #allocation32 [shape = 's32[1]{0}', space=sflag, size = 0x4, scoped, tag = 'scoped memory for closed_call.25']
    #allocation33 [shape = 'u8[16384]{0}', space=vmem, size = 0x4000, scoped, tag = 'input window, operand 19, single buffered']
    #allocation34 [shape = 'u8[512]{0}', space=vmem, size = 0x400, scoped, tag = 'input window, operand 20, single buffered']
    #allocation35 [shape = 's32[1]{0}', space=sflag, size = 0x4, scoped, tag = 'scoped memory for closed_call.25']
    #allocation36 [shape = 'u8[16384]{0}', space=vmem, size = 0x4000, scoped, tag = 'input window, operand 21, single buffered']
    #allocation37 [shape = 'u8[512]{0}', space=vmem, size = 0x400, scoped, tag = 'input window, operand 22, single buffered']
    #allocation38 [shape = 's32[1]{0}', space=sflag, size = 0x4, scoped, tag = 'scoped memory for closed_call.25']
    #allocation39 [shape = 'u8[512]{0}', space=vmem, size = 0x400, scoped, tag = 'input window, operand 23, single buffered']
    #allocation40 [shape = 'u8[512]{0}', space=vmem, size = 0x400, scoped, tag = 'input window, operand 24, single buffered']
    #allocation41 [shape = 's32[1]{0}', space=sflag, size = 0x4, scoped, tag = 'scoped memory for closed_call.25']
    #allocation42 [shape = 'u8[16384]{0}', space=vmem, size = 0x4000, scoped, tag = 'input window, operand 25, single buffered']
    #allocation43 [shape = 'u8[512]{0}', space=vmem, size = 0x400, scoped, tag = 'input window, operand 26, single buffered']
    #allocation44 [shape = 's32[1]{0}', space=sflag, size = 0x4, scoped, tag = 'scoped memory for closed_call.25']
    #allocation45 [shape = 'u8[1024]{0}', space=vmem, size = 0x400, scoped, tag = 'output window, operand 0, single buffered']
    #allocation46 [shape = 'u8[512]{0}', space=vmem, size = 0x400, scoped, tag = 'output window, operand 1, single buffered']
    #allocation47 [shape = 's32[1]{0}', space=sflag, size = 0x4, scoped, tag = 'scoped memory for closed_call.25']
    #allocation48 [shape = 'u8[512]{0}', space=vmem, size = 0x400, scoped, tag = 'output window, operand 2, single buffered']
    %66 = vsyncpa [#allocation5], 0
    %67 = vsyncpa [#allocation8], 0
    %68 = vsyncpa [#allocation11], 0
    %69 = vsyncpa [#allocation14], 0
    %70 = vsyncpa [#allocation17], 0
    %71 = vsyncpa [#allocation20], 0
    %72 = vsyncpa [#allocation23], 0
    %73 = vsyncpa [#allocation26], 0
    %74 = vsyncpa [#allocation29], 0
    %75 = vsyncpa [#allocation32], 0
    %76 = vsyncpa [#allocation35], 0
    %77 = vsyncpa [#allocation38], 0
    %78 = vsyncpa [#allocation41], 0
    %79 = vsyncpa [#allocation44], 0
    %80 = vsyncpa [#allocation6], 0
    %81 = vsyncpa [#allocation47], 0
    // Predicated region
    $region2: #{closed_call.25} parent=1 // pred_check
      _
    $region3: #{closed_call.25} parent=1 // pred_check_branch
      %83 = sbr.rel (0) target = $region5
    $region4: #{closed_call.25} parent=1 // pred_region
      %s85 = ssub.s32 32, 32
      %86 = vsyncadd [#allocation5], %s85
      %s88 = sshll.u32 [#allocation4], 4
      %s89 = int_to_ptr.vmem [resolvable:$true] %s88
      %91 = dma.hbm_to_vmem [thread:$0]  %s3, 32, %s89, [#allocation5]
    $region5: #{closed_call.25} parent=1 // pred_fallthru
      _
    // Predicated region
    $region6: #{closed_call.25} parent=1 // pred_check
      _
    $region7: #{closed_call.25} parent=1 // pred_check_branch
      %93 = sbr.rel (0) target = $region9
    $region8: #{closed_call.25} parent=1 // pred_region
      %s95 = ssub.s32 256, 256
      %96 = vsyncadd [#allocation8], %s95
      %s97 = sshll.u32 [#allocation7], 4
      %s98 = int_to_ptr.vmem [resolvable:$true] %s97
      %103 = dma.hbm_to_vmem [thread:$0]  %s5, 256, %s98, [#allocation8], 64, 64, 4
    $region9: #{closed_call.25} parent=1 // pred_fallthru
      _
    // Predicated region
    $region10: #{closed_call.25} parent=1 // pred_check
      _
    $region11: #{closed_call.25} parent=1 // pred_check_branch
      %105 = sbr.rel (0) target = $region13
    $region12: #{closed_call.25} parent=1 // pred_region
      %s107 = ssub.s32 256, 256
      %108 = vsyncadd [#allocation8], %s107
      %s109 = sshll.u32 [#allocation9], 4
      %s110 = int_to_ptr.vmem [resolvable:$true] %s109
      %115 = dma.hbm_to_vmem [thread:$0]  %s7, 256, %s110, [#allocation8], 64, 64, 4
    $region13: #{closed_call.25} parent=1 // pred_fallthru
      _
    // Predicated region
    $region14: #{closed_call.25} parent=1 // pred_check
      _
    $region15: #{closed_call.25} parent=1 // pred_check_branch
      %117 = sbr.rel (0) target = $region17
    $region16: #{closed_call.25} parent=1 // pred_region
      %s119 = ssub.s32 32, 32
      %120 = vsyncadd [#allocation11], %s119
      %s122 = sshll.u32 [#allocation10], 4
      %s123 = int_to_ptr.vmem [resolvable:$true] %s122
      %125 = dma.hbm_to_vmem [thread:$0]  %s9, 32, %s123, [#allocation11]
    $region17: #{closed_call.25} parent=1 // pred_fallthru
      _
    // Predicated region
    $region18: #{closed_call.25} parent=1 // pred_check
      _
    $region19: #{closed_call.25} parent=1 // pred_check_branch
      %127 = sbr.rel (0) target = $region21
    $region20: #{closed_call.25} parent=1 // pred_region
      %s129 = ssub.s32 128, 128
      %130 = vsyncadd [#allocation11], %s129
      %s131 = sshll.u32 [#allocation12], 4
      %s132 = int_to_ptr.vmem [resolvable:$true] %s131
      %137 = dma.hbm_to_vmem [thread:$0]  %s11, 128, %s132, [#allocation11], 64, 64, 4
    $region21: #{closed_call.25} parent=1 // pred_fallthru
      _
    // Predicated region
    $region22: #{closed_call.25} parent=1 // pred_check
      _
    $region23: #{closed_call.25} parent=1 // pred_check_branch
      %139 = sbr.rel (0) target = $region25
    $region24: #{closed_call.25} parent=1 // pred_region
      %s141 = ssub.s32 128, 128
      %142 = vsyncadd [#allocation14], %s141
      %s143 = sshll.u32 [#allocation13], 4
      %s144 = int_to_ptr.vmem [resolvable:$true] %s143
      %149 = dma.hbm_to_vmem [thread:$0]  %s13, 128, %s144, [#allocation14], 64, 64, 4
    $region25: #{closed_call.25} parent=1 // pred_fallthru
      _
    // Predicated region
    $region26: #{closed_call.25} parent=1 // pred_check
      _
    $region27: #{closed_call.25} parent=1 // pred_check_branch
      %151 = sbr.rel (0) target = $region29
    $region28: #{closed_call.25} parent=1 // pred_region
      %s153 = ssub.s32 512, 512
      %154 = vsyncadd [#allocation14], %s153
      %s155 = sshll.u32 [#allocation15], 4
      %s156 = int_to_ptr.vmem [resolvable:$true] %s155
      %161 = dma.hbm_to_vmem [thread:$0]  %s15, 512, %s156, [#allocation14], 128, 128, 8
    $region29: #{closed_call.25} parent=1 // pred_fallthru
      _
    // Predicated region
    $region30: #{closed_call.25} parent=1 // pred_check
      _
    $region31: #{closed_call.25} parent=1 // pred_check_branch
      %163 = sbr.rel (0) target = $region33
    $region32: #{closed_call.25} parent=1 // pred_region
      %s165 = ssub.s32 16, 16
      %166 = vsyncadd [#allocation17], %s165
      %s168 = sshll.u32 [#allocation16], 4
      %s169 = int_to_ptr.vmem [resolvable:$true] %s168
      %171 = dma.hbm_to_vmem [thread:$0]  %s17, 16, %s169, [#allocation17]
    $region33: #{closed_call.25} parent=1 // pred_fallthru
      _
    // Predicated region
    $region34: #{closed_call.25} parent=1 // pred_check
      _
    $region35: #{closed_call.25} parent=1 // pred_check_branch
      %173 = sbr.rel (0) target = $region37
    $region36: #{closed_call.25} parent=1 // pred_region
      %s175 = ssub.s32 512, 512
      %176 = vsyncadd [#allocation17], %s175
      %s177 = sshll.u32 [#allocation18], 4
      %s178 = int_to_ptr.vmem [resolvable:$true] %s177
      %183 = dma.hbm_to_vmem [thread:$0]  %s19, 512, %s178, [#allocation17], 128, 128, 8
    $region37: #{closed_call.25} parent=1 // pred_fallthru
      _
    // Predicated region
    $region38: #{closed_call.25} parent=1 // pred_check
      _
    $region39: #{closed_call.25} parent=1 // pred_check_branch
      %185 = sbr.rel (0) target = $region41
    $region40: #{closed_call.25} parent=1 // pred_region
      %s187 = ssub.s32 16, 16
      %188 = vsyncadd [#allocation20], %s187
      %s190 = sshll.u32 [#allocation19], 4
      %s191 = int_to_ptr.vmem [resolvable:$true] %s190
      %193 = dma.hbm_to_vmem [thread:$0]  %s21, 16, %s191, [#allocation20]
    $region41: #{closed_call.25} parent=1 // pred_fallthru
      _
    // Predicated region
    $region42: #{closed_call.25} parent=1 // pred_check
      _
    $region43: #{closed_call.25} parent=1 // pred_check_branch
      %195 = sbr.rel (0) target = $region45
    $region44: #{closed_call.25} parent=1 // pred_region
      %s197 = ssub.s32 16, 16
      %198 = vsyncadd [#allocation20], %s197
      %s200 = sshll.u32 [#allocation21], 4
      %s201 = int_to_ptr.vmem [resolvable:$true] %s200
      %203 = dma.hbm_to_vmem [thread:$0]  %s23, 16, %s201, [#allocation20]
    $region45: #{closed_call.25} parent=1 // pred_fallthru
      _
    // Predicated region
    $region46: #{closed_call.25} parent=1 // pred_check
      _
    $region47: #{closed_call.25} parent=1 // pred_check_branch
      %205 = sbr.rel (0) target = $region49
    $region48: #{closed_call.25} parent=1 // pred_region
      %s207 = ssub.s32 16, 16
      %208 = vsyncadd [#allocation23], %s207
      %s210 = sshll.u32 [#allocation22], 4
      %s211 = int_to_ptr.vmem [resolvable:$true] %s210
      %213 = dma.hbm_to_vmem [thread:$0]  %s25, 16, %s211, [#allocation23]
    $region49: #{closed_call.25} parent=1 // pred_fallthru
      _
    // Predicated region
    $region50: #{closed_call.25} parent=1 // pred_check
      _
    $region51: #{closed_call.25} parent=1 // pred_check_branch
      %215 = sbr.rel (0) target = $region53
    $region52: #{closed_call.25} parent=1 // pred_region
      %s217 = ssub.s32 512, 512
      %218 = vsyncadd [#allocation23], %s217
      %s219 = sshll.u32 [#allocation24], 4
      %s220 = int_to_ptr.vmem [resolvable:$true] %s219
      %225 = dma.hbm_to_vmem [thread:$0]  %s27, 512, %s220, [#allocation23], 128, 128, 8
    $region53: #{closed_call.25} parent=1 // pred_fallthru
      _
    // Predicated region
    $region54: #{closed_call.25} parent=1 // pred_check
      _
    $region55: #{closed_call.25} parent=1 // pred_check_branch
      %227 = sbr.rel (0) target = $region57
    $region56: #{closed_call.25} parent=1 // pred_region
      %s229 = ssub.s32 16, 16
      %230 = vsyncadd [#allocation26], %s229
      %s232 = sshll.u32 [#allocation25], 4
      %s233 = int_to_ptr.vmem [resolvable:$true] %s232
      %235 = dma.hbm_to_vmem [thread:$0]  %s29, 16, %s233, [#allocation26]
    $region57: #{closed_call.25} parent=1 // pred_fallthru
      _
    // Predicated region
    $region58: #{closed_call.25} parent=1 // pred_check
      _
    $region59: #{closed_call.25} parent=1 // pred_check_branch
      %237 = sbr.rel (0) target = $region61
    $region60: #{closed_call.25} parent=1 // pred_region
      %s239 = ssub.s32 512, 512
      %240 = vsyncadd [#allocation26], %s239
      %s241 = sshll.u32 [#allocation27], 4
      %s242 = int_to_ptr.vmem [resolvable:$true] %s241
      %247 = dma.hbm_to_vmem [thread:$0]  %s31, 512, %s242, [#allocation26], 128, 128, 8
    $region61: #{closed_call.25} parent=1 // pred_fallthru
      _
    // Predicated region
    $region62: #{closed_call.25} parent=1 // pred_check
      _
    $region63: #{closed_call.25} parent=1 // pred_check_branch
      %249 = sbr.rel (0) target = $region65
    $region64: #{closed_call.25} parent=1 // pred_region
      %s251 = ssub.s32 16, 16
      %252 = vsyncadd [#allocation29], %s251
      %s254 = sshll.u32 [#allocation28], 4
      %s255 = int_to_ptr.vmem [resolvable:$true] %s254
      %257 = dma.hbm_to_vmem [thread:$0]  %s33, 16, %s255, [#allocation29]
    $region65: #{closed_call.25} parent=1 // pred_fallthru
      _
    // Predicated region
    $region66: #{closed_call.25} parent=1 // pred_check
      _
    $region67: #{closed_call.25} parent=1 // pred_check_branch
      %259 = sbr.rel (0) target = $region69
    $region68: #{closed_call.25} parent=1 // pred_region
      %s261 = ssub.s32 16, 16
      %262 = vsyncadd [#allocation29], %s261
      %s264 = sshll.u32 [#allocation30], 4
      %s265 = int_to_ptr.vmem [resolvable:$true] %s264
      %267 = dma.hbm_to_vmem [thread:$0]  %s35, 16, %s265, [#allocation29]
    $region69: #{closed_call.25} parent=1 // pred_fallthru
      _
    // Predicated region
    $region70: #{closed_call.25} parent=1 // pred_check
      _
    $region71: #{closed_call.25} parent=1 // pred_check_branch
      %269 = sbr.rel (0) target = $region73
    $region72: #{closed_call.25} parent=1 // pred_region
      %s271 = ssub.s32 16, 16
      %272 = vsyncadd [#allocation32], %s271
      %s274 = sshll.u32 [#allocation31], 4
      %s275 = int_to_ptr.vmem [resolvable:$true] %s274
      %277 = dma.hbm_to_vmem [thread:$0]  %s37, 16, %s275, [#allocation32]
    $region73: #{closed_call.25} parent=1 // pred_fallthru
      _
    // Predicated region
    $region74: #{closed_call.25} parent=1 // pred_check
      _
    $region75: #{closed_call.25} parent=1 // pred_check_branch
      %279 = sbr.rel (0) target = $region77
    $region76: #{closed_call.25} parent=1 // pred_region
      %s281 = ssub.s32 512, 512
      %282 = vsyncadd [#allocation32], %s281
      %s283 = sshll.u32 [#allocation33], 4
      %s284 = int_to_ptr.vmem [resolvable:$true] %s283
      %289 = dma.hbm_to_vmem [thread:$0]  %s39, 512, %s284, [#allocation32], 128, 128, 8
    $region77: #{closed_call.25} parent=1 // pred_fallthru
      _
    // Predicated region
    $region78: #{closed_call.25} parent=1 // pred_check
      _
    $region79: #{closed_call.25} parent=1 // pred_check_branch
      %291 = sbr.rel (0) target = $region81
    $region80: #{closed_call.25} parent=1 // pred_region
      %s293 = ssub.s32 16, 16
      %294 = vsyncadd [#allocation35], %s293
      %s296 = sshll.u32 [#allocation34], 4
      %s297 = int_to_ptr.vmem [resolvable:$true] %s296
      %299 = dma.hbm_to_vmem [thread:$0]  %s41, 16, %s297, [#allocation35]
    $region81: #{closed_call.25} parent=1 // pred_fallthru
      _
    // Predicated region
    $region82: #{closed_call.25} parent=1 // pred_check
      _
    $region83: #{closed_call.25} parent=1 // pred_check_branch
      %301 = sbr.rel (0) target = $region85
    $region84: #{closed_call.25} parent=1 // pred_region
      %s303 = ssub.s32 512, 512
      %304 = vsyncadd [#allocation35], %s303
      %s305 = sshll.u32 [#allocation36], 4
      %s306 = int_to_ptr.vmem [resolvable:$true] %s305
      %311 = dma.hbm_to_vmem [thread:$0]  %s43, 512, %s306, [#allocation35], 128, 128, 8
    $region85: #{closed_call.25} parent=1 // pred_fallthru
      _
    // Predicated region
    $region86: #{closed_call.25} parent=1 // pred_check
      _
    $region87: #{closed_call.25} parent=1 // pred_check_branch
      %313 = sbr.rel (0) target = $region89
    $region88: #{closed_call.25} parent=1 // pred_region
      %s315 = ssub.s32 16, 16
      %316 = vsyncadd [#allocation38], %s315
      %s318 = sshll.u32 [#allocation37], 4
      %s319 = int_to_ptr.vmem [resolvable:$true] %s318
      %321 = dma.hbm_to_vmem [thread:$0]  %s45, 16, %s319, [#allocation38]
    $region89: #{closed_call.25} parent=1 // pred_fallthru
      _
    // Predicated region
    $region90: #{closed_call.25} parent=1 // pred_check
      _
    $region91: #{closed_call.25} parent=1 // pred_check_branch
      %323 = sbr.rel (0) target = $region93
    $region92: #{closed_call.25} parent=1 // pred_region
      %s325 = ssub.s32 16, 16
      %326 = vsyncadd [#allocation38], %s325
      %s328 = sshll.u32 [#allocation39], 4
      %s329 = int_to_ptr.vmem [resolvable:$true] %s328
      %331 = dma.hbm_to_vmem [thread:$0]  %s47, 16, %s329, [#allocation38]
    $region93: #{closed_call.25} parent=1 // pred_fallthru
      _
    // Predicated region
    $region94: #{closed_call.25} parent=1 // pred_check
      _
    $region95: #{closed_call.25} parent=1 // pred_check_branch
      %333 = sbr.rel (0) target = $region97
    $region96: #{closed_call.25} parent=1 // pred_region
      %s335 = ssub.s32 16, 16
      %336 = vsyncadd [#allocation41], %s335
      %s338 = sshll.u32 [#allocation40], 4
      %s339 = int_to_ptr.vmem [resolvable:$true] %s338
      %341 = dma.hbm_to_vmem [thread:$0]  %s49, 16, %s339, [#allocation41]
    $region97: #{closed_call.25} parent=1 // pred_fallthru
      _
    // Predicated region
    $region98: #{closed_call.25} parent=1 // pred_check
      _
    $region99: #{closed_call.25} parent=1 // pred_check_branch
      %343 = sbr.rel (0) target = $region101
    $region100: #{closed_call.25} parent=1 // pred_region
      %s345 = ssub.s32 512, 512
      %346 = vsyncadd [#allocation41], %s345
      %s347 = sshll.u32 [#allocation42], 4
      %s348 = int_to_ptr.vmem [resolvable:$true] %s347
      %353 = dma.hbm_to_vmem [thread:$0]  %s51, 512, %s348, [#allocation41], 128, 128, 8
    $region101: #{closed_call.25} parent=1 // pred_fallthru
      _
    // Predicated region
    $region102: #{closed_call.25} parent=1 // pred_check
      _
    $region103: #{closed_call.25} parent=1 // pred_check_branch
      %355 = sbr.rel (0) target = $region105
    $region104: #{closed_call.25} parent=1 // pred_region
      %s357 = ssub.s32 16, 16
      %358 = vsyncadd [#allocation44], %s357
      %s360 = sshll.u32 [#allocation43], 4
      %s361 = int_to_ptr.vmem [resolvable:$true] %s360
      %363 = dma.hbm_to_vmem [thread:$0]  %s53, 16, %s361, [#allocation44]
    $region105: #{closed_call.25} parent=1 // pred_fallthru
      _
    // Predicated region
    $region106: #{closed_call.25} parent=1 // pred_check
      _
    $region107: #{closed_call.25} parent=1 // pred_check_branch
      %365 = sbr.rel (0) target = $region109
    $region108: #{closed_call.25} parent=1 // pred_region
      %366 = dma.done [#allocation5], 32
    $region109: #{closed_call.25} parent=1 // pred_fallthru
      _
    // Predicated region
    $region110: #{closed_call.25} parent=1 // pred_check
      _
    $region111: #{closed_call.25} parent=1 // pred_check_branch
      %368 = sbr.rel (0) target = $region113
    $region112: #{closed_call.25} parent=1 // pred_region
      %369 = dma.done [#allocation8], 256
    $region113: #{closed_call.25} parent=1 // pred_fallthru
      _
    // Predicated region
    $region114: #{closed_call.25} parent=1 // pred_check
      _
    $region115: #{closed_call.25} parent=1 // pred_check_branch
      %371 = sbr.rel (0) target = $region117
    $region116: #{closed_call.25} parent=1 // pred_region
      %372 = dma.done [#allocation8], 256
    $region117: #{closed_call.25} parent=1 // pred_fallthru
      _
    // Predicated region
    $region118: #{closed_call.25} parent=1 // pred_check
      _
    $region119: #{closed_call.25} parent=1 // pred_check_branch
      %374 = sbr.rel (0) target = $region121
    $region120: #{closed_call.25} parent=1 // pred_region
      %375 = dma.done [#allocation11], 32
    $region121: #{closed_call.25} parent=1 // pred_fallthru
      _
    // Predicated region
    $region122: #{closed_call.25} parent=1 // pred_check
      _
    $region123: #{closed_call.25} parent=1 // pred_check_branch
      %377 = sbr.rel (0) target = $region125
    $region124: #{closed_call.25} parent=1 // pred_region
      %378 = dma.done [#allocation11], 128
    $region125: #{closed_call.25} parent=1 // pred_fallthru
      _
    // Predicated region
    $region126: #{closed_call.25} parent=1 // pred_check
      _
    $region127: #{closed_call.25} parent=1 // pred_check_branch
      %380 = sbr.rel (0) target = $region129
    $region128: #{closed_call.25} parent=1 // pred_region
      %381 = dma.done [#allocation14], 128
    $region129: #{closed_call.25} parent=1 // pred_fallthru
      _
    // Predicated region
    $region130: #{closed_call.25} parent=1 // pred_check
      _
    $region131: #{closed_call.25} parent=1 // pred_check_branch
      %383 = sbr.rel (0) target = $region133
    $region132: #{closed_call.25} parent=1 // pred_region
      %384 = dma.done [#allocation14], 512
    $region133: #{closed_call.25} parent=1 // pred_fallthru
      _
    // Predicated region
    $region134: #{closed_call.25} parent=1 // pred_check
      _
    $region135: #{closed_call.25} parent=1 // pred_check_branch
      %386 = sbr.rel (0) target = $region137
    $region136: #{closed_call.25} parent=1 // pred_region
      %387 = dma.done [#allocation17], 16
    $region137: #{closed_call.25} parent=1 // pred_fallthru
      _
    // Predicated region
    $region138: #{closed_call.25} parent=1 // pred_check
      _
    $region139: #{closed_call.25} parent=1 // pred_check_branch
      %389 = sbr.rel (0) target = $region141
    $region140: #{closed_call.25} parent=1 // pred_region
      %390 = dma.done [#allocation17], 512
    $region141: #{closed_call.25} parent=1 // pred_fallthru
      _
    // Predicated region
    $region142: #{closed_call.25} parent=1 // pred_check
      _
    $region143: #{closed_call.25} parent=1 // pred_check_branch
      %392 = sbr.rel (0) target = $region145
    $region144: #{closed_call.25} parent=1 // pred_region
      %393 = dma.done [#allocation20], 16
    $region145: #{closed_call.25} parent=1 // pred_fallthru
      _
    // Predicated region
    $region146: #{closed_call.25} parent=1 // pred_check
      _
    $region147: #{closed_call.25} parent=1 // pred_check_branch
      %395 = sbr.rel (0) target = $region149
    $region148: #{closed_call.25} parent=1 // pred_region
      %396 = dma.done [#allocation20], 16
    $region149: #{closed_call.25} parent=1 // pred_fallthru
      _
    // Predicated region
    $region150: #{closed_call.25} parent=1 // pred_check
      _
    $region151: #{closed_call.25} parent=1 // pred_check_branch
      %398 = sbr.rel (0) target = $region153
    $region152: #{closed_call.25} parent=1 // pred_region
      %399 = dma.done [#allocation23], 16
    $region153: #{closed_call.25} parent=1 // pred_fallthru
      _
    // Predicated region
    $region154: #{closed_call.25} parent=1 // pred_check
      _
    $region155: #{closed_call.25} parent=1 // pred_check_branch
      %401 = sbr.rel (0) target = $region157
    $region156: #{closed_call.25} parent=1 // pred_region
      %402 = dma.done [#allocation23], 512
    $region157: #{closed_call.25} parent=1 // pred_fallthru
      _
    // Predicated region
    $region158: #{closed_call.25} parent=1 // pred_check
      _
    $region159: #{closed_call.25} parent=1 // pred_check_branch
      %404 = sbr.rel (0) target = $region161
    $region160: #{closed_call.25} parent=1 // pred_region
      %405 = dma.done [#allocation26], 16
    $region161: #{closed_call.25} parent=1 // pred_fallthru
      _
    // Predicated region
    $region162: #{closed_call.25} parent=1 // pred_check
      _
    $region163: #{closed_call.25} parent=1 // pred_check_branch
      %407 = sbr.rel (0) target = $region165
    $region164: #{closed_call.25} parent=1 // pred_region
      %408 = dma.done [#allocation26], 512
    $region165: #{closed_call.25} parent=1 // pred_fallthru
      _
    // Predicated region
    $region166: #{closed_call.25} parent=1 // pred_check
      _
    $region167: #{closed_call.25} parent=1 // pred_check_branch
      %410 = sbr.rel (0) target = $region169
    $region168: #{closed_call.25} parent=1 // pred_region
      %411 = dma.done [#allocation29], 16
    $region169: #{closed_call.25} parent=1 // pred_fallthru
      _
    // Predicated region
    $region170: #{closed_call.25} parent=1 // pred_check
      _
    $region171: #{closed_call.25} parent=1 // pred_check_branch
      %413 = sbr.rel (0) target = $region173
    $region172: #{closed_call.25} parent=1 // pred_region
      %414 = dma.done [#allocation29], 16
    $region173: #{closed_call.25} parent=1 // pred_fallthru
      _
    // Predicated region
    $region174: #{closed_call.25} parent=1 // pred_check
      _
    $region175: #{closed_call.25} parent=1 // pred_check_branch
      %416 = sbr.rel (0) target = $region177
    $region176: #{closed_call.25} parent=1 // pred_region
      %417 = dma.done [#allocation32], 16
    $region177: #{closed_call.25} parent=1 // pred_fallthru
      _
    // Predicated region
    $region178: #{closed_call.25} parent=1 // pred_check
      _
    $region179: #{closed_call.25} parent=1 // pred_check_branch
      %419 = sbr.rel (0) target = $region181
    $region180: #{closed_call.25} parent=1 // pred_region
      %420 = dma.done [#allocation32], 512
    $region181: #{closed_call.25} parent=1 // pred_fallthru
      _
    // Predicated region
    $region182: #{closed_call.25} parent=1 // pred_check
      _
    $region183: #{closed_call.25} parent=1 // pred_check_branch
      %422 = sbr.rel (0) target = $region185
    $region184: #{closed_call.25} parent=1 // pred_region
      %423 = dma.done [#allocation35], 16
    $region185: #{closed_call.25} parent=1 // pred_fallthru
      _
    // Predicated region
    $region186: #{closed_call.25} parent=1 // pred_check
      _
    $region187: #{closed_call.25} parent=1 // pred_check_branch
      %425 = sbr.rel (0) target = $region189
    $region188: #{closed_call.25} parent=1 // pred_region
      %426 = dma.done [#allocation35], 512
    $region189: #{closed_call.25} parent=1 // pred_fallthru
      _
    // Predicated region
    $region190: #{closed_call.25} parent=1 // pred_check
      _
    $region191: #{closed_call.25} parent=1 // pred_check_branch
      %428 = sbr.rel (0) target = $region193
    $region192: #{closed_call.25} parent=1 // pred_region
      %429 = dma.done [#allocation38], 16
    $region193: #{closed_call.25} parent=1 // pred_fallthru
      _
    // Predicated region
    $region194: #{closed_call.25} parent=1 // pred_check
      _
    $region195: #{closed_call.25} parent=1 // pred_check_branch
      %431 = sbr.rel (0) target = $region197
    $region196: #{closed_call.25} parent=1 // pred_region
      %432 = dma.done [#allocation38], 16
    $region197: #{closed_call.25} parent=1 // pred_fallthru
      _
    // Predicated region
    $region198: #{closed_call.25} parent=1 // pred_check
      _
    $region199: #{closed_call.25} parent=1 // pred_check_branch
      %434 = sbr.rel (0) target = $region201
    $region200: #{closed_call.25} parent=1 // pred_region
      %435 = dma.done [#allocation41], 16
    $region201: #{closed_call.25} parent=1 // pred_fallthru
      _
    // Predicated region
    $region202: #{closed_call.25} parent=1 // pred_check
      _
    $region203: #{closed_call.25} parent=1 // pred_check_branch
      %437 = sbr.rel (0) target = $region205
    $region204: #{closed_call.25} parent=1 // pred_region
      %438 = dma.done [#allocation41], 512
    $region205: #{closed_call.25} parent=1 // pred_fallthru
      _
    // Predicated region
    $region206: #{closed_call.25} parent=1 // pred_check
      _
    $region207: #{closed_call.25} parent=1 // pred_check_branch
      %440 = sbr.rel (0) target = $region209
    $region208: #{closed_call.25} parent=1 // pred_region
      %441 = dma.done [#allocation44], 16
    $region209: #{closed_call.25} parent=1 // pred_fallthru
      _
    %s443 = sld [smem:[#allocation3]]
    %v444 = vld [vmem:[#allocation4] sm:$0x3]
    %v445 = vld [vmem:[#allocation10] sm:$0x3]
    %vm446 = vcmp.gt.s32.totalorder %v445, 0
    %v447 = vsel %vm446, -1e+09, 0.0
    %v450 = vunpack.c.l.s4 1966171168
    %v451 = vunpack.c.0.s8 %v450
    %v452 = vlaneseq
    %v453 = vshrl.u32 %v452, 7
    %v454 = vsub.s32 %v451, %v453
    %v455 = vrot.slane %v447, %v454
    %v456 = vcombine.high %v455, %v455
    %v458 = vunpack.c.l.s4 1966171168
    %v459 = vunpack.c.0.s8 %v458
    %v460 = vlaneseq
    %v461 = vshrl.u32 %v460, 7
    %v462 = vsub.s32 %v459, %v461
    %v463 = vrot.slane %v455, %v462
    %v465 = vunpack.c.l.s4 1966171168
    %v466 = vunpack.c.0.s8 %v465
    %v467 = vlaneseq
    %v468 = vshrl.u32 %v467, 7
    %v469 = vsub.s32 %v466, %v468
    %v470 = vrot.slane %v456, %v469
    %v473 = vlaneseq
    %v474 = vand.u32 %v473, 127
    %v475 = vstv %s443
    %vm476 = vcmp.lt.s32.totalorder %v474, %v475
    %v477 = vsel %vm476, 0.0, -1e+09
    %v478 = vld [vmem:[#allocation15] sm:$0xff]
    %v479 = vld [vmem:[#allocation15 + $0x8] sm:$0xff]
    %v480 = vld [vmem:[#allocation15 + $0x10] sm:$0xff]
    %v481 = vld [vmem:[#allocation15 + $0x18] sm:$0xff]
    %v482 = vld [vmem:[#allocation16] sm:$0x1]
    %v484 = vlaneseq
    %v485 = vshrl.u32 %v484, 7
    %v486 = vsub.s32 0, %v485
    %v487 = vrot.slane %v482, %v486
    %vm489 = vcmask 261120
    %v491 = vsel %vm489, %v444, 0
    %493 = vmatprep.subr.mxu0 0.0
    %494 = vmatpush1.msra.mxu0 %v478
    %495 = vmatprep.subr.mxu0 0.0
    %496 = vmatpush1.msra.mxu0 %v479
    %497 = vmatprep.subr.mxu0 0.0
    %498 = vmatpush1.msra.mxu0 %v480
    %499 = vmatprep.subr.mxu0 0.0
    %500 = vmatpush1.msra.mxu0 %v481
    %501 = vmatprep.subr.mxu0 0.0
    %502 = vmatpush1.msra.mxu0 0.0
    %503 = vmatprep.subr.mxu0 0.0
    %504 = vmatpush1.msra.mxu0 0.0
    %505 = vmatprep.subr.mxu0 0.0
    %506 = vmatpush1.msra.mxu0 0.0
    %507 = vmatprep.subr.mxu0 0.0
    %508 = vmatpush1.msra.mxu0 0.0
    %509 = vmatprep.subr.mxu0 0.0
    %510 = vmatpush1.msra.mxu0 0.0
    %511 = vmatprep.subr.mxu0 0.0
    %512 = vmatpush1.msra.mxu0 0.0
    %513 = vmatprep.subr.mxu0 0.0
    %514 = vmatpush1.msra.mxu0 0.0
    %515 = vmatprep.subr.mxu0 0.0
    %516 = vmatpush1.msra.mxu0 0.0
    %517 = vmatprep.subr.mxu0 0.0
    %518 = vmatpush1.msra.mxu0 0.0
    %519 = vmatprep.subr.mxu0 0.0
    %520 = vmatpush1.msra.mxu0 0.0
    %521 = vmatprep.subr.mxu0 0.0
    %522 = vmatpush1.msra.mxu0 0.0
    %523 = vmatprep.subr.mxu0 0.0
    %524 = vmatpush1.msra.mxu0 0.0
    %525 = vmatprep.subr.mxu0 0.0
    %526 = vmatpush1.msra.mxu0 0.0
    %527 = vmatprep.subr.mxu0 0.0
    %528 = vmatpush1.msra.mxu0 0.0
    %529 = vmatprep.subr.mxu0 0.0
    %530 = vmatpush1.msra.mxu0 0.0
    %531 = vmatprep.subr.mxu0 0.0
    %532 = vmatpush1.msra.mxu0 0.0
    %533 = vmatprep.subr.mxu0 0.0
    %534 = vmatpush1.msra.mxu0 0.0
    %535 = vmatprep.subr.mxu0 0.0
    %536 = vmatpush1.msra.mxu0 0.0
    %537 = vmatprep.subr.mxu0 0.0
    %538 = vmatpush1.msra.mxu0 0.0
    %539 = vmatprep.subr.mxu0 0.0
    %540 = vmatpush1.msra.mxu0 0.0
    %541 = vmatprep.subr.mxu0 0.0
    %542 = vmatpush1.msra.mxu0 0.0
    %543 = vmatprep.subr.mxu0 0.0
    %544 = vmatpush1.msra.mxu0 0.0
    %545 = vmatprep.subr.mxu0 0.0
    %546 = vmatpush1.msra.mxu0 0.0
    %547 = vmatprep.subr.mxu0 0.0
    %548 = vmatpush1.msra.mxu0 0.0
    %549 = vmatprep.subr.mxu0 0.0
    %550 = vmatpush1.msra.mxu0 0.0
    %551 = vmatprep.subr.mxu0 0.0
    %552 = vmatpush1.msra.mxu0 0.0
    %553 = vmatprep.subr.mxu0 0.0
    %554 = vmatpush1.msra.mxu0 0.0
    %555 = vmatprep.subr.mxu0 0.0
    %556 = vmatpush1.msra.mxu0 0.0
    %557 = vmatprep.mubr.f32.mxu0 0.0
    %558 = vmatmul.mubr.f32.gmra.mrb[0].mxu0 %v491
    %v559 = vpop.f32.mrb[0].mxu0
    %v560 = vadd.f32 %v487, %v559
    %v561 = vpop.f32.mrb[0].mxu0
    %562 = vdwg.mxu0
    %v563 = vpack.c.bf16 %v560, %v560
    %v566 = vunpack.c.l.s4 1966171168
    %v567 = vunpack.c.0.s8 %v566
    %v568 = vlaneseq
    %v569 = vshrl.u32 %v568, 7
    %v570 = vsub.s32 %v567, %v569
    %v571 = vrot.slane %v563, %v570
    %v573 = vunpack.c.l.s4 1966171168
    %v574 = vunpack.c.0.s8 %v573
    %v575 = vlaneseq
    %v576 = vshrl.u32 %v575, 7
    %v577 = vsub.s32 %v574, %v576
    %v578 = vrot.slane %v571, %v577
    %579 = vrot.lane.b32.xlu0 %v578, 96
    %v580 = vpop.permute.xlu0 %579
    %vm582 = vcmask 253952
    %583 = vst.msk [vmem:[#allocation46] sm:$0x1] %vm582, %v580
    %584 = vrot.lane.b32.xlu0 %v578, 64
    %v585 = vpop.permute.xlu0 %584
    %587 = vst.msk [vmem:[#allocation48] sm:$0x1] %vm582, %v585
    %v588 = vld [vmem:[#allocation12] sm:$0xf]
    %v589 = vld [vmem:[#allocation12 + $0x4] sm:$0xf]
    %v590 = vld [vmem:[#allocation13] sm:$0xf]
    %v591 = vld [vmem:[#allocation13 + $0x4] sm:$0xf]
    %v592 = vunpack.i.l.s16 %v578
    %v593 = vunpack.i.h.s16 %v578
    %v594 = vpack.i.b16 %v592, %v592
    %v595 = vlaneseq
    %v596 = vshrl.u32 %v595, 7
    %v597 = vsub.s32 0, %v596
    %v598 = vrot.slane %v594, %v597
    %vm599 = vcmask 64512
    %v601 = vsel %vm599, %v598, 0
    %v604 = vsel %vm599, %v588, 0
    %606 = vmatprep.subr.bf16.mxu0 0
    %607 = vmatpush1.bf16.xpose.msra.mxu0 %v604
    %608 = vmatprep.subr.bf16.mxu0 0
    %609 = vmatpush1.bf16.xpose.msra.mxu0 0
    %610 = vmatprep.subr.bf16.mxu0 0
    %611 = vmatpush1.bf16.xpose.msra.mxu0 0
    %612 = vmatprep.subr.bf16.mxu0 0
    %613 = vmatpush1.bf16.xpose.msra.mxu0 0
    %614 = vmatprep.subr.bf16.mxu0 0
    %615 = vmatpush1.bf16.xpose.msra.mxu0 0
    %616 = vmatprep.subr.bf16.mxu0 0
    %617 = vmatpush1.bf16.xpose.msra.mxu0 0
    %618 = vmatprep.subr.bf16.mxu0 0
    %619 = vmatpush1.bf16.xpose.msra.mxu0 0
    %620 = vmatprep.subr.bf16.mxu0 0
    %621 = vmatpush1.bf16.xpose.msra.mxu0 0
    %622 = vmatprep.subr.bf16.mxu0 0
    %623 = vmatpush1.bf16.xpose.msra.mxu0 0
    %624 = vmatprep.subr.bf16.mxu0 0
    %625 = vmatpush1.bf16.xpose.msra.mxu0 0
    %626 = vmatprep.subr.bf16.mxu0 0
    %627 = vmatpush1.bf16.xpose.msra.mxu0 0
    %628 = vmatprep.subr.bf16.mxu0 0
    %629 = vmatpush1.bf16.xpose.msra.mxu0 0
    %630 = vmatprep.subr.bf16.mxu0 0
    %631 = vmatpush1.bf16.xpose.msra.mxu0 0
    %632 = vmatprep.subr.bf16.mxu0 0
    %633 = vmatpush1.bf16.xpose.msra.mxu0 0
    %634 = vmatprep.subr.bf16.mxu0 0
    %635 = vmatpush1.bf16.xpose.msra.mxu0 0
    %636 = vmatprep.subr.bf16.mxu0 0
    %637 = vmatpush1.bf16.xpose.msra.mxu0 0
    %638 = vmatprep.mubr.bf16.mxu0 0
    %639 = vmatmul.mubr.bf16.gmra.mrb[0].mxu0 %v601
    %v640 = vpop.f32.mrb[0].mxu0
    %v641 = vadd.f32 0.0, %v640
    %v642 = vpop.f32.mrb[0].mxu0
    %v643 = vpop.f32.mrb[0].mxu0
    %v644 = vpop.f32.mrb[0].mxu0
    %645 = vdwg.mxu0
    %v646 = vpack.i.b16 %v593, %v593
    %v647 = vlaneseq
    %v648 = vshrl.u32 %v647, 7
    %v649 = vsub.s32 0, %v648
    %v650 = vrot.slane %v646, %v649
    %v652 = vsel %vm599, %v650, 0
    %v655 = vsel %vm599, %v589, 0
    %657 = vmatprep.subr.bf16.mxu0 0
    %658 = vmatpush1.bf16.xpose.msra.mxu0 %v655
    %659 = vmatprep.subr.bf16.mxu0 0
    %660 = vmatpush1.bf16.xpose.msra.mxu0 0
    %661 = vmatprep.subr.bf16.mxu0 0
    %662 = vmatpush1.bf16.xpose.msra.mxu0 0
    %663 = vmatprep.subr.bf16.mxu0 0
    %664 = vmatpush1.bf16.xpose.msra.mxu0 0
    %665 = vmatprep.subr.bf16.mxu0 0
    %666 = vmatpush1.bf16.xpose.msra.mxu0 0
    %667 = vmatprep.subr.bf16.mxu0 0
    %668 = vmatpush1.bf16.xpose.msra.mxu0 0
    %669 = vmatprep.subr.bf16.mxu0 0
    %670 = vmatpush1.bf16.xpose.msra.mxu0 0
    %671 = vmatprep.subr.bf16.mxu0 0
    %672 = vmatpush1.bf16.xpose.msra.mxu0 0
    %673 = vmatprep.subr.bf16.mxu0 0
    %674 = vmatpush1.bf16.xpose.msra.mxu0 0
    %675 = vmatprep.subr.bf16.mxu0 0
    %676 = vmatpush1.bf16.xpose.msra.mxu0 0
    %677 = vmatprep.subr.bf16.mxu0 0
    %678 = vmatpush1.bf16.xpose.msra.mxu0 0
    %679 = vmatprep.subr.bf16.mxu0 0
    %680 = vmatpush1.bf16.xpose.msra.mxu0 0
    %681 = vmatprep.subr.bf16.mxu0 0
    %682 = vmatpush1.bf16.xpose.msra.mxu0 0
    %683 = vmatprep.subr.bf16.mxu0 0
    %684 = vmatpush1.bf16.xpose.msra.mxu0 0
    %685 = vmatprep.subr.bf16.mxu0 0
    %686 = vmatpush1.bf16.xpose.msra.mxu0 0
    %687 = vmatprep.subr.bf16.mxu0 0
    %688 = vmatpush1.bf16.xpose.msra.mxu0 0
    %689 = vmatprep.mubr.bf16.mxu0 0
    %690 = vmatmul.mubr.bf16.gmra.mrb[0].mxu0 %v652
    %v691 = vpop.f32.mrb[0].mxu0
    %v692 = vadd.f32 0.0, %v691
    %v693 = vpop.f32.mrb[0].mxu0
    %v694 = vpop.f32.mrb[0].mxu0
    %v695 = vpop.f32.mrb[0].mxu0
    %696 = vdwg.mxu0
    %v697 = vmul.f32 %v641, 0.35355338
    %v698 = vmul.f32 %v692, 0.35355338
    %v699 = vadd.f32 %v697, %v477
    %v700 = vadd.f32 %v698, %v477
    %702 = vrot.lane.b32.xlu0 %v560, 96
    %v703 = vpop.permute.xlu0 %702
    %v705 = vmul.f32 %v560, %v703
    %vm706 = vcmask 58368
    %v707 = vsel %vm706, %v705, 0.0
    %708 = vadd.xlane.f32.xlu0 %v707
    %v709 = vpop.xlane.xlu0 %708
    %v711 = vlaneseq
    %v712 = vshrl.u32 %v711, 7
    %v713 = vsub.s32 0, %v712
    %v714 = vrot.slane %v709, %v713
    %v715 = vlaneseq
    %v716 = vshrl.u32 %v715, 7
    %v717 = vsub.s32 1, %v716
    %v718 = vrot.slane %v709, %v717
    %v721 = vmul.f32 %v714, 0.35355338
    %v722 = vmul.f32 %v718, 0.35355338
    %vm723 = vcmask 57344
    %v724 = vsel %vm723, %v699, -inf
    %725 = vmax.xlane.f32.xlu0 %v724
    %v726 = vpop.xlane.xlu0 %725
    %v727 = vsel %vm723, %v700, -inf
    %728 = vmax.xlane.f32.xlu0 %v727
    %v729 = vpop.xlane.xlu0 %728
    %v730 = vmax.f32 %v726, %v721
    %v731 = vmax.f32 %v729, %v722
    %v732 = vsub.f32 %v699, %v730
    %v733 = vsub.f32 %v700, %v731
    %v734 = vmul.f32 %v732, 1.442695
    %v735 = vpow.pop %v734
    %v736 = vmul.f32 %v733, 1.442695
    %v737 = vpow.pop %v736
    %v738 = vsub.f32 %v721, %v730
    %v739 = vsub.f32 %v722, %v731
    %v740 = vmul.f32 %v738, 1.442695
    %v741 = vpow.pop %v740
    %v742 = vmul.f32 %v739, 1.442695
    %v743 = vpow.pop %v742
    %v744 = vsel %vm723, %v735, 0.0
    %745 = vadd.xlane.f32.xlu0 %v744
    %v746 = vpop.xlane.xlu0 %745
    %v747 = vsel %vm723, %v737, 0.0
    %748 = vadd.xlane.f32.xlu0 %v747
    %v749 = vpop.xlane.xlu0 %748
    %v750 = vadd.f32 %v746, %v741
    %v751 = vadd.f32 %v749, %v743
    %v752 = vrcp.pop %v750
    %v753 = vrcp.pop %v751
    %v754 = vpack.c.bf16 %v735, %v735
    %v755 = vpack.c.bf16 %v737, %v737
    %v757 = vunpack.c.l.s4 1966171168
    %v758 = vunpack.c.0.s8 %v757
    %v759 = vlaneseq
    %v760 = vshrl.u32 %v759, 7
    %v761 = vsub.s32 %v758, %v760
    %v762 = vrot.slane %v560, %v761
    %v763 = vcombine.high %v762, %v762
    %v765 = vunpack.c.l.s4 1966171168
    %v766 = vunpack.c.0.s8 %v765
    %v767 = vlaneseq
    %v768 = vshrl.u32 %v767, 7
    %v769 = vsub.s32 %v766, %v768
    %v770 = vrot.slane %v762, %v769
    %v772 = vunpack.c.l.s4 1966171168
    %v773 = vunpack.c.0.s8 %v772
    %v774 = vlaneseq
    %v775 = vshrl.u32 %v774, 7
    %v776 = vsub.s32 %v773, %v775
    %v777 = vrot.slane %v763, %v776
    %v778 = vlaneseq
    %v779 = vshrl.u32 %v778, 7
    %v780 = vsub.s32 0, %v779
    %v781 = vrot.slane %v770, %v780
    %v782 = vlaneseq
    %v783 = vshrl.u32 %v782, 7
    %v784 = vsub.s32 0, %v783
    %v785 = vrot.slane %v777, %v784
    %786 = vrot.lane.b32.xlu0 %v781, 64
    %v787 = vpop.permute.xlu0 %786
    %788 = vrot.lane.b32.xlu0 %v785, 64
    %v789 = vpop.permute.xlu0 %788
    %v792 = vmul.f32 %v741, %v787
    %v793 = vmul.f32 %v743, %v789
    %v795 = vsel %vm599, %v754, 0
    %vm797 = vcmask 1043456
    %v799 = vsel %vm797, %v590, 0
    %801 = vmatprep.subr.bf16.mxu0 0
    %802 = vmatpush1.bf16.msra.mxu0 %v799
    %803 = vmatprep.subr.bf16.mxu0 0
    %804 = vmatpush1.bf16.msra.mxu0 0
    %805 = vmatprep.subr.bf16.mxu0 0
    %806 = vmatpush1.bf16.msra.mxu0 0
    %807 = vmatprep.subr.bf16.mxu0 0
    %808 = vmatpush1.bf16.msra.mxu0 0
    %809 = vmatprep.subr.bf16.mxu0 0
    %810 = vmatpush1.bf16.msra.mxu0 0
    %811 = vmatprep.subr.bf16.mxu0 0
    %812 = vmatpush1.bf16.msra.mxu0 0
    %813 = vmatprep.subr.bf16.mxu0 0
    %814 = vmatpush1.bf16.msra.mxu0 0
    %815 = vmatprep.subr.bf16.mxu0 0
    %816 = vmatpush1.bf16.msra.mxu0 0
    %817 = vmatprep.subr.bf16.mxu0 0
    %818 = vmatpush1.bf16.msra.mxu0 0
    %819 = vmatprep.subr.bf16.mxu0 0
    %820 = vmatpush1.bf16.msra.mxu0 0
    %821 = vmatprep.subr.bf16.mxu0 0
    %822 = vmatpush1.bf16.msra.mxu0 0
    %823 = vmatprep.subr.bf16.mxu0 0
    %824 = vmatpush1.bf16.msra.mxu0 0
    %825 = vmatprep.subr.bf16.mxu0 0
    %826 = vmatpush1.bf16.msra.mxu0 0
    %827 = vmatprep.subr.bf16.mxu0 0
    %828 = vmatpush1.bf16.msra.mxu0 0
    %829 = vmatprep.subr.bf16.mxu0 0
    %830 = vmatpush1.bf16.msra.mxu0 0
    %831 = vmatprep.subr.bf16.mxu0 0
    %832 = vmatpush1.bf16.msra.mxu0 0
    %833 = vmatprep.mubr.bf16.mxu0 0
    %834 = vmatmul.mubr.bf16.gmra.mrb[0].mxu0 %v795
    %v835 = vpop.f32.mrb[0].mxu0
    %v836 = vadd.f32 %v792, %v835
    %v837 = vpop.f32.mrb[0].mxu0
    %v838 = vpop.f32.mrb[0].mxu0
    %v839 = vpop.f32.mrb[0].mxu0
    %840 = vdwg.mxu0
    %v842 = vsel %vm599, %v755, 0
    %v845 = vsel %vm797, %v591, 0
    %847 = vmatprep.subr.bf16.mxu0 0
    %848 = vmatpush1.bf16.msra.mxu0 %v845
    %849 = vmatprep.subr.bf16.mxu0 0
    %850 = vmatpush1.bf16.msra.mxu0 0
    %851 = vmatprep.subr.bf16.mxu0 0
    %852 = vmatpush1.bf16.msra.mxu0 0
    %853 = vmatprep.subr.bf16.mxu0 0
    %854 = vmatpush1.bf16.msra.mxu0 0
    %855 = vmatprep.subr.bf16.mxu0 0
    %856 = vmatpush1.bf16.msra.mxu0 0
    %857 = vmatprep.subr.bf16.mxu0 0
    %858 = vmatpush1.bf16.msra.mxu0 0
    %859 = vmatprep.subr.bf16.mxu0 0
    %860 = vmatpush1.bf16.msra.mxu0 0
    %861 = vmatprep.subr.bf16.mxu0 0
    %862 = vmatpush1.bf16.msra.mxu0 0
    %863 = vmatprep.subr.bf16.mxu0 0
    %864 = vmatpush1.bf16.msra.mxu0 0
    %865 = vmatprep.subr.bf16.mxu0 0
    %866 = vmatpush1.bf16.msra.mxu0 0
    %867 = vmatprep.subr.bf16.mxu0 0
    %868 = vmatpush1.bf16.msra.mxu0 0
    %869 = vmatprep.subr.bf16.mxu0 0
    %870 = vmatpush1.bf16.msra.mxu0 0
    %871 = vmatprep.subr.bf16.mxu0 0
    %872 = vmatpush1.bf16.msra.mxu0 0
    %873 = vmatprep.subr.bf16.mxu0 0
    %874 = vmatpush1.bf16.msra.mxu0 0
    %875 = vmatprep.subr.bf16.mxu0 0
    %876 = vmatpush1.bf16.msra.mxu0 0
    %877 = vmatprep.subr.bf16.mxu0 0
    %878 = vmatpush1.bf16.msra.mxu0 0
    %879 = vmatprep.mubr.bf16.mxu0 0
    %880 = vmatmul.mubr.bf16.gmra.mrb[0].mxu0 %v842
    %v881 = vpop.f32.mrb[0].mxu0
    %v882 = vadd.f32 %v793, %v881
    %v883 = vpop.f32.mrb[0].mxu0
    %v884 = vpop.f32.mrb[0].mxu0
    %v885 = vpop.f32.mrb[0].mxu0
    %886 = vdwg.mxu0
    %v887 = vmul.f32 %v836, %v752
    %v888 = vmul.f32 %v882, %v753
    %889 = vrot.lane.b32.xlu0 %v598, 120
    %v890 = vpop.permute.xlu0 %889
    %v892 = vunpack.c.l.b16 %v588
    %v893 = vpack.c.b16 %v892, %v892
    %894 = vrot.lane.b32.xlu0 %v893, 120
    %v895 = vpop.permute.xlu0 %894
    %v897 = vsel %vm599, %v890, 0
    %v900 = vsel %vm599, %v895, 0
    %902 = vmatprep.subr.bf16.mxu0 0
    %903 = vmatpush1.bf16.xpose.msra.mxu0 %v900
    %904 = vmatprep.subr.bf16.mxu0 0
    %905 = vmatpush1.bf16.xpose.msra.mxu0 0
    %906 = vmatprep.subr.bf16.mxu0 0
    %907 = vmatpush1.bf16.xpose.msra.mxu0 0
    %908 = vmatprep.subr.bf16.mxu0 0
    %909 = vmatpush1.bf16.xpose.msra.mxu0 0
    %910 = vmatprep.subr.bf16.mxu0 0
    %911 = vmatpush1.bf16.xpose.msra.mxu0 0
    %912 = vmatprep.subr.bf16.mxu0 0
    %913 = vmatpush1.bf16.xpose.msra.mxu0 0
    %914 = vmatprep.subr.bf16.mxu0 0
    %915 = vmatpush1.bf16.xpose.msra.mxu0 0
    %916 = vmatprep.subr.bf16.mxu0 0
    %917 = vmatpush1.bf16.xpose.msra.mxu0 0
    %918 = vmatprep.subr.bf16.mxu0 0
    %919 = vmatpush1.bf16.xpose.msra.mxu0 0
    %920 = vmatprep.subr.bf16.mxu0 0
    %921 = vmatpush1.bf16.xpose.msra.mxu0 0
    %922 = vmatprep.subr.bf16.mxu0 0
    %923 = vmatpush1.bf16.xpose.msra.mxu0 0
    %924 = vmatprep.subr.bf16.mxu0 0
    %925 = vmatpush1.bf16.xpose.msra.mxu0 0
    %926 = vmatprep.subr.bf16.mxu0 0
    %927 = vmatpush1.bf16.xpose.msra.mxu0 0
    %928 = vmatprep.subr.bf16.mxu0 0
    %929 = vmatpush1.bf16.xpose.msra.mxu0 0
    %930 = vmatprep.subr.bf16.mxu0 0
    %931 = vmatpush1.bf16.xpose.msra.mxu0 0
    %932 = vmatprep.subr.bf16.mxu0 0
    %933 = vmatpush1.bf16.xpose.msra.mxu0 0
    %934 = vmatprep.mubr.bf16.mxu0 0
    %935 = vmatmul.mubr.bf16.gmra.mrb[0].mxu0 %v897
    %v936 = vpop.f32.mrb[0].mxu0
    %v937 = vadd.f32 0.0, %v936
    %v938 = vpop.f32.mrb[0].mxu0
    %v939 = vpop.f32.mrb[0].mxu0
    %v940 = vpop.f32.mrb[0].mxu0
    %941 = vdwg.mxu0
    %942 = vrot.lane.b32.xlu0 %v650, 120
    %v943 = vpop.permute.xlu0 %942
    %v945 = vunpack.c.l.b16 %v589
    %v946 = vpack.c.b16 %v945, %v945
    %947 = vrot.lane.b32.xlu0 %v946, 120
    %v948 = vpop.permute.xlu0 %947
    %v950 = vsel %vm599, %v943, 0
    %v953 = vsel %vm599, %v948, 0
    %955 = vmatprep.subr.bf16.mxu0 0
    %956 = vmatpush1.bf16.xpose.msra.mxu0 %v953
    %957 = vmatprep.subr.bf16.mxu0 0
    %958 = vmatpush1.bf16.xpose.msra.mxu0 0
    %959 = vmatprep.subr.bf16.mxu0 0
    %960 = vmatpush1.bf16.xpose.msra.mxu0 0
    %961 = vmatprep.subr.bf16.mxu0 0
    %962 = vmatpush1.bf16.xpose.msra.mxu0 0
    %963 = vmatprep.subr.bf16.mxu0 0
    %964 = vmatpush1.bf16.xpose.msra.mxu0 0
    %965 = vmatprep.subr.bf16.mxu0 0
    %966 = vmatpush1.bf16.xpose.msra.mxu0 0
    %967 = vmatprep.subr.bf16.mxu0 0
    %968 = vmatpush1.bf16.xpose.msra.mxu0 0
    %969 = vmatprep.subr.bf16.mxu0 0
    %970 = vmatpush1.bf16.xpose.msra.mxu0 0
    %971 = vmatprep.subr.bf16.mxu0 0
    %972 = vmatpush1.bf16.xpose.msra.mxu0 0
    %973 = vmatprep.subr.bf16.mxu0 0
    %974 = vmatpush1.bf16.xpose.msra.mxu0 0
    %975 = vmatprep.subr.bf16.mxu0 0
    %976 = vmatpush1.bf16.xpose.msra.mxu0 0
    %977 = vmatprep.subr.bf16.mxu0 0
    %978 = vmatpush1.bf16.xpose.msra.mxu0 0
    %979 = vmatprep.subr.bf16.mxu0 0
    %980 = vmatpush1.bf16.xpose.msra.mxu0 0
    %981 = vmatprep.subr.bf16.mxu0 0
    %982 = vmatpush1.bf16.xpose.msra.mxu0 0
    %983 = vmatprep.subr.bf16.mxu0 0
    %984 = vmatpush1.bf16.xpose.msra.mxu0 0
    %985 = vmatprep.subr.bf16.mxu0 0
    %986 = vmatpush1.bf16.xpose.msra.mxu0 0
    %987 = vmatprep.mubr.bf16.mxu0 0
    %988 = vmatmul.mubr.bf16.gmra.mrb[0].mxu0 %v950
    %v989 = vpop.f32.mrb[0].mxu0
    %v990 = vadd.f32 0.0, %v989
    %v991 = vpop.f32.mrb[0].mxu0
    %v992 = vpop.f32.mrb[0].mxu0
    %v993 = vpop.f32.mrb[0].mxu0
    %994 = vdwg.mxu0
    %v995 = vmul.f32 %v937, 0.35355338
    %v996 = vmul.f32 %v990, 0.35355338
    %v997 = vadd.f32 %v995, %v477
    %v998 = vadd.f32 %v996, %v477
    %1000 = vrot.lane.b32.xlu0 %v705, 120
    %v1001 = vpop.permute.xlu0 %1000
    %v1003 = vsel %vm706, %v1001, 0.0
    %1004 = vadd.xlane.f32.xlu0 %v1003
    %v1005 = vpop.xlane.xlu0 %1004
    %v1007 = vlaneseq
    %v1008 = vshrl.u32 %v1007, 7
    %v1009 = vsub.s32 0, %v1008
    %v1010 = vrot.slane %v1005, %v1009
    %v1011 = vlaneseq
    %v1012 = vshrl.u32 %v1011, 7
    %v1013 = vsub.s32 1, %v1012
    %v1014 = vrot.slane %v1005, %v1013
    %v1017 = vmul.f32 %v1010, 0.35355338
    %v1018 = vmul.f32 %v1014, 0.35355338
    %v1019 = vsel %vm723, %v997, -inf
    %1020 = vmax.xlane.f32.xlu0 %v1019
    %v1021 = vpop.xlane.xlu0 %1020
    %v1022 = vsel %vm723, %v998, -inf
    %1023 = vmax.xlane.f32.xlu0 %v1022
    %v1024 = vpop.xlane.xlu0 %1023
    %v1025 = vmax.f32 %v1021, %v1017
    %v1026 = vmax.f32 %v1024, %v1018
    %v1027 = vsub.f32 %v997, %v1025
    %v1028 = vsub.f32 %v998, %v1026
    %v1029 = vmul.f32 %v1027, 1.442695
    %v1030 = vpow.pop %v1029
    %v1031 = vmul.f32 %v1028, 1.442695
    %v1032 = vpow.pop %v1031
    %v1033 = vsub.f32 %v1017, %v1025
    %v1034 = vsub.f32 %v1018, %v1026
    %v1035 = vmul.f32 %v1033, 1.442695
    %v1036 = vpow.pop %v1035
    %v1037 = vmul.f32 %v1034, 1.442695
    %v1038 = vpow.pop %v1037
    %v1039 = vsel %vm723, %v1030, 0.0
    %1040 = vadd.xlane.f32.xlu0 %v1039
    %v1041 = vpop.xlane.xlu0 %1040
    %v1042 = vsel %vm723, %v1032, 0.0
    %1043 = vadd.xlane.f32.xlu0 %v1042
    %v1044 = vpop.xlane.xlu0 %1043
    %v1045 = vadd.f32 %v1041, %v1036
    %v1046 = vadd.f32 %v1044, %v1038
    %v1047 = vrcp.pop %v1045
    %v1048 = vrcp.pop %v1046
    %v1049 = vpack.c.bf16 %v1030, %v1030
    %v1050 = vpack.c.bf16 %v1032, %v1032
    %1051 = vrot.lane.b32.xlu0 %v781, 56
    %v1052 = vpop.permute.xlu0 %1051
    %1053 = vrot.lane.b32.xlu0 %v785, 56
    %v1054 = vpop.permute.xlu0 %1053
    %v1057 = vmul.f32 %v1036, %v1052
    %v1058 = vmul.f32 %v1038, %v1054
    %v1060 = vunpack.c.l.b16 %v590
    %v1061 = vpack.c.b16 %v1060, %v1060
    %1062 = vrot.lane.b32.xlu0 %v1061, 120
    %v1063 = vpop.permute.xlu0 %1062
    %v1065 = vsel %vm599, %v1049, 0
    %v1068 = vsel %vm797, %v1063, 0
    %1070 = vmatprep.subr.bf16.mxu0 0
    %1071 = vmatpush1.bf16.msra.mxu0 %v1068
    %1072 = vmatprep.subr.bf16.mxu0 0
    %1073 = vmatpush1.bf16.msra.mxu0 0
    %1074 = vmatprep.subr.bf16.mxu0 0
    %1075 = vmatpush1.bf16.msra.mxu0 0
    %1076 = vmatprep.subr.bf16.mxu0 0
    %1077 = vmatpush1.bf16.msra.mxu0 0
    %1078 = vmatprep.subr.bf16.mxu0 0
    %1079 = vmatpush1.bf16.msra.mxu0 0
    %1080 = vmatprep.subr.bf16.mxu0 0
    %1081 = vmatpush1.bf16.msra.mxu0 0
    %1082 = vmatprep.subr.bf16.mxu0 0
    %1083 = vmatpush1.bf16.msra.mxu0 0
    %1084 = vmatprep.subr.bf16.mxu0 0
    %1085 = vmatpush1.bf16.msra.mxu0 0
    %1086 = vmatprep.subr.bf16.mxu0 0
    %1087 = vmatpush1.bf16.msra.mxu0 0
    %1088 = vmatprep.subr.bf16.mxu0 0
    %1089 = vmatpush1.bf16.msra.mxu0 0
    %1090 = vmatprep.subr.bf16.mxu0 0
    %1091 = vmatpush1.bf16.msra.mxu0 0
    %1092 = vmatprep.subr.bf16.mxu0 0
    %1093 = vmatpush1.bf16.msra.mxu0 0
    %1094 = vmatprep.subr.bf16.mxu0 0
    %1095 = vmatpush1.bf16.msra.mxu0 0
    %1096 = vmatprep.subr.bf16.mxu0 0
    %1097 = vmatpush1.bf16.msra.mxu0 0
    %1098 = vmatprep.subr.bf16.mxu0 0
    %1099 = vmatpush1.bf16.msra.mxu0 0
    %1100 = vmatprep.subr.bf16.mxu0 0
    %1101 = vmatpush1.bf16.msra.mxu0 0
    %1102 = vmatprep.mubr.bf16.mxu0 0
    %1103 = vmatmul.mubr.bf16.gmra.mrb[0].mxu0 %v1065
    %v1104 = vpop.f32.mrb[0].mxu0
    %v1105 = vadd.f32 %v1057, %v1104
    %v1106 = vpop.f32.mrb[0].mxu0
    %v1107 = vpop.f32.mrb[0].mxu0
    %v1108 = vpop.f32.mrb[0].mxu0
    %1109 = vdwg.mxu0
    %v1111 = vunpack.c.l.b16 %v591
    %v1112 = vpack.c.b16 %v1111, %v1111
    %1113 = vrot.lane.b32.xlu0 %v1112, 120
    %v1114 = vpop.permute.xlu0 %1113
    %v1116 = vsel %vm599, %v1050, 0
    %v1119 = vsel %vm797, %v1114, 0
    %1121 = vmatprep.subr.bf16.mxu0 0
    %1122 = vmatpush1.bf16.msra.mxu0 %v1119
    %1123 = vmatprep.subr.bf16.mxu0 0
    %1124 = vmatpush1.bf16.msra.mxu0 0
    %1125 = vmatprep.subr.bf16.mxu0 0
    %1126 = vmatpush1.bf16.msra.mxu0 0
    %1127 = vmatprep.subr.bf16.mxu0 0
    %1128 = vmatpush1.bf16.msra.mxu0 0
    %1129 = vmatprep.subr.bf16.mxu0 0
    %1130 = vmatpush1.bf16.msra.mxu0 0
    %1131 = vmatprep.subr.bf16.mxu0 0
    %1132 = vmatpush1.bf16.msra.mxu0 0
    %1133 = vmatprep.subr.bf16.mxu0 0
    %1134 = vmatpush1.bf16.msra.mxu0 0
    %1135 = vmatprep.subr.bf16.mxu0 0
    %1136 = vmatpush1.bf16.msra.mxu0 0
    %1137 = vmatprep.subr.bf16.mxu0 0
    %1138 = vmatpush1.bf16.msra.mxu0 0
    %1139 = vmatprep.subr.bf16.mxu0 0
    %1140 = vmatpush1.bf16.msra.mxu0 0
    %1141 = vmatprep.subr.bf16.mxu0 0
    %1142 = vmatpush1.bf16.msra.mxu0 0
    %1143 = vmatprep.subr.bf16.mxu0 0
    %1144 = vmatpush1.bf16.msra.mxu0 0
    %1145 = vmatprep.subr.bf16.mxu0 0
    %1146 = vmatpush1.bf16.msra.mxu0 0
    %1147 = vmatprep.subr.bf16.mxu0 0
    %1148 = vmatpush1.bf16.msra.mxu0 0
    %1149 = vmatprep.subr.bf16.mxu0 0
    %1150 = vmatpush1.bf16.msra.mxu0 0
    %1151 = vmatprep.subr.bf16.mxu0 0
    %1152 = vmatpush1.bf16.msra.mxu0 0
    %1153 = vmatprep.mubr.bf16.mxu0 0
    %1154 = vmatmul.mubr.bf16.gmra.mrb[0].mxu0 %v1116
    %v1155 = vpop.f32.mrb[0].mxu0
    %v1156 = vadd.f32 %v1058, %v1155
    %v1157 = vpop.f32.mrb[0].mxu0
    %v1158 = vpop.f32.mrb[0].mxu0
    %v1159 = vpop.f32.mrb[0].mxu0
    %1160 = vdwg.mxu0
    %v1161 = vmul.f32 %v1105, %v1047
    %v1162 = vmul.f32 %v1156, %v1048
    %1163 = vrot.lane.b32.xlu0 %v598, 112
    %v1164 = vpop.permute.xlu0 %1163
    %1165 = vrot.lane.b32.xlu0 %v893, 112
    %v1166 = vpop.permute.xlu0 %1165
    %v1168 = vsel %vm599, %v1164, 0
    %v1171 = vsel %vm599, %v1166, 0
    %1173 = vmatprep.subr.bf16.mxu0 0
    %1174 = vmatpush1.bf16.xpose.msra.mxu0 %v1171
    %1175 = vmatprep.subr.bf16.mxu0 0
    %1176 = vmatpush1.bf16.xpose.msra.mxu0 0
    %1177 = vmatprep.subr.bf16.mxu0 0
    %1178 = vmatpush1.bf16.xpose.msra.mxu0 0
    %1179 = vmatprep.subr.bf16.mxu0 0
    %1180 = vmatpush1.bf16.xpose.msra.mxu0 0
    %1181 = vmatprep.subr.bf16.mxu0 0
    %1182 = vmatpush1.bf16.xpose.msra.mxu0 0
    %1183 = vmatprep.subr.bf16.mxu0 0
    %1184 = vmatpush1.bf16.xpose.msra.mxu0 0
    %1185 = vmatprep.subr.bf16.mxu0 0
    %1186 = vmatpush1.bf16.xpose.msra.mxu0 0
    %1187 = vmatprep.subr.bf16.mxu0 0
    %1188 = vmatpush1.bf16.xpose.msra.mxu0 0
    %1189 = vmatprep.subr.bf16.mxu0 0
    %1190 = vmatpush1.bf16.xpose.msra.mxu0 0
    %1191 = vmatprep.subr.bf16.mxu0 0
    %1192 = vmatpush1.bf16.xpose.msra.mxu0 0
    %1193 = vmatprep.subr.bf16.mxu0 0
    %1194 = vmatpush1.bf16.xpose.msra.mxu0 0
    %1195 = vmatprep.subr.bf16.mxu0 0
    %1196 = vmatpush1.bf16.xpose.msra.mxu0 0
    %1197 = vmatprep.subr.bf16.mxu0 0
    %1198 = vmatpush1.bf16.xpose.msra.mxu0 0
    %1199 = vmatprep.subr.bf16.mxu0 0
    %1200 = vmatpush1.bf16.xpose.msra.mxu0 0
    %1201 = vmatprep.subr.bf16.mxu0 0
    %1202 = vmatpush1.bf16.xpose.msra.mxu0 0
    %1203 = vmatprep.subr.bf16.mxu0 0
    %1204 = vmatpush1.bf16.xpose.msra.mxu0 0
    %1205 = vmatprep.mubr.bf16.mxu0 0
    %1206 = vmatmul.mubr.bf16.gmra.mrb[0].mxu0 %v1168
    %v1207 = vpop.f32.mrb[0].mxu0
    %v1208 = vadd.f32 0.0, %v1207
    %v1209 = vpop.f32.mrb[0].mxu0
    %v1210 = vpop.f32.mrb[0].mxu0
    %v1211 = vpop.f32.mrb[0].mxu0
    %1212 = vdwg.mxu0
    %1213 = vrot.lane.b32.xlu0 %v650, 112
    %v1214 = vpop.permute.xlu0 %1213
    %1215 = vrot.lane.b32.xlu0 %v946, 112
    %v1216 = vpop.permute.xlu0 %1215
    %v1218 = vsel %vm599, %v1214, 0
    %v1221 = vsel %vm599, %v1216, 0
    %1223 = vmatprep.subr.bf16.mxu0 0
    %1224 = vmatpush1.bf16.xpose.msra.mxu0 %v1221
    %1225 = vmatprep.subr.bf16.mxu0 0
    %1226 = vmatpush1.bf16.xpose.msra.mxu0 0
    %1227 = vmatprep.subr.bf16.mxu0 0
    %1228 = vmatpush1.bf16.xpose.msra.mxu0 0
    %1229 = vmatprep.subr.bf16.mxu0 0
    %1230 = vmatpush1.bf16.xpose.msra.mxu0 0
    %1231 = vmatprep.subr.bf16.mxu0 0
    %1232 = vmatpush1.bf16.xpose.msra.mxu0 0
    %1233 = vmatprep.subr.bf16.mxu0 0
    %1234 = vmatpush1.bf16.xpose.msra.mxu0 0
    %1235 = vmatprep.subr.bf16.mxu0 0
    %1236 = vmatpush1.bf16.xpose.msra.mxu0 0
    %1237 = vmatprep.subr.bf16.mxu0 0
    %1238 = vmatpush1.bf16.xpose.msra.mxu0 0
    %1239 = vmatprep.subr.bf16.mxu0 0
    %1240 = vmatpush1.bf16.xpose.msra.mxu0 0
    %1241 = vmatprep.subr.bf16.mxu0 0
    %1242 = vmatpush1.bf16.xpose.msra.mxu0 0
    %1243 = vmatprep.subr.bf16.mxu0 0
    %1244 = vmatpush1.bf16.xpose.msra.mxu0 0
    %1245 = vmatprep.subr.bf16.mxu0 0
    %1246 = vmatpush1.bf16.xpose.msra.mxu0 0
    %1247 = vmatprep.subr.bf16.mxu0 0
    %1248 = vmatpush1.bf16.xpose.msra.mxu0 0
    %1249 = vmatprep.subr.bf16.mxu0 0
    %1250 = vmatpush1.bf16.xpose.msra.mxu0 0
    %1251 = vmatprep.subr.bf16.mxu0 0
    %1252 = vmatpush1.bf16.xpose.msra.mxu0 0
    %1253 = vmatprep.subr.bf16.mxu0 0
    %1254 = vmatpush1.bf16.xpose.msra.mxu0 0
    %1255 = vmatprep.mubr.bf16.mxu0 0
    %1256 = vmatmul.mubr.bf16.gmra.mrb[0].mxu0 %v1218
    %v1257 = vpop.f32.mrb[0].mxu0
    %v1258 = vadd.f32 0.0, %v1257
    %v1259 = vpop.f32.mrb[0].mxu0
    %v1260 = vpop.f32.mrb[0].mxu0
    %v1261 = vpop.f32.mrb[0].mxu0
    %1262 = vdwg.mxu0
    %v1263 = vmul.f32 %v1208, 0.35355338
    %v1264 = vmul.f32 %v1258, 0.35355338
    %v1265 = vadd.f32 %v1263, %v477
    %v1266 = vadd.f32 %v1264, %v477
    %1267 = vrot.lane.b32.xlu0 %v705, 112
    %v1268 = vpop.permute.xlu0 %1267
    %v1270 = vsel %vm706, %v1268, 0.0
    %1271 = vadd.xlane.f32.xlu0 %v1270
    %v1272 = vpop.xlane.xlu0 %1271
    %v1274 = vlaneseq
    %v1275 = vshrl.u32 %v1274, 7
    %v1276 = vsub.s32 0, %v1275
    %v1277 = vrot.slane %v1272, %v1276
    %v1278 = vlaneseq
    %v1279 = vshrl.u32 %v1278, 7
    %v1280 = vsub.s32 1, %v1279
    %v1281 = vrot.slane %v1272, %v1280
    %v1284 = vmul.f32 %v1277, 0.35355338
    %v1285 = vmul.f32 %v1281, 0.35355338
    %v1286 = vsel %vm723, %v1265, -inf
    %1287 = vmax.xlane.f32.xlu0 %v1286
    %v1288 = vpop.xlane.xlu0 %1287
    %v1289 = vsel %vm723, %v1266, -inf
    %1290 = vmax.xlane.f32.xlu0 %v1289
    %v1291 = vpop.xlane.xlu0 %1290
    %v1292 = vmax.f32 %v1288, %v1284
    %v1293 = vmax.f32 %v1291, %v1285
    %v1294 = vsub.f32 %v1265, %v1292
    %v1295 = vsub.f32 %v1266, %v1293
    %v1296 = vmul.f32 %v1294, 1.442695
    %v1297 = vpow.pop %v1296
    %v1298 = vmul.f32 %v1295, 1.442695
    %v1299 = vpow.pop %v1298
    %v1300 = vsub.f32 %v1284, %v1292
    %v1301 = vsub.f32 %v1285, %v1293
    %v1302 = vmul.f32 %v1300, 1.442695
    %v1303 = vpow.pop %v1302
    %v1304 = vmul.f32 %v1301, 1.442695
    %v1305 = vpow.pop %v1304
    %v1306 = vsel %vm723, %v1297, 0.0
    %1307 = vadd.xlane.f32.xlu0 %v1306
    %v1308 = vpop.xlane.xlu0 %1307
    %v1309 = vsel %vm723, %v1299, 0.0
    %1310 = vadd.xlane.f32.xlu0 %v1309
    %v1311 = vpop.xlane.xlu0 %1310
    %v1312 = vadd.f32 %v1308, %v1303
    %v1313 = vadd.f32 %v1311, %v1305
    %v1314 = vrcp.pop %v1312
    %v1315 = vrcp.pop %v1313
    %v1316 = vpack.c.bf16 %v1297, %v1297
    %v1317 = vpack.c.bf16 %v1299, %v1299
    %1318 = vrot.lane.b32.xlu0 %v781, 48
    %v1319 = vpop.permute.xlu0 %1318
    %1320 = vrot.lane.b32.xlu0 %v785, 48
    %v1321 = vpop.permute.xlu0 %1320
    %v1324 = vmul.f32 %v1303, %v1319
    %v1325 = vmul.f32 %v1305, %v1321
    %1326 = vrot.lane.b32.xlu0 %v1061, 112
    %v1327 = vpop.permute.xlu0 %1326
    %v1329 = vsel %vm599, %v1316, 0
    %v1332 = vsel %vm797, %v1327, 0
    %1334 = vmatprep.subr.bf16.mxu0 0
    %1335 = vmatpush1.bf16.msra.mxu0 %v1332
    %1336 = vmatprep.subr.bf16.mxu0 0
    %1337 = vmatpush1.bf16.msra.mxu0 0
    %1338 = vmatprep.subr.bf16.mxu0 0
    %1339 = vmatpush1.bf16.msra.mxu0 0
    %1340 = vmatprep.subr.bf16.mxu0 0
    %1341 = vmatpush1.bf16.msra.mxu0 0
    %1342 = vmatprep.subr.bf16.mxu0 0
    %1343 = vmatpush1.bf16.msra.mxu0 0
    %1344 = vmatprep.subr.bf16.mxu0 0
    %1345 = vmatpush1.bf16.msra.mxu0 0
    %1346 = vmatprep.subr.bf16.mxu0 0
    %1347 = vmatpush1.bf16.msra.mxu0 0
    %1348 = vmatprep.subr.bf16.mxu0 0
    %1349 = vmatpush1.bf16.msra.mxu0 0
    %1350 = vmatprep.subr.bf16.mxu0 0
    %1351 = vmatpush1.bf16.msra.mxu0 0
    %1352 = vmatprep.subr.bf16.mxu0 0
    %1353 = vmatpush1.bf16.msra.mxu0 0
    %1354 = vmatprep.subr.bf16.mxu0 0
    %1355 = vmatpush1.bf16.msra.mxu0 0
    %1356 = vmatprep.subr.bf16.mxu0 0
    %1357 = vmatpush1.bf16.msra.mxu0 0
    %1358 = vmatprep.subr.bf16.mxu0 0
    %1359 = vmatpush1.bf16.msra.mxu0 0
    %1360 = vmatprep.subr.bf16.mxu0 0
    %1361 = vmatpush1.bf16.msra.mxu0 0
    %1362 = vmatprep.subr.bf16.mxu0 0
    %1363 = vmatpush1.bf16.msra.mxu0 0
    %1364 = vmatprep.subr.bf16.mxu0 0
    %1365 = vmatpush1.bf16.msra.mxu0 0
    %1366 = vmatprep.mubr.bf16.mxu0 0
    %1367 = vmatmul.mubr.bf16.gmra.mrb[0].mxu0 %v1329
    %v1368 = vpop.f32.mrb[0].mxu0
    %v1369 = vadd.f32 %v1324, %v1368
    %v1370 = vpop.f32.mrb[0].mxu0
    %v1371 = vpop.f32.mrb[0].mxu0
    %v1372 = vpop.f32.mrb[0].mxu0
    %1373 = vdwg.mxu0
    %1374 = vrot.lane.b32.xlu0 %v1112, 112
    %v1375 = vpop.permute.xlu0 %1374
    %v1377 = vsel %vm599, %v1317, 0
    %v1380 = vsel %vm797, %v1375, 0
    %1382 = vmatprep.subr.bf16.mxu0 0
    %1383 = vmatpush1.bf16.msra.mxu0 %v1380
    %1384 = vmatprep.subr.bf16.mxu0 0
    %1385 = vmatpush1.bf16.msra.mxu0 0
    %1386 = vmatprep.subr.bf16.mxu0 0
    %1387 = vmatpush1.bf16.msra.mxu0 0
    %1388 = vmatprep.subr.bf16.mxu0 0
    %1389 = vmatpush1.bf16.msra.mxu0 0
    %1390 = vmatprep.subr.bf16.mxu0 0
    %1391 = vmatpush1.bf16.msra.mxu0 0
    %1392 = vmatprep.subr.bf16.mxu0 0
    %1393 = vmatpush1.bf16.msra.mxu0 0
    %1394 = vmatprep.subr.bf16.mxu0 0
    %1395 = vmatpush1.bf16.msra.mxu0 0
    %1396 = vmatprep.subr.bf16.mxu0 0
    %1397 = vmatpush1.bf16.msra.mxu0 0
    %1398 = vmatprep.subr.bf16.mxu0 0
    %1399 = vmatpush1.bf16.msra.mxu0 0
    %1400 = vmatprep.subr.bf16.mxu0 0
    %1401 = vmatpush1.bf16.msra.mxu0 0
    %1402 = vmatprep.subr.bf16.mxu0 0
    %1403 = vmatpush1.bf16.msra.mxu0 0
    %1404 = vmatprep.subr.bf16.mxu0 0
    %1405 = vmatpush1.bf16.msra.mxu0 0
    %1406 = vmatprep.subr.bf16.mxu0 0
    %1407 = vmatpush1.bf16.msra.mxu0 0
    %1408 = vmatprep.subr.bf16.mxu0 0
    %1409 = vmatpush1.bf16.msra.mxu0 0
    %1410 = vmatprep.subr.bf16.mxu0 0
    %1411 = vmatpush1.bf16.msra.mxu0 0
    %1412 = vmatprep.subr.bf16.mxu0 0
    %1413 = vmatpush1.bf16.msra.mxu0 0
    %1414 = vmatprep.mubr.bf16.mxu0 0
    %1415 = vmatmul.mubr.bf16.gmra.mrb[0].mxu0 %v1377
    %v1416 = vpop.f32.mrb[0].mxu0
    %v1417 = vadd.f32 %v1325, %v1416
    %v1418 = vpop.f32.mrb[0].mxu0
    %v1419 = vpop.f32.mrb[0].mxu0
    %v1420 = vpop.f32.mrb[0].mxu0
    %1421 = vdwg.mxu0
    %v1422 = vmul.f32 %v1369, %v1314
    %v1423 = vmul.f32 %v1417, %v1315
    %1424 = vrot.lane.b32.xlu0 %v598, 104
    %v1425 = vpop.permute.xlu0 %1424
    %1426 = vrot.lane.b32.xlu0 %v893, 104
    %v1427 = vpop.permute.xlu0 %1426
    %v1429 = vsel %vm599, %v1425, 0
    %v1432 = vsel %vm599, %v1427, 0
    %1434 = vmatprep.subr.bf16.mxu0 0
    %1435 = vmatpush1.bf16.xpose.msra.mxu0 %v1432
    %1436 = vmatprep.subr.bf16.mxu0 0
    %1437 = vmatpush1.bf16.xpose.msra.mxu0 0
    %1438 = vmatprep.subr.bf16.mxu0 0
    %1439 = vmatpush1.bf16.xpose.msra.mxu0 0
    %1440 = vmatprep.subr.bf16.mxu0 0
    %1441 = vmatpush1.bf16.xpose.msra.mxu0 0
    %1442 = vmatprep.subr.bf16.mxu0 0
    %1443 = vmatpush1.bf16.xpose.msra.mxu0 0
    %1444 = vmatprep.subr.bf16.mxu0 0
    %1445 = vmatpush1.bf16.xpose.msra.mxu0 0
    %1446 = vmatprep.subr.bf16.mxu0 0
    %1447 = vmatpush1.bf16.xpose.msra.mxu0 0
    %1448 = vmatprep.subr.bf16.mxu0 0
    %1449 = vmatpush1.bf16.xpose.msra.mxu0 0
    %1450 = vmatprep.subr.bf16.mxu0 0
    %1451 = vmatpush1.bf16.xpose.msra.mxu0 0
    %1452 = vmatprep.subr.bf16.mxu0 0
    %1453 = vmatpush1.bf16.xpose.msra.mxu0 0
    %1454 = vmatprep.subr.bf16.mxu0 0
    %1455 = vmatpush1.bf16.xpose.msra.mxu0 0
    %1456 = vmatprep.subr.bf16.mxu0 0
    %1457 = vmatpush1.bf16.xpose.msra.mxu0 0
    %1458 = vmatprep.subr.bf16.mxu0 0
    %1459 = vmatpush1.bf16.xpose.msra.mxu0 0
    %1460 = vmatprep.subr.bf16.mxu0 0
    %1461 = vmatpush1.bf16.xpose.msra.mxu0 0
    %1462 = vmatprep.subr.bf16.mxu0 0
    %1463 = vmatpush1.bf16.xpose.msra.mxu0 0
    %1464 = vmatprep.subr.bf16.mxu0 0
    %1465 = vmatpush1.bf16.xpose.msra.mxu0 0
    %1466 = vmatprep.mubr.bf16.mxu0 0
    %1467 = vmatmul.mubr.bf16.gmra.mrb[0].mxu0 %v1429
    %v1468 = vpop.f32.mrb[0].mxu0
    %v1469 = vadd.f32 0.0, %v1468
    %v1470 = vpop.f32.mrb[0].mxu0
    %v1471 = vpop.f32.mrb[0].mxu0
    %v1472 = vpop.f32.mrb[0].mxu0
    %1473 = vdwg.mxu0
    %1474 = vrot.lane.b32.xlu0 %v650, 104
    %v1475 = vpop.permute.xlu0 %1474
    %1476 = vrot.lane.b32.xlu0 %v946, 104
    %v1477 = vpop.permute.xlu0 %1476
    %v1479 = vsel %vm599, %v1475, 0
    %v1482 = vsel %vm599, %v1477, 0
    %1484 = vmatprep.subr.bf16.mxu0 0
    %1485 = vmatpush1.bf16.xpose.msra.mxu0 %v1482
    %1486 = vmatprep.subr.bf16.mxu0 0
    %1487 = vmatpush1.bf16.xpose.msra.mxu0 0
    %1488 = vmatprep.subr.bf16.mxu0 0
    %1489 = vmatpush1.bf16.xpose.msra.mxu0 0
    %1490 = vmatprep.subr.bf16.mxu0 0
    %1491 = vmatpush1.bf16.xpose.msra.mxu0 0
    %1492 = vmatprep.subr.bf16.mxu0 0
    %1493 = vmatpush1.bf16.xpose.msra.mxu0 0
    %1494 = vmatprep.subr.bf16.mxu0 0
    %1495 = vmatpush1.bf16.xpose.msra.mxu0 0
    %1496 = vmatprep.subr.bf16.mxu0 0
    %1497 = vmatpush1.bf16.xpose.msra.mxu0 0
    %1498 = vmatprep.subr.bf16.mxu0 0
    %1499 = vmatpush1.bf16.xpose.msra.mxu0 0
    %1500 = vmatprep.subr.bf16.mxu0 0
    %1501 = vmatpush1.bf16.xpose.msra.mxu0 0
    %1502 = vmatprep.subr.bf16.mxu0 0
    %1503 = vmatpush1.bf16.xpose.msra.mxu0 0
    %1504 = vmatprep.subr.bf16.mxu0 0
    %1505 = vmatpush1.bf16.xpose.msra.mxu0 0
    %1506 = vmatprep.subr.bf16.mxu0 0
    %1507 = vmatpush1.bf16.xpose.msra.mxu0 0
    %1508 = vmatprep.subr.bf16.mxu0 0
    %1509 = vmatpush1.bf16.xpose.msra.mxu0 0
    %1510 = vmatprep.subr.bf16.mxu0 0
    %1511 = vmatpush1.bf16.xpose.msra.mxu0 0
    %1512 = vmatprep.subr.bf16.mxu0 0
    %1513 = vmatpush1.bf16.xpose.msra.mxu0 0
    %1514 = vmatprep.subr.bf16.mxu0 0
    %1515 = vmatpush1.bf16.xpose.msra.mxu0 0
    %1516 = vmatprep.mubr.bf16.mxu0 0
    %1517 = vmatmul.mubr.bf16.gmra.mrb[0].mxu0 %v1479
    %v1518 = vpop.f32.mrb[0].mxu0
    %v1519 = vadd.f32 0.0, %v1518
    %v1520 = vpop.f32.mrb[0].mxu0
    %v1521 = vpop.f32.mrb[0].mxu0
    %v1522 = vpop.f32.mrb[0].mxu0
    %1523 = vdwg.mxu0
    %v1524 = vmul.f32 %v1469, 0.35355338
    %v1525 = vmul.f32 %v1519, 0.35355338
    %v1526 = vadd.f32 %v1524, %v477
    %v1527 = vadd.f32 %v1525, %v477
    %1528 = vrot.lane.b32.xlu0 %v705, 104
    %v1529 = vpop.permute.xlu0 %1528
    %v1531 = vsel %vm706, %v1529, 0.0
    %1532 = vadd.xlane.f32.xlu0 %v1531
    %v1533 = vpop.xlane.xlu0 %1532
    %v1535 = vlaneseq
    %v1536 = vshrl.u32 %v1535, 7
    %v1537 = vsub.s32 0, %v1536
    %v1538 = vrot.slane %v1533, %v1537
    %v1539 = vlaneseq
    %v1540 = vshrl.u32 %v1539, 7
    %v1541 = vsub.s32 1, %v1540
    %v1542 = vrot.slane %v1533, %v1541
    %v1545 = vmul.f32 %v1538, 0.35355338
    %v1546 = vmul.f32 %v1542, 0.35355338
    %v1547 = vsel %vm723, %v1526, -inf
    %1548 = vmax.xlane.f32.xlu0 %v1547
    %v1549 = vpop.xlane.xlu0 %1548
    %v1550 = vsel %vm723, %v1527, -inf
    %1551 = vmax.xlane.f32.xlu0 %v1550
    %v1552 = vpop.xlane.xlu0 %1551
    %v1553 = vmax.f32 %v1549, %v1545
    %v1554 = vmax.f32 %v1552, %v1546
    %v1555 = vsub.f32 %v1526, %v1553
    %v1556 = vsub.f32 %v1527, %v1554
    %v1557 = vmul.f32 %v1555, 1.442695
    %v1558 = vpow.pop %v1557
    %v1559 = vmul.f32 %v1556, 1.442695
    %v1560 = vpow.pop %v1559
    %v1561 = vsub.f32 %v1545, %v1553
    %v1562 = vsub.f32 %v1546, %v1554
    %v1563 = vmul.f32 %v1561, 1.442695
    %v1564 = vpow.pop %v1563
    %v1565 = vmul.f32 %v1562, 1.442695
    %v1566 = vpow.pop %v1565
    %v1567 = vsel %vm723, %v1558, 0.0
    %1568 = vadd.xlane.f32.xlu0 %v1567
    %v1569 = vpop.xlane.xlu0 %1568
    %v1570 = vsel %vm723, %v1560, 0.0
    %1571 = vadd.xlane.f32.xlu0 %v1570
    %v1572 = vpop.xlane.xlu0 %1571
    %v1573 = vadd.f32 %v1569, %v1564
    %v1574 = vadd.f32 %v1572, %v1566
    %v1575 = vrcp.pop %v1573
    %v1576 = vrcp.pop %v1574
    %v1577 = vpack.c.bf16 %v1558, %v1558
    %v1578 = vpack.c.bf16 %v1560, %v1560
    %1579 = vrot.lane.b32.xlu0 %v781, 40
    %v1580 = vpop.permute.xlu0 %1579
    %1581 = vrot.lane.b32.xlu0 %v785, 40
    %v1582 = vpop.permute.xlu0 %1581
    %v1585 = vmul.f32 %v1564, %v1580
    %v1586 = vmul.f32 %v1566, %v1582
    %1587 = vrot.lane.b32.xlu0 %v1061, 104
    %v1588 = vpop.permute.xlu0 %1587
    %v1590 = vsel %vm599, %v1577, 0
    %v1593 = vsel %vm797, %v1588, 0
    %1595 = vmatprep.subr.bf16.mxu0 0
    %1596 = vmatpush1.bf16.msra.mxu0 %v1593
    %1597 = vmatprep.subr.bf16.mxu0 0
    %1598 = vmatpush1.bf16.msra.mxu0 0
    %1599 = vmatprep.subr.bf16.mxu0 0
    %1600 = vmatpush1.bf16.msra.mxu0 0
    %1601 = vmatprep.subr.bf16.mxu0 0
    %1602 = vmatpush1.bf16.msra.mxu0 0
    %1603 = vmatprep.subr.bf16.mxu0 0
    %1604 = vmatpush1.bf16.msra.mxu0 0
    %1605 = vmatprep.subr.bf16.mxu0 0
    %1606 = vmatpush1.bf16.msra.mxu0 0
    %1607 = vmatprep.subr.bf16.mxu0 0
    %1608 = vmatpush1.bf16.msra.mxu0 0
    %1609 = vmatprep.subr.bf16.mxu0 0
    %1610 = vmatpush1.bf16.msra.mxu0 0
    %1611 = vmatprep.subr.bf16.mxu0 0
    %1612 = vmatpush1.bf16.msra.mxu0 0
    %1613 = vmatprep.subr.bf16.mxu0 0
    %1614 = vmatpush1.bf16.msra.mxu0 0
    %1615 = vmatprep.subr.bf16.mxu0 0
    %1616 = vmatpush1.bf16.msra.mxu0 0
    %1617 = vmatprep.subr.bf16.mxu0 0
    %1618 = vmatpush1.bf16.msra.mxu0 0
    %1619 = vmatprep.subr.bf16.mxu0 0
    %1620 = vmatpush1.bf16.msra.mxu0 0
    %1621 = vmatprep.subr.bf16.mxu0 0
    %1622 = vmatpush1.bf16.msra.mxu0 0
    %1623 = vmatprep.subr.bf16.mxu0 0
    %1624 = vmatpush1.bf16.msra.mxu0 0
    %1625 = vmatprep.subr.bf16.mxu0 0
    %1626 = vmatpush1.bf16.msra.mxu0 0
    %1627 = vmatprep.mubr.bf16.mxu0 0
    %1628 = vmatmul.mubr.bf16.gmra.mrb[0].mxu0 %v1590
    %v1629 = vpop.f32.mrb[0].mxu0
    %v1630 = vadd.f32 %v1585, %v1629
    %v1631 = vpop.f32.mrb[0].mxu0
    %v1632 = vpop.f32.mrb[0].mxu0
    %v1633 = vpop.f32.mrb[0].mxu0
    %1634 = vdwg.mxu0
    %1635 = vrot.lane.b32.xlu0 %v1112, 104
    %v1636 = vpop.permute.xlu0 %1635
    %v1638 = vsel %vm599, %v1578, 0
    %v1641 = vsel %vm797, %v1636, 0
    %1643 = vmatprep.subr.bf16.mxu0 0
    %1644 = vmatpush1.bf16.msra.mxu0 %v1641
    %1645 = vmatprep.subr.bf16.mxu0 0
    %1646 = vmatpush1.bf16.msra.mxu0 0
    %1647 = vmatprep.subr.bf16.mxu0 0
    %1648 = vmatpush1.bf16.msra.mxu0 0
    %1649 = vmatprep.subr.bf16.mxu0 0
    %1650 = vmatpush1.bf16.msra.mxu0 0
    %1651 = vmatprep.subr.bf16.mxu0 0
    %1652 = vmatpush1.bf16.msra.mxu0 0
    %1653 = vmatprep.subr.bf16.mxu0 0
    %1654 = vmatpush1.bf16.msra.mxu0 0
    %1655 = vmatprep.subr.bf16.mxu0 0
    %1656 = vmatpush1.bf16.msra.mxu0 0
    %1657 = vmatprep.subr.bf16.mxu0 0
    %1658 = vmatpush1.bf16.msra.mxu0 0
    %1659 = vmatprep.subr.bf16.mxu0 0
    %1660 = vmatpush1.bf16.msra.mxu0 0
    %1661 = vmatprep.subr.bf16.mxu0 0
    %1662 = vmatpush1.bf16.msra.mxu0 0
    %1663 = vmatprep.subr.bf16.mxu0 0
    %1664 = vmatpush1.bf16.msra.mxu0 0
    %1665 = vmatprep.subr.bf16.mxu0 0
    %1666 = vmatpush1.bf16.msra.mxu0 0
    %1667 = vmatprep.subr.bf16.mxu0 0
    %1668 = vmatpush1.bf16.msra.mxu0 0
    %1669 = vmatprep.subr.bf16.mxu0 0
    %1670 = vmatpush1.bf16.msra.mxu0 0
    %1671 = vmatprep.subr.bf16.mxu0 0
    %1672 = vmatpush1.bf16.msra.mxu0 0
    %1673 = vmatprep.subr.bf16.mxu0 0
    %1674 = vmatpush1.bf16.msra.mxu0 0
    %1675 = vmatprep.mubr.bf16.mxu0 0
    %1676 = vmatmul.mubr.bf16.gmra.mrb[0].mxu0 %v1638
    %v1677 = vpop.f32.mrb[0].mxu0
    %v1678 = vadd.f32 %v1586, %v1677
    %v1679 = vpop.f32.mrb[0].mxu0
    %v1680 = vpop.f32.mrb[0].mxu0
    %v1681 = vpop.f32.mrb[0].mxu0
    %1682 = vdwg.mxu0
    %v1683 = vmul.f32 %v1630, %v1575
    %v1684 = vmul.f32 %v1678, %v1576
    %1687 = vrot.lane.b32.xlu0 %v1161, 8
    %v1688 = vpop.permute.xlu0 %1687
    %1689 = vrot.lane.b32.xlu0 %v1162, 8
    %v1690 = vpop.permute.xlu0 %1689
    %1695 = vrot.lane.b32.xlu0 %v1422, 16
    %v1696 = vpop.permute.xlu0 %1695
    %1697 = vrot.lane.b32.xlu0 %v1423, 16
    %v1698 = vpop.permute.xlu0 %1697
    %1703 = vrot.lane.b32.xlu0 %v1683, 24
    %v1704 = vpop.permute.xlu0 %1703
    %1705 = vrot.lane.b32.xlu0 %v1684, 24
    %v1706 = vpop.permute.xlu0 %1705
    %v1709 = vsel %vm599, %v887, %v1688
    %v1710 = vsel %vm599, %v888, %v1690
    %vm1711 = vcmask 130048
    %v1712 = vsel %vm1711, %v1709, %v1696
    %v1713 = vsel %vm1711, %v1710, %v1698
    %vm1714 = vcmask 195584
    %v1715 = vsel %vm1714, %v1712, %v1704
    %v1716 = vsel %vm1714, %v1713, %v1706
    %v1717 = vld [vmem:[#allocation18] sm:$0xff]
    %v1718 = vld [vmem:[#allocation18 + $0x8] sm:$0xff]
    %v1719 = vld [vmem:[#allocation18 + $0x10] sm:$0xff]
    %v1720 = vld [vmem:[#allocation18 + $0x18] sm:$0xff]
    %v1721 = vld [vmem:[#allocation19] sm:$0x1]
    %v1723 = vlaneseq
    %v1724 = vshrl.u32 %v1723, 7
    %v1725 = vsub.s32 0, %v1724
    %v1726 = vrot.slane %v1721, %v1725
    %v1730 = vrot.slane %v1716, 7
    %vm1731 = vcmask 1041409
    %v1732 = vsel %vm1731, %v1730, %v1715
    %v1733 = vsel %vm489, %v1732, 0
    %1735 = vmatprep.subr.mxu0 0.0
    %1736 = vmatpush1.msra.mxu0 %v1717
    %1737 = vmatprep.subr.mxu0 0.0
    %1738 = vmatpush1.msra.mxu0 %v1718
    %1739 = vmatprep.subr.mxu0 0.0
    %1740 = vmatpush1.msra.mxu0 %v1719
    %1741 = vmatprep.subr.mxu0 0.0
    %1742 = vmatpush1.msra.mxu0 %v1720
    %1743 = vmatprep.subr.mxu0 0.0
    %1744 = vmatpush1.msra.mxu0 0.0
    %1745 = vmatprep.subr.mxu0 0.0
    %1746 = vmatpush1.msra.mxu0 0.0
    %1747 = vmatprep.subr.mxu0 0.0
    %1748 = vmatpush1.msra.mxu0 0.0
    %1749 = vmatprep.subr.mxu0 0.0
    %1750 = vmatpush1.msra.mxu0 0.0
    %1751 = vmatprep.subr.mxu0 0.0
    %1752 = vmatpush1.msra.mxu0 0.0
    %1753 = vmatprep.subr.mxu0 0.0
    %1754 = vmatpush1.msra.mxu0 0.0
    %1755 = vmatprep.subr.mxu0 0.0
    %1756 = vmatpush1.msra.mxu0 0.0
    %1757 = vmatprep.subr.mxu0 0.0
    %1758 = vmatpush1.msra.mxu0 0.0
    %1759 = vmatprep.subr.mxu0 0.0
    %1760 = vmatpush1.msra.mxu0 0.0
    %1761 = vmatprep.subr.mxu0 0.0
    %1762 = vmatpush1.msra.mxu0 0.0
    %1763 = vmatprep.subr.mxu0 0.0
    %1764 = vmatpush1.msra.mxu0 0.0
    %1765 = vmatprep.subr.mxu0 0.0
    %1766 = vmatpush1.msra.mxu0 0.0
    %1767 = vmatprep.subr.mxu0 0.0
    %1768 = vmatpush1.msra.mxu0 0.0
    %1769 = vmatprep.subr.mxu0 0.0
    %1770 = vmatpush1.msra.mxu0 0.0
    %1771 = vmatprep.subr.mxu0 0.0
    %1772 = vmatpush1.msra.mxu0 0.0
    %1773 = vmatprep.subr.mxu0 0.0
    %1774 = vmatpush1.msra.mxu0 0.0
    %1775 = vmatprep.subr.mxu0 0.0
    %1776 = vmatpush1.msra.mxu0 0.0
    %1777 = vmatprep.subr.mxu0 0.0
    %1778 = vmatpush1.msra.mxu0 0.0
    %1779 = vmatprep.subr.mxu0 0.0
    %1780 = vmatpush1.msra.mxu0 0.0
    %1781 = vmatprep.subr.mxu0 0.0
    %1782 = vmatpush1.msra.mxu0 0.0
    %1783 = vmatprep.subr.mxu0 0.0
    %1784 = vmatpush1.msra.mxu0 0.0
    %1785 = vmatprep.subr.mxu0 0.0
    %1786 = vmatpush1.msra.mxu0 0.0
    %1787 = vmatprep.subr.mxu0 0.0
    %1788 = vmatpush1.msra.mxu0 0.0
    %1789 = vmatprep.subr.mxu0 0.0
    %1790 = vmatpush1.msra.mxu0 0.0
    %1791 = vmatprep.subr.mxu0 0.0
    %1792 = vmatpush1.msra.mxu0 0.0
    %1793 = vmatprep.subr.mxu0 0.0
    %1794 = vmatpush1.msra.mxu0 0.0
    %1795 = vmatprep.subr.mxu0 0.0
    %1796 = vmatpush1.msra.mxu0 0.0
    %1797 = vmatprep.subr.mxu0 0.0
    %1798 = vmatpush1.msra.mxu0 0.0
    %1799 = vmatprep.mubr.f32.mxu0 0.0
    %1800 = vmatmul.mubr.f32.gmra.mrb[0].mxu0 %v1733
    %v1801 = vpop.f32.mrb[0].mxu0
    %v1802 = vadd.f32 %v1726, %v1801
    %v1803 = vpop.f32.mrb[0].mxu0
    %1804 = vdwg.mxu0
    %v1805 = vadd.f32 %v444, %v1802
    %v1806 = vld [vmem:[#allocation21] sm:$0x1]
    %v1807 = vld [vmem:[#allocation22] sm:$0x1]
    %vm1808 = vcmask 254976
    %v1809 = vsel %vm1808, %v1805, 0.0
    %1810 = vadd.xlane.f32.xlu0 %v1809
    %v1811 = vpop.xlane.xlu0 %1810
    %v1812 = vrcp.pop 32.0
    %v1813 = vmul.f32 %v1811, %v1812
    %v1814 = vsub.f32 %v1805, %v1813
    %v1815 = vmul.f32 %v1814, %v1814
    %v1816 = vsel %vm1808, %v1815, 0.0
    %1817 = vadd.xlane.f32.xlu0 %v1816
    %v1818 = vpop.xlane.xlu0 %1817
    %v1819 = vmul.f32 %v1818, %v1812
    %v1820 = vadd.f32 %v1819, 1e-05
    %v1821 = vrsqrt.pop %v1820
    %v1822 = vmul.f32 %v1814, %v1821
    %v1824 = vlaneseq
    %v1825 = vshrl.u32 %v1824, 7
    %v1826 = vsub.s32 0, %v1825
    %v1827 = vrot.slane %v1806, %v1826
    %v1829 = vmul.f32 %v1822, %v1827
    %v1831 = vlaneseq
    %v1832 = vshrl.u32 %v1831, 7
    %v1833 = vsub.s32 0, %v1832
    %v1834 = vrot.slane %v1807, %v1833
    %v1836 = vadd.f32 %v1829, %v1834
    %v1837 = vld [vmem:[#allocation24] sm:$0xff]
    %v1838 = vld [vmem:[#allocation24 + $0x8] sm:$0xff]
    %v1839 = vld [vmem:[#allocation24 + $0x10] sm:$0xff]
    %v1840 = vld [vmem:[#allocation24 + $0x18] sm:$0xff]
    %v1841 = vld [vmem:[#allocation25] sm:$0x1]
    %v1843 = vlaneseq
    %v1844 = vshrl.u32 %v1843, 7
    %v1845 = vsub.s32 0, %v1844
    %v1846 = vrot.slane %v1841, %v1845
    %v1849 = vsel %vm489, %v1836, 0
    %1851 = vmatprep.subr.mxu0 0.0
    %1852 = vmatpush1.msra.mxu0 %v1837
    %1853 = vmatprep.subr.mxu0 0.0
    %1854 = vmatpush1.msra.mxu0 %v1838
    %1855 = vmatprep.subr.mxu0 0.0
    %1856 = vmatpush1.msra.mxu0 %v1839
    %1857 = vmatprep.subr.mxu0 0.0
    %1858 = vmatpush1.msra.mxu0 %v1840
    %1859 = vmatprep.subr.mxu0 0.0
    %1860 = vmatpush1.msra.mxu0 0.0
    %1861 = vmatprep.subr.mxu0 0.0
    %1862 = vmatpush1.msra.mxu0 0.0
    %1863 = vmatprep.subr.mxu0 0.0
    %1864 = vmatpush1.msra.mxu0 0.0
    %1865 = vmatprep.subr.mxu0 0.0
    %1866 = vmatpush1.msra.mxu0 0.0
    %1867 = vmatprep.subr.mxu0 0.0
    %1868 = vmatpush1.msra.mxu0 0.0
    %1869 = vmatprep.subr.mxu0 0.0
    %1870 = vmatpush1.msra.mxu0 0.0
    %1871 = vmatprep.subr.mxu0 0.0
    %1872 = vmatpush1.msra.mxu0 0.0
    %1873 = vmatprep.subr.mxu0 0.0
    %1874 = vmatpush1.msra.mxu0 0.0
    %1875 = vmatprep.subr.mxu0 0.0
    %1876 = vmatpush1.msra.mxu0 0.0
    %1877 = vmatprep.subr.mxu0 0.0
    %1878 = vmatpush1.msra.mxu0 0.0
    %1879 = vmatprep.subr.mxu0 0.0
    %1880 = vmatpush1.msra.mxu0 0.0
    %1881 = vmatprep.subr.mxu0 0.0
    %1882 = vmatpush1.msra.mxu0 0.0
    %1883 = vmatprep.subr.mxu0 0.0
    %1884 = vmatpush1.msra.mxu0 0.0
    %1885 = vmatprep.subr.mxu0 0.0
    %1886 = vmatpush1.msra.mxu0 0.0
    %1887 = vmatprep.subr.mxu0 0.0
    %1888 = vmatpush1.msra.mxu0 0.0
    %1889 = vmatprep.subr.mxu0 0.0
    %1890 = vmatpush1.msra.mxu0 0.0
    %1891 = vmatprep.subr.mxu0 0.0
    %1892 = vmatpush1.msra.mxu0 0.0
    %1893 = vmatprep.subr.mxu0 0.0
    %1894 = vmatpush1.msra.mxu0 0.0
    %1895 = vmatprep.subr.mxu0 0.0
    %1896 = vmatpush1.msra.mxu0 0.0
    %1897 = vmatprep.subr.mxu0 0.0
    %1898 = vmatpush1.msra.mxu0 0.0
    %1899 = vmatprep.subr.mxu0 0.0
    %1900 = vmatpush1.msra.mxu0 0.0
    %1901 = vmatprep.subr.mxu0 0.0
    %1902 = vmatpush1.msra.mxu0 0.0
    %1903 = vmatprep.subr.mxu0 0.0
    %1904 = vmatpush1.msra.mxu0 0.0
    %1905 = vmatprep.subr.mxu0 0.0
    %1906 = vmatpush1.msra.mxu0 0.0
    %1907 = vmatprep.subr.mxu0 0.0
    %1908 = vmatpush1.msra.mxu0 0.0
    %1909 = vmatprep.subr.mxu0 0.0
    %1910 = vmatpush1.msra.mxu0 0.0
    %1911 = vmatprep.subr.mxu0 0.0
    %1912 = vmatpush1.msra.mxu0 0.0
    %1913 = vmatprep.subr.mxu0 0.0
    %1914 = vmatpush1.msra.mxu0 0.0
    %1915 = vmatprep.mubr.f32.mxu0 0.0
    %1916 = vmatmul.mubr.f32.gmra.mrb[0].mxu0 %v1849
    %v1917 = vpop.f32.mrb[0].mxu0
    %v1918 = vadd.f32 %v1846, %v1917
    %v1919 = vpop.f32.mrb[0].mxu0
    %1920 = vdwg.mxu0
    %v1921 = vld [vmem:[#allocation7] sm:$0xf]
    %v1922 = vld [vmem:[#allocation7 + $0x4] sm:$0x1]
    %v1923 = vld [vmem:[#allocation7 + $0x8] sm:$0xf]
    %v1924 = vld [vmem:[#allocation7 + $0xc] sm:$0x1]
    %v1925 = vld [vmem:[#allocation9] sm:$0xf]
    %v1926 = vld [vmem:[#allocation9 + $0x4] sm:$0x1]
    %v1927 = vld [vmem:[#allocation9 + $0x8] sm:$0xf]
    %v1928 = vld [vmem:[#allocation9 + $0xc] sm:$0x1]
    %v1929 = vld [vmem:[#allocation27] sm:$0xff]
    %v1930 = vld [vmem:[#allocation27 + $0x8] sm:$0xff]
    %v1931 = vld [vmem:[#allocation27 + $0x10] sm:$0xff]
    %v1932 = vld [vmem:[#allocation27 + $0x18] sm:$0xff]
    %v1933 = vld [vmem:[#allocation28] sm:$0x1]
    %v1934 = vpack.c.bf16 %v1918, %v1918
    %v1937 = vunpack.c.l.s4 1966171168
    %v1938 = vunpack.c.0.s8 %v1937
    %v1939 = vlaneseq
    %v1940 = vshrl.u32 %v1939, 7
    %v1941 = vsub.s32 %v1938, %v1940
    %v1942 = vrot.slane %v1934, %v1941
    %v1944 = vunpack.c.l.s4 1966171168
    %v1945 = vunpack.c.0.s8 %v1944
    %v1946 = vlaneseq
    %v1947 = vshrl.u32 %v1946, 7
    %v1948 = vsub.s32 %v1945, %v1947
    %v1949 = vrot.slane %v1942, %v1948
    %v1950 = vunpack.i.l.s16 %v1949
    %v1951 = vunpack.i.h.s16 %v1949
    %v1952 = vpack.i.b16 %v1950, %v1950
    %v1953 = vlaneseq
    %v1954 = vshrl.u32 %v1953, 7
    %v1955 = vsub.s32 0, %v1954
    %v1956 = vrot.slane %v1952, %v1955
    %v1959 = vunpack.c.l.b16 %v1921
    %v1960 = vunpack.c.l.b16 %v1922
    %v1961 = vpack.c.b16 %v1960, %v1959
    %v1963 = vsel %vm599, %v1956, 0
    %v1966 = vsel %vm599, %v1961, 0
    %1968 = vmatprep.subr.bf16.mxu0 0
    %1969 = vmatpush1.bf16.xpose.msra.mxu0 %v1966
    %1970 = vmatprep.subr.bf16.mxu0 0
    %1971 = vmatpush1.bf16.xpose.msra.mxu0 0
    %1972 = vmatprep.subr.bf16.mxu0 0
    %1973 = vmatpush1.bf16.xpose.msra.mxu0 0
    %1974 = vmatprep.subr.bf16.mxu0 0
    %1975 = vmatpush1.bf16.xpose.msra.mxu0 0
    %1976 = vmatprep.subr.bf16.mxu0 0
    %1977 = vmatpush1.bf16.xpose.msra.mxu0 0
    %1978 = vmatprep.subr.bf16.mxu0 0
    %1979 = vmatpush1.bf16.xpose.msra.mxu0 0
    %1980 = vmatprep.subr.bf16.mxu0 0
    %1981 = vmatpush1.bf16.xpose.msra.mxu0 0
    %1982 = vmatprep.subr.bf16.mxu0 0
    %1983 = vmatpush1.bf16.xpose.msra.mxu0 0
    %1984 = vmatprep.subr.bf16.mxu0 0
    %1985 = vmatpush1.bf16.xpose.msra.mxu0 0
    %1986 = vmatprep.subr.bf16.mxu0 0
    %1987 = vmatpush1.bf16.xpose.msra.mxu0 0
    %1988 = vmatprep.subr.bf16.mxu0 0
    %1989 = vmatpush1.bf16.xpose.msra.mxu0 0
    %1990 = vmatprep.subr.bf16.mxu0 0
    %1991 = vmatpush1.bf16.xpose.msra.mxu0 0
    %1992 = vmatprep.subr.bf16.mxu0 0
    %1993 = vmatpush1.bf16.xpose.msra.mxu0 0
    %1994 = vmatprep.subr.bf16.mxu0 0
    %1995 = vmatpush1.bf16.xpose.msra.mxu0 0
    %1996 = vmatprep.subr.bf16.mxu0 0
    %1997 = vmatpush1.bf16.xpose.msra.mxu0 0
    %1998 = vmatprep.subr.bf16.mxu0 0
    %1999 = vmatpush1.bf16.xpose.msra.mxu0 0
    %2000 = vmatprep.mubr.bf16.mxu0 0
    %2001 = vmatmul.mubr.bf16.gmra.mrb[0].mxu0 %v1963
    %v2002 = vpop.f32.mrb[0].mxu0
    %v2003 = vadd.f32 0.0, %v2002
    %v2004 = vpop.f32.mrb[0].mxu0
    %v2005 = vpop.f32.mrb[0].mxu0
    %v2006 = vpop.f32.mrb[0].mxu0
    %2007 = vdwg.mxu0
    %v2008 = vpack.i.b16 %v1951, %v1951
    %v2009 = vlaneseq
    %v2010 = vshrl.u32 %v2009, 7
    %v2011 = vsub.s32 0, %v2010
    %v2012 = vrot.slane %v2008, %v2011
    %v2015 = vunpack.c.l.b16 %v1923
    %v2016 = vunpack.c.l.b16 %v1924
    %v2017 = vpack.c.b16 %v2016, %v2015
    %v2019 = vsel %vm599, %v2012, 0
    %v2022 = vsel %vm599, %v2017, 0
    %2024 = vmatprep.subr.bf16.mxu0 0
    %2025 = vmatpush1.bf16.xpose.msra.mxu0 %v2022
    %2026 = vmatprep.subr.bf16.mxu0 0
    %2027 = vmatpush1.bf16.xpose.msra.mxu0 0
    %2028 = vmatprep.subr.bf16.mxu0 0
    %2029 = vmatpush1.bf16.xpose.msra.mxu0 0
    %2030 = vmatprep.subr.bf16.mxu0 0
    %2031 = vmatpush1.bf16.xpose.msra.mxu0 0
    %2032 = vmatprep.subr.bf16.mxu0 0
    %2033 = vmatpush1.bf16.xpose.msra.mxu0 0
    %2034 = vmatprep.subr.bf16.mxu0 0
    %2035 = vmatpush1.bf16.xpose.msra.mxu0 0
    %2036 = vmatprep.subr.bf16.mxu0 0
    %2037 = vmatpush1.bf16.xpose.msra.mxu0 0
    %2038 = vmatprep.subr.bf16.mxu0 0
    %2039 = vmatpush1.bf16.xpose.msra.mxu0 0
    %2040 = vmatprep.subr.bf16.mxu0 0
    %2041 = vmatpush1.bf16.xpose.msra.mxu0 0
    %2042 = vmatprep.subr.bf16.mxu0 0
    %2043 = vmatpush1.bf16.xpose.msra.mxu0 0
    %2044 = vmatprep.subr.bf16.mxu0 0
    %2045 = vmatpush1.bf16.xpose.msra.mxu0 0
    %2046 = vmatprep.subr.bf16.mxu0 0
    %2047 = vmatpush1.bf16.xpose.msra.mxu0 0
    %2048 = vmatprep.subr.bf16.mxu0 0
    %2049 = vmatpush1.bf16.xpose.msra.mxu0 0
    %2050 = vmatprep.subr.bf16.mxu0 0
    %2051 = vmatpush1.bf16.xpose.msra.mxu0 0
    %2052 = vmatprep.subr.bf16.mxu0 0
    %2053 = vmatpush1.bf16.xpose.msra.mxu0 0
    %2054 = vmatprep.subr.bf16.mxu0 0
    %2055 = vmatpush1.bf16.xpose.msra.mxu0 0
    %2056 = vmatprep.mubr.bf16.mxu0 0
    %2057 = vmatmul.mubr.bf16.gmra.mrb[0].mxu0 %v2019
    %v2058 = vpop.f32.mrb[0].mxu0
    %v2059 = vadd.f32 0.0, %v2058
    %v2060 = vpop.f32.mrb[0].mxu0
    %v2061 = vpop.f32.mrb[0].mxu0
    %v2062 = vpop.f32.mrb[0].mxu0
    %2063 = vdwg.mxu0
    %v2064 = vmul.f32 %v2003, 0.35355338
    %v2065 = vmul.f32 %v2059, 0.35355338
    %v2066 = vadd.f32 %v2064, %v463
    %v2067 = vadd.f32 %v2065, %v470
    %vm2068 = vcmask 65536
    %v2069 = vsel %vm2068, %v2066, -inf
    %2070 = vmax.xlane.f32.xlu0 %v2069
    %v2071 = vpop.xlane.xlu0 %2070
    %v2072 = vsel %vm2068, %v2067, -inf
    %2073 = vmax.xlane.f32.xlu0 %v2072
    %v2074 = vpop.xlane.xlu0 %2073
    %v2075 = vsub.f32 %v2066, %v2071
    %v2076 = vsub.f32 %v2067, %v2074
    %v2077 = vmul.f32 %v2075, 1.442695
    %v2078 = vpow.pop %v2077
    %v2079 = vmul.f32 %v2076, 1.442695
    %v2080 = vpow.pop %v2079
    %v2081 = vsel %vm2068, %v2078, 0.0
    %2082 = vadd.xlane.f32.xlu0 %v2081
    %v2083 = vpop.xlane.xlu0 %2082
    %v2084 = vsel %vm2068, %v2080, 0.0
    %2085 = vadd.xlane.f32.xlu0 %v2084
    %v2086 = vpop.xlane.xlu0 %2085
    %v2087 = vrcp.pop %v2083
    %v2088 = vrcp.pop %v2086
    %v2089 = vmul.f32 %v2078, %v2087
    %v2090 = vmul.f32 %v2080, %v2088
    %v2091 = vpack.c.bf16 %v2089, %v2089
    %v2092 = vpack.c.bf16 %v2090, %v2090
    %v2095 = vunpack.c.l.b16 %v1925
    %v2096 = vunpack.c.l.b16 %v1926
    %v2097 = vpack.c.b16 %v2096, %v2095
    %vm2098 = vcmask 72704
    %v2100 = vsel %vm2098, %v2091, 0
    %vm2102 = vcmask 1044480
    %v2103 = vsel %vm797, 4294967295, 65535
    %v2104 = vsel %vm2102, %v2103, 0
    %v2106 = vand.u32 %v2097, %v2104
    %2108 = vmatprep.subr.bf16.mxu0 0
    %2109 = vmatpush1.bf16.msra.mxu0 %v2106
    %2110 = vmatprep.subr.bf16.mxu0 0
    %2111 = vmatpush1.bf16.msra.mxu0 0
    %2112 = vmatprep.subr.bf16.mxu0 0
    %2113 = vmatpush1.bf16.msra.mxu0 0
    %2114 = vmatprep.subr.bf16.mxu0 0
    %2115 = vmatpush1.bf16.msra.mxu0 0
    %2116 = vmatprep.subr.bf16.mxu0 0
    %2117 = vmatpush1.bf16.msra.mxu0 0
    %2118 = vmatprep.subr.bf16.mxu0 0
    %2119 = vmatpush1.bf16.msra.mxu0 0
    %2120 = vmatprep.subr.bf16.mxu0 0
    %2121 = vmatpush1.bf16.msra.mxu0 0
    %2122 = vmatprep.subr.bf16.mxu0 0
    %2123 = vmatpush1.bf16.msra.mxu0 0
    %2124 = vmatprep.subr.bf16.mxu0 0
    %2125 = vmatpush1.bf16.msra.mxu0 0
    %2126 = vmatprep.subr.bf16.mxu0 0
    %2127 = vmatpush1.bf16.msra.mxu0 0
    %2128 = vmatprep.subr.bf16.mxu0 0
    %2129 = vmatpush1.bf16.msra.mxu0 0
    %2130 = vmatprep.subr.bf16.mxu0 0
    %2131 = vmatpush1.bf16.msra.mxu0 0
    %2132 = vmatprep.subr.bf16.mxu0 0
    %2133 = vmatpush1.bf16.msra.mxu0 0
    %2134 = vmatprep.subr.bf16.mxu0 0
    %2135 = vmatpush1.bf16.msra.mxu0 0
    %2136 = vmatprep.subr.bf16.mxu0 0
    %2137 = vmatpush1.bf16.msra.mxu0 0
    %2138 = vmatprep.subr.bf16.mxu0 0
    %2139 = vmatpush1.bf16.msra.mxu0 0
    %2140 = vmatprep.mubr.bf16.mxu0 0
    %2141 = vmatmul.mubr.bf16.gmra.mrb[0].mxu0 %v2100
    %v2142 = vpop.f32.mrb[0].mxu0
    %v2143 = vadd.f32 0.0, %v2142
    %v2144 = vpop.f32.mrb[0].mxu0
    %v2145 = vpop.f32.mrb[0].mxu0
    %v2146 = vpop.f32.mrb[0].mxu0
    %2147 = vdwg.mxu0
    %v2150 = vunpack.c.l.b16 %v1927
    %v2151 = vunpack.c.l.b16 %v1928
    %v2152 = vpack.c.b16 %v2151, %v2150
    %v2154 = vsel %vm2098, %v2092, 0
    %v2157 = vand.u32 %v2152, %v2104
    %2159 = vmatprep.subr.bf16.mxu0 0
    %2160 = vmatpush1.bf16.msra.mxu0 %v2157
    %2161 = vmatprep.subr.bf16.mxu0 0
    %2162 = vmatpush1.bf16.msra.mxu0 0
    %2163 = vmatprep.subr.bf16.mxu0 0
    %2164 = vmatpush1.bf16.msra.mxu0 0
    %2165 = vmatprep.subr.bf16.mxu0 0
    %2166 = vmatpush1.bf16.msra.mxu0 0
    %2167 = vmatprep.subr.bf16.mxu0 0
    %2168 = vmatpush1.bf16.msra.mxu0 0
    %2169 = vmatprep.subr.bf16.mxu0 0
    %2170 = vmatpush1.bf16.msra.mxu0 0
    %2171 = vmatprep.subr.bf16.mxu0 0
    %2172 = vmatpush1.bf16.msra.mxu0 0
    %2173 = vmatprep.subr.bf16.mxu0 0
    %2174 = vmatpush1.bf16.msra.mxu0 0
    %2175 = vmatprep.subr.bf16.mxu0 0
    %2176 = vmatpush1.bf16.msra.mxu0 0
    %2177 = vmatprep.subr.bf16.mxu0 0
    %2178 = vmatpush1.bf16.msra.mxu0 0
    %2179 = vmatprep.subr.bf16.mxu0 0
    %2180 = vmatpush1.bf16.msra.mxu0 0
    %2181 = vmatprep.subr.bf16.mxu0 0
    %2182 = vmatpush1.bf16.msra.mxu0 0
    %2183 = vmatprep.subr.bf16.mxu0 0
    %2184 = vmatpush1.bf16.msra.mxu0 0
    %2185 = vmatprep.subr.bf16.mxu0 0
    %2186 = vmatpush1.bf16.msra.mxu0 0
    %2187 = vmatprep.subr.bf16.mxu0 0
    %2188 = vmatpush1.bf16.msra.mxu0 0
    %2189 = vmatprep.subr.bf16.mxu0 0
    %2190 = vmatpush1.bf16.msra.mxu0 0
    %2191 = vmatprep.mubr.bf16.mxu0 0
    %2192 = vmatmul.mubr.bf16.gmra.mrb[0].mxu0 %v2154
    %v2193 = vpop.f32.mrb[0].mxu0
    %v2194 = vadd.f32 0.0, %v2193
    %v2195 = vpop.f32.mrb[0].mxu0
    %v2196 = vpop.f32.mrb[0].mxu0
    %v2197 = vpop.f32.mrb[0].mxu0
    %2198 = vdwg.mxu0
    %2199 = vrot.lane.b32.xlu0 %v1956, 120
    %v2200 = vpop.permute.xlu0 %2199
    %2201 = vrot.lane.b32.xlu0 %v1961, 120
    %v2202 = vpop.permute.xlu0 %2201
    %v2204 = vsel %vm599, %v2200, 0
    %v2207 = vsel %vm599, %v2202, 0
    %2209 = vmatprep.subr.bf16.mxu0 0
    %2210 = vmatpush1.bf16.xpose.msra.mxu0 %v2207
    %2211 = vmatprep.subr.bf16.mxu0 0
    %2212 = vmatpush1.bf16.xpose.msra.mxu0 0
    %2213 = vmatprep.subr.bf16.mxu0 0
    %2214 = vmatpush1.bf16.xpose.msra.mxu0 0
    %2215 = vmatprep.subr.bf16.mxu0 0
    %2216 = vmatpush1.bf16.xpose.msra.mxu0 0
    %2217 = vmatprep.subr.bf16.mxu0 0
    %2218 = vmatpush1.bf16.xpose.msra.mxu0 0
    %2219 = vmatprep.subr.bf16.mxu0 0
    %2220 = vmatpush1.bf16.xpose.msra.mxu0 0
    %2221 = vmatprep.subr.bf16.mxu0 0
    %2222 = vmatpush1.bf16.xpose.msra.mxu0 0
    %2223 = vmatprep.subr.bf16.mxu0 0
    %2224 = vmatpush1.bf16.xpose.msra.mxu0 0
    %2225 = vmatprep.subr.bf16.mxu0 0
    %2226 = vmatpush1.bf16.xpose.msra.mxu0 0
    %2227 = vmatprep.subr.bf16.mxu0 0
    %2228 = vmatpush1.bf16.xpose.msra.mxu0 0
    %2229 = vmatprep.subr.bf16.mxu0 0
    %2230 = vmatpush1.bf16.xpose.msra.mxu0 0
    %2231 = vmatprep.subr.bf16.mxu0 0
    %2232 = vmatpush1.bf16.xpose.msra.mxu0 0
    %2233 = vmatprep.subr.bf16.mxu0 0
    %2234 = vmatpush1.bf16.xpose.msra.mxu0 0
    %2235 = vmatprep.subr.bf16.mxu0 0
    %2236 = vmatpush1.bf16.xpose.msra.mxu0 0
    %2237 = vmatprep.subr.bf16.mxu0 0
    %2238 = vmatpush1.bf16.xpose.msra.mxu0 0
    %2239 = vmatprep.subr.bf16.mxu0 0
    %2240 = vmatpush1.bf16.xpose.msra.mxu0 0
    %2241 = vmatprep.mubr.bf16.mxu0 0
    %2242 = vmatmul.mubr.bf16.gmra.mrb[0].mxu0 %v2204
    %v2243 = vpop.f32.mrb[0].mxu0
    %v2244 = vadd.f32 0.0, %v2243
    %v2245 = vpop.f32.mrb[0].mxu0
    %v2246 = vpop.f32.mrb[0].mxu0
    %v2247 = vpop.f32.mrb[0].mxu0
    %2248 = vdwg.mxu0
    %2249 = vrot.lane.b32.xlu0 %v2012, 120
    %v2250 = vpop.permute.xlu0 %2249
    %2251 = vrot.lane.b32.xlu0 %v2017, 120
    %v2252 = vpop.permute.xlu0 %2251
    %v2254 = vsel %vm599, %v2250, 0
    %v2257 = vsel %vm599, %v2252, 0
    %2259 = vmatprep.subr.bf16.mxu0 0
    %2260 = vmatpush1.bf16.xpose.msra.mxu0 %v2257
    %2261 = vmatprep.subr.bf16.mxu0 0
    %2262 = vmatpush1.bf16.xpose.msra.mxu0 0
    %2263 = vmatprep.subr.bf16.mxu0 0
    %2264 = vmatpush1.bf16.xpose.msra.mxu0 0
    %2265 = vmatprep.subr.bf16.mxu0 0
    %2266 = vmatpush1.bf16.xpose.msra.mxu0 0
    %2267 = vmatprep.subr.bf16.mxu0 0
    %2268 = vmatpush1.bf16.xpose.msra.mxu0 0
    %2269 = vmatprep.subr.bf16.mxu0 0
    %2270 = vmatpush1.bf16.xpose.msra.mxu0 0
    %2271 = vmatprep.subr.bf16.mxu0 0
    %2272 = vmatpush1.bf16.xpose.msra.mxu0 0
    %2273 = vmatprep.subr.bf16.mxu0 0
    %2274 = vmatpush1.bf16.xpose.msra.mxu0 0
    %2275 = vmatprep.subr.bf16.mxu0 0
    %2276 = vmatpush1.bf16.xpose.msra.mxu0 0
    %2277 = vmatprep.subr.bf16.mxu0 0
    %2278 = vmatpush1.bf16.xpose.msra.mxu0 0
    %2279 = vmatprep.subr.bf16.mxu0 0
    %2280 = vmatpush1.bf16.xpose.msra.mxu0 0
    %2281 = vmatprep.subr.bf16.mxu0 0
    %2282 = vmatpush1.bf16.xpose.msra.mxu0 0
    %2283 = vmatprep.subr.bf16.mxu0 0
    %2284 = vmatpush1.bf16.xpose.msra.mxu0 0
    %2285 = vmatprep.subr.bf16.mxu0 0
    %2286 = vmatpush1.bf16.xpose.msra.mxu0 0
    %2287 = vmatprep.subr.bf16.mxu0 0
    %2288 = vmatpush1.bf16.xpose.msra.mxu0 0
    %2289 = vmatprep.subr.bf16.mxu0 0
    %2290 = vmatpush1.bf16.xpose.msra.mxu0 0
    %2291 = vmatprep.mubr.bf16.mxu0 0
    %2292 = vmatmul.mubr.bf16.gmra.mrb[0].mxu0 %v2254
    %v2293 = vpop.f32.mrb[0].mxu0
    %v2294 = vadd.f32 0.0, %v2293
    %v2295 = vpop.f32.mrb[0].mxu0
    %v2296 = vpop.f32.mrb[0].mxu0
    %v2297 = vpop.f32.mrb[0].mxu0
    %2298 = vdwg.mxu0
    %v2299 = vmul.f32 %v2244, 0.35355338
    %v2300 = vmul.f32 %v2294, 0.35355338
    %v2301 = vadd.f32 %v2299, %v463
    %v2302 = vadd.f32 %v2300, %v470
    %v2303 = vsel %vm2068, %v2301, -inf
    %2304 = vmax.xlane.f32.xlu0 %v2303
    %v2305 = vpop.xlane.xlu0 %2304
    %v2306 = vsel %vm2068, %v2302, -inf
    %2307 = vmax.xlane.f32.xlu0 %v2306
    %v2308 = vpop.xlane.xlu0 %2307
    %v2309 = vsub.f32 %v2301, %v2305
    %v2310 = vsub.f32 %v2302, %v2308
    %v2311 = vmul.f32 %v2309, 1.442695
    %v2312 = vpow.pop %v2311
    %v2313 = vmul.f32 %v2310, 1.442695
    %v2314 = vpow.pop %v2313
    %v2315 = vsel %vm2068, %v2312, 0.0
    %2316 = vadd.xlane.f32.xlu0 %v2315
    %v2317 = vpop.xlane.xlu0 %2316
    %v2318 = vsel %vm2068, %v2314, 0.0
    %2319 = vadd.xlane.f32.xlu0 %v2318
    %v2320 = vpop.xlane.xlu0 %2319
    %v2321 = vrcp.pop %v2317
    %v2322 = vrcp.pop %v2320
    %v2323 = vmul.f32 %v2312, %v2321
    %v2324 = vmul.f32 %v2314, %v2322
    %v2325 = vpack.c.bf16 %v2323, %v2323
    %v2326 = vpack.c.bf16 %v2324, %v2324
    %2327 = vrot.lane.b32.xlu0 %v2097, 120
    %v2328 = vpop.permute.xlu0 %2327
    %v2330 = vsel %vm2098, %v2325, 0
    %v2333 = vand.u32 %v2328, %v2104
    %2335 = vmatprep.subr.bf16.mxu0 0
    %2336 = vmatpush1.bf16.msra.mxu0 %v2333
    %2337 = vmatprep.subr.bf16.mxu0 0
    %2338 = vmatpush1.bf16.msra.mxu0 0
    %2339 = vmatprep.subr.bf16.mxu0 0
    %2340 = vmatpush1.bf16.msra.mxu0 0
    %2341 = vmatprep.subr.bf16.mxu0 0
    %2342 = vmatpush1.bf16.msra.mxu0 0
    %2343 = vmatprep.subr.bf16.mxu0 0
    %2344 = vmatpush1.bf16.msra.mxu0 0
    %2345 = vmatprep.subr.bf16.mxu0 0
    %2346 = vmatpush1.bf16.msra.mxu0 0
    %2347 = vmatprep.subr.bf16.mxu0 0
    %2348 = vmatpush1.bf16.msra.mxu0 0
    %2349 = vmatprep.subr.bf16.mxu0 0
    %2350 = vmatpush1.bf16.msra.mxu0 0
    %2351 = vmatprep.subr.bf16.mxu0 0
    %2352 = vmatpush1.bf16.msra.mxu0 0
    %2353 = vmatprep.subr.bf16.mxu0 0
    %2354 = vmatpush1.bf16.msra.mxu0 0
    %2355 = vmatprep.subr.bf16.mxu0 0
    %2356 = vmatpush1.bf16.msra.mxu0 0
    %2357 = vmatprep.subr.bf16.mxu0 0
    %2358 = vmatpush1.bf16.msra.mxu0 0
    %2359 = vmatprep.subr.bf16.mxu0 0
    %2360 = vmatpush1.bf16.msra.mxu0 0
    %2361 = vmatprep.subr.bf16.mxu0 0
    %2362 = vmatpush1.bf16.msra.mxu0 0
    %2363 = vmatprep.subr.bf16.mxu0 0
    %2364 = vmatpush1.bf16.msra.mxu0 0
    %2365 = vmatprep.subr.bf16.mxu0 0
    %2366 = vmatpush1.bf16.msra.mxu0 0
    %2367 = vmatprep.mubr.bf16.mxu0 0
    %2368 = vmatmul.mubr.bf16.gmra.mrb[0].mxu0 %v2330
    %v2369 = vpop.f32.mrb[0].mxu0
    %v2370 = vadd.f32 0.0, %v2369
    %v2371 = vpop.f32.mrb[0].mxu0
    %v2372 = vpop.f32.mrb[0].mxu0
    %v2373 = vpop.f32.mrb[0].mxu0
    %2374 = vdwg.mxu0
    %2375 = vrot.lane.b32.xlu0 %v2152, 120
    %v2376 = vpop.permute.xlu0 %2375
    %v2378 = vsel %vm2098, %v2326, 0
    %v2381 = vand.u32 %v2376, %v2104
    %2383 = vmatprep.subr.bf16.mxu0 0
    %2384 = vmatpush1.bf16.msra.mxu0 %v2381
    %2385 = vmatprep.subr.bf16.mxu0 0
    %2386 = vmatpush1.bf16.msra.mxu0 0
    %2387 = vmatprep.subr.bf16.mxu0 0
    %2388 = vmatpush1.bf16.msra.mxu0 0
    %2389 = vmatprep.subr.bf16.mxu0 0
    %2390 = vmatpush1.bf16.msra.mxu0 0
    %2391 = vmatprep.subr.bf16.mxu0 0
    %2392 = vmatpush1.bf16.msra.mxu0 0
    %2393 = vmatprep.subr.bf16.mxu0 0
    %2394 = vmatpush1.bf16.msra.mxu0 0
    %2395 = vmatprep.subr.bf16.mxu0 0
    %2396 = vmatpush1.bf16.msra.mxu0 0
    %2397 = vmatprep.subr.bf16.mxu0 0
    %2398 = vmatpush1.bf16.msra.mxu0 0
    %2399 = vmatprep.subr.bf16.mxu0 0
    %2400 = vmatpush1.bf16.msra.mxu0 0
    %2401 = vmatprep.subr.bf16.mxu0 0
    %2402 = vmatpush1.bf16.msra.mxu0 0
    %2403 = vmatprep.subr.bf16.mxu0 0
    %2404 = vmatpush1.bf16.msra.mxu0 0
    %2405 = vmatprep.subr.bf16.mxu0 0
    %2406 = vmatpush1.bf16.msra.mxu0 0
    %2407 = vmatprep.subr.bf16.mxu0 0
    %2408 = vmatpush1.bf16.msra.mxu0 0
    %2409 = vmatprep.subr.bf16.mxu0 0
    %2410 = vmatpush1.bf16.msra.mxu0 0
    %2411 = vmatprep.subr.bf16.mxu0 0
    %2412 = vmatpush1.bf16.msra.mxu0 0
    %2413 = vmatprep.subr.bf16.mxu0 0
    %2414 = vmatpush1.bf16.msra.mxu0 0
    %2415 = vmatprep.mubr.bf16.mxu0 0
    %2416 = vmatmul.mubr.bf16.gmra.mrb[0].mxu0 %v2378
    %v2417 = vpop.f32.mrb[0].mxu0
    %v2418 = vadd.f32 0.0, %v2417
    %v2419 = vpop.f32.mrb[0].mxu0
    %v2420 = vpop.f32.mrb[0].mxu0
    %v2421 = vpop.f32.mrb[0].mxu0
    %2422 = vdwg.mxu0
    %2423 = vrot.lane.b32.xlu0 %v1956, 112
    %v2424 = vpop.permute.xlu0 %2423
    %2425 = vrot.lane.b32.xlu0 %v1961, 112
    %v2426 = vpop.permute.xlu0 %2425
    %v2428 = vsel %vm599, %v2424, 0
    %v2431 = vsel %vm599, %v2426, 0
    %2433 = vmatprep.subr.bf16.mxu0 0
    %2434 = vmatpush1.bf16.xpose.msra.mxu0 %v2431
    %2435 = vmatprep.subr.bf16.mxu0 0
    %2436 = vmatpush1.bf16.xpose.msra.mxu0 0
    %2437 = vmatprep.subr.bf16.mxu0 0
    %2438 = vmatpush1.bf16.xpose.msra.mxu0 0
    %2439 = vmatprep.subr.bf16.mxu0 0
    %2440 = vmatpush1.bf16.xpose.msra.mxu0 0
    %2441 = vmatprep.subr.bf16.mxu0 0
    %2442 = vmatpush1.bf16.xpose.msra.mxu0 0
    %2443 = vmatprep.subr.bf16.mxu0 0
    %2444 = vmatpush1.bf16.xpose.msra.mxu0 0
    %2445 = vmatprep.subr.bf16.mxu0 0
    %2446 = vmatpush1.bf16.xpose.msra.mxu0 0
    %2447 = vmatprep.subr.bf16.mxu0 0
    %2448 = vmatpush1.bf16.xpose.msra.mxu0 0
    %2449 = vmatprep.subr.bf16.mxu0 0
    %2450 = vmatpush1.bf16.xpose.msra.mxu0 0
    %2451 = vmatprep.subr.bf16.mxu0 0
    %2452 = vmatpush1.bf16.xpose.msra.mxu0 0
    %2453 = vmatprep.subr.bf16.mxu0 0
    %2454 = vmatpush1.bf16.xpose.msra.mxu0 0
    %2455 = vmatprep.subr.bf16.mxu0 0
    %2456 = vmatpush1.bf16.xpose.msra.mxu0 0
    %2457 = vmatprep.subr.bf16.mxu0 0
    %2458 = vmatpush1.bf16.xpose.msra.mxu0 0
    %2459 = vmatprep.subr.bf16.mxu0 0
    %2460 = vmatpush1.bf16.xpose.msra.mxu0 0
    %2461 = vmatprep.subr.bf16.mxu0 0
    %2462 = vmatpush1.bf16.xpose.msra.mxu0 0
    %2463 = vmatprep.subr.bf16.mxu0 0
    %2464 = vmatpush1.bf16.xpose.msra.mxu0 0
    %2465 = vmatprep.mubr.bf16.mxu0 0
    %2466 = vmatmul.mubr.bf16.gmra.mrb[0].mxu0 %v2428
    %v2467 = vpop.f32.mrb[0].mxu0
    %v2468 = vadd.f32 0.0, %v2467
    %v2469 = vpop.f32.mrb[0].mxu0
    %v2470 = vpop.f32.mrb[0].mxu0
    %v2471 = vpop.f32.mrb[0].mxu0
    %2472 = vdwg.mxu0
    %2473 = vrot.lane.b32.xlu0 %v2012, 112
    %v2474 = vpop.permute.xlu0 %2473
    %2475 = vrot.lane.b32.xlu0 %v2017, 112
    %v2476 = vpop.permute.xlu0 %2475
    %v2478 = vsel %vm599, %v2474, 0
    %v2481 = vsel %vm599, %v2476, 0
    %2483 = vmatprep.subr.bf16.mxu0 0
    %2484 = vmatpush1.bf16.xpose.msra.mxu0 %v2481
    %2485 = vmatprep.subr.bf16.mxu0 0
    %2486 = vmatpush1.bf16.xpose.msra.mxu0 0
    %2487 = vmatprep.subr.bf16.mxu0 0
    %2488 = vmatpush1.bf16.xpose.msra.mxu0 0
    %2489 = vmatprep.subr.bf16.mxu0 0
    %2490 = vmatpush1.bf16.xpose.msra.mxu0 0
    %2491 = vmatprep.subr.bf16.mxu0 0
    %2492 = vmatpush1.bf16.xpose.msra.mxu0 0
    %2493 = vmatprep.subr.bf16.mxu0 0
    %2494 = vmatpush1.bf16.xpose.msra.mxu0 0
    %2495 = vmatprep.subr.bf16.mxu0 0
    %2496 = vmatpush1.bf16.xpose.msra.mxu0 0
    %2497 = vmatprep.subr.bf16.mxu0 0
    %2498 = vmatpush1.bf16.xpose.msra.mxu0 0
    %2499 = vmatprep.subr.bf16.mxu0 0
    %2500 = vmatpush1.bf16.xpose.msra.mxu0 0
    %2501 = vmatprep.subr.bf16.mxu0 0
    %2502 = vmatpush1.bf16.xpose.msra.mxu0 0
    %2503 = vmatprep.subr.bf16.mxu0 0
    %2504 = vmatpush1.bf16.xpose.msra.mxu0 0
    %2505 = vmatprep.subr.bf16.mxu0 0
    %2506 = vmatpush1.bf16.xpose.msra.mxu0 0
    %2507 = vmatprep.subr.bf16.mxu0 0
    %2508 = vmatpush1.bf16.xpose.msra.mxu0 0
    %2509 = vmatprep.subr.bf16.mxu0 0
    %2510 = vmatpush1.bf16.xpose.msra.mxu0 0
    %2511 = vmatprep.subr.bf16.mxu0 0
    %2512 = vmatpush1.bf16.xpose.msra.mxu0 0
    %2513 = vmatprep.subr.bf16.mxu0 0
    %2514 = vmatpush1.bf16.xpose.msra.mxu0 0
    %2515 = vmatprep.mubr.bf16.mxu0 0
    %2516 = vmatmul.mubr.bf16.gmra.mrb[0].mxu0 %v2478
    %v2517 = vpop.f32.mrb[0].mxu0
    %v2518 = vadd.f32 0.0, %v2517
    %v2519 = vpop.f32.mrb[0].mxu0
    %v2520 = vpop.f32.mrb[0].mxu0
    %v2521 = vpop.f32.mrb[0].mxu0
    %2522 = vdwg.mxu0
    %v2523 = vmul.f32 %v2468, 0.35355338
    %v2524 = vmul.f32 %v2518, 0.35355338
    %v2525 = vadd.f32 %v2523, %v463
    %v2526 = vadd.f32 %v2524, %v470
    %v2527 = vsel %vm2068, %v2525, -inf
    %2528 = vmax.xlane.f32.xlu0 %v2527
    %v2529 = vpop.xlane.xlu0 %2528
    %v2530 = vsel %vm2068, %v2526, -inf
    %2531 = vmax.xlane.f32.xlu0 %v2530
    %v2532 = vpop.xlane.xlu0 %2531
    %v2533 = vsub.f32 %v2525, %v2529
    %v2534 = vsub.f32 %v2526, %v2532
    %v2535 = vmul.f32 %v2533, 1.442695
    %v2536 = vpow.pop %v2535
    %v2537 = vmul.f32 %v2534, 1.442695
    %v2538 = vpow.pop %v2537
    %v2539 = vsel %vm2068, %v2536, 0.0
    %2540 = vadd.xlane.f32.xlu0 %v2539
    %v2541 = vpop.xlane.xlu0 %2540
    %v2542 = vsel %vm2068, %v2538, 0.0
    %2543 = vadd.xlane.f32.xlu0 %v2542
    %v2544 = vpop.xlane.xlu0 %2543
    %v2545 = vrcp.pop %v2541
    %v2546 = vrcp.pop %v2544
    %v2547 = vmul.f32 %v2536, %v2545
    %v2548 = vmul.f32 %v2538, %v2546
    %v2549 = vpack.c.bf16 %v2547, %v2547
    %v2550 = vpack.c.bf16 %v2548, %v2548
    %2551 = vrot.lane.b32.xlu0 %v2097, 112
    %v2552 = vpop.permute.xlu0 %2551
    %v2554 = vsel %vm2098, %v2549, 0
    %v2557 = vand.u32 %v2552, %v2104
    %2559 = vmatprep.subr.bf16.mxu0 0
    %2560 = vmatpush1.bf16.msra.mxu0 %v2557
    %2561 = vmatprep.subr.bf16.mxu0 0
    %2562 = vmatpush1.bf16.msra.mxu0 0
    %2563 = vmatprep.subr.bf16.mxu0 0
    %2564 = vmatpush1.bf16.msra.mxu0 0
    %2565 = vmatprep.subr.bf16.mxu0 0
    %2566 = vmatpush1.bf16.msra.mxu0 0
    %2567 = vmatprep.subr.bf16.mxu0 0
    %2568 = vmatpush1.bf16.msra.mxu0 0
    %2569 = vmatprep.subr.bf16.mxu0 0
    %2570 = vmatpush1.bf16.msra.mxu0 0
    %2571 = vmatprep.subr.bf16.mxu0 0
    %2572 = vmatpush1.bf16.msra.mxu0 0
    %2573 = vmatprep.subr.bf16.mxu0 0
    %2574 = vmatpush1.bf16.msra.mxu0 0
    %2575 = vmatprep.subr.bf16.mxu0 0
    %2576 = vmatpush1.bf16.msra.mxu0 0
    %2577 = vmatprep.subr.bf16.mxu0 0
    %2578 = vmatpush1.bf16.msra.mxu0 0
    %2579 = vmatprep.subr.bf16.mxu0 0
    %2580 = vmatpush1.bf16.msra.mxu0 0
    %2581 = vmatprep.subr.bf16.mxu0 0
    %2582 = vmatpush1.bf16.msra.mxu0 0
    %2583 = vmatprep.subr.bf16.mxu0 0
    %2584 = vmatpush1.bf16.msra.mxu0 0
    %2585 = vmatprep.subr.bf16.mxu0 0
    %2586 = vmatpush1.bf16.msra.mxu0 0
    %2587 = vmatprep.subr.bf16.mxu0 0
    %2588 = vmatpush1.bf16.msra.mxu0 0
    %2589 = vmatprep.subr.bf16.mxu0 0
    %2590 = vmatpush1.bf16.msra.mxu0 0
    %2591 = vmatprep.mubr.bf16.mxu0 0
    %2592 = vmatmul.mubr.bf16.gmra.mrb[0].mxu0 %v2554
    %v2593 = vpop.f32.mrb[0].mxu0
    %v2594 = vadd.f32 0.0, %v2593
    %v2595 = vpop.f32.mrb[0].mxu0
    %v2596 = vpop.f32.mrb[0].mxu0
    %v2597 = vpop.f32.mrb[0].mxu0
    %2598 = vdwg.mxu0
    %2599 = vrot.lane.b32.xlu0 %v2152, 112
    %v2600 = vpop.permute.xlu0 %2599
    %v2602 = vsel %vm2098, %v2550, 0
    %v2605 = vand.u32 %v2600, %v2104
    %2607 = vmatprep.subr.bf16.mxu0 0
    %2608 = vmatpush1.bf16.msra.mxu0 %v2605
    %2609 = vmatprep.subr.bf16.mxu0 0
    %2610 = vmatpush1.bf16.msra.mxu0 0
    %2611 = vmatprep.subr.bf16.mxu0 0
    %2612 = vmatpush1.bf16.msra.mxu0 0
    %2613 = vmatprep.subr.bf16.mxu0 0
    %2614 = vmatpush1.bf16.msra.mxu0 0
    %2615 = vmatprep.subr.bf16.mxu0 0
    %2616 = vmatpush1.bf16.msra.mxu0 0
    %2617 = vmatprep.subr.bf16.mxu0 0
    %2618 = vmatpush1.bf16.msra.mxu0 0
    %2619 = vmatprep.subr.bf16.mxu0 0
    %2620 = vmatpush1.bf16.msra.mxu0 0
    %2621 = vmatprep.subr.bf16.mxu0 0
    %2622 = vmatpush1.bf16.msra.mxu0 0
    %2623 = vmatprep.subr.bf16.mxu0 0
    %2624 = vmatpush1.bf16.msra.mxu0 0
    %2625 = vmatprep.subr.bf16.mxu0 0
    %2626 = vmatpush1.bf16.msra.mxu0 0
    %2627 = vmatprep.subr.bf16.mxu0 0
    %2628 = vmatpush1.bf16.msra.mxu0 0
    %2629 = vmatprep.subr.bf16.mxu0 0
    %2630 = vmatpush1.bf16.msra.mxu0 0
    %2631 = vmatprep.subr.bf16.mxu0 0
    %2632 = vmatpush1.bf16.msra.mxu0 0
    %2633 = vmatprep.subr.bf16.mxu0 0
    %2634 = vmatpush1.bf16.msra.mxu0 0
    %2635 = vmatprep.subr.bf16.mxu0 0
    %2636 = vmatpush1.bf16.msra.mxu0 0
    %2637 = vmatprep.subr.bf16.mxu0 0
    %2638 = vmatpush1.bf16.msra.mxu0 0
    %2639 = vmatprep.mubr.bf16.mxu0 0
    %2640 = vmatmul.mubr.bf16.gmra.mrb[0].mxu0 %v2602
    %v2641 = vpop.f32.mrb[0].mxu0
    %v2642 = vadd.f32 0.0, %v2641
    %v2643 = vpop.f32.mrb[0].mxu0
    %v2644 = vpop.f32.mrb[0].mxu0
    %v2645 = vpop.f32.mrb[0].mxu0
    %2646 = vdwg.mxu0
    %2647 = vrot.lane.b32.xlu0 %v1956, 104
    %v2648 = vpop.permute.xlu0 %2647
    %2649 = vrot.lane.b32.xlu0 %v1961, 104
    %v2650 = vpop.permute.xlu0 %2649
    %v2652 = vsel %vm599, %v2648, 0
    %v2655 = vsel %vm599, %v2650, 0
    %2657 = vmatprep.subr.bf16.mxu0 0
    %2658 = vmatpush1.bf16.xpose.msra.mxu0 %v2655
    %2659 = vmatprep.subr.bf16.mxu0 0
    %2660 = vmatpush1.bf16.xpose.msra.mxu0 0
    %2661 = vmatprep.subr.bf16.mxu0 0
    %2662 = vmatpush1.bf16.xpose.msra.mxu0 0
    %2663 = vmatprep.subr.bf16.mxu0 0
    %2664 = vmatpush1.bf16.xpose.msra.mxu0 0
    %2665 = vmatprep.subr.bf16.mxu0 0
    %2666 = vmatpush1.bf16.xpose.msra.mxu0 0
    %2667 = vmatprep.subr.bf16.mxu0 0
    %2668 = vmatpush1.bf16.xpose.msra.mxu0 0
    %2669 = vmatprep.subr.bf16.mxu0 0
    %2670 = vmatpush1.bf16.xpose.msra.mxu0 0
    %2671 = vmatprep.subr.bf16.mxu0 0
    %2672 = vmatpush1.bf16.xpose.msra.mxu0 0
    %2673 = vmatprep.subr.bf16.mxu0 0
    %2674 = vmatpush1.bf16.xpose.msra.mxu0 0
    %2675 = vmatprep.subr.bf16.mxu0 0
    %2676 = vmatpush1.bf16.xpose.msra.mxu0 0
    %2677 = vmatprep.subr.bf16.mxu0 0
    %2678 = vmatpush1.bf16.xpose.msra.mxu0 0
    %2679 = vmatprep.subr.bf16.mxu0 0
    %2680 = vmatpush1.bf16.xpose.msra.mxu0 0
    %2681 = vmatprep.subr.bf16.mxu0 0
    %2682 = vmatpush1.bf16.xpose.msra.mxu0 0
    %2683 = vmatprep.subr.bf16.mxu0 0
    %2684 = vmatpush1.bf16.xpose.msra.mxu0 0
    %2685 = vmatprep.subr.bf16.mxu0 0
    %2686 = vmatpush1.bf16.xpose.msra.mxu0 0
    %2687 = vmatprep.subr.bf16.mxu0 0
    %2688 = vmatpush1.bf16.xpose.msra.mxu0 0
    %2689 = vmatprep.mubr.bf16.mxu0 0
    %2690 = vmatmul.mubr.bf16.gmra.mrb[0].mxu0 %v2652
    %v2691 = vpop.f32.mrb[0].mxu0
    %v2692 = vadd.f32 0.0, %v2691
    %v2693 = vpop.f32.mrb[0].mxu0
    %v2694 = vpop.f32.mrb[0].mxu0
    %v2695 = vpop.f32.mrb[0].mxu0
    %2696 = vdwg.mxu0
    %2697 = vrot.lane.b32.xlu0 %v2012, 104
    %v2698 = vpop.permute.xlu0 %2697
    %2699 = vrot.lane.b32.xlu0 %v2017, 104
    %v2700 = vpop.permute.xlu0 %2699
    %v2702 = vsel %vm599, %v2698, 0
    %v2705 = vsel %vm599, %v2700, 0
    %2707 = vmatprep.subr.bf16.mxu0 0
    %2708 = vmatpush1.bf16.xpose.msra.mxu0 %v2705
    %2709 = vmatprep.subr.bf16.mxu0 0
    %2710 = vmatpush1.bf16.xpose.msra.mxu0 0
    %2711 = vmatprep.subr.bf16.mxu0 0
    %2712 = vmatpush1.bf16.xpose.msra.mxu0 0
    %2713 = vmatprep.subr.bf16.mxu0 0
    %2714 = vmatpush1.bf16.xpose.msra.mxu0 0
    %2715 = vmatprep.subr.bf16.mxu0 0
    %2716 = vmatpush1.bf16.xpose.msra.mxu0 0
    %2717 = vmatprep.subr.bf16.mxu0 0
    %2718 = vmatpush1.bf16.xpose.msra.mxu0 0
    %2719 = vmatprep.subr.bf16.mxu0 0
    %2720 = vmatpush1.bf16.xpose.msra.mxu0 0
    %2721 = vmatprep.subr.bf16.mxu0 0
    %2722 = vmatpush1.bf16.xpose.msra.mxu0 0
    %2723 = vmatprep.subr.bf16.mxu0 0
    %2724 = vmatpush1.bf16.xpose.msra.mxu0 0
    %2725 = vmatprep.subr.bf16.mxu0 0
    %2726 = vmatpush1.bf16.xpose.msra.mxu0 0
    %2727 = vmatprep.subr.bf16.mxu0 0
    %2728 = vmatpush1.bf16.xpose.msra.mxu0 0
    %2729 = vmatprep.subr.bf16.mxu0 0
    %2730 = vmatpush1.bf16.xpose.msra.mxu0 0
    %2731 = vmatprep.subr.bf16.mxu0 0
    %2732 = vmatpush1.bf16.xpose.msra.mxu0 0
    %2733 = vmatprep.subr.bf16.mxu0 0
    %2734 = vmatpush1.bf16.xpose.msra.mxu0 0
    %2735 = vmatprep.subr.bf16.mxu0 0
    %2736 = vmatpush1.bf16.xpose.msra.mxu0 0
    %2737 = vmatprep.subr.bf16.mxu0 0
    %2738 = vmatpush1.bf16.xpose.msra.mxu0 0
    %2739 = vmatprep.mubr.bf16.mxu0 0
    %2740 = vmatmul.mubr.bf16.gmra.mrb[0].mxu0 %v2702
    %v2741 = vpop.f32.mrb[0].mxu0
    %v2742 = vadd.f32 0.0, %v2741
    %v2743 = vpop.f32.mrb[0].mxu0
    %v2744 = vpop.f32.mrb[0].mxu0
    %v2745 = vpop.f32.mrb[0].mxu0
    %2746 = vdwg.mxu0
    %v2747 = vmul.f32 %v2692, 0.35355338
    %v2748 = vmul.f32 %v2742, 0.35355338
    %v2749 = vadd.f32 %v2747, %v463
    %v2750 = vadd.f32 %v2748, %v470
    %v2751 = vsel %vm2068, %v2749, -inf
    %2752 = vmax.xlane.f32.xlu0 %v2751
    %v2753 = vpop.xlane.xlu0 %2752
    %v2754 = vsel %vm2068, %v2750, -inf
    %2755 = vmax.xlane.f32.xlu0 %v2754
    %v2756 = vpop.xlane.xlu0 %2755
    %v2757 = vsub.f32 %v2749, %v2753
    %v2758 = vsub.f32 %v2750, %v2756
    %v2759 = vmul.f32 %v2757, 1.442695
    %v2760 = vpow.pop %v2759
    %v2761 = vmul.f32 %v2758, 1.442695
    %v2762 = vpow.pop %v2761
    %v2763 = vsel %vm2068, %v2760, 0.0
    %2764 = vadd.xlane.f32.xlu0 %v2763
    %v2765 = vpop.xlane.xlu0 %2764
    %v2766 = vsel %vm2068, %v2762, 0.0
    %2767 = vadd.xlane.f32.xlu0 %v2766
    %v2768 = vpop.xlane.xlu0 %2767
    %v2769 = vrcp.pop %v2765
    %v2770 = vrcp.pop %v2768
    %v2771 = vmul.f32 %v2760, %v2769
    %v2772 = vmul.f32 %v2762, %v2770
    %v2773 = vpack.c.bf16 %v2771, %v2771
    %v2774 = vpack.c.bf16 %v2772, %v2772
    %2775 = vrot.lane.b32.xlu0 %v2097, 104
    %v2776 = vpop.permute.xlu0 %2775
    %v2778 = vsel %vm2098, %v2773, 0
    %v2781 = vand.u32 %v2776, %v2104
    %2783 = vmatprep.subr.bf16.mxu0 0
    %2784 = vmatpush1.bf16.msra.mxu0 %v2781
    %2785 = vmatprep.subr.bf16.mxu0 0
    %2786 = vmatpush1.bf16.msra.mxu0 0
    %2787 = vmatprep.subr.bf16.mxu0 0
    %2788 = vmatpush1.bf16.msra.mxu0 0
    %2789 = vmatprep.subr.bf16.mxu0 0
    %2790 = vmatpush1.bf16.msra.mxu0 0
    %2791 = vmatprep.subr.bf16.mxu0 0
    %2792 = vmatpush1.bf16.msra.mxu0 0
    %2793 = vmatprep.subr.bf16.mxu0 0
    %2794 = vmatpush1.bf16.msra.mxu0 0
    %2795 = vmatprep.subr.bf16.mxu0 0
    %2796 = vmatpush1.bf16.msra.mxu0 0
    %2797 = vmatprep.subr.bf16.mxu0 0
    %2798 = vmatpush1.bf16.msra.mxu0 0
    %2799 = vmatprep.subr.bf16.mxu0 0
    %2800 = vmatpush1.bf16.msra.mxu0 0
    %2801 = vmatprep.subr.bf16.mxu0 0
    %2802 = vmatpush1.bf16.msra.mxu0 0
    %2803 = vmatprep.subr.bf16.mxu0 0
    %2804 = vmatpush1.bf16.msra.mxu0 0
    %2805 = vmatprep.subr.bf16.mxu0 0
    %2806 = vmatpush1.bf16.msra.mxu0 0
    %2807 = vmatprep.subr.bf16.mxu0 0
    %2808 = vmatpush1.bf16.msra.mxu0 0
    %2809 = vmatprep.subr.bf16.mxu0 0
    %2810 = vmatpush1.bf16.msra.mxu0 0
    %2811 = vmatprep.subr.bf16.mxu0 0
    %2812 = vmatpush1.bf16.msra.mxu0 0
    %2813 = vmatprep.subr.bf16.mxu0 0
    %2814 = vmatpush1.bf16.msra.mxu0 0
    %2815 = vmatprep.mubr.bf16.mxu0 0
    %2816 = vmatmul.mubr.bf16.gmra.mrb[0].mxu0 %v2778
    %v2817 = vpop.f32.mrb[0].mxu0
    %v2818 = vadd.f32 0.0, %v2817
    %v2819 = vpop.f32.mrb[0].mxu0
    %v2820 = vpop.f32.mrb[0].mxu0
    %v2821 = vpop.f32.mrb[0].mxu0
    %2822 = vdwg.mxu0
    %2823 = vrot.lane.b32.xlu0 %v2152, 104
    %v2824 = vpop.permute.xlu0 %2823
    %v2826 = vsel %vm2098, %v2774, 0
    %v2829 = vand.u32 %v2824, %v2104
    %2831 = vmatprep.subr.bf16.mxu0 0
    %2832 = vmatpush1.bf16.msra.mxu0 %v2829
    %2833 = vmatprep.subr.bf16.mxu0 0
    %2834 = vmatpush1.bf16.msra.mxu0 0
    %2835 = vmatprep.subr.bf16.mxu0 0
    %2836 = vmatpush1.bf16.msra.mxu0 0
    %2837 = vmatprep.subr.bf16.mxu0 0
    %2838 = vmatpush1.bf16.msra.mxu0 0
    %2839 = vmatprep.subr.bf16.mxu0 0
    %2840 = vmatpush1.bf16.msra.mxu0 0
    %2841 = vmatprep.subr.bf16.mxu0 0
    %2842 = vmatpush1.bf16.msra.mxu0 0
    %2843 = vmatprep.subr.bf16.mxu0 0
    %2844 = vmatpush1.bf16.msra.mxu0 0
    %2845 = vmatprep.subr.bf16.mxu0 0
    %2846 = vmatpush1.bf16.msra.mxu0 0
    %2847 = vmatprep.subr.bf16.mxu0 0
    %2848 = vmatpush1.bf16.msra.mxu0 0
    %2849 = vmatprep.subr.bf16.mxu0 0
    %2850 = vmatpush1.bf16.msra.mxu0 0
    %2851 = vmatprep.subr.bf16.mxu0 0
    %2852 = vmatpush1.bf16.msra.mxu0 0
    %2853 = vmatprep.subr.bf16.mxu0 0
    %2854 = vmatpush1.bf16.msra.mxu0 0
    %2855 = vmatprep.subr.bf16.mxu0 0
    %2856 = vmatpush1.bf16.msra.mxu0 0
    %2857 = vmatprep.subr.bf16.mxu0 0
    %2858 = vmatpush1.bf16.msra.mxu0 0
    %2859 = vmatprep.subr.bf16.mxu0 0
    %2860 = vmatpush1.bf16.msra.mxu0 0
    %2861 = vmatprep.subr.bf16.mxu0 0
    %2862 = vmatpush1.bf16.msra.mxu0 0
    %2863 = vmatprep.mubr.bf16.mxu0 0
    %2864 = vmatmul.mubr.bf16.gmra.mrb[0].mxu0 %v2826
    %v2865 = vpop.f32.mrb[0].mxu0
    %v2866 = vadd.f32 0.0, %v2865
    %v2867 = vpop.f32.mrb[0].mxu0
    %v2868 = vpop.f32.mrb[0].mxu0
    %v2869 = vpop.f32.mrb[0].mxu0
    %2870 = vdwg.mxu0
    %2873 = vrot.lane.b32.xlu0 %v2370, 8
    %v2874 = vpop.permute.xlu0 %2873
    %2875 = vrot.lane.b32.xlu0 %v2418, 8
    %v2876 = vpop.permute.xlu0 %2875
    %2881 = vrot.lane.b32.xlu0 %v2594, 16
    %v2882 = vpop.permute.xlu0 %2881
    %2883 = vrot.lane.b32.xlu0 %v2642, 16
    %v2884 = vpop.permute.xlu0 %2883
    %2889 = vrot.lane.b32.xlu0 %v2818, 24
    %v2890 = vpop.permute.xlu0 %2889
    %2891 = vrot.lane.b32.xlu0 %v2866, 24
    %v2892 = vpop.permute.xlu0 %2891
    %v2895 = vsel %vm599, %v2143, %v2874
    %v2896 = vsel %vm599, %v2194, %v2876
    %v2897 = vsel %vm1711, %v2895, %v2882
    %v2898 = vsel %vm1711, %v2896, %v2884
    %v2899 = vsel %vm1714, %v2897, %v2890
    %v2900 = vsel %vm1714, %v2898, %v2892
    %v2902 = vlaneseq
    %v2903 = vshrl.u32 %v2902, 7
    %v2904 = vsub.s32 0, %v2903
    %v2905 = vrot.slane %v1933, %v2904
    %v2909 = vrot.slane %v2900, 7
    %v2910 = vsel %vm1731, %v2909, %v2899
    %v2911 = vsel %vm489, %v2910, 0
    %2913 = vmatprep.subr.mxu0 0.0
    %2914 = vmatpush1.msra.mxu0 %v1929
    %2915 = vmatprep.subr.mxu0 0.0
    %2916 = vmatpush1.msra.mxu0 %v1930
    %2917 = vmatprep.subr.mxu0 0.0
    %2918 = vmatpush1.msra.mxu0 %v1931
    %2919 = vmatprep.subr.mxu0 0.0
    %2920 = vmatpush1.msra.mxu0 %v1932
    %2921 = vmatprep.subr.mxu0 0.0
    %2922 = vmatpush1.msra.mxu0 0.0
    %2923 = vmatprep.subr.mxu0 0.0
    %2924 = vmatpush1.msra.mxu0 0.0
    %2925 = vmatprep.subr.mxu0 0.0
    %2926 = vmatpush1.msra.mxu0 0.0
    %2927 = vmatprep.subr.mxu0 0.0
    %2928 = vmatpush1.msra.mxu0 0.0
    %2929 = vmatprep.subr.mxu0 0.0
    %2930 = vmatpush1.msra.mxu0 0.0
    %2931 = vmatprep.subr.mxu0 0.0
    %2932 = vmatpush1.msra.mxu0 0.0
    %2933 = vmatprep.subr.mxu0 0.0
    %2934 = vmatpush1.msra.mxu0 0.0
    %2935 = vmatprep.subr.mxu0 0.0
    %2936 = vmatpush1.msra.mxu0 0.0
    %2937 = vmatprep.subr.mxu0 0.0
    %2938 = vmatpush1.msra.mxu0 0.0
    %2939 = vmatprep.subr.mxu0 0.0
    %2940 = vmatpush1.msra.mxu0 0.0
    %2941 = vmatprep.subr.mxu0 0.0
    %2942 = vmatpush1.msra.mxu0 0.0
    %2943 = vmatprep.subr.mxu0 0.0
    %2944 = vmatpush1.msra.mxu0 0.0
    %2945 = vmatprep.subr.mxu0 0.0
    %2946 = vmatpush1.msra.mxu0 0.0
    %2947 = vmatprep.subr.mxu0 0.0
    %2948 = vmatpush1.msra.mxu0 0.0
    %2949 = vmatprep.subr.mxu0 0.0
    %2950 = vmatpush1.msra.mxu0 0.0
    %2951 = vmatprep.subr.mxu0 0.0
    %2952 = vmatpush1.msra.mxu0 0.0
    %2953 = vmatprep.subr.mxu0 0.0
    %2954 = vmatpush1.msra.mxu0 0.0
    %2955 = vmatprep.subr.mxu0 0.0
    %2956 = vmatpush1.msra.mxu0 0.0
    %2957 = vmatprep.subr.mxu0 0.0
    %2958 = vmatpush1.msra.mxu0 0.0
    %2959 = vmatprep.subr.mxu0 0.0
    %2960 = vmatpush1.msra.mxu0 0.0
    %2961 = vmatprep.subr.mxu0 0.0
    %2962 = vmatpush1.msra.mxu0 0.0
    %2963 = vmatprep.subr.mxu0 0.0
    %2964 = vmatpush1.msra.mxu0 0.0
    %2965 = vmatprep.subr.mxu0 0.0
    %2966 = vmatpush1.msra.mxu0 0.0
    %2967 = vmatprep.subr.mxu0 0.0
    %2968 = vmatpush1.msra.mxu0 0.0
    %2969 = vmatprep.subr.mxu0 0.0
    %2970 = vmatpush1.msra.mxu0 0.0
    %2971 = vmatprep.subr.mxu0 0.0
    %2972 = vmatpush1.msra.mxu0 0.0
    %2973 = vmatprep.subr.mxu0 0.0
    %2974 = vmatpush1.msra.mxu0 0.0
    %2975 = vmatprep.subr.mxu0 0.0
    %2976 = vmatpush1.msra.mxu0 0.0
    %2977 = vmatprep.mubr.f32.mxu0 0.0
    %2978 = vmatmul.mubr.f32.gmra.mrb[0].mxu0 %v2911
    %v2979 = vpop.f32.mrb[0].mxu0
    %v2980 = vadd.f32 %v2905, %v2979
    %v2981 = vpop.f32.mrb[0].mxu0
    %2982 = vdwg.mxu0
    %v2983 = vadd.f32 %v1836, %v2980
    %v2984 = vld [vmem:[#allocation30] sm:$0x1]
    %v2985 = vld [vmem:[#allocation31] sm:$0x1]
    %v2986 = vsel %vm1808, %v2983, 0.0
    %2987 = vadd.xlane.f32.xlu0 %v2986
    %v2988 = vpop.xlane.xlu0 %2987
    %v2989 = vmul.f32 %v2988, %v1812
    %v2990 = vsub.f32 %v2983, %v2989
    %v2991 = vmul.f32 %v2990, %v2990
    %v2992 = vsel %vm1808, %v2991, 0.0
    %2993 = vadd.xlane.f32.xlu0 %v2992
    %v2994 = vpop.xlane.xlu0 %2993
    %v2995 = vmul.f32 %v2994, %v1812
    %v2996 = vadd.f32 %v2995, 1e-05
    %v2997 = vrsqrt.pop %v2996
    %v2998 = vmul.f32 %v2990, %v2997
    %v3000 = vlaneseq
    %v3001 = vshrl.u32 %v3000, 7
    %v3002 = vsub.s32 0, %v3001
    %v3003 = vrot.slane %v2984, %v3002
    %v3005 = vmul.f32 %v2998, %v3003
    %v3007 = vlaneseq
    %v3008 = vshrl.u32 %v3007, 7
    %v3009 = vsub.s32 0, %v3008
    %v3010 = vrot.slane %v2985, %v3009
    %v3012 = vadd.f32 %v3005, %v3010
    %v3013 = vld [vmem:[#allocation33] sm:$0xff]
    %v3014 = vld [vmem:[#allocation33 + $0x8] sm:$0xff]
    %v3015 = vld [vmem:[#allocation33 + $0x10] sm:$0xff]
    %v3016 = vld [vmem:[#allocation33 + $0x18] sm:$0xff]
    %v3017 = vld [vmem:[#allocation34] sm:$0x1]
    %v3019 = vlaneseq
    %v3020 = vshrl.u32 %v3019, 7
    %v3021 = vsub.s32 0, %v3020
    %v3022 = vrot.slane %v3017, %v3021
    %v3025 = vsel %vm489, %v3012, 0
    %3027 = vmatprep.subr.mxu0 0.0
    %3028 = vmatpush1.msra.mxu0 %v3013
    %3029 = vmatprep.subr.mxu0 0.0
    %3030 = vmatpush1.msra.mxu0 %v3014
    %3031 = vmatprep.subr.mxu0 0.0
    %3032 = vmatpush1.msra.mxu0 %v3015
    %3033 = vmatprep.subr.mxu0 0.0
    %3034 = vmatpush1.msra.mxu0 %v3016
    %3035 = vmatprep.subr.mxu0 0.0
    %3036 = vmatpush1.msra.mxu0 0.0
    %3037 = vmatprep.subr.mxu0 0.0
    %3038 = vmatpush1.msra.mxu0 0.0
    %3039 = vmatprep.subr.mxu0 0.0
    %3040 = vmatpush1.msra.mxu0 0.0
    %3041 = vmatprep.subr.mxu0 0.0
    %3042 = vmatpush1.msra.mxu0 0.0
    %3043 = vmatprep.subr.mxu0 0.0
    %3044 = vmatpush1.msra.mxu0 0.0
    %3045 = vmatprep.subr.mxu0 0.0
    %3046 = vmatpush1.msra.mxu0 0.0
    %3047 = vmatprep.subr.mxu0 0.0
    %3048 = vmatpush1.msra.mxu0 0.0
    %3049 = vmatprep.subr.mxu0 0.0
    %3050 = vmatpush1.msra.mxu0 0.0
    %3051 = vmatprep.subr.mxu0 0.0
    %3052 = vmatpush1.msra.mxu0 0.0
    %3053 = vmatprep.subr.mxu0 0.0
    %3054 = vmatpush1.msra.mxu0 0.0
    %3055 = vmatprep.subr.mxu0 0.0
    %3056 = vmatpush1.msra.mxu0 0.0
    %3057 = vmatprep.subr.mxu0 0.0
    %3058 = vmatpush1.msra.mxu0 0.0
    %3059 = vmatprep.subr.mxu0 0.0
    %3060 = vmatpush1.msra.mxu0 0.0
    %3061 = vmatprep.subr.mxu0 0.0
    %3062 = vmatpush1.msra.mxu0 0.0
    %3063 = vmatprep.subr.mxu0 0.0
    %3064 = vmatpush1.msra.mxu0 0.0
    %3065 = vmatprep.subr.mxu0 0.0
    %3066 = vmatpush1.msra.mxu0 0.0
    %3067 = vmatprep.subr.mxu0 0.0
    %3068 = vmatpush1.msra.mxu0 0.0
    %3069 = vmatprep.subr.mxu0 0.0
    %3070 = vmatpush1.msra.mxu0 0.0
    %3071 = vmatprep.subr.mxu0 0.0
    %3072 = vmatpush1.msra.mxu0 0.0
    %3073 = vmatprep.subr.mxu0 0.0
    %3074 = vmatpush1.msra.mxu0 0.0
    %3075 = vmatprep.subr.mxu0 0.0
    %3076 = vmatpush1.msra.mxu0 0.0
    %3077 = vmatprep.subr.mxu0 0.0
    %3078 = vmatpush1.msra.mxu0 0.0
    %3079 = vmatprep.subr.mxu0 0.0
    %3080 = vmatpush1.msra.mxu0 0.0
    %3081 = vmatprep.subr.mxu0 0.0
    %3082 = vmatpush1.msra.mxu0 0.0
    %3083 = vmatprep.subr.mxu0 0.0
    %3084 = vmatpush1.msra.mxu0 0.0
    %3085 = vmatprep.subr.mxu0 0.0
    %3086 = vmatpush1.msra.mxu0 0.0
    %3087 = vmatprep.subr.mxu0 0.0
    %3088 = vmatpush1.msra.mxu0 0.0
    %3089 = vmatprep.subr.mxu0 0.0
    %3090 = vmatpush1.msra.mxu0 0.0
    %3091 = vmatprep.mubr.f32.mxu0 0.0
    %3092 = vmatmul.mubr.f32.gmra.mrb[0].mxu0 %v3025
    %v3093 = vpop.f32.mrb[0].mxu0
    %v3094 = vadd.f32 %v3022, %v3093
    %v3095 = vpop.f32.mrb[0].mxu0
    %3096 = vdwg.mxu0
    %v3097 = vmax.f32 %v3094, 0.0
    %v3098 = vld [vmem:[#allocation36] sm:$0xff]
    %v3099 = vld [vmem:[#allocation36 + $0x8] sm:$0xff]
    %v3100 = vld [vmem:[#allocation36 + $0x10] sm:$0xff]
    %v3101 = vld [vmem:[#allocation36 + $0x18] sm:$0xff]
    %v3102 = vld [vmem:[#allocation37] sm:$0x1]
    %v3104 = vlaneseq
    %v3105 = vshrl.u32 %v3104, 7
    %v3106 = vsub.s32 0, %v3105
    %v3107 = vrot.slane %v3102, %v3106
    %v3110 = vsel %vm489, %v3097, 0
    %3112 = vmatprep.subr.mxu0 0.0
    %3113 = vmatpush1.msra.mxu0 %v3098
    %3114 = vmatprep.subr.mxu0 0.0
    %3115 = vmatpush1.msra.mxu0 %v3099
    %3116 = vmatprep.subr.mxu0 0.0
    %3117 = vmatpush1.msra.mxu0 %v3100
    %3118 = vmatprep.subr.mxu0 0.0
    %3119 = vmatpush1.msra.mxu0 %v3101
    %3120 = vmatprep.subr.mxu0 0.0
    %3121 = vmatpush1.msra.mxu0 0.0
    %3122 = vmatprep.subr.mxu0 0.0
    %3123 = vmatpush1.msra.mxu0 0.0
    %3124 = vmatprep.subr.mxu0 0.0
    %3125 = vmatpush1.msra.mxu0 0.0
    %3126 = vmatprep.subr.mxu0 0.0
    %3127 = vmatpush1.msra.mxu0 0.0
    %3128 = vmatprep.subr.mxu0 0.0
    %3129 = vmatpush1.msra.mxu0 0.0
    %3130 = vmatprep.subr.mxu0 0.0
    %3131 = vmatpush1.msra.mxu0 0.0
    %3132 = vmatprep.subr.mxu0 0.0
    %3133 = vmatpush1.msra.mxu0 0.0
    %3134 = vmatprep.subr.mxu0 0.0
    %3135 = vmatpush1.msra.mxu0 0.0
    %3136 = vmatprep.subr.mxu0 0.0
    %3137 = vmatpush1.msra.mxu0 0.0
    %3138 = vmatprep.subr.mxu0 0.0
    %3139 = vmatpush1.msra.mxu0 0.0
    %3140 = vmatprep.subr.mxu0 0.0
    %3141 = vmatpush1.msra.mxu0 0.0
    %3142 = vmatprep.subr.mxu0 0.0
    %3143 = vmatpush1.msra.mxu0 0.0
    %3144 = vmatprep.subr.mxu0 0.0
    %3145 = vmatpush1.msra.mxu0 0.0
    %3146 = vmatprep.subr.mxu0 0.0
    %3147 = vmatpush1.msra.mxu0 0.0
    %3148 = vmatprep.subr.mxu0 0.0
    %3149 = vmatpush1.msra.mxu0 0.0
    %3150 = vmatprep.subr.mxu0 0.0
    %3151 = vmatpush1.msra.mxu0 0.0
    %3152 = vmatprep.subr.mxu0 0.0
    %3153 = vmatpush1.msra.mxu0 0.0
    %3154 = vmatprep.subr.mxu0 0.0
    %3155 = vmatpush1.msra.mxu0 0.0
    %3156 = vmatprep.subr.mxu0 0.0
    %3157 = vmatpush1.msra.mxu0 0.0
    %3158 = vmatprep.subr.mxu0 0.0
    %3159 = vmatpush1.msra.mxu0 0.0
    %3160 = vmatprep.subr.mxu0 0.0
    %3161 = vmatpush1.msra.mxu0 0.0
    %3162 = vmatprep.subr.mxu0 0.0
    %3163 = vmatpush1.msra.mxu0 0.0
    %3164 = vmatprep.subr.mxu0 0.0
    %3165 = vmatpush1.msra.mxu0 0.0
    %3166 = vmatprep.subr.mxu0 0.0
    %3167 = vmatpush1.msra.mxu0 0.0
    %3168 = vmatprep.subr.mxu0 0.0
    %3169 = vmatpush1.msra.mxu0 0.0
    %3170 = vmatprep.subr.mxu0 0.0
    %3171 = vmatpush1.msra.mxu0 0.0
    %3172 = vmatprep.subr.mxu0 0.0
    %3173 = vmatpush1.msra.mxu0 0.0
    %3174 = vmatprep.subr.mxu0 0.0
    %3175 = vmatpush1.msra.mxu0 0.0
    %3176 = vmatprep.mubr.f32.mxu0 0.0
    %3177 = vmatmul.mubr.f32.gmra.mrb[0].mxu0 %v3110
    %v3178 = vpop.f32.mrb[0].mxu0
    %v3179 = vadd.f32 %v3107, %v3178
    %v3180 = vpop.f32.mrb[0].mxu0
    %3181 = vdwg.mxu0
    %v3182 = vadd.f32 %v3012, %v3179
    %v3183 = vld [vmem:[#allocation39] sm:$0x1]
    %v3184 = vld [vmem:[#allocation40] sm:$0x1]
    %v3185 = vsel %vm1808, %v3182, 0.0
    %3186 = vadd.xlane.f32.xlu0 %v3185
    %v3187 = vpop.xlane.xlu0 %3186
    %v3188 = vmul.f32 %v3187, %v1812
    %v3189 = vsub.f32 %v3182, %v3188
    %v3190 = vmul.f32 %v3189, %v3189
    %v3191 = vsel %vm1808, %v3190, 0.0
    %3192 = vadd.xlane.f32.xlu0 %v3191
    %v3193 = vpop.xlane.xlu0 %3192
    %v3194 = vmul.f32 %v3193, %v1812
    %v3195 = vadd.f32 %v3194, 1e-05
    %v3196 = vrsqrt.pop %v3195
    %v3197 = vmul.f32 %v3189, %v3196
    %v3199 = vlaneseq
    %v3200 = vshrl.u32 %v3199, 7
    %v3201 = vsub.s32 0, %v3200
    %v3202 = vrot.slane %v3183, %v3201
    %v3204 = vmul.f32 %v3197, %v3202
    %v3206 = vlaneseq
    %v3207 = vshrl.u32 %v3206, 7
    %v3208 = vsub.s32 0, %v3207
    %v3209 = vrot.slane %v3184, %v3208
    %v3211 = vadd.f32 %v3204, %v3209
    %v3212 = vld [vmem:[#allocation42] sm:$0xff]
    %v3213 = vld [vmem:[#allocation42 + $0x8] sm:$0xff]
    %v3214 = vld [vmem:[#allocation42 + $0x10] sm:$0xff]
    %v3215 = vld [vmem:[#allocation42 + $0x18] sm:$0xff]
    %v3216 = vld [vmem:[#allocation43] sm:$0x1]
    %v3218 = vlaneseq
    %v3219 = vshrl.u32 %v3218, 7
    %v3220 = vsub.s32 0, %v3219
    %v3221 = vrot.slane %v3216, %v3220
    %v3224 = vsel %vm489, %v3211, 0
    %3226 = vmatprep.subr.mxu0 0.0
    %3227 = vmatpush1.msra.mxu0 %v3212
    %3228 = vmatprep.subr.mxu0 0.0
    %3229 = vmatpush1.msra.mxu0 %v3213
    %3230 = vmatprep.subr.mxu0 0.0
    %3231 = vmatpush1.msra.mxu0 %v3214
    %3232 = vmatprep.subr.mxu0 0.0
    %3233 = vmatpush1.msra.mxu0 %v3215
    %3234 = vmatprep.subr.mxu0 0.0
    %3235 = vmatpush1.msra.mxu0 0.0
    %3236 = vmatprep.subr.mxu0 0.0
    %3237 = vmatpush1.msra.mxu0 0.0
    %3238 = vmatprep.subr.mxu0 0.0
    %3239 = vmatpush1.msra.mxu0 0.0
    %3240 = vmatprep.subr.mxu0 0.0
    %3241 = vmatpush1.msra.mxu0 0.0
    %3242 = vmatprep.subr.mxu0 0.0
    %3243 = vmatpush1.msra.mxu0 0.0
    %3244 = vmatprep.subr.mxu0 0.0
    %3245 = vmatpush1.msra.mxu0 0.0
    %3246 = vmatprep.subr.mxu0 0.0
    %3247 = vmatpush1.msra.mxu0 0.0
    %3248 = vmatprep.subr.mxu0 0.0
    %3249 = vmatpush1.msra.mxu0 0.0
    %3250 = vmatprep.subr.mxu0 0.0
    %3251 = vmatpush1.msra.mxu0 0.0
    %3252 = vmatprep.subr.mxu0 0.0
    %3253 = vmatpush1.msra.mxu0 0.0
    %3254 = vmatprep.subr.mxu0 0.0
    %3255 = vmatpush1.msra.mxu0 0.0
    %3256 = vmatprep.subr.mxu0 0.0
    %3257 = vmatpush1.msra.mxu0 0.0
    %3258 = vmatprep.subr.mxu0 0.0
    %3259 = vmatpush1.msra.mxu0 0.0
    %3260 = vmatprep.subr.mxu0 0.0
    %3261 = vmatpush1.msra.mxu0 0.0
    %3262 = vmatprep.subr.mxu0 0.0
    %3263 = vmatpush1.msra.mxu0 0.0
    %3264 = vmatprep.subr.mxu0 0.0
    %3265 = vmatpush1.msra.mxu0 0.0
    %3266 = vmatprep.subr.mxu0 0.0
    %3267 = vmatpush1.msra.mxu0 0.0
    %3268 = vmatprep.subr.mxu0 0.0
    %3269 = vmatpush1.msra.mxu0 0.0
    %3270 = vmatprep.subr.mxu0 0.0
    %3271 = vmatpush1.msra.mxu0 0.0
    %3272 = vmatprep.subr.mxu0 0.0
    %3273 = vmatpush1.msra.mxu0 0.0
    %3274 = vmatprep.subr.mxu0 0.0
    %3275 = vmatpush1.msra.mxu0 0.0
    %3276 = vmatprep.subr.mxu0 0.0
    %3277 = vmatpush1.msra.mxu0 0.0
    %3278 = vmatprep.subr.mxu0 0.0
    %3279 = vmatpush1.msra.mxu0 0.0
    %3280 = vmatprep.subr.mxu0 0.0
    %3281 = vmatpush1.msra.mxu0 0.0
    %3282 = vmatprep.subr.mxu0 0.0
    %3283 = vmatpush1.msra.mxu0 0.0
    %3284 = vmatprep.subr.mxu0 0.0
    %3285 = vmatpush1.msra.mxu0 0.0
    %3286 = vmatprep.subr.mxu0 0.0
    %3287 = vmatpush1.msra.mxu0 0.0
    %3288 = vmatprep.subr.mxu0 0.0
    %3289 = vmatpush1.msra.mxu0 0.0
    %3290 = vmatprep.mubr.f32.mxu0 0.0
    %3291 = vmatmul.mubr.f32.gmra.mrb[0].mxu0 %v3224
    %v3292 = vpop.f32.mrb[0].mxu0
    %v3293 = vadd.f32 %v3221, %v3292
    %v3294 = vpop.f32.mrb[0].mxu0
    %3295 = vdwg.mxu0
    %v3296 = vld [vmem:[#allocation7] sm:$0xf]
    %v3297 = vld [vmem:[#allocation7 + $0x4] sm:$0x1]
    %v3298 = vld [vmem:[#allocation7 + $0x8] sm:$0xf]
    %v3299 = vld [vmem:[#allocation7 + $0xc] sm:$0x1]
    %v3300 = vunpack.c.l.bf16 %v3296
    %v3301 = vunpack.c.l.bf16 %v3297
    %v3302 = vunpack.c.l.bf16 %v3298
    %v3303 = vunpack.c.l.bf16 %v3299
    %v3306 = vunpack.c.l.s4 1966171168
    %v3307 = vunpack.c.0.s8 %v3306
    %v3308 = vlaneseq
    %v3309 = vshrl.u32 %v3308, 7
    %v3310 = vsub.s32 %v3307, %v3309
    %v3311 = vrot.slane %v3293, %v3310
    %v3312 = vcombine.high %v3311, %v3311
    %v3314 = vunpack.c.l.s4 1966171168
    %v3315 = vunpack.c.0.s8 %v3314
    %v3316 = vlaneseq
    %v3317 = vshrl.u32 %v3316, 7
    %v3318 = vsub.s32 %v3315, %v3317
    %v3319 = vrot.slane %v3311, %v3318
    %v3321 = vunpack.c.l.s4 1966171168
    %v3322 = vunpack.c.0.s8 %v3321
    %v3323 = vlaneseq
    %v3324 = vshrl.u32 %v3323, 7
    %v3325 = vsub.s32 %v3322, %v3324
    %v3326 = vrot.slane %v3312, %v3325
    %3329 = vrot.lane.b32.xlu0 %v3300, 96
    %v3330 = vpop.permute.xlu0 %3329
    %3331 = vrot.lane.b32.xlu0 %v3301, 96
    %v3332 = vpop.permute.xlu0 %3331
    %v3333 = vsel %vm489, %v3319, 0
    %v3335 = vsel %vm489, %v3330, 0
    %v3337 = vsel %vm489, %v3332, 0
    %3339 = vmatprep.subr.mxu0 0.0
    %3340 = vmatpush1.xpose.msra.mxu0 %v3335
    %3341 = vmatprep.subr.mxu0 0.0
    %3342 = vmatpush1.xpose.msra.mxu0 %v3337
    %3343 = vmatprep.subr.mxu0 0.0
    %3344 = vmatpush1.xpose.msra.mxu0 0.0
    %3345 = vmatprep.subr.mxu0 0.0
    %3346 = vmatpush1.xpose.msra.mxu0 0.0
    %3347 = vmatprep.subr.mxu0 0.0
    %3348 = vmatpush1.xpose.msra.mxu0 0.0
    %3349 = vmatprep.subr.mxu0 0.0
    %3350 = vmatpush1.xpose.msra.mxu0 0.0
    %3351 = vmatprep.subr.mxu0 0.0
    %3352 = vmatpush1.xpose.msra.mxu0 0.0
    %3353 = vmatprep.subr.mxu0 0.0
    %3354 = vmatpush1.xpose.msra.mxu0 0.0
    %3355 = vmatprep.subr.mxu0 0.0
    %3356 = vmatpush1.xpose.msra.mxu0 0.0
    %3357 = vmatprep.subr.mxu0 0.0
    %3358 = vmatpush1.xpose.msra.mxu0 0.0
    %3359 = vmatprep.subr.mxu0 0.0
    %3360 = vmatpush1.xpose.msra.mxu0 0.0
    %3361 = vmatprep.subr.mxu0 0.0
    %3362 = vmatpush1.xpose.msra.mxu0 0.0
    %3363 = vmatprep.subr.mxu0 0.0
    %3364 = vmatpush1.xpose.msra.mxu0 0.0
    %3365 = vmatprep.subr.mxu0 0.0
    %3366 = vmatpush1.xpose.msra.mxu0 0.0
    %3367 = vmatprep.subr.mxu0 0.0
    %3368 = vmatpush1.xpose.msra.mxu0 0.0
    %3369 = vmatprep.subr.mxu0 0.0
    %3370 = vmatpush1.xpose.msra.mxu0 0.0
    %3371 = vmatprep.subr.mxu0 0.0
    %3372 = vmatpush1.xpose.msra.mxu0 0.0
    %3373 = vmatprep.subr.mxu0 0.0
    %3374 = vmatpush1.xpose.msra.mxu0 0.0
    %3375 = vmatprep.subr.mxu0 0.0
    %3376 = vmatpush1.xpose.msra.mxu0 0.0
    %3377 = vmatprep.subr.mxu0 0.0
    %3378 = vmatpush1.xpose.msra.mxu0 0.0
    %3379 = vmatprep.subr.mxu0 0.0
    %3380 = vmatpush1.xpose.msra.mxu0 0.0
    %3381 = vmatprep.subr.mxu0 0.0
    %3382 = vmatpush1.xpose.msra.mxu0 0.0
    %3383 = vmatprep.subr.mxu0 0.0
    %3384 = vmatpush1.xpose.msra.mxu0 0.0
    %3385 = vmatprep.subr.mxu0 0.0
    %3386 = vmatpush1.xpose.msra.mxu0 0.0
    %3387 = vmatprep.subr.mxu0 0.0
    %3388 = vmatpush1.xpose.msra.mxu0 0.0
    %3389 = vmatprep.subr.mxu0 0.0
    %3390 = vmatpush1.xpose.msra.mxu0 0.0
    %3391 = vmatprep.subr.mxu0 0.0
    %3392 = vmatpush1.xpose.msra.mxu0 0.0
    %3393 = vmatprep.subr.mxu0 0.0
    %3394 = vmatpush1.xpose.msra.mxu0 0.0
    %3395 = vmatprep.subr.mxu0 0.0
    %3396 = vmatpush1.xpose.msra.mxu0 0.0
    %3397 = vmatprep.subr.mxu0 0.0
    %3398 = vmatpush1.xpose.msra.mxu0 0.0
    %3399 = vmatprep.subr.mxu0 0.0
    %3400 = vmatpush1.xpose.msra.mxu0 0.0
    %3401 = vmatprep.subr.mxu0 0.0
    %3402 = vmatpush1.xpose.msra.mxu0 0.0
    %3403 = vmatprep.mubr.f32.mxu0 0.0
    %3404 = vmatmul.mubr.f32.gmra.mrb[0].mxu0 %v3333
    %v3405 = vpop.f32.mrb[0].mxu0
    %v3406 = vadd.f32 0.0, %v3405
    %v3407 = vpop.f32.mrb[0].mxu0
    %3408 = vdwg.mxu0
    %3411 = vrot.lane.b32.xlu0 %v3302, 96
    %v3412 = vpop.permute.xlu0 %3411
    %3413 = vrot.lane.b32.xlu0 %v3303, 96
    %v3414 = vpop.permute.xlu0 %3413
    %v3415 = vsel %vm489, %v3326, 0
    %v3417 = vsel %vm489, %v3412, 0
    %v3419 = vsel %vm489, %v3414, 0
    %3421 = vmatprep.subr.mxu0 0.0
    %3422 = vmatpush1.xpose.msra.mxu0 %v3417
    %3423 = vmatprep.subr.mxu0 0.0
    %3424 = vmatpush1.xpose.msra.mxu0 %v3419
    %3425 = vmatprep.subr.mxu0 0.0
    %3426 = vmatpush1.xpose.msra.mxu0 0.0
    %3427 = vmatprep.subr.mxu0 0.0
    %3428 = vmatpush1.xpose.msra.mxu0 0.0
    %3429 = vmatprep.subr.mxu0 0.0
    %3430 = vmatpush1.xpose.msra.mxu0 0.0
    %3431 = vmatprep.subr.mxu0 0.0
    %3432 = vmatpush1.xpose.msra.mxu0 0.0
    %3433 = vmatprep.subr.mxu0 0.0
    %3434 = vmatpush1.xpose.msra.mxu0 0.0
    %3435 = vmatprep.subr.mxu0 0.0
    %3436 = vmatpush1.xpose.msra.mxu0 0.0
    %3437 = vmatprep.subr.mxu0 0.0
    %3438 = vmatpush1.xpose.msra.mxu0 0.0
    %3439 = vmatprep.subr.mxu0 0.0
    %3440 = vmatpush1.xpose.msra.mxu0 0.0
    %3441 = vmatprep.subr.mxu0 0.0
    %3442 = vmatpush1.xpose.msra.mxu0 0.0
    %3443 = vmatprep.subr.mxu0 0.0
    %3444 = vmatpush1.xpose.msra.mxu0 0.0
    %3445 = vmatprep.subr.mxu0 0.0
    %3446 = vmatpush1.xpose.msra.mxu0 0.0
    %3447 = vmatprep.subr.mxu0 0.0
    %3448 = vmatpush1.xpose.msra.mxu0 0.0
    %3449 = vmatprep.subr.mxu0 0.0
    %3450 = vmatpush1.xpose.msra.mxu0 0.0
    %3451 = vmatprep.subr.mxu0 0.0
    %3452 = vmatpush1.xpose.msra.mxu0 0.0
    %3453 = vmatprep.subr.mxu0 0.0
    %3454 = vmatpush1.xpose.msra.mxu0 0.0
    %3455 = vmatprep.subr.mxu0 0.0
    %3456 = vmatpush1.xpose.msra.mxu0 0.0
    %3457 = vmatprep.subr.mxu0 0.0
    %3458 = vmatpush1.xpose.msra.mxu0 0.0
    %3459 = vmatprep.subr.mxu0 0.0
    %3460 = vmatpush1.xpose.msra.mxu0 0.0
    %3461 = vmatprep.subr.mxu0 0.0
    %3462 = vmatpush1.xpose.msra.mxu0 0.0
    %3463 = vmatprep.subr.mxu0 0.0
    %3464 = vmatpush1.xpose.msra.mxu0 0.0
    %3465 = vmatprep.subr.mxu0 0.0
    %3466 = vmatpush1.xpose.msra.mxu0 0.0
    %3467 = vmatprep.subr.mxu0 0.0
    %3468 = vmatpush1.xpose.msra.mxu0 0.0
    %3469 = vmatprep.subr.mxu0 0.0
    %3470 = vmatpush1.xpose.msra.mxu0 0.0
    %3471 = vmatprep.subr.mxu0 0.0
    %3472 = vmatpush1.xpose.msra.mxu0 0.0
    %3473 = vmatprep.subr.mxu0 0.0
    %3474 = vmatpush1.xpose.msra.mxu0 0.0
    %3475 = vmatprep.subr.mxu0 0.0
    %3476 = vmatpush1.xpose.msra.mxu0 0.0
    %3477 = vmatprep.subr.mxu0 0.0
    %3478 = vmatpush1.xpose.msra.mxu0 0.0
    %3479 = vmatprep.subr.mxu0 0.0
    %3480 = vmatpush1.xpose.msra.mxu0 0.0
    %3481 = vmatprep.subr.mxu0 0.0
    %3482 = vmatpush1.xpose.msra.mxu0 0.0
    %3483 = vmatprep.subr.mxu0 0.0
    %3484 = vmatpush1.xpose.msra.mxu0 0.0
    %3485 = vmatprep.mubr.f32.mxu0 0.0
    %3486 = vmatmul.mubr.f32.gmra.mrb[0].mxu0 %v3415
    %v3487 = vpop.f32.mrb[0].mxu0
    %v3488 = vadd.f32 0.0, %v3487
    %v3489 = vpop.f32.mrb[0].mxu0
    %3490 = vdwg.mxu0
    %v3491 = vmul.f32 %v3406, 0.17677669
    %v3492 = vmul.f32 %v3488, 0.17677669
    %v3493 = vtanh.pop %v3491
    %v3494 = vtanh.pop %v3492
    %v3495 = vmul.f32 %v3493, 10.0
    %v3496 = vmul.f32 %v3494, 10.0
    %v3499 = vrot.slane %v3496, 7
    %v3500 = vsel %vm1731, %v3499, %v3495
    %v3502 = vsel %vm446, -1e+09, %v3500
    %vm3503 = vcmask 66560
    %v3504 = vsel %vm3503, %v3502, -inf
    %3505 = vmax.xlane.f32.xlu0 %v3504
    %v3506 = vpop.xlane.xlu0 %3505
    %v3507 = vsub.f32 %v3502, %v3506
    %v3508 = vmul.f32 %v3507, 1.442695
    %v3509 = vpow.pop %v3508
    %v3510 = vsel %vm3503, %v3509, 0.0
    %3511 = vadd.xlane.f32.xlu0 %v3510
    %v3512 = vpop.xlane.xlu0 %3511
    %v3513 = vlog2.pop %v3512
    %v3514 = vmul.f32 %v3513, 0.6931472
    %v3515 = vsub.f32 %v3507, %v3514
    %3516 = vst.msk [vmem:[#allocation45] sm:$0x3] %vm3503, %v3515
    // Predicated region
    $region210: #{closed_call.25} parent=1 // pred_check
      _
    $region211: #{closed_call.25} parent=1 // pred_check_branch
      %3518 = sbr.rel (0) target = $region213
    $region212: #{closed_call.25} parent=1 // pred_region
      %s3520 = ssub.s32 32, 32
      %3521 = vsyncadd [#allocation6], %s3520
      %s3523 = sshll.u32 [#allocation45], 4
      %s3524 = int_to_ptr.vmem [resolvable:$true] %s3523
      %3526 = dma.vmem_to_hbm [thread:$0]  %s3524, 32, %s55, [#allocation6]
    $region213: #{closed_call.25} parent=1 // pred_fallthru
      _
    // Predicated region
    $region214: #{closed_call.25} parent=1 // pred_check
      _
    $region215: #{closed_call.25} parent=1 // pred_check_branch
      %3528 = sbr.rel (0) target = $region217
    $region216: #{closed_call.25} parent=1 // pred_region
      %s3530 = ssub.s32 16, 16
      %3531 = vsyncadd [#allocation47], %s3530
      %s3533 = sshll.u32 [#allocation46], 4
      %s3534 = int_to_ptr.vmem [resolvable:$true] %s3533
      %3536 = dma.vmem_to_hbm [thread:$0]  %s3534, 16, %s57, [#allocation47]
    $region217: #{closed_call.25} parent=1 // pred_fallthru
      _
    // Predicated region
    $region218: #{closed_call.25} parent=1 // pred_check
      _
    $region219: #{closed_call.25} parent=1 // pred_check_branch
      %3538 = sbr.rel (0) target = $region221
    $region220: #{closed_call.25} parent=1 // pred_region
      %s3540 = ssub.s32 16, 16
      %3541 = vsyncadd [#allocation47], %s3540
      %s3543 = sshll.u32 [#allocation48], 4
      %s3544 = int_to_ptr.vmem [resolvable:$true] %s3543
      %3546 = dma.vmem_to_hbm [thread:$0]  %s3544, 16, %s59, [#allocation47]
    $region221: #{closed_call.25} parent=1 // pred_fallthru
      _
    // Predicated region
    $region222: #{closed_call.25} parent=1 // pred_check
      _
    $region223: #{closed_call.25} parent=1 // pred_check_branch
      %3548 = sbr.rel (0) target = $region225
    $region224: #{closed_call.25} parent=1 // pred_region
      %3549 = dma.done [#allocation6], 32
    $region225: #{closed_call.25} parent=1 // pred_fallthru
      _
    // Predicated region
    $region226: #{closed_call.25} parent=1 // pred_check
      _
    $region227: #{closed_call.25} parent=1 // pred_check_branch
      %3551 = sbr.rel (0) target = $region229
    $region228: #{closed_call.25} parent=1 // pred_region
      %3552 = dma.done [#allocation47], 16
    $region229: #{closed_call.25} parent=1 // pred_fallthru
      _
    // Predicated region
    $region230: #{closed_call.25} parent=1 // pred_check
      _
    $region231: #{closed_call.25} parent=1 // pred_check_branch
      %3554 = sbr.rel (0) target = $region233
    $region232: #{closed_call.25} parent=1 // pred_region
      %3555 = dma.done [#allocation47], 16
    $region233: #{closed_call.25} parent=1 // pred_fallthru
      _
    %3556 = vsyncpa [#allocation5], 1
    %3557 = vsyncpa [#allocation8], 1
    %3558 = vsyncpa [#allocation11], 1
    %3559 = vsyncpa [#allocation14], 1
    %3560 = vsyncpa [#allocation17], 1
    %3561 = vsyncpa [#allocation20], 1
    %3562 = vsyncpa [#allocation23], 1
    %3563 = vsyncpa [#allocation26], 1
    %3564 = vsyncpa [#allocation29], 1
    %3565 = vsyncpa [#allocation32], 1
    %3566 = vsyncpa [#allocation35], 1
    %3567 = vsyncpa [#allocation38], 1
    %3568 = vsyncpa [#allocation41], 1
    %3569 = vsyncpa [#allocation44], 1
    %3570 = vsyncpa [#allocation6], 1
    %3571 = vsyncpa [#allocation47], 1

</llo_original>
